<compile_context>
chip_gen: v7x
topology: tpu7x:2x2x1
jax: 0.10.0
libtpu: 0.0.40
codegen_flags: <defaults>
</compile_context>

<pallas_src>
import numpy as np
import jax
import jax.numpy as jnp
from jax.experimental import pallas as pl
from jax.experimental.pallas import tpu as pltpu

BN_EPS = 1e-5
CP = 128     # padded output-channel width (lane-dense stores, MXU-native N)
PADH = 16    # halo rows around the staged block0 output (16 = bf16 sublane tile)


# ------------------------------ fused kernel ----------------------------------

def _make_bottleneck_down_kernel(B, H, W, Cin, Cr):
    """Fused BottleNeckDown forward.

    block0: 1x1 conv -> BN(train stats) -> SiLU
    block1: 3x3 conv (stride 1, pad 1) -> BN(train stats) -> SiLU

    x_ref   : (M, Cin)          bf16, rows ordered (b, h, w), M = B*H*W
    w0_ref  : (Cin, CP)         bf16, zero-padded past the real Cr channels
    w1_ref  : (9*Cr, CP)        bf16, rows ordered (di, dj, c); padded past Cin
    g*/b*   : (1, CP)           f32 BN affine (gamma padded with 1, beta with 0)
    o_ref   : (M, CP)           f32 lane-dense output (real channels in [:Cin])
    ybuf_ref: (M+2*PADH, Cr)    bf16 scratch: block0 output + zero halo so the
                                w +/- 1 neighbours are +/-1-row slices
    zbuf_ref: (M+(B+1)*W, 3Cr)  bf16 scratch: dj-packed rows with a W-row zero
                                gap between images -> di taps are aligned,
                                mask-free row slices.
    """
    HW = H * W
    M = B * HW
    K3 = 3 * Cr          # K of each di row-block of the packed 3x3 weights
    GAP = W              # zero rows between images (absorbs the di=+-1 overrun)

    def _bn_silu(acc, g, b):
        # One-pass training-mode BatchNorm2d stats (biased var) + exact SiLU.
        inv_n = 1.0 / acc.shape[0]
        mean = jnp.sum(acc, axis=0, keepdims=True) * inv_n
        ex2 = jnp.sum(acc * acc, axis=0, keepdims=True) * inv_n
        var = ex2 - mean * mean
        y = (acc - mean) * jax.lax.rsqrt(var + BN_EPS) * g + b
        # silu(y) = y * sigmoid(y) = y * 0.5 * (1 + tanh(y/2))  -> one EUP push
        return y * (0.5 + 0.5 * jnp.tanh(0.5 * y))

    def kernel(x_ref, w0_ref, g0_ref, b0_ref, w1_ref, g1_ref, b1_ref,
               o_ref, ybuf_ref, zbuf_ref):
        # ------------------ block0: 1x1 conv + BN + SiLU ----------------------
        acc0 = jnp.dot(x_ref[...], w0_ref[...],
                       preferred_element_type=jnp.float32)          # (M, CP) f32
        y0 = _bn_silu(acc0, g0_ref[...], b0_ref[...])
        y0n = y0[:, :Cr].astype(jnp.bfloat16)                        # (M, Cr)

        # Stage y0 with a 1-row-capable halo; w +/- 1 neighbours are row slices.
        ybuf_ref[0:PADH, :] = jnp.zeros((PADH, Cr), jnp.bfloat16)
        ybuf_ref[PADH + M:PADH + M + PADH, :] = jnp.zeros((PADH, Cr), jnp.bfloat16)
        ybuf_ref[PADH:PADH + M, :] = y0n

        # dj packing: z = [left | centre | right] along lanes, w-edges zeroed
        # with exactly two selects (the only masks in the whole 3x3 conv).
        w_idx = jax.lax.broadcasted_iota(jnp.int32, (M, 1), 0) % W
        yl = ybuf_ref[PADH - 1:PADH - 1 + M, :]                      # value at w-1
        yr = ybuf_ref[PADH + 1:PADH + 1 + M, :]                      # value at w+1
        yl = jnp.where(w_idx == 0, jnp.zeros_like(yl), yl)
        yr = jnp.where(w_idx == W - 1, jnp.zeros_like(yr), yr)
        z = jnp.concatenate([yl, y0n, yr], axis=1)                   # (M, 3*Cr)

        # Stage z with W zero rows before/after every image: the di = +-1 taps
        # never read the neighbouring image, so no h-mask is needed and every
        # tap slice below starts on a multiple of 16 (bf16 sublane tile).
        zbuf_ref[...] = jnp.zeros(zbuf_ref.shape, jnp.bfloat16)
        for bi in range(B):
            s0 = (bi + 1) * GAP + bi * HW
            zbuf_ref[s0:s0 + HW, :] = z[bi * HW:(bi + 1) * HW, :]

        # ------------- block1: 3x3 conv as K-packed, mask-free matmuls --------
        # out(b,h,w,:) = sum_di  zbuf[row(b,h,w) + (di-1)*W, :] @ w1[di-block]
        accs = []
        for bi in range(B):
            s0 = (bi + 1) * GAP + bi * HW
            acc_bi = None
            for di in range(3):
                r0 = s0 + (di - 1) * W
                lhs = zbuf_ref[r0:r0 + HW, :]                        # (HW, 3Cr)
                part = jnp.dot(lhs, w1_ref[di * K3:(di + 1) * K3, :],
                               preferred_element_type=jnp.float32)   # (HW, CP)
                acc_bi = part if acc_bi is None else acc_bi + part
            accs.append(acc_bi)
        acc1 = jnp.concatenate(accs, axis=0)                         # (M, CP)

        # ------------------ block1 BN + SiLU + lane-dense store ---------------
        o_ref[...] = _bn_silu(acc1, g1_ref[...], b1_ref[...])

    return kernel


# ------------------------------ parameters ------------------------------------

def init_bottleneck_down(key, in_channels):
    """Synthetic deterministic parameters mirroring BottleNeckDown(in_channels)."""
    cr = in_channels // 2
    k0, k1, kg0, kb0, kg1, kb1 = jax.random.split(key, 6)
    return {
        "cin": in_channels, "cr": cr,
        # block0: 1x1 conv, stored as (Cin, Cr) (HWIO with k=1 squeezed)
        "w0": jax.random.normal(k0, (in_channels, cr), jnp.float32) / np.sqrt(in_channels),
        # block1: 3x3 conv, HWIO (3, 3, Cr, Cout=Cin)
        "w1": jax.random.normal(k1, (3, 3, cr, in_channels), jnp.float32) / np.sqrt(9 * cr),
        "g0": 1.0 + 0.1 * jax.random.normal(kg0, (cr,), jnp.float32),
        "b0": 0.05 * jax.random.normal(kb0, (cr,), jnp.float32),
        "g1": 1.0 + 0.1 * jax.random.normal(kg1, (in_channels,), jnp.float32),
        "b1": 0.05 * jax.random.normal(kb1, (in_channels,), jnp.float32),
    }


def pack_bottleneck_down_params(p):
    """One-time packing (OFF the per-forward path): pad channels, cast to bf16.

    Padded gamma lanes are 1 and beta lanes are 0 so BN of the exactly-zero
    padded columns stays exactly zero (rsqrt(eps) * 0 * 1 + 0).
    """
    cin, cr = p["cin"], p["cr"]
    w0p = jnp.zeros((cin, CP), jnp.float32).at[:, :cr].set(p["w0"]).astype(jnp.bfloat16)
    # (3,3,Cr,Cin) -> rows ordered (di, dj, c), matching the dj-packed LHS lanes.
    w1p = (jnp.zeros((9 * cr, CP), jnp.float32)
           .at[:, :cin].set(p["w1"].reshape(9 * cr, cin)).astype(jnp.bfloat16))
    g0p = jnp.ones((1, CP), jnp.float32).at[0, :cr].set(p["g0"])
    b0p = jnp.zeros((1, CP), jnp.float32).at[0, :cr].set(p["b0"])
    g1p = jnp.ones((1, CP), jnp.float32).at[0, :cin].set(p["g1"])
    b1p = jnp.zeros((1, CP), jnp.float32).at[0, :cin].set(p["b1"])
    return {"w0": w0p, "w1": w1p, "g0": g0p, "b0": b0p, "g1": g1p, "b1": b1p}


# ------------------------------ jitted forward ---------------------------------

@jax.jit
def bottleneck_down_forward(packed, x_nchw):
    """x: (B, Cin, H, W) f32 -> (B, Cin, H, W) f32, matching BottleNeckDown.forward."""
    B, Cin, H, W = x_nchw.shape
    Cr = Cin // 2
    M = B * H * W
    x2d = jnp.transpose(x_nchw, (0, 2, 3, 1)).reshape(M, Cin).astype(jnp.bfloat16)

    out2d = pl.pallas_call(
        _make_bottleneck_down_kernel(B, H, W, Cin, Cr),
        grid=(1,),
        in_specs=[
            pl.BlockSpec((M, Cin), lambda i: (0, 0)),
            pl.BlockSpec((Cin, CP), lambda i: (0, 0)),
            pl.BlockSpec((1, CP), lambda i: (0, 0)),
            pl.BlockSpec((1, CP), lambda i: (0, 0)),
            pl.BlockSpec((9 * Cr, CP), lambda i: (0, 0)),
            pl.BlockSpec((1, CP), lambda i: (0, 0)),
            pl.BlockSpec((1, CP), lambda i: (0, 0)),
        ],
        out_specs=pl.BlockSpec((M, CP), lambda i: (0, 0)),
        out_shape=jax.ShapeDtypeStruct((M, CP), jnp.float32),
        scratch_shapes=[
            pltpu.VMEM((M + 2 * PADH, Cr), jnp.bfloat16),        # ybuf (haloed y0)
            pltpu.VMEM((M + (B + 1) * W, 3 * Cr), jnp.bfloat16),  # zbuf (dj-packed)
        ],
        compiler_params=pltpu.CompilerParams(dimension_semantics=("arbitrary",)),
    )(x2d, packed["w0"], packed["g0"], packed["b0"],
      packed["w1"], packed["g1"], packed["b1"])

    return out2d[:, :Cin].reshape(B, H, W, Cin).transpose(0, 3, 1, 2)


# ------------------------------ pure-JAX reference ----------------------------

def _reference_forward(params, x_nchw):
    x = jnp.transpose(x_nchw, (0, 2, 3, 1))

    def conv_bn_silu(x, w, g, b, pad):
        y = jax.lax.conv_general_dilated(
            x, w, window_strides=(1, 1), padding=[(pad, pad), (pad, pad)],
            dimension_numbers=("NHWC", "HWIO", "NHWC"),
            precision=jax.lax.Precision.HIGHEST)
        mean = jnp.mean(y, axis=(0, 1, 2))
        var = jnp.mean(jnp.square(y - mean), axis=(0, 1, 2))
        y = (y - mean) * jax.lax.rsqrt(var + BN_EPS) * g + b
        return y * jax.nn.sigmoid(y)

    y0 = conv_bn_silu(x, params["w0"].reshape(1, 1, params["cin"], params["cr"]),
                      params["g0"], params["b0"], pad=0)
    y1 = conv_bn_silu(y0, params["w1"], params["g1"], params["b1"], pad=1)
    return jnp.transpose(y1, (0, 3, 1, 2))


# ----------------------------------- main --------------------------------------

if __name__ == "__main__":
    key = jax.random.PRNGKey(0)
    pkey, xkey = jax.random.split(key)

    IN_CHANNELS, B, H, W = 32, 2, 16, 16
    params = init_bottleneck_down(pkey, IN_CHANNELS)
    packed = pack_bottleneck_down_params(params)      # one-time, off the hot path
    x = jax.random.normal(xkey, (B, IN_CHANNELS, H, W), jnp.float32)

    out = bottleneck_down_forward(packed, x)
    out = jax.block_until_ready(out)

    assert out.shape == (B, IN_CHANNELS, H, W), f"bad shape {out.shape}"
    assert bool(jnp.all(jnp.isfinite(out))), "non-finite output"

    ref = _reference_forward(params, x)
    max_err = float(jnp.max(jnp.abs(out - ref)))
    # Exact sigmoid now; residual error is bf16 staging of x / weights / y0.
    assert max_err < 0.06, f"kernel/reference mismatch: max abs err {max_err}"

    print("KERNEL_OK")
</pallas_src>

<mosaic_0001>
module attributes {stable_mosaic.version = 11 : i64} {
  func.func @kernel(%arg0: i32, %arg1: memref<512x32xbf16, #tpu.memory_space<vmem>>, %arg2: memref<32x128xbf16, #tpu.memory_space<vmem>>, %arg3: memref<1x128xf32, #tpu.memory_space<vmem>>, %arg4: memref<1x128xf32, #tpu.memory_space<vmem>>, %arg5: memref<144x128xbf16, #tpu.memory_space<vmem>>, %arg6: memref<1x128xf32, #tpu.memory_space<vmem>>, %arg7: memref<1x128xf32, #tpu.memory_space<vmem>>, %arg8: memref<512x128xf32, #tpu.memory_space<vmem>>, %arg9: memref<544x16xbf16, #tpu.memory_space<vmem>>, %arg10: memref<560x48xbf16, #tpu.memory_space<vmem>>) attributes {dimension_semantics = [#tpu.dimension_semantics<arbitrary>], iteration_bounds = array<i64: 1>, scalar_prefetch = 0 : i64, scratch_operands = 2 : i64, tpu.core_type = #tpu.core_type<tc>, window_params = [{pipeline_mode = #tpu.pipeline_mode<synchronous>, transform_indices = @transform_0, window_bounds = array<i64: 512, 32>}, {pipeline_mode = #tpu.pipeline_mode<synchronous>, transform_indices = @transform_1, window_bounds = array<i64: 32, 128>}, {pipeline_mode = #tpu.pipeline_mode<synchronous>, transform_indices = @transform_2, window_bounds = array<i64: 1, 128>}, {pipeline_mode = #tpu.pipeline_mode<synchronous>, transform_indices = @transform_3, window_bounds = array<i64: 1, 128>}, {pipeline_mode = #tpu.pipeline_mode<synchronous>, transform_indices = @transform_4, window_bounds = array<i64: 144, 128>}, {pipeline_mode = #tpu.pipeline_mode<synchronous>, transform_indices = @transform_5, window_bounds = array<i64: 1, 128>}, {pipeline_mode = #tpu.pipeline_mode<synchronous>, transform_indices = @transform_6, window_bounds = array<i64: 1, 128>}, {pipeline_mode = #tpu.pipeline_mode<synchronous>, transform_indices = @transform_7, window_bounds = array<i64: 512, 128>}]} {
    %c0 = arith.constant 0 : index
    %c0_0 = arith.constant 0 : index
    %0 = vector.load %arg1[%c0, %c0_0] : memref<512x32xbf16, #tpu.memory_space<vmem>>, vector<512x32xbf16>
    %c0_1 = arith.constant 0 : index
    %c0_2 = arith.constant 0 : index
    %1 = vector.load %arg2[%c0_1, %c0_2] : memref<32x128xbf16, #tpu.memory_space<vmem>>, vector<32x128xbf16>
    %cst = arith.constant dense<0.000000e+00> : vector<512x128xf32>
    %2 = tpu.matmul %0, %1, %cst {dimension_numbers = #tpu.dot_dimension_numbers<[1], [0], [0], [1], [0, 0, 1, 1], [], []>} : vector<512x32xbf16>, vector<32x128xbf16>, vector<512x128xf32> -> vector<512x128xf32>
    %c0_3 = arith.constant 0 : index
    %c0_4 = arith.constant 0 : index
    %3 = vector.load %arg3[%c0_3, %c0_4] : memref<1x128xf32, #tpu.memory_space<vmem>>, vector<1x128xf32>
    %c0_5 = arith.constant 0 : index
    %c0_6 = arith.constant 0 : index
    %4 = vector.load %arg4[%c0_5, %c0_6] : memref<1x128xf32, #tpu.memory_space<vmem>>, vector<1x128xf32>
    %cst_7 = arith.constant dense<0.000000e+00> : vector<128xf32>
    %5 = vector.multi_reduction <add>, %2, %cst_7 [0] : vector<512x128xf32> to vector<128xf32>
    %6 = vector.shape_cast %5 : vector<128xf32> to vector<1x128xf32>
    %cst_8 = arith.constant 0.001953125 : f32
    %7 = vector.broadcast %cst_8 : f32 to vector<1x128xf32>
    %8 = arith.mulf %6, %7 : vector<1x128xf32>
    %9 = arith.mulf %2, %2 : vector<512x128xf32>
    %cst_9 = arith.constant dense<0.000000e+00> : vector<128xf32>
    %10 = vector.multi_reduction <add>, %9, %cst_9 [0] : vector<512x128xf32> to vector<128xf32>
    %11 = vector.shape_cast %10 : vector<128xf32> to vector<1x128xf32>
    %cst_10 = arith.constant 0.001953125 : f32
    %12 = vector.broadcast %cst_10 : f32 to vector<1x128xf32>
    %13 = arith.mulf %11, %12 : vector<1x128xf32>
    %14 = arith.mulf %8, %8 : vector<1x128xf32>
    %15 = arith.subf %13, %14 : vector<1x128xf32>
    %16 = vector.broadcast %8 : vector<1x128xf32> to vector<512x128xf32>
    %17 = arith.subf %2, %16 : vector<512x128xf32>
    %cst_11 = arith.constant 9.99999974E-6 : f32
    %18 = vector.broadcast %cst_11 : f32 to vector<1x128xf32>
    %19 = arith.addf %15, %18 : vector<1x128xf32>
    %20 = math.rsqrt %19 : vector<1x128xf32>
    %21 = vector.broadcast %20 : vector<1x128xf32> to vector<512x128xf32>
    %22 = arith.mulf %17, %21 : vector<512x128xf32>
    %23 = vector.broadcast %3 : vector<1x128xf32> to vector<512x128xf32>
    %24 = arith.mulf %22, %23 : vector<512x128xf32>
    %25 = vector.broadcast %4 : vector<1x128xf32> to vector<512x128xf32>
    %26 = arith.addf %24, %25 : vector<512x128xf32>
    %cst_12 = arith.constant 5.000000e-01 : f32
    %27 = vector.broadcast %cst_12 : f32 to vector<512x128xf32>
    %28 = arith.mulf %27, %26 : vector<512x128xf32>
    %29 = math.tanh %28 : vector<512x128xf32>
    %cst_13 = arith.constant 5.000000e-01 : f32
    %30 = vector.broadcast %cst_13 : f32 to vector<512x128xf32>
    %31 = arith.mulf %30, %29 : vector<512x128xf32>
    %cst_14 = arith.constant 5.000000e-01 : f32
    %32 = vector.broadcast %cst_14 : f32 to vector<512x128xf32>
    %33 = arith.addf %32, %31 : vector<512x128xf32>
    %34 = arith.mulf %26, %33 : vector<512x128xf32>
    %35 = vector.extract_strided_slice %34 {offsets = [0, 0], sizes = [512, 16], strides = [1, 1]} : vector<512x128xf32> to vector<512x16xf32>
    %36 = arith.truncf %35 : vector<512x16xf32> to vector<512x16xbf16>
    %cst_15 = arith.constant 0.000000e+00 : bf16
    %37 = vector.broadcast %cst_15 : bf16 to vector<16x16xbf16>
    %c0_16 = arith.constant 0 : index
    %c0_17 = arith.constant 0 : index
    %38 = vector.load %arg9[%c0_16, %c0_17] : memref<544x16xbf16, #tpu.memory_space<vmem>>, vector<16x16xbf16>
    tpu.vector_store %arg9[%c0_16, %c0_17], %37 {strides = array<i32>} : memref<544x16xbf16, #tpu.memory_space<vmem>>, vector<16x16xbf16>,
    %cst_18 = arith.constant 0.000000e+00 : bf16
    %39 = vector.broadcast %cst_18 : bf16 to vector<16x16xbf16>
    %c528 = arith.constant 528 : index
    %c0_19 = arith.constant 0 : index
    %40 = vector.load %arg9[%c528, %c0_19] : memref<544x16xbf16, #tpu.memory_space<vmem>>, vector<16x16xbf16>
    tpu.vector_store %arg9[%c528, %c0_19], %39 {strides = array<i32>} : memref<544x16xbf16, #tpu.memory_space<vmem>>, vector<16x16xbf16>,
    %c16 = arith.constant 16 : index
    %c0_20 = arith.constant 0 : index
    %41 = vector.load %arg9[%c16, %c0_20] : memref<544x16xbf16, #tpu.memory_space<vmem>>, vector<512x16xbf16>
    tpu.vector_store %arg9[%c16, %c0_20], %36 {strides = array<i32>} : memref<544x16xbf16, #tpu.memory_space<vmem>>, vector<512x16xbf16>,
    %42 = tpu.iota {dimensions = array<i32: 0>} : vector<512x1xi32>
    %c16_i32 = arith.constant 16 : i32
    %c0_i32 = arith.constant 0 : i32
    %43 = arith.cmpi eq, %c16_i32, %c0_i32 : i32
    %c1_i32 = arith.constant 1 : i32
    %44 = arith.select %43, %c1_i32, %c16_i32 : i32
    %45 = vector.broadcast %44 : i32 to vector<512x1xi32>
    %46 = arith.remsi %42, %45 : vector<512x1xi32>
    %c0_i32_21 = arith.constant 0 : i32
    %47 = vector.broadcast %c0_i32_21 : i32 to vector<512x1xi32>
    %48 = arith.cmpi ne, %46, %47 : vector<512x1xi32>
    %c0_i32_22 = arith.constant 0 : i32
    %49 = vector.broadcast %c0_i32_22 : i32 to vector<512x1xi32>
    %50 = arith.cmpi slt, %46, %49 : vector<512x1xi32>
    %c0_i32_23 = arith.constant 0 : i32
    %51 = arith.cmpi slt, %44, %c0_i32_23 : i32
    %52 = vector.broadcast %51 : i1 to vector<512x1xi1>
    %53 = vector.broadcast %52 : vector<512x1xi1> to vector<512x1xi1>
    %54 = arith.xori %50, %53 : vector<512x1xi1>
    %55 = arith.andi %54, %48 : vector<512x1xi1>
    %56 = vector.broadcast %44 : i32 to vector<512x1xi32>
    %57 = arith.addi %46, %56 : vector<512x1xi32>
    %58 = arith.select %55, %57, %46 : vector<512x1xi1>, vector<512x1xi32>
    %c15 = arith.constant 15 : index
    %c0_24 = arith.constant 0 : index
    %59 = vector.load %arg9[%c15, %c0_24] : memref<544x16xbf16, #tpu.memory_space<vmem>>, vector<512x16xbf16>
    %c17 = arith.constant 17 : index
    %c0_25 = arith.constant 0 : index
    %60 = vector.load %arg9[%c17, %c0_25] : memref<544x16xbf16, #tpu.memory_space<vmem>>, vector<512x16xbf16>
    %c0_i32_26 = arith.constant 0 : i32
    %61 = vector.broadcast %c0_i32_26 : i32 to vector<512x1xi32>
    %62 = arith.cmpi eq, %58, %61 : vector<512x1xi32>
    %cst_27 = arith.constant 0.000000e+00 : bf16
    %63 = vector.broadcast %cst_27 : bf16 to vector<512x16xbf16>
    %64 = vector.shape_cast %62 : vector<512x1xi1> to vector<512x1xi1>
    %65 = vector.broadcast %64 : vector<512x1xi1> to vector<512x16xi1>
    %66 = arith.select %65, %63, %59 : vector<512x16xi1>, vector<512x16xbf16>
    %c15_i32 = arith.constant 15 : i32
    %67 = vector.broadcast %c15_i32 : i32 to vector<512x1xi32>
    %68 = arith.cmpi eq, %58, %67 : vector<512x1xi32>
    %cst_28 = arith.constant 0.000000e+00 : bf16
    %69 = vector.broadcast %cst_28 : bf16 to vector<512x16xbf16>
    %70 = vector.shape_cast %68 : vector<512x1xi1> to vector<512x1xi1>
    %71 = vector.broadcast %70 : vector<512x1xi1> to vector<512x16xi1>
    %72 = arith.select %71, %69, %60 : vector<512x16xi1>, vector<512x16xbf16>
    %73 = tpu.concatenate %66, %36, %72 in 1 : vector<512x16xbf16>, vector<512x16xbf16>, vector<512x16xbf16> -> vector<512x48xbf16>
    %cst_29 = arith.constant 0.000000e+00 : bf16
    %74 = vector.broadcast %cst_29 : bf16 to vector<560x48xbf16>
    %c0_30 = arith.constant 0 : index
    %c0_31 = arith.constant 0 : index
    %75 = vector.load %arg10[%c0_30, %c0_31] : memref<560x48xbf16, #tpu.memory_space<vmem>>, vector<560x48xbf16>
    tpu.vector_store %arg10[%c0_30, %c0_31], %74 {strides = array<i32>} : memref<560x48xbf16, #tpu.memory_space<vmem>>, vector<560x48xbf16>,
    %76 = vector.extract_strided_slice %73 {offsets = [0, 0], sizes = [256, 48], strides = [1, 1]} : vector<512x48xbf16> to vector<256x48xbf16>
    %c16_32 = arith.constant 16 : index
    %c0_33 = arith.constant 0 : index
    %77 = vector.load %arg10[%c16_32, %c0_33] : memref<560x48xbf16, #tpu.memory_space<vmem>>, vector<256x48xbf16>
    tpu.vector_store %arg10[%c16_32, %c0_33], %76 {strides = array<i32>} : memref<560x48xbf16, #tpu.memory_space<vmem>>, vector<256x48xbf16>,
    %78 = vector.extract_strided_slice %73 {offsets = [256, 0], sizes = [256, 48], strides = [1, 1]} : vector<512x48xbf16> to vector<256x48xbf16>
    %c288 = arith.constant 288 : index
    %c0_34 = arith.constant 0 : index
    %79 = vector.load %arg10[%c288, %c0_34] : memref<560x48xbf16, #tpu.memory_space<vmem>>, vector<256x48xbf16>
    tpu.vector_store %arg10[%c288, %c0_34], %78 {strides = array<i32>} : memref<560x48xbf16, #tpu.memory_space<vmem>>, vector<256x48xbf16>,
    %c0_35 = arith.constant 0 : index
    %c0_36 = arith.constant 0 : index
    %80 = vector.load %arg10[%c0_35, %c0_36] : memref<560x48xbf16, #tpu.memory_space<vmem>>, vector<256x48xbf16>
    %c0_37 = arith.constant 0 : index
    %c0_38 = arith.constant 0 : index
    %81 = vector.load %arg5[%c0_37, %c0_38] : memref<144x128xbf16, #tpu.memory_space<vmem>>, vector<48x128xbf16>
    %cst_39 = arith.constant dense<0.000000e+00> : vector<256x128xf32>
    %82 = tpu.matmul %80, %81, %cst_39 {dimension_numbers = #tpu.dot_dimension_numbers<[1], [0], [0], [1], [0, 0, 1, 1], [], []>} : vector<256x48xbf16>, vector<48x128xbf16>, vector<256x128xf32> -> vector<256x128xf32>
    %c16_40 = arith.constant 16 : index
    %c0_41 = arith.constant 0 : index
    %83 = vector.load %arg10[%c16_40, %c0_41] : memref<560x48xbf16, #tpu.memory_space<vmem>>, vector<256x48xbf16>
    %c48 = arith.constant 48 : index
    %c0_42 = arith.constant 0 : index
    %84 = vector.load %arg5[%c48, %c0_42] : memref<144x128xbf16, #tpu.memory_space<vmem>>, vector<48x128xbf16>
    %cst_43 = arith.constant dense<0.000000e+00> : vector<256x128xf32>
    %85 = tpu.matmul %83, %84, %cst_43 {dimension_numbers = #tpu.dot_dimension_numbers<[1], [0], [0], [1], [0, 0, 1, 1], [], []>} : vector<256x48xbf16>, vector<48x128xbf16>, vector<256x128xf32> -> vector<256x128xf32>
    %86 = arith.addf %82, %85 : vector<256x128xf32>
    %c32 = arith.constant 32 : index
    %c0_44 = arith.constant 0 : index
    %87 = vector.load %arg10[%c32, %c0_44] : memref<560x48xbf16, #tpu.memory_space<vmem>>, vector<256x48xbf16>
    %c96 = arith.constant 96 : index
    %c0_45 = arith.constant 0 : index
    %88 = vector.load %arg5[%c96, %c0_45] : memref<144x128xbf16, #tpu.memory_space<vmem>>, vector<48x128xbf16>
    %cst_46 = arith.constant dense<0.000000e+00> : vector<256x128xf32>
    %89 = tpu.matmul %87, %88, %cst_46 {dimension_numbers = #tpu.dot_dimension_numbers<[1], [0], [0], [1], [0, 0, 1, 1], [], []>} : vector<256x48xbf16>, vector<48x128xbf16>, vector<256x128xf32> -> vector<256x128xf32>
    %90 = arith.addf %86, %89 : vector<256x128xf32>
    %c272 = arith.constant 272 : index
    %c0_47 = arith.constant 0 : index
    %91 = vector.load %arg10[%c272, %c0_47] : memref<560x48xbf16, #tpu.memory_space<vmem>>, vector<256x48xbf16>
    %c0_48 = arith.constant 0 : index
    %c0_49 = arith.constant 0 : index
    %92 = vector.load %arg5[%c0_48, %c0_49] : memref<144x128xbf16, #tpu.memory_space<vmem>>, vector<48x128xbf16>
    %cst_50 = arith.constant dense<0.000000e+00> : vector<256x128xf32>
    %93 = tpu.matmul %91, %92, %cst_50 {dimension_numbers = #tpu.dot_dimension_numbers<[1], [0], [0], [1], [0, 0, 1, 1], [], []>} : vector<256x48xbf16>, vector<48x128xbf16>, vector<256x128xf32> -> vector<256x128xf32>
    %c288_51 = arith.constant 288 : index
    %c0_52 = arith.constant 0 : index
    %94 = vector.load %arg10[%c288_51, %c0_52] : memref<560x48xbf16, #tpu.memory_space<vmem>>, vector<256x48xbf16>
    %c48_53 = arith.constant 48 : index
    %c0_54 = arith.constant 0 : index
    %95 = vector.load %arg5[%c48_53, %c0_54] : memref<144x128xbf16, #tpu.memory_space<vmem>>, vector<48x128xbf16>
    %cst_55 = arith.constant dense<0.000000e+00> : vector<256x128xf32>
    %96 = tpu.matmul %94, %95, %cst_55 {dimension_numbers = #tpu.dot_dimension_numbers<[1], [0], [0], [1], [0, 0, 1, 1], [], []>} : vector<256x48xbf16>, vector<48x128xbf16>, vector<256x128xf32> -> vector<256x128xf32>
    %97 = arith.addf %93, %96 : vector<256x128xf32>
    %c304 = arith.constant 304 : index
    %c0_56 = arith.constant 0 : index
    %98 = vector.load %arg10[%c304, %c0_56] : memref<560x48xbf16, #tpu.memory_space<vmem>>, vector<256x48xbf16>
    %c96_57 = arith.constant 96 : index
    %c0_58 = arith.constant 0 : index
    %99 = vector.load %arg5[%c96_57, %c0_58] : memref<144x128xbf16, #tpu.memory_space<vmem>>, vector<48x128xbf16>
    %cst_59 = arith.constant dense<0.000000e+00> : vector<256x128xf32>
    %100 = tpu.matmul %98, %99, %cst_59 {dimension_numbers = #tpu.dot_dimension_numbers<[1], [0], [0], [1], [0, 0, 1, 1], [], []>} : vector<256x48xbf16>, vector<48x128xbf16>, vector<256x128xf32> -> vector<256x128xf32>
    %101 = arith.addf %97, %100 : vector<256x128xf32>
    %102 = tpu.concatenate %90, %101 in 0 : vector<256x128xf32>, vector<256x128xf32> -> vector<512x128xf32>
    %c0_60 = arith.constant 0 : index
    %c0_61 = arith.constant 0 : index
    %103 = vector.load %arg6[%c0_60, %c0_61] : memref<1x128xf32, #tpu.memory_space<vmem>>, vector<1x128xf32>
    %c0_62 = arith.constant 0 : index
    %c0_63 = arith.constant 0 : index
    %104 = vector.load %arg7[%c0_62, %c0_63] : memref<1x128xf32, #tpu.memory_space<vmem>>, vector<1x128xf32>
    %cst_64 = arith.constant dense<0.000000e+00> : vector<128xf32>
    %105 = vector.multi_reduction <add>, %102, %cst_64 [0] : vector<512x128xf32> to vector<128xf32>
    %106 = vector.shape_cast %105 : vector<128xf32> to vector<1x128xf32>
    %cst_65 = arith.constant 0.001953125 : f32
    %107 = vector.broadcast %cst_65 : f32 to vector<1x128xf32>
    %108 = arith.mulf %106, %107 : vector<1x128xf32>
    %109 = arith.mulf %102, %102 : vector<512x128xf32>
    %cst_66 = arith.constant dense<0.000000e+00> : vector<128xf32>
    %110 = vector.multi_reduction <add>, %109, %cst_66 [0] : vector<512x128xf32> to vector<128xf32>
    %111 = vector.shape_cast %110 : vector<128xf32> to vector<1x128xf32>
    %cst_67 = arith.constant 0.001953125 : f32
    %112 = vector.broadcast %cst_67 : f32 to vector<1x128xf32>
    %113 = arith.mulf %111, %112 : vector<1x128xf32>
    %114 = arith.mulf %108, %108 : vector<1x128xf32>
    %115 = arith.subf %113, %114 : vector<1x128xf32>
    %116 = vector.broadcast %108 : vector<1x128xf32> to vector<512x128xf32>
    %117 = arith.subf %102, %116 : vector<512x128xf32>
    %cst_68 = arith.constant 9.99999974E-6 : f32
    %118 = vector.broadcast %cst_68 : f32 to vector<1x128xf32>
    %119 = arith.addf %115, %118 : vector<1x128xf32>
    %120 = math.rsqrt %119 : vector<1x128xf32>
    %121 = vector.broadcast %120 : vector<1x128xf32> to vector<512x128xf32>
    %122 = arith.mulf %117, %121 : vector<512x128xf32>
    %123 = vector.broadcast %103 : vector<1x128xf32> to vector<512x128xf32>
    %124 = arith.mulf %122, %123 : vector<512x128xf32>
    %125 = vector.broadcast %104 : vector<1x128xf32> to vector<512x128xf32>
    %126 = arith.addf %124, %125 : vector<512x128xf32>
    %cst_69 = arith.constant 5.000000e-01 : f32
    %127 = vector.broadcast %cst_69 : f32 to vector<512x128xf32>
    %128 = arith.mulf %127, %126 : vector<512x128xf32>
    %129 = math.tanh %128 : vector<512x128xf32>
    %cst_70 = arith.constant 5.000000e-01 : f32
    %130 = vector.broadcast %cst_70 : f32 to vector<512x128xf32>
    %131 = arith.mulf %130, %129 : vector<512x128xf32>
    %cst_71 = arith.constant 5.000000e-01 : f32
    %132 = vector.broadcast %cst_71 : f32 to vector<512x128xf32>
    %133 = arith.addf %132, %131 : vector<512x128xf32>
    %134 = arith.mulf %126, %133 : vector<512x128xf32>
    %c0_72 = arith.constant 0 : index
    %c0_73 = arith.constant 0 : index
    %135 = vector.load %arg8[%c0_72, %c0_73] : memref<512x128xf32, #tpu.memory_space<vmem>>, vector<512x128xf32>
    tpu.vector_store %arg8[%c0_72, %c0_73], %134 {strides = array<i32>} : memref<512x128xf32, #tpu.memory_space<vmem>>, vector<512x128xf32>,
    return
  }
  func.func @transform_0(%arg0: i32) -> (i32, i32) {
    %c0_i32 = arith.constant 0 : i32
    %c0_i32_0 = arith.constant 0 : i32
    %c0_i32_1 = arith.constant 0 : i32
    return %c0_i32, %c0_i32_0 : i32, i32
  }
  func.func @transform_1(%arg0: i32) -> (i32, i32) {
    %c0_i32 = arith.constant 0 : i32
    %c0_i32_0 = arith.constant 0 : i32
    %c0_i32_1 = arith.constant 0 : i32
    return %c0_i32, %c0_i32_0 : i32, i32
  }
  func.func @transform_2(%arg0: i32) -> (i32, i32) {
    %c0_i32 = arith.constant 0 : i32
    %c0_i32_0 = arith.constant 0 : i32
    %c0_i32_1 = arith.constant 0 : i32
    return %c0_i32, %c0_i32_0 : i32, i32
  }
  func.func @transform_3(%arg0: i32) -> (i32, i32) {
    %c0_i32 = arith.constant 0 : i32
    %c0_i32_0 = arith.constant 0 : i32
    %c0_i32_1 = arith.constant 0 : i32
    return %c0_i32, %c0_i32_0 : i32, i32
  }
  func.func @transform_4(%arg0: i32) -> (i32, i32) {
    %c0_i32 = arith.constant 0 : i32
    %c0_i32_0 = arith.constant 0 : i32
    %c0_i32_1 = arith.constant 0 : i32
    return %c0_i32, %c0_i32_0 : i32, i32
  }
  func.func @transform_5(%arg0: i32) -> (i32, i32) {
    %c0_i32 = arith.constant 0 : i32
    %c0_i32_0 = arith.constant 0 : i32
    %c0_i32_1 = arith.constant 0 : i32
    return %c0_i32, %c0_i32_0 : i32, i32
  }
  func.func @transform_6(%arg0: i32) -> (i32, i32) {
    %c0_i32 = arith.constant 0 : i32
    %c0_i32_0 = arith.constant 0 : i32
    %c0_i32_1 = arith.constant 0 : i32
    return %c0_i32, %c0_i32_0 : i32, i32
  }
  func.func @transform_7(%arg0: i32) -> (i32, i32) {
    %c0_i32 = arith.constant 0 : i32
    %c0_i32_0 = arith.constant 0 : i32
    %c0_i32_1 = arith.constant 0 : i32
    return %c0_i32, %c0_i32_0 : i32, i32
  }
}

</mosaic_0001>

<llo_original>
// kernel: bottleneck_down_forward.1
$region0: #{bottleneck_down_forward.1}
  #allocation0 [shape = 'u32[]', space=smem, size = 0x4, offset = 0x4, fixed_abs, tag = 'smem constant byte address 0x4 - core index']
  #allocation1 [shape = 'u32[144,128]{1,0:T(1,128)}', space=vmem, size = 0x12000, scoped, tag = 'internal scratch']
  #allocation2 [shape = 'bf16[544,16]{1,0:T(16,128)(2,1)}', space=vmem, size = 0x22000, scoped, tag = 'scratch operand']
  #allocation3 [shape = 'bf16[560,48]{1,0:T(16,128)(2,1)}', space=vmem, size = 0x23000, scoped, tag = 'scratch operand']
  %s0 = inlined_call_operand.vmem [shape: bf16[512,32], index: 0, kind: input, shape index: {}]
  %s1 = inlined_call_operand.vmem [shape: bf16[32,128], index: 1, kind: input, shape index: {}]
  %s2 = inlined_call_operand.vmem [shape: f32[1,128], index: 2, kind: input, shape index: {}]
  %s3 = inlined_call_operand.vmem [shape: f32[1,128], index: 3, kind: input, shape index: {}]
  %s4 = inlined_call_operand.vmem [shape: bf16[144,128], index: 4, kind: input, shape index: {}]
  %s5 = inlined_call_operand.vmem [shape: f32[1,128], index: 5, kind: input, shape index: {}]
  %s6 = inlined_call_operand.vmem [shape: f32[1,128], index: 6, kind: input, shape index: {}]
  %s7 = inlined_call_operand.hbm [shape: f32[512,128], index: 7, kind: output, shape index: {}]
  %s8 = sld [smem:[#allocation0]]
  $region38: #{bottleneck_down_forward.1} parent=0
    _
  %s10 = ssub.s32 1, %s8
  %s11 = scalar_select 0, %s10, %s8
  $region1: #{bottleneck_down_forward.1} parent=0
    #allocation4 [shape = 'u8[262144]{0}', space=vmem, size = 0x40000, scoped, tag = 'output window, operand 0, single buffered']
    #allocation5 [shape = 's32[1]{0}', space=sflag, size = 0x4, scoped, tag = 'scoped memory for bottleneck_down_forward.1']
    %12 = vsyncpa [#allocation5], 0
    // Predicated region
    $region2: #{bottleneck_down_forward.1} parent=1 // pred_check
      _
    $region3: #{bottleneck_down_forward.1} parent=1 // pred_check_branch
      %14 = sbr.rel (0) target = $region5
    $region4: #{bottleneck_down_forward.1} parent=1 // pred_region
      _
    $region5: #{bottleneck_down_forward.1} parent=1 // pred_fallthru
      _
    // Predicated region
    $region6: #{bottleneck_down_forward.1} parent=1 // pred_check
      _
    $region7: #{bottleneck_down_forward.1} parent=1 // pred_check_branch
      %16 = sbr.rel (0) target = $region9
    $region8: #{bottleneck_down_forward.1} parent=1 // pred_region
      _
    $region9: #{bottleneck_down_forward.1} parent=1 // pred_fallthru
      _
    // Predicated region
    $region10: #{bottleneck_down_forward.1} parent=1 // pred_check
      _
    $region11: #{bottleneck_down_forward.1} parent=1 // pred_check_branch
      %18 = sbr.rel (0) target = $region13
    $region12: #{bottleneck_down_forward.1} parent=1 // pred_region
      _
    $region13: #{bottleneck_down_forward.1} parent=1 // pred_fallthru
      _
    // Predicated region
    $region14: #{bottleneck_down_forward.1} parent=1 // pred_check
      _
    $region15: #{bottleneck_down_forward.1} parent=1 // pred_check_branch
      %20 = sbr.rel (0) target = $region17
    $region16: #{bottleneck_down_forward.1} parent=1 // pred_region
      _
    $region17: #{bottleneck_down_forward.1} parent=1 // pred_fallthru
      _
    // Predicated region
    $region18: #{bottleneck_down_forward.1} parent=1 // pred_check
      _
    $region19: #{bottleneck_down_forward.1} parent=1 // pred_check_branch
      %22 = sbr.rel (0) target = $region21
    $region20: #{bottleneck_down_forward.1} parent=1 // pred_region
      _
    $region21: #{bottleneck_down_forward.1} parent=1 // pred_fallthru
      _
    // Predicated region
    $region22: #{bottleneck_down_forward.1} parent=1 // pred_check
      _
    $region23: #{bottleneck_down_forward.1} parent=1 // pred_check_branch
      %24 = sbr.rel (0) target = $region25
    $region24: #{bottleneck_down_forward.1} parent=1 // pred_region
      _
    $region25: #{bottleneck_down_forward.1} parent=1 // pred_fallthru
      _
    // Predicated region
    $region26: #{bottleneck_down_forward.1} parent=1 // pred_check
      _
    $region27: #{bottleneck_down_forward.1} parent=1 // pred_check_branch
      %26 = sbr.rel (0) target = $region29
    $region28: #{bottleneck_down_forward.1} parent=1 // pred_region
      _
    $region29: #{bottleneck_down_forward.1} parent=1 // pred_fallthru
      _
    %v30 = vld [vmem:[%s0] sm:$0xf]
    %v31 = vld [vmem:[%s0 + $0x4] sm:$0xf]
    %v32 = vld [vmem:[%s0 + $0x8] sm:$0xf]
    %v33 = vld [vmem:[%s0 + $0xc] sm:$0xf]
    %v34 = vld [vmem:[%s0 + $0x10] sm:$0xf]
    %v35 = vld [vmem:[%s0 + $0x14] sm:$0xf]
    %v36 = vld [vmem:[%s0 + $0x18] sm:$0xf]
    %v37 = vld [vmem:[%s0 + $0x1c] sm:$0xf]
    %v38 = vld [vmem:[%s0 + $0x20] sm:$0xf]
    %v39 = vld [vmem:[%s0 + $0x24] sm:$0xf]
    %v40 = vld [vmem:[%s0 + $0x28] sm:$0xf]
    %v41 = vld [vmem:[%s0 + $0x2c] sm:$0xf]
    %v42 = vld [vmem:[%s0 + $0x30] sm:$0xf]
    %v43 = vld [vmem:[%s0 + $0x34] sm:$0xf]
    %v44 = vld [vmem:[%s0 + $0x38] sm:$0xf]
    %v45 = vld [vmem:[%s0 + $0x3c] sm:$0xf]
    %v46 = vld [vmem:[%s0 + $0x40] sm:$0xf]
    %v47 = vld [vmem:[%s0 + $0x44] sm:$0xf]
    %v48 = vld [vmem:[%s0 + $0x48] sm:$0xf]
    %v49 = vld [vmem:[%s0 + $0x4c] sm:$0xf]
    %v50 = vld [vmem:[%s0 + $0x50] sm:$0xf]
    %v51 = vld [vmem:[%s0 + $0x54] sm:$0xf]
    %v52 = vld [vmem:[%s0 + $0x58] sm:$0xf]
    %v53 = vld [vmem:[%s0 + $0x5c] sm:$0xf]
    %v54 = vld [vmem:[%s0 + $0x60] sm:$0xf]
    %v55 = vld [vmem:[%s0 + $0x64] sm:$0xf]
    %v56 = vld [vmem:[%s0 + $0x68] sm:$0xf]
    %v57 = vld [vmem:[%s0 + $0x6c] sm:$0xf]
    %v58 = vld [vmem:[%s0 + $0x70] sm:$0xf]
    %v59 = vld [vmem:[%s0 + $0x74] sm:$0xf]
    %v60 = vld [vmem:[%s0 + $0x78] sm:$0xf]
    %v61 = vld [vmem:[%s0 + $0x7c] sm:$0xf]
    %v62 = vld [vmem:[%s0 + $0x80] sm:$0xf]
    %v63 = vld [vmem:[%s0 + $0x84] sm:$0xf]
    %v64 = vld [vmem:[%s0 + $0x88] sm:$0xf]
    %v65 = vld [vmem:[%s0 + $0x8c] sm:$0xf]
    %v66 = vld [vmem:[%s0 + $0x90] sm:$0xf]
    %v67 = vld [vmem:[%s0 + $0x94] sm:$0xf]
    %v68 = vld [vmem:[%s0 + $0x98] sm:$0xf]
    %v69 = vld [vmem:[%s0 + $0x9c] sm:$0xf]
    %v70 = vld [vmem:[%s0 + $0xa0] sm:$0xf]
    %v71 = vld [vmem:[%s0 + $0xa4] sm:$0xf]
    %v72 = vld [vmem:[%s0 + $0xa8] sm:$0xf]
    %v73 = vld [vmem:[%s0 + $0xac] sm:$0xf]
    %v74 = vld [vmem:[%s0 + $0xb0] sm:$0xf]
    %v75 = vld [vmem:[%s0 + $0xb4] sm:$0xf]
    %v76 = vld [vmem:[%s0 + $0xb8] sm:$0xf]
    %v77 = vld [vmem:[%s0 + $0xbc] sm:$0xf]
    %v78 = vld [vmem:[%s0 + $0xc0] sm:$0xf]
    %v79 = vld [vmem:[%s0 + $0xc4] sm:$0xf]
    %v80 = vld [vmem:[%s0 + $0xc8] sm:$0xf]
    %v81 = vld [vmem:[%s0 + $0xcc] sm:$0xf]
    %v82 = vld [vmem:[%s0 + $0xd0] sm:$0xf]
    %v83 = vld [vmem:[%s0 + $0xd4] sm:$0xf]
    %v84 = vld [vmem:[%s0 + $0xd8] sm:$0xf]
    %v85 = vld [vmem:[%s0 + $0xdc] sm:$0xf]
    %v86 = vld [vmem:[%s0 + $0xe0] sm:$0xf]
    %v87 = vld [vmem:[%s0 + $0xe4] sm:$0xf]
    %v88 = vld [vmem:[%s0 + $0xe8] sm:$0xf]
    %v89 = vld [vmem:[%s0 + $0xec] sm:$0xf]
    %v90 = vld [vmem:[%s0 + $0xf0] sm:$0xf]
    %v91 = vld [vmem:[%s0 + $0xf4] sm:$0xf]
    %v92 = vld [vmem:[%s0 + $0xf8] sm:$0xf]
    %v93 = vld [vmem:[%s0 + $0xfc] sm:$0xf]
    %v94 = vld [vmem:[%s1] sm:$0xf]
    %v95 = vld [vmem:[%s1 + $0x4] sm:$0xf]
    %v96 = vld [vmem:[%s1 + $0x8] sm:$0xf]
    %v97 = vld [vmem:[%s1 + $0xc] sm:$0xf]
    %v162 = vunpack.c.l.b16 %v30
    %v163 = vunpack.c.l.b16 %v31
    %v164 = vunpack.c.l.b16 %v32
    %v165 = vunpack.c.l.b16 %v33
    %v166 = vunpack.c.l.b16 %v34
    %v167 = vunpack.c.l.b16 %v35
    %v168 = vunpack.c.l.b16 %v36
    %v169 = vunpack.c.l.b16 %v37
    %v170 = vunpack.c.l.b16 %v38
    %v171 = vunpack.c.l.b16 %v39
    %v172 = vunpack.c.l.b16 %v40
    %v173 = vunpack.c.l.b16 %v41
    %v174 = vunpack.c.l.b16 %v42
    %v175 = vunpack.c.l.b16 %v43
    %v176 = vunpack.c.l.b16 %v44
    %v177 = vunpack.c.l.b16 %v45
    %v178 = vunpack.c.l.b16 %v46
    %v179 = vunpack.c.l.b16 %v47
    %v180 = vunpack.c.l.b16 %v48
    %v181 = vunpack.c.l.b16 %v49
    %v182 = vunpack.c.l.b16 %v50
    %v183 = vunpack.c.l.b16 %v51
    %v184 = vunpack.c.l.b16 %v52
    %v185 = vunpack.c.l.b16 %v53
    %v186 = vunpack.c.l.b16 %v54
    %v187 = vunpack.c.l.b16 %v55
    %v188 = vunpack.c.l.b16 %v56
    %v189 = vunpack.c.l.b16 %v57
    %v190 = vunpack.c.l.b16 %v58
    %v191 = vunpack.c.l.b16 %v59
    %v192 = vunpack.c.l.b16 %v60
    %v193 = vunpack.c.l.b16 %v61
    %v194 = vunpack.c.l.b16 %v62
    %v195 = vunpack.c.l.b16 %v63
    %v196 = vunpack.c.l.b16 %v64
    %v197 = vunpack.c.l.b16 %v65
    %v198 = vunpack.c.l.b16 %v66
    %v199 = vunpack.c.l.b16 %v67
    %v200 = vunpack.c.l.b16 %v68
    %v201 = vunpack.c.l.b16 %v69
    %v202 = vunpack.c.l.b16 %v70
    %v203 = vunpack.c.l.b16 %v71
    %v204 = vunpack.c.l.b16 %v72
    %v205 = vunpack.c.l.b16 %v73
    %v206 = vunpack.c.l.b16 %v74
    %v207 = vunpack.c.l.b16 %v75
    %v208 = vunpack.c.l.b16 %v76
    %v209 = vunpack.c.l.b16 %v77
    %v210 = vunpack.c.l.b16 %v78
    %v211 = vunpack.c.l.b16 %v79
    %v212 = vunpack.c.l.b16 %v80
    %v213 = vunpack.c.l.b16 %v81
    %v214 = vunpack.c.l.b16 %v82
    %v215 = vunpack.c.l.b16 %v83
    %v216 = vunpack.c.l.b16 %v84
    %v217 = vunpack.c.l.b16 %v85
    %v218 = vunpack.c.l.b16 %v86
    %v219 = vunpack.c.l.b16 %v87
    %v220 = vunpack.c.l.b16 %v88
    %v221 = vunpack.c.l.b16 %v89
    %v222 = vunpack.c.l.b16 %v90
    %v223 = vunpack.c.l.b16 %v91
    %v224 = vunpack.c.l.b16 %v92
    %v225 = vunpack.c.l.b16 %v93
    %v226 = vpack.c.b16 %v163, %v162
    %v227 = vpack.c.b16 %v165, %v164
    %v228 = vpack.c.b16 %v167, %v166
    %v229 = vpack.c.b16 %v169, %v168
    %v230 = vpack.c.b16 %v171, %v170
    %v231 = vpack.c.b16 %v173, %v172
    %v232 = vpack.c.b16 %v175, %v174
    %v233 = vpack.c.b16 %v177, %v176
    %v234 = vpack.c.b16 %v179, %v178
    %v235 = vpack.c.b16 %v181, %v180
    %v236 = vpack.c.b16 %v183, %v182
    %v237 = vpack.c.b16 %v185, %v184
    %v238 = vpack.c.b16 %v187, %v186
    %v239 = vpack.c.b16 %v189, %v188
    %v240 = vpack.c.b16 %v191, %v190
    %v241 = vpack.c.b16 %v193, %v192
    %v242 = vpack.c.b16 %v195, %v194
    %v243 = vpack.c.b16 %v197, %v196
    %v244 = vpack.c.b16 %v199, %v198
    %v245 = vpack.c.b16 %v201, %v200
    %v246 = vpack.c.b16 %v203, %v202
    %v247 = vpack.c.b16 %v205, %v204
    %v248 = vpack.c.b16 %v207, %v206
    %v249 = vpack.c.b16 %v209, %v208
    %v250 = vpack.c.b16 %v211, %v210
    %v251 = vpack.c.b16 %v213, %v212
    %v252 = vpack.c.b16 %v215, %v214
    %v253 = vpack.c.b16 %v217, %v216
    %v254 = vpack.c.b16 %v219, %v218
    %v255 = vpack.c.b16 %v221, %v220
    %v256 = vpack.c.b16 %v223, %v222
    %v257 = vpack.c.b16 %v225, %v224
    %v262 = vunpack.c.l.b16 %v94
    %v263 = vunpack.c.l.b16 %v95
    %v264 = vunpack.c.l.b16 %v96
    %v265 = vunpack.c.l.b16 %v97
    %v266 = vpack.c.b16 %v263, %v262
    %v267 = vpack.c.b16 %v265, %v264
    %vm270 = vcmask 261120
    %v272 = vsel %vm270, %v226, 0
    %v275 = vsel %vm270, %v227, 0
    %v278 = vsel %vm270, %v228, 0
    %v281 = vsel %vm270, %v229, 0
    %v284 = vsel %vm270, %v230, 0
    %v287 = vsel %vm270, %v231, 0
    %v290 = vsel %vm270, %v232, 0
    %v293 = vsel %vm270, %v233, 0
    %v296 = vsel %vm270, %v234, 0
    %v299 = vsel %vm270, %v235, 0
    %v302 = vsel %vm270, %v236, 0
    %v305 = vsel %vm270, %v237, 0
    %v308 = vsel %vm270, %v238, 0
    %v311 = vsel %vm270, %v239, 0
    %v314 = vsel %vm270, %v240, 0
    %v317 = vsel %vm270, %v241, 0
    %v320 = vsel %vm270, %v242, 0
    %v323 = vsel %vm270, %v243, 0
    %v326 = vsel %vm270, %v244, 0
    %v329 = vsel %vm270, %v245, 0
    %v332 = vsel %vm270, %v246, 0
    %v335 = vsel %vm270, %v247, 0
    %v338 = vsel %vm270, %v248, 0
    %v341 = vsel %vm270, %v249, 0
    %v344 = vsel %vm270, %v250, 0
    %v347 = vsel %vm270, %v251, 0
    %v350 = vsel %vm270, %v252, 0
    %v353 = vsel %vm270, %v253, 0
    %v356 = vsel %vm270, %v254, 0
    %v359 = vsel %vm270, %v255, 0
    %v362 = vsel %vm270, %v256, 0
    %v365 = vsel %vm270, %v257, 0
    %367 = vmatprep.subr.bf16.mxu0 0
    %368 = vmatpush1.bf16.msra.mxu0 %v266
    %369 = vmatprep.subr.bf16.mxu0 0
    %370 = vmatpush1.bf16.msra.mxu0 %v267
    %371 = vmatprep.subr.bf16.mxu0 0
    %372 = vmatpush1.bf16.msra.mxu0 0
    %373 = vmatprep.subr.bf16.mxu0 0
    %374 = vmatpush1.bf16.msra.mxu0 0
    %375 = vmatprep.subr.bf16.mxu0 0
    %376 = vmatpush1.bf16.msra.mxu0 0
    %377 = vmatprep.subr.bf16.mxu0 0
    %378 = vmatpush1.bf16.msra.mxu0 0
    %379 = vmatprep.subr.bf16.mxu0 0
    %380 = vmatpush1.bf16.msra.mxu0 0
    %381 = vmatprep.subr.bf16.mxu0 0
    %382 = vmatpush1.bf16.msra.mxu0 0
    %383 = vmatprep.subr.bf16.mxu0 0
    %384 = vmatpush1.bf16.msra.mxu0 0
    %385 = vmatprep.subr.bf16.mxu0 0
    %386 = vmatpush1.bf16.msra.mxu0 0
    %387 = vmatprep.subr.bf16.mxu0 0
    %388 = vmatpush1.bf16.msra.mxu0 0
    %389 = vmatprep.subr.bf16.mxu0 0
    %390 = vmatpush1.bf16.msra.mxu0 0
    %391 = vmatprep.subr.bf16.mxu0 0
    %392 = vmatpush1.bf16.msra.mxu0 0
    %393 = vmatprep.subr.bf16.mxu0 0
    %394 = vmatpush1.bf16.msra.mxu0 0
    %395 = vmatprep.subr.bf16.mxu0 0
    %396 = vmatpush1.bf16.msra.mxu0 0
    %397 = vmatprep.subr.bf16.mxu0 0
    %398 = vmatpush1.bf16.msra.mxu0 0
    %399 = vmatprep.mubr.bf16.mxu0 0
    %400 = vmatmul.mubr.bf16.gmra.mrb[0].mxu0 %v272
    %v401 = vpop.f32.mrb[0].mxu0
    %v402 = vadd.f32 0.0, %v401
    %v403 = vpop.f32.mrb[0].mxu0
    %v404 = vpop.f32.mrb[0].mxu0
    %v405 = vadd.f32 0.0, %v404
    %v406 = vpop.f32.mrb[0].mxu0
    %407 = vmatprep.mubr.bf16.mxu0 0
    %408 = vmatmul.mubr.bf16.gmra.mrb[0].mxu0 %v275
    %v409 = vpop.f32.mrb[0].mxu0
    %v410 = vadd.f32 0.0, %v409
    %v411 = vpop.f32.mrb[0].mxu0
    %v412 = vpop.f32.mrb[0].mxu0
    %v413 = vadd.f32 0.0, %v412
    %v414 = vpop.f32.mrb[0].mxu0
    %415 = vmatprep.mubr.bf16.mxu0 0
    %416 = vmatmul.mubr.bf16.gmra.mrb[0].mxu0 %v278
    %v417 = vpop.f32.mrb[0].mxu0
    %v418 = vadd.f32 0.0, %v417
    %v419 = vpop.f32.mrb[0].mxu0
    %v420 = vpop.f32.mrb[0].mxu0
    %v421 = vadd.f32 0.0, %v420
    %v422 = vpop.f32.mrb[0].mxu0
    %423 = vmatprep.mubr.bf16.mxu0 0
    %424 = vmatmul.mubr.bf16.gmra.mrb[0].mxu0 %v281
    %v425 = vpop.f32.mrb[0].mxu0
    %v426 = vadd.f32 0.0, %v425
    %v427 = vpop.f32.mrb[0].mxu0
    %v428 = vpop.f32.mrb[0].mxu0
    %v429 = vadd.f32 0.0, %v428
    %v430 = vpop.f32.mrb[0].mxu0
    %431 = vmatprep.mubr.bf16.mxu0 0
    %432 = vmatmul.mubr.bf16.gmra.mrb[0].mxu0 %v284
    %v433 = vpop.f32.mrb[0].mxu0
    %v434 = vadd.f32 0.0, %v433
    %v435 = vpop.f32.mrb[0].mxu0
    %v436 = vpop.f32.mrb[0].mxu0
    %v437 = vadd.f32 0.0, %v436
    %v438 = vpop.f32.mrb[0].mxu0
    %439 = vmatprep.mubr.bf16.mxu0 0
    %440 = vmatmul.mubr.bf16.gmra.mrb[0].mxu0 %v287
    %v441 = vpop.f32.mrb[0].mxu0
    %v442 = vadd.f32 0.0, %v441
    %v443 = vpop.f32.mrb[0].mxu0
    %v444 = vpop.f32.mrb[0].mxu0
    %v445 = vadd.f32 0.0, %v444
    %v446 = vpop.f32.mrb[0].mxu0
    %447 = vmatprep.mubr.bf16.mxu0 0
    %448 = vmatmul.mubr.bf16.gmra.mrb[0].mxu0 %v290
    %v449 = vpop.f32.mrb[0].mxu0
    %v450 = vadd.f32 0.0, %v449
    %v451 = vpop.f32.mrb[0].mxu0
    %v452 = vpop.f32.mrb[0].mxu0
    %v453 = vadd.f32 0.0, %v452
    %v454 = vpop.f32.mrb[0].mxu0
    %455 = vmatprep.mubr.bf16.mxu0 0
    %456 = vmatmul.mubr.bf16.gmra.mrb[0].mxu0 %v293
    %v457 = vpop.f32.mrb[0].mxu0
    %v458 = vadd.f32 0.0, %v457
    %v459 = vpop.f32.mrb[0].mxu0
    %v460 = vpop.f32.mrb[0].mxu0
    %v461 = vadd.f32 0.0, %v460
    %v462 = vpop.f32.mrb[0].mxu0
    %463 = vmatprep.mubr.bf16.mxu0 0
    %464 = vmatmul.mubr.bf16.gmra.mrb[0].mxu0 %v296
    %v465 = vpop.f32.mrb[0].mxu0
    %v466 = vadd.f32 0.0, %v465
    %v467 = vpop.f32.mrb[0].mxu0
    %v468 = vpop.f32.mrb[0].mxu0
    %v469 = vadd.f32 0.0, %v468
    %v470 = vpop.f32.mrb[0].mxu0
    %471 = vmatprep.mubr.bf16.mxu0 0
    %472 = vmatmul.mubr.bf16.gmra.mrb[0].mxu0 %v299
    %v473 = vpop.f32.mrb[0].mxu0
    %v474 = vadd.f32 0.0, %v473
    %v475 = vpop.f32.mrb[0].mxu0
    %v476 = vpop.f32.mrb[0].mxu0
    %v477 = vadd.f32 0.0, %v476
    %v478 = vpop.f32.mrb[0].mxu0
    %479 = vmatprep.mubr.bf16.mxu0 0
    %480 = vmatmul.mubr.bf16.gmra.mrb[0].mxu0 %v302
    %v481 = vpop.f32.mrb[0].mxu0
    %v482 = vadd.f32 0.0, %v481
    %v483 = vpop.f32.mrb[0].mxu0
    %v484 = vpop.f32.mrb[0].mxu0
    %v485 = vadd.f32 0.0, %v484
    %v486 = vpop.f32.mrb[0].mxu0
    %487 = vmatprep.mubr.bf16.mxu0 0
    %488 = vmatmul.mubr.bf16.gmra.mrb[0].mxu0 %v305
    %v489 = vpop.f32.mrb[0].mxu0
    %v490 = vadd.f32 0.0, %v489
    %v491 = vpop.f32.mrb[0].mxu0
    %v492 = vpop.f32.mrb[0].mxu0
    %v493 = vadd.f32 0.0, %v492
    %v494 = vpop.f32.mrb[0].mxu0
    %495 = vmatprep.mubr.bf16.mxu0 0
    %496 = vmatmul.mubr.bf16.gmra.mrb[0].mxu0 %v308
    %v497 = vpop.f32.mrb[0].mxu0
    %v498 = vadd.f32 0.0, %v497
    %v499 = vpop.f32.mrb[0].mxu0
    %v500 = vpop.f32.mrb[0].mxu0
    %v501 = vadd.f32 0.0, %v500
    %v502 = vpop.f32.mrb[0].mxu0
    %503 = vmatprep.mubr.bf16.mxu0 0
    %504 = vmatmul.mubr.bf16.gmra.mrb[0].mxu0 %v311
    %v505 = vpop.f32.mrb[0].mxu0
    %v506 = vadd.f32 0.0, %v505
    %v507 = vpop.f32.mrb[0].mxu0
    %v508 = vpop.f32.mrb[0].mxu0
    %v509 = vadd.f32 0.0, %v508
    %v510 = vpop.f32.mrb[0].mxu0
    %511 = vmatprep.mubr.bf16.mxu0 0
    %512 = vmatmul.mubr.bf16.gmra.mrb[0].mxu0 %v314
    %v513 = vpop.f32.mrb[0].mxu0
    %v514 = vadd.f32 0.0, %v513
    %v515 = vpop.f32.mrb[0].mxu0
    %v516 = vpop.f32.mrb[0].mxu0
    %v517 = vadd.f32 0.0, %v516
    %v518 = vpop.f32.mrb[0].mxu0
    %519 = vmatprep.mubr.bf16.mxu0 0
    %520 = vmatmul.mubr.bf16.gmra.mrb[0].mxu0 %v317
    %v521 = vpop.f32.mrb[0].mxu0
    %v522 = vadd.f32 0.0, %v521
    %v523 = vpop.f32.mrb[0].mxu0
    %v524 = vpop.f32.mrb[0].mxu0
    %v525 = vadd.f32 0.0, %v524
    %v526 = vpop.f32.mrb[0].mxu0
    %527 = vmatprep.mubr.bf16.mxu0 0
    %528 = vmatmul.mubr.bf16.gmra.mrb[0].mxu0 %v320
    %v529 = vpop.f32.mrb[0].mxu0
    %v530 = vadd.f32 0.0, %v529
    %v531 = vpop.f32.mrb[0].mxu0
    %v532 = vpop.f32.mrb[0].mxu0
    %v533 = vadd.f32 0.0, %v532
    %v534 = vpop.f32.mrb[0].mxu0
    %535 = vmatprep.mubr.bf16.mxu0 0
    %536 = vmatmul.mubr.bf16.gmra.mrb[0].mxu0 %v323
    %v537 = vpop.f32.mrb[0].mxu0
    %v538 = vadd.f32 0.0, %v537
    %v539 = vpop.f32.mrb[0].mxu0
    %v540 = vpop.f32.mrb[0].mxu0
    %v541 = vadd.f32 0.0, %v540
    %v542 = vpop.f32.mrb[0].mxu0
    %543 = vmatprep.mubr.bf16.mxu0 0
    %544 = vmatmul.mubr.bf16.gmra.mrb[0].mxu0 %v326
    %v545 = vpop.f32.mrb[0].mxu0
    %v546 = vadd.f32 0.0, %v545
    %v547 = vpop.f32.mrb[0].mxu0
    %v548 = vpop.f32.mrb[0].mxu0
    %v549 = vadd.f32 0.0, %v548
    %v550 = vpop.f32.mrb[0].mxu0
    %551 = vmatprep.mubr.bf16.mxu0 0
    %552 = vmatmul.mubr.bf16.gmra.mrb[0].mxu0 %v329
    %v553 = vpop.f32.mrb[0].mxu0
    %v554 = vadd.f32 0.0, %v553
    %v555 = vpop.f32.mrb[0].mxu0
    %v556 = vpop.f32.mrb[0].mxu0
    %v557 = vadd.f32 0.0, %v556
    %v558 = vpop.f32.mrb[0].mxu0
    %559 = vmatprep.mubr.bf16.mxu0 0
    %560 = vmatmul.mubr.bf16.gmra.mrb[0].mxu0 %v332
    %v561 = vpop.f32.mrb[0].mxu0
    %v562 = vadd.f32 0.0, %v561
    %v563 = vpop.f32.mrb[0].mxu0
    %v564 = vpop.f32.mrb[0].mxu0
    %v565 = vadd.f32 0.0, %v564
    %v566 = vpop.f32.mrb[0].mxu0
    %567 = vmatprep.mubr.bf16.mxu0 0
    %568 = vmatmul.mubr.bf16.gmra.mrb[0].mxu0 %v335
    %v569 = vpop.f32.mrb[0].mxu0
    %v570 = vadd.f32 0.0, %v569
    %v571 = vpop.f32.mrb[0].mxu0
    %v572 = vpop.f32.mrb[0].mxu0
    %v573 = vadd.f32 0.0, %v572
    %v574 = vpop.f32.mrb[0].mxu0
    %575 = vmatprep.mubr.bf16.mxu0 0
    %576 = vmatmul.mubr.bf16.gmra.mrb[0].mxu0 %v338
    %v577 = vpop.f32.mrb[0].mxu0
    %v578 = vadd.f32 0.0, %v577
    %v579 = vpop.f32.mrb[0].mxu0
    %v580 = vpop.f32.mrb[0].mxu0
    %v581 = vadd.f32 0.0, %v580
    %v582 = vpop.f32.mrb[0].mxu0
    %583 = vmatprep.mubr.bf16.mxu0 0
    %584 = vmatmul.mubr.bf16.gmra.mrb[0].mxu0 %v341
    %v585 = vpop.f32.mrb[0].mxu0
    %v586 = vadd.f32 0.0, %v585
    %v587 = vpop.f32.mrb[0].mxu0
    %v588 = vpop.f32.mrb[0].mxu0
    %v589 = vadd.f32 0.0, %v588
    %v590 = vpop.f32.mrb[0].mxu0
    %591 = vmatprep.mubr.bf16.mxu0 0
    %592 = vmatmul.mubr.bf16.gmra.mrb[0].mxu0 %v344
    %v593 = vpop.f32.mrb[0].mxu0
    %v594 = vadd.f32 0.0, %v593
    %v595 = vpop.f32.mrb[0].mxu0
    %v596 = vpop.f32.mrb[0].mxu0
    %v597 = vadd.f32 0.0, %v596
    %v598 = vpop.f32.mrb[0].mxu0
    %599 = vmatprep.mubr.bf16.mxu0 0
    %600 = vmatmul.mubr.bf16.gmra.mrb[0].mxu0 %v347
    %v601 = vpop.f32.mrb[0].mxu0
    %v602 = vadd.f32 0.0, %v601
    %v603 = vpop.f32.mrb[0].mxu0
    %v604 = vpop.f32.mrb[0].mxu0
    %v605 = vadd.f32 0.0, %v604
    %v606 = vpop.f32.mrb[0].mxu0
    %607 = vmatprep.mubr.bf16.mxu0 0
    %608 = vmatmul.mubr.bf16.gmra.mrb[0].mxu0 %v350
    %v609 = vpop.f32.mrb[0].mxu0
    %v610 = vadd.f32 0.0, %v609
    %v611 = vpop.f32.mrb[0].mxu0
    %v612 = vpop.f32.mrb[0].mxu0
    %v613 = vadd.f32 0.0, %v612
    %v614 = vpop.f32.mrb[0].mxu0
    %615 = vmatprep.mubr.bf16.mxu0 0
    %616 = vmatmul.mubr.bf16.gmra.mrb[0].mxu0 %v353
    %v617 = vpop.f32.mrb[0].mxu0
    %v618 = vadd.f32 0.0, %v617
    %v619 = vpop.f32.mrb[0].mxu0
    %v620 = vpop.f32.mrb[0].mxu0
    %v621 = vadd.f32 0.0, %v620
    %v622 = vpop.f32.mrb[0].mxu0
    %623 = vmatprep.mubr.bf16.mxu0 0
    %624 = vmatmul.mubr.bf16.gmra.mrb[0].mxu0 %v356
    %v625 = vpop.f32.mrb[0].mxu0
    %v626 = vadd.f32 0.0, %v625
    %v627 = vpop.f32.mrb[0].mxu0
    %v628 = vpop.f32.mrb[0].mxu0
    %v629 = vadd.f32 0.0, %v628
    %v630 = vpop.f32.mrb[0].mxu0
    %631 = vmatprep.mubr.bf16.mxu0 0
    %632 = vmatmul.mubr.bf16.gmra.mrb[0].mxu0 %v359
    %v633 = vpop.f32.mrb[0].mxu0
    %v634 = vadd.f32 0.0, %v633
    %v635 = vpop.f32.mrb[0].mxu0
    %v636 = vpop.f32.mrb[0].mxu0
    %v637 = vadd.f32 0.0, %v636
    %v638 = vpop.f32.mrb[0].mxu0
    %639 = vmatprep.mubr.bf16.mxu0 0
    %640 = vmatmul.mubr.bf16.gmra.mrb[0].mxu0 %v362
    %v641 = vpop.f32.mrb[0].mxu0
    %v642 = vadd.f32 0.0, %v641
    %v643 = vpop.f32.mrb[0].mxu0
    %v644 = vpop.f32.mrb[0].mxu0
    %v645 = vadd.f32 0.0, %v644
    %v646 = vpop.f32.mrb[0].mxu0
    %647 = vmatprep.mubr.bf16.mxu0 0
    %648 = vmatmul.mubr.bf16.gmra.mrb[0].mxu0 %v365
    %v649 = vpop.f32.mrb[0].mxu0
    %v650 = vadd.f32 0.0, %v649
    %v651 = vpop.f32.mrb[0].mxu0
    %v652 = vpop.f32.mrb[0].mxu0
    %v653 = vadd.f32 0.0, %v652
    %v654 = vpop.f32.mrb[0].mxu0
    %655 = vdwg.mxu0
    %v656 = vld [vmem:[%s2] sm:$0x1]
    %v657 = vld [vmem:[%s3] sm:$0x1]
    %v658 = vadd.f32 %v402, %v405
    %v659 = vadd.f32 %v658, %v410
    %v660 = vadd.f32 %v659, %v413
    %v661 = vadd.f32 %v660, %v418
    %v662 = vadd.f32 %v661, %v421
    %v663 = vadd.f32 %v662, %v426
    %v664 = vadd.f32 %v663, %v429
    %v665 = vadd.f32 %v664, %v434
    %v666 = vadd.f32 %v665, %v437
    %v667 = vadd.f32 %v666, %v442
    %v668 = vadd.f32 %v667, %v445
    %v669 = vadd.f32 %v668, %v450
    %v670 = vadd.f32 %v669, %v453
    %v671 = vadd.f32 %v670, %v458
    %v672 = vadd.f32 %v671, %v461
    %v673 = vadd.f32 %v672, %v466
    %v674 = vadd.f32 %v673, %v469
    %v675 = vadd.f32 %v674, %v474
    %v676 = vadd.f32 %v675, %v477
    %v677 = vadd.f32 %v676, %v482
    %v678 = vadd.f32 %v677, %v485
    %v679 = vadd.f32 %v678, %v490
    %v680 = vadd.f32 %v679, %v493
    %v681 = vadd.f32 %v680, %v498
    %v682 = vadd.f32 %v681, %v501
    %v683 = vadd.f32 %v682, %v506
    %v684 = vadd.f32 %v683, %v509
    %v685 = vadd.f32 %v684, %v514
    %v686 = vadd.f32 %v685, %v517
    %v687 = vadd.f32 %v686, %v522
    %v688 = vadd.f32 %v687, %v525
    %v689 = vadd.f32 %v688, %v530
    %v690 = vadd.f32 %v689, %v533
    %v691 = vadd.f32 %v690, %v538
    %v692 = vadd.f32 %v691, %v541
    %v693 = vadd.f32 %v692, %v546
    %v694 = vadd.f32 %v693, %v549
    %v695 = vadd.f32 %v694, %v554
    %v696 = vadd.f32 %v695, %v557
    %v697 = vadd.f32 %v696, %v562
    %v698 = vadd.f32 %v697, %v565
    %v699 = vadd.f32 %v698, %v570
    %v700 = vadd.f32 %v699, %v573
    %v701 = vadd.f32 %v700, %v578
    %v702 = vadd.f32 %v701, %v581
    %v703 = vadd.f32 %v702, %v586
    %v704 = vadd.f32 %v703, %v589
    %v705 = vadd.f32 %v704, %v594
    %v706 = vadd.f32 %v705, %v597
    %v707 = vadd.f32 %v706, %v602
    %v708 = vadd.f32 %v707, %v605
    %v709 = vadd.f32 %v708, %v610
    %v710 = vadd.f32 %v709, %v613
    %v711 = vadd.f32 %v710, %v618
    %v712 = vadd.f32 %v711, %v621
    %v713 = vadd.f32 %v712, %v626
    %v714 = vadd.f32 %v713, %v629
    %v715 = vadd.f32 %v714, %v634
    %v716 = vadd.f32 %v715, %v637
    %v717 = vadd.f32 %v716, %v642
    %v718 = vadd.f32 %v717, %v645
    %v719 = vadd.f32 %v718, %v650
    %v720 = vadd.f32 %v719, %v653
    %v721 = vrot.slane %v720, 4
    %v722 = vadd.f32 %v720, %v721
    %v723 = vrot.slane %v722, 2
    %v724 = vadd.f32 %v722, %v723
    %v725 = vrot.slane %v724, 1
    %v726 = vadd.f32 %v724, %v725
    %v727 = vmul.f32 %v726, 0.001953125
    %v728 = vmul.f32 %v402, %v402
    %v729 = vmul.f32 %v405, %v405
    %v730 = vmul.f32 %v410, %v410
    %v731 = vmul.f32 %v413, %v413
    %v732 = vmul.f32 %v418, %v418
    %v733 = vmul.f32 %v421, %v421
    %v734 = vmul.f32 %v426, %v426
    %v735 = vmul.f32 %v429, %v429
    %v736 = vmul.f32 %v434, %v434
    %v737 = vmul.f32 %v437, %v437
    %v738 = vmul.f32 %v442, %v442
    %v739 = vmul.f32 %v445, %v445
    %v740 = vmul.f32 %v450, %v450
    %v741 = vmul.f32 %v453, %v453
    %v742 = vmul.f32 %v458, %v458
    %v743 = vmul.f32 %v461, %v461
    %v744 = vmul.f32 %v466, %v466
    %v745 = vmul.f32 %v469, %v469
    %v746 = vmul.f32 %v474, %v474
    %v747 = vmul.f32 %v477, %v477
    %v748 = vmul.f32 %v482, %v482
    %v749 = vmul.f32 %v485, %v485
    %v750 = vmul.f32 %v490, %v490
    %v751 = vmul.f32 %v493, %v493
    %v752 = vmul.f32 %v498, %v498
    %v753 = vmul.f32 %v501, %v501
    %v754 = vmul.f32 %v506, %v506
    %v755 = vmul.f32 %v509, %v509
    %v756 = vmul.f32 %v514, %v514
    %v757 = vmul.f32 %v517, %v517
    %v758 = vmul.f32 %v522, %v522
    %v759 = vmul.f32 %v525, %v525
    %v760 = vmul.f32 %v530, %v530
    %v761 = vmul.f32 %v533, %v533
    %v762 = vmul.f32 %v538, %v538
    %v763 = vmul.f32 %v541, %v541
    %v764 = vmul.f32 %v546, %v546
    %v765 = vmul.f32 %v549, %v549
    %v766 = vmul.f32 %v554, %v554
    %v767 = vmul.f32 %v557, %v557
    %v768 = vmul.f32 %v562, %v562
    %v769 = vmul.f32 %v565, %v565
    %v770 = vmul.f32 %v570, %v570
    %v771 = vmul.f32 %v573, %v573
    %v772 = vmul.f32 %v578, %v578
    %v773 = vmul.f32 %v581, %v581
    %v774 = vmul.f32 %v586, %v586
    %v775 = vmul.f32 %v589, %v589
    %v776 = vmul.f32 %v594, %v594
    %v777 = vmul.f32 %v597, %v597
    %v778 = vmul.f32 %v602, %v602
    %v779 = vmul.f32 %v605, %v605
    %v780 = vmul.f32 %v610, %v610
    %v781 = vmul.f32 %v613, %v613
    %v782 = vmul.f32 %v618, %v618
    %v783 = vmul.f32 %v621, %v621
    %v784 = vmul.f32 %v626, %v626
    %v785 = vmul.f32 %v629, %v629
    %v786 = vmul.f32 %v634, %v634
    %v787 = vmul.f32 %v637, %v637
    %v788 = vmul.f32 %v642, %v642
    %v789 = vmul.f32 %v645, %v645
    %v790 = vmul.f32 %v650, %v650
    %v791 = vmul.f32 %v653, %v653
    %v792 = vadd.f32 %v728, %v729
    %v793 = vadd.f32 %v792, %v730
    %v794 = vadd.f32 %v793, %v731
    %v795 = vadd.f32 %v794, %v732
    %v796 = vadd.f32 %v795, %v733
    %v797 = vadd.f32 %v796, %v734
    %v798 = vadd.f32 %v797, %v735
    %v799 = vadd.f32 %v798, %v736
    %v800 = vadd.f32 %v799, %v737
    %v801 = vadd.f32 %v800, %v738
    %v802 = vadd.f32 %v801, %v739
    %v803 = vadd.f32 %v802, %v740
    %v804 = vadd.f32 %v803, %v741
    %v805 = vadd.f32 %v804, %v742
    %v806 = vadd.f32 %v805, %v743
    %v807 = vadd.f32 %v806, %v744
    %v808 = vadd.f32 %v807, %v745
    %v809 = vadd.f32 %v808, %v746
    %v810 = vadd.f32 %v809, %v747
    %v811 = vadd.f32 %v810, %v748
    %v812 = vadd.f32 %v811, %v749
    %v813 = vadd.f32 %v812, %v750
    %v814 = vadd.f32 %v813, %v751
    %v815 = vadd.f32 %v814, %v752
    %v816 = vadd.f32 %v815, %v753
    %v817 = vadd.f32 %v816, %v754
    %v818 = vadd.f32 %v817, %v755
    %v819 = vadd.f32 %v818, %v756
    %v820 = vadd.f32 %v819, %v757
    %v821 = vadd.f32 %v820, %v758
    %v822 = vadd.f32 %v821, %v759
    %v823 = vadd.f32 %v822, %v760
    %v824 = vadd.f32 %v823, %v761
    %v825 = vadd.f32 %v824, %v762
    %v826 = vadd.f32 %v825, %v763
    %v827 = vadd.f32 %v826, %v764
    %v828 = vadd.f32 %v827, %v765
    %v829 = vadd.f32 %v828, %v766
    %v830 = vadd.f32 %v829, %v767
    %v831 = vadd.f32 %v830, %v768
    %v832 = vadd.f32 %v831, %v769
    %v833 = vadd.f32 %v832, %v770
    %v834 = vadd.f32 %v833, %v771
    %v835 = vadd.f32 %v834, %v772
    %v836 = vadd.f32 %v835, %v773
    %v837 = vadd.f32 %v836, %v774
    %v838 = vadd.f32 %v837, %v775
    %v839 = vadd.f32 %v838, %v776
    %v840 = vadd.f32 %v839, %v777
    %v841 = vadd.f32 %v840, %v778
    %v842 = vadd.f32 %v841, %v779
    %v843 = vadd.f32 %v842, %v780
    %v844 = vadd.f32 %v843, %v781
    %v845 = vadd.f32 %v844, %v782
    %v846 = vadd.f32 %v845, %v783
    %v847 = vadd.f32 %v846, %v784
    %v848 = vadd.f32 %v847, %v785
    %v849 = vadd.f32 %v848, %v786
    %v850 = vadd.f32 %v849, %v787
    %v851 = vadd.f32 %v850, %v788
    %v852 = vadd.f32 %v851, %v789
    %v853 = vadd.f32 %v852, %v790
    %v854 = vadd.f32 %v853, %v791
    %v855 = vrot.slane %v854, 4
    %v856 = vadd.f32 %v854, %v855
    %v857 = vrot.slane %v856, 2
    %v858 = vadd.f32 %v856, %v857
    %v859 = vrot.slane %v858, 1
    %v860 = vadd.f32 %v858, %v859
    %v861 = vmul.f32 %v860, 0.001953125
    %v862 = vmul.f32 %v727, %v727
    %v863 = vsub.f32 %v861, %v862
    %v864 = vsub.f32 %v402, %v727
    %v865 = vsub.f32 %v405, %v727
    %v866 = vsub.f32 %v410, %v727
    %v867 = vsub.f32 %v413, %v727
    %v868 = vsub.f32 %v418, %v727
    %v869 = vsub.f32 %v421, %v727
    %v870 = vsub.f32 %v426, %v727
    %v871 = vsub.f32 %v429, %v727
    %v872 = vsub.f32 %v434, %v727
    %v873 = vsub.f32 %v437, %v727
    %v874 = vsub.f32 %v442, %v727
    %v875 = vsub.f32 %v445, %v727
    %v876 = vsub.f32 %v450, %v727
    %v877 = vsub.f32 %v453, %v727
    %v878 = vsub.f32 %v458, %v727
    %v879 = vsub.f32 %v461, %v727
    %v880 = vsub.f32 %v466, %v727
    %v881 = vsub.f32 %v469, %v727
    %v882 = vsub.f32 %v474, %v727
    %v883 = vsub.f32 %v477, %v727
    %v884 = vsub.f32 %v482, %v727
    %v885 = vsub.f32 %v485, %v727
    %v886 = vsub.f32 %v490, %v727
    %v887 = vsub.f32 %v493, %v727
    %v888 = vsub.f32 %v498, %v727
    %v889 = vsub.f32 %v501, %v727
    %v890 = vsub.f32 %v506, %v727
    %v891 = vsub.f32 %v509, %v727
    %v892 = vsub.f32 %v514, %v727
    %v893 = vsub.f32 %v517, %v727
    %v894 = vsub.f32 %v522, %v727
    %v895 = vsub.f32 %v525, %v727
    %v896 = vsub.f32 %v530, %v727
    %v897 = vsub.f32 %v533, %v727
    %v898 = vsub.f32 %v538, %v727
    %v899 = vsub.f32 %v541, %v727
    %v900 = vsub.f32 %v546, %v727
    %v901 = vsub.f32 %v549, %v727
    %v902 = vsub.f32 %v554, %v727
    %v903 = vsub.f32 %v557, %v727
    %v904 = vsub.f32 %v562, %v727
    %v905 = vsub.f32 %v565, %v727
    %v906 = vsub.f32 %v570, %v727
    %v907 = vsub.f32 %v573, %v727
    %v908 = vsub.f32 %v578, %v727
    %v909 = vsub.f32 %v581, %v727
    %v910 = vsub.f32 %v586, %v727
    %v911 = vsub.f32 %v589, %v727
    %v912 = vsub.f32 %v594, %v727
    %v913 = vsub.f32 %v597, %v727
    %v914 = vsub.f32 %v602, %v727
    %v915 = vsub.f32 %v605, %v727
    %v916 = vsub.f32 %v610, %v727
    %v917 = vsub.f32 %v613, %v727
    %v918 = vsub.f32 %v618, %v727
    %v919 = vsub.f32 %v621, %v727
    %v920 = vsub.f32 %v626, %v727
    %v921 = vsub.f32 %v629, %v727
    %v922 = vsub.f32 %v634, %v727
    %v923 = vsub.f32 %v637, %v727
    %v924 = vsub.f32 %v642, %v727
    %v925 = vsub.f32 %v645, %v727
    %v926 = vsub.f32 %v650, %v727
    %v927 = vsub.f32 %v653, %v727
    %v928 = vadd.f32 %v863, 1e-05
    %v929 = vrsqrt.pop %v928
    %v930 = vmul.f32 %v864, %v929
    %v931 = vmul.f32 %v865, %v929
    %v932 = vmul.f32 %v866, %v929
    %v933 = vmul.f32 %v867, %v929
    %v934 = vmul.f32 %v868, %v929
    %v935 = vmul.f32 %v869, %v929
    %v936 = vmul.f32 %v870, %v929
    %v937 = vmul.f32 %v871, %v929
    %v938 = vmul.f32 %v872, %v929
    %v939 = vmul.f32 %v873, %v929
    %v940 = vmul.f32 %v874, %v929
    %v941 = vmul.f32 %v875, %v929
    %v942 = vmul.f32 %v876, %v929
    %v943 = vmul.f32 %v877, %v929
    %v944 = vmul.f32 %v878, %v929
    %v945 = vmul.f32 %v879, %v929
    %v946 = vmul.f32 %v880, %v929
    %v947 = vmul.f32 %v881, %v929
    %v948 = vmul.f32 %v882, %v929
    %v949 = vmul.f32 %v883, %v929
    %v950 = vmul.f32 %v884, %v929
    %v951 = vmul.f32 %v885, %v929
    %v952 = vmul.f32 %v886, %v929
    %v953 = vmul.f32 %v887, %v929
    %v954 = vmul.f32 %v888, %v929
    %v955 = vmul.f32 %v889, %v929
    %v956 = vmul.f32 %v890, %v929
    %v957 = vmul.f32 %v891, %v929
    %v958 = vmul.f32 %v892, %v929
    %v959 = vmul.f32 %v893, %v929
    %v960 = vmul.f32 %v894, %v929
    %v961 = vmul.f32 %v895, %v929
    %v962 = vmul.f32 %v896, %v929
    %v963 = vmul.f32 %v897, %v929
    %v964 = vmul.f32 %v898, %v929
    %v965 = vmul.f32 %v899, %v929
    %v966 = vmul.f32 %v900, %v929
    %v967 = vmul.f32 %v901, %v929
    %v968 = vmul.f32 %v902, %v929
    %v969 = vmul.f32 %v903, %v929
    %v970 = vmul.f32 %v904, %v929
    %v971 = vmul.f32 %v905, %v929
    %v972 = vmul.f32 %v906, %v929
    %v973 = vmul.f32 %v907, %v929
    %v974 = vmul.f32 %v908, %v929
    %v975 = vmul.f32 %v909, %v929
    %v976 = vmul.f32 %v910, %v929
    %v977 = vmul.f32 %v911, %v929
    %v978 = vmul.f32 %v912, %v929
    %v979 = vmul.f32 %v913, %v929
    %v980 = vmul.f32 %v914, %v929
    %v981 = vmul.f32 %v915, %v929
    %v982 = vmul.f32 %v916, %v929
    %v983 = vmul.f32 %v917, %v929
    %v984 = vmul.f32 %v918, %v929
    %v985 = vmul.f32 %v919, %v929
    %v986 = vmul.f32 %v920, %v929
    %v987 = vmul.f32 %v921, %v929
    %v988 = vmul.f32 %v922, %v929
    %v989 = vmul.f32 %v923, %v929
    %v990 = vmul.f32 %v924, %v929
    %v991 = vmul.f32 %v925, %v929
    %v992 = vmul.f32 %v926, %v929
    %v993 = vmul.f32 %v927, %v929
    %v995 = vlaneseq
    %v996 = vshrl.u32 %v995, 7
    %v997 = vsub.s32 0, %v996
    %v998 = vrot.slane %v656, %v997
    %v1000 = vmul.f32 %v930, %v998
    %v1001 = vmul.f32 %v931, %v998
    %v1002 = vmul.f32 %v932, %v998
    %v1003 = vmul.f32 %v933, %v998
    %v1004 = vmul.f32 %v934, %v998
    %v1005 = vmul.f32 %v935, %v998
    %v1006 = vmul.f32 %v936, %v998
    %v1007 = vmul.f32 %v937, %v998
    %v1008 = vmul.f32 %v938, %v998
    %v1009 = vmul.f32 %v939, %v998
    %v1010 = vmul.f32 %v940, %v998
    %v1011 = vmul.f32 %v941, %v998
    %v1012 = vmul.f32 %v942, %v998
    %v1013 = vmul.f32 %v943, %v998
    %v1014 = vmul.f32 %v944, %v998
    %v1015 = vmul.f32 %v945, %v998
    %v1016 = vmul.f32 %v946, %v998
    %v1017 = vmul.f32 %v947, %v998
    %v1018 = vmul.f32 %v948, %v998
    %v1019 = vmul.f32 %v949, %v998
    %v1020 = vmul.f32 %v950, %v998
    %v1021 = vmul.f32 %v951, %v998
    %v1022 = vmul.f32 %v952, %v998
    %v1023 = vmul.f32 %v953, %v998
    %v1024 = vmul.f32 %v954, %v998
    %v1025 = vmul.f32 %v955, %v998
    %v1026 = vmul.f32 %v956, %v998
    %v1027 = vmul.f32 %v957, %v998
    %v1028 = vmul.f32 %v958, %v998
    %v1029 = vmul.f32 %v959, %v998
    %v1030 = vmul.f32 %v960, %v998
    %v1031 = vmul.f32 %v961, %v998
    %v1032 = vmul.f32 %v962, %v998
    %v1033 = vmul.f32 %v963, %v998
    %v1034 = vmul.f32 %v964, %v998
    %v1035 = vmul.f32 %v965, %v998
    %v1036 = vmul.f32 %v966, %v998
    %v1037 = vmul.f32 %v967, %v998
    %v1038 = vmul.f32 %v968, %v998
    %v1039 = vmul.f32 %v969, %v998
    %v1040 = vmul.f32 %v970, %v998
    %v1041 = vmul.f32 %v971, %v998
    %v1042 = vmul.f32 %v972, %v998
    %v1043 = vmul.f32 %v973, %v998
    %v1044 = vmul.f32 %v974, %v998
    %v1045 = vmul.f32 %v975, %v998
    %v1046 = vmul.f32 %v976, %v998
    %v1047 = vmul.f32 %v977, %v998
    %v1048 = vmul.f32 %v978, %v998
    %v1049 = vmul.f32 %v979, %v998
    %v1050 = vmul.f32 %v980, %v998
    %v1051 = vmul.f32 %v981, %v998
    %v1052 = vmul.f32 %v982, %v998
    %v1053 = vmul.f32 %v983, %v998
    %v1054 = vmul.f32 %v984, %v998
    %v1055 = vmul.f32 %v985, %v998
    %v1056 = vmul.f32 %v986, %v998
    %v1057 = vmul.f32 %v987, %v998
    %v1058 = vmul.f32 %v988, %v998
    %v1059 = vmul.f32 %v989, %v998
    %v1060 = vmul.f32 %v990, %v998
    %v1061 = vmul.f32 %v991, %v998
    %v1062 = vmul.f32 %v992, %v998
    %v1063 = vmul.f32 %v993, %v998
    %v1065 = vlaneseq
    %v1066 = vshrl.u32 %v1065, 7
    %v1067 = vsub.s32 0, %v1066
    %v1068 = vrot.slane %v657, %v1067
    %v1070 = vadd.f32 %v1000, %v1068
    %v1071 = vadd.f32 %v1001, %v1068
    %v1072 = vadd.f32 %v1002, %v1068
    %v1073 = vadd.f32 %v1003, %v1068
    %v1074 = vadd.f32 %v1004, %v1068
    %v1075 = vadd.f32 %v1005, %v1068
    %v1076 = vadd.f32 %v1006, %v1068
    %v1077 = vadd.f32 %v1007, %v1068
    %v1078 = vadd.f32 %v1008, %v1068
    %v1079 = vadd.f32 %v1009, %v1068
    %v1080 = vadd.f32 %v1010, %v1068
    %v1081 = vadd.f32 %v1011, %v1068
    %v1082 = vadd.f32 %v1012, %v1068
    %v1083 = vadd.f32 %v1013, %v1068
    %v1084 = vadd.f32 %v1014, %v1068
    %v1085 = vadd.f32 %v1015, %v1068
    %v1086 = vadd.f32 %v1016, %v1068
    %v1087 = vadd.f32 %v1017, %v1068
    %v1088 = vadd.f32 %v1018, %v1068
    %v1089 = vadd.f32 %v1019, %v1068
    %v1090 = vadd.f32 %v1020, %v1068
    %v1091 = vadd.f32 %v1021, %v1068
    %v1092 = vadd.f32 %v1022, %v1068
    %v1093 = vadd.f32 %v1023, %v1068
    %v1094 = vadd.f32 %v1024, %v1068
    %v1095 = vadd.f32 %v1025, %v1068
    %v1096 = vadd.f32 %v1026, %v1068
    %v1097 = vadd.f32 %v1027, %v1068
    %v1098 = vadd.f32 %v1028, %v1068
    %v1099 = vadd.f32 %v1029, %v1068
    %v1100 = vadd.f32 %v1030, %v1068
    %v1101 = vadd.f32 %v1031, %v1068
    %v1102 = vadd.f32 %v1032, %v1068
    %v1103 = vadd.f32 %v1033, %v1068
    %v1104 = vadd.f32 %v1034, %v1068
    %v1105 = vadd.f32 %v1035, %v1068
    %v1106 = vadd.f32 %v1036, %v1068
    %v1107 = vadd.f32 %v1037, %v1068
    %v1108 = vadd.f32 %v1038, %v1068
    %v1109 = vadd.f32 %v1039, %v1068
    %v1110 = vadd.f32 %v1040, %v1068
    %v1111 = vadd.f32 %v1041, %v1068
    %v1112 = vadd.f32 %v1042, %v1068
    %v1113 = vadd.f32 %v1043, %v1068
    %v1114 = vadd.f32 %v1044, %v1068
    %v1115 = vadd.f32 %v1045, %v1068
    %v1116 = vadd.f32 %v1046, %v1068
    %v1117 = vadd.f32 %v1047, %v1068
    %v1118 = vadd.f32 %v1048, %v1068
    %v1119 = vadd.f32 %v1049, %v1068
    %v1120 = vadd.f32 %v1050, %v1068
    %v1121 = vadd.f32 %v1051, %v1068
    %v1122 = vadd.f32 %v1052, %v1068
    %v1123 = vadd.f32 %v1053, %v1068
    %v1124 = vadd.f32 %v1054, %v1068
    %v1125 = vadd.f32 %v1055, %v1068
    %v1126 = vadd.f32 %v1056, %v1068
    %v1127 = vadd.f32 %v1057, %v1068
    %v1128 = vadd.f32 %v1058, %v1068
    %v1129 = vadd.f32 %v1059, %v1068
    %v1130 = vadd.f32 %v1060, %v1068
    %v1131 = vadd.f32 %v1061, %v1068
    %v1132 = vadd.f32 %v1062, %v1068
    %v1133 = vadd.f32 %v1063, %v1068
    %v1134 = vmul.f32 %v1070, 0.5
    %v1135 = vmul.f32 %v1071, 0.5
    %v1136 = vmul.f32 %v1072, 0.5
    %v1137 = vmul.f32 %v1073, 0.5
    %v1138 = vmul.f32 %v1074, 0.5
    %v1139 = vmul.f32 %v1075, 0.5
    %v1140 = vmul.f32 %v1076, 0.5
    %v1141 = vmul.f32 %v1077, 0.5
    %v1142 = vmul.f32 %v1078, 0.5
    %v1143 = vmul.f32 %v1079, 0.5
    %v1144 = vmul.f32 %v1080, 0.5
    %v1145 = vmul.f32 %v1081, 0.5
    %v1146 = vmul.f32 %v1082, 0.5
    %v1147 = vmul.f32 %v1083, 0.5
    %v1148 = vmul.f32 %v1084, 0.5
    %v1149 = vmul.f32 %v1085, 0.5
    %v1150 = vmul.f32 %v1086, 0.5
    %v1151 = vmul.f32 %v1087, 0.5
    %v1152 = vmul.f32 %v1088, 0.5
    %v1153 = vmul.f32 %v1089, 0.5
    %v1154 = vmul.f32 %v1090, 0.5
    %v1155 = vmul.f32 %v1091, 0.5
    %v1156 = vmul.f32 %v1092, 0.5
    %v1157 = vmul.f32 %v1093, 0.5
    %v1158 = vmul.f32 %v1094, 0.5
    %v1159 = vmul.f32 %v1095, 0.5
    %v1160 = vmul.f32 %v1096, 0.5
    %v1161 = vmul.f32 %v1097, 0.5
    %v1162 = vmul.f32 %v1098, 0.5
    %v1163 = vmul.f32 %v1099, 0.5
    %v1164 = vmul.f32 %v1100, 0.5
    %v1165 = vmul.f32 %v1101, 0.5
    %v1166 = vmul.f32 %v1102, 0.5
    %v1167 = vmul.f32 %v1103, 0.5
    %v1168 = vmul.f32 %v1104, 0.5
    %v1169 = vmul.f32 %v1105, 0.5
    %v1170 = vmul.f32 %v1106, 0.5
    %v1171 = vmul.f32 %v1107, 0.5
    %v1172 = vmul.f32 %v1108, 0.5
    %v1173 = vmul.f32 %v1109, 0.5
    %v1174 = vmul.f32 %v1110, 0.5
    %v1175 = vmul.f32 %v1111, 0.5
    %v1176 = vmul.f32 %v1112, 0.5
    %v1177 = vmul.f32 %v1113, 0.5
    %v1178 = vmul.f32 %v1114, 0.5
    %v1179 = vmul.f32 %v1115, 0.5
    %v1180 = vmul.f32 %v1116, 0.5
    %v1181 = vmul.f32 %v1117, 0.5
    %v1182 = vmul.f32 %v1118, 0.5
    %v1183 = vmul.f32 %v1119, 0.5
    %v1184 = vmul.f32 %v1120, 0.5
    %v1185 = vmul.f32 %v1121, 0.5
    %v1186 = vmul.f32 %v1122, 0.5
    %v1187 = vmul.f32 %v1123, 0.5
    %v1188 = vmul.f32 %v1124, 0.5
    %v1189 = vmul.f32 %v1125, 0.5
    %v1190 = vmul.f32 %v1126, 0.5
    %v1191 = vmul.f32 %v1127, 0.5
    %v1192 = vmul.f32 %v1128, 0.5
    %v1193 = vmul.f32 %v1129, 0.5
    %v1194 = vmul.f32 %v1130, 0.5
    %v1195 = vmul.f32 %v1131, 0.5
    %v1196 = vmul.f32 %v1132, 0.5
    %v1197 = vmul.f32 %v1133, 0.5
    %v1198 = vtanh.pop %v1134
    %v1199 = vtanh.pop %v1135
    %v1200 = vtanh.pop %v1136
    %v1201 = vtanh.pop %v1137
    %v1202 = vtanh.pop %v1138
    %v1203 = vtanh.pop %v1139
    %v1204 = vtanh.pop %v1140
    %v1205 = vtanh.pop %v1141
    %v1206 = vtanh.pop %v1142
    %v1207 = vtanh.pop %v1143
    %v1208 = vtanh.pop %v1144
    %v1209 = vtanh.pop %v1145
    %v1210 = vtanh.pop %v1146
    %v1211 = vtanh.pop %v1147
    %v1212 = vtanh.pop %v1148
    %v1213 = vtanh.pop %v1149
    %v1214 = vtanh.pop %v1150
    %v1215 = vtanh.pop %v1151
    %v1216 = vtanh.pop %v1152
    %v1217 = vtanh.pop %v1153
    %v1218 = vtanh.pop %v1154
    %v1219 = vtanh.pop %v1155
    %v1220 = vtanh.pop %v1156
    %v1221 = vtanh.pop %v1157
    %v1222 = vtanh.pop %v1158
    %v1223 = vtanh.pop %v1159
    %v1224 = vtanh.pop %v1160
    %v1225 = vtanh.pop %v1161
    %v1226 = vtanh.pop %v1162
    %v1227 = vtanh.pop %v1163
    %v1228 = vtanh.pop %v1164
    %v1229 = vtanh.pop %v1165
    %v1230 = vtanh.pop %v1166
    %v1231 = vtanh.pop %v1167
    %v1232 = vtanh.pop %v1168
    %v1233 = vtanh.pop %v1169
    %v1234 = vtanh.pop %v1170
    %v1235 = vtanh.pop %v1171
    %v1236 = vtanh.pop %v1172
    %v1237 = vtanh.pop %v1173
    %v1238 = vtanh.pop %v1174
    %v1239 = vtanh.pop %v1175
    %v1240 = vtanh.pop %v1176
    %v1241 = vtanh.pop %v1177
    %v1242 = vtanh.pop %v1178
    %v1243 = vtanh.pop %v1179
    %v1244 = vtanh.pop %v1180
    %v1245 = vtanh.pop %v1181
    %v1246 = vtanh.pop %v1182
    %v1247 = vtanh.pop %v1183
    %v1248 = vtanh.pop %v1184
    %v1249 = vtanh.pop %v1185
    %v1250 = vtanh.pop %v1186
    %v1251 = vtanh.pop %v1187
    %v1252 = vtanh.pop %v1188
    %v1253 = vtanh.pop %v1189
    %v1254 = vtanh.pop %v1190
    %v1255 = vtanh.pop %v1191
    %v1256 = vtanh.pop %v1192
    %v1257 = vtanh.pop %v1193
    %v1258 = vtanh.pop %v1194
    %v1259 = vtanh.pop %v1195
    %v1260 = vtanh.pop %v1196
    %v1261 = vtanh.pop %v1197
    %v1262 = vmul.f32 %v1198, 0.5
    %v1263 = vmul.f32 %v1199, 0.5
    %v1264 = vmul.f32 %v1200, 0.5
    %v1265 = vmul.f32 %v1201, 0.5
    %v1266 = vmul.f32 %v1202, 0.5
    %v1267 = vmul.f32 %v1203, 0.5
    %v1268 = vmul.f32 %v1204, 0.5
    %v1269 = vmul.f32 %v1205, 0.5
    %v1270 = vmul.f32 %v1206, 0.5
    %v1271 = vmul.f32 %v1207, 0.5
    %v1272 = vmul.f32 %v1208, 0.5
    %v1273 = vmul.f32 %v1209, 0.5
    %v1274 = vmul.f32 %v1210, 0.5
    %v1275 = vmul.f32 %v1211, 0.5
    %v1276 = vmul.f32 %v1212, 0.5
    %v1277 = vmul.f32 %v1213, 0.5
    %v1278 = vmul.f32 %v1214, 0.5
    %v1279 = vmul.f32 %v1215, 0.5
    %v1280 = vmul.f32 %v1216, 0.5
    %v1281 = vmul.f32 %v1217, 0.5
    %v1282 = vmul.f32 %v1218, 0.5
    %v1283 = vmul.f32 %v1219, 0.5
    %v1284 = vmul.f32 %v1220, 0.5
    %v1285 = vmul.f32 %v1221, 0.5
    %v1286 = vmul.f32 %v1222, 0.5
    %v1287 = vmul.f32 %v1223, 0.5
    %v1288 = vmul.f32 %v1224, 0.5
    %v1289 = vmul.f32 %v1225, 0.5
    %v1290 = vmul.f32 %v1226, 0.5
    %v1291 = vmul.f32 %v1227, 0.5
    %v1292 = vmul.f32 %v1228, 0.5
    %v1293 = vmul.f32 %v1229, 0.5
    %v1294 = vmul.f32 %v1230, 0.5
    %v1295 = vmul.f32 %v1231, 0.5
    %v1296 = vmul.f32 %v1232, 0.5
    %v1297 = vmul.f32 %v1233, 0.5
    %v1298 = vmul.f32 %v1234, 0.5
    %v1299 = vmul.f32 %v1235, 0.5
    %v1300 = vmul.f32 %v1236, 0.5
    %v1301 = vmul.f32 %v1237, 0.5
    %v1302 = vmul.f32 %v1238, 0.5
    %v1303 = vmul.f32 %v1239, 0.5
    %v1304 = vmul.f32 %v1240, 0.5
    %v1305 = vmul.f32 %v1241, 0.5
    %v1306 = vmul.f32 %v1242, 0.5
    %v1307 = vmul.f32 %v1243, 0.5
    %v1308 = vmul.f32 %v1244, 0.5
    %v1309 = vmul.f32 %v1245, 0.5
    %v1310 = vmul.f32 %v1246, 0.5
    %v1311 = vmul.f32 %v1247, 0.5
    %v1312 = vmul.f32 %v1248, 0.5
    %v1313 = vmul.f32 %v1249, 0.5
    %v1314 = vmul.f32 %v1250, 0.5
    %v1315 = vmul.f32 %v1251, 0.5
    %v1316 = vmul.f32 %v1252, 0.5
    %v1317 = vmul.f32 %v1253, 0.5
    %v1318 = vmul.f32 %v1254, 0.5
    %v1319 = vmul.f32 %v1255, 0.5
    %v1320 = vmul.f32 %v1256, 0.5
    %v1321 = vmul.f32 %v1257, 0.5
    %v1322 = vmul.f32 %v1258, 0.5
    %v1323 = vmul.f32 %v1259, 0.5
    %v1324 = vmul.f32 %v1260, 0.5
    %v1325 = vmul.f32 %v1261, 0.5
    %v1326 = vadd.f32 %v1262, 0.5
    %v1327 = vadd.f32 %v1263, 0.5
    %v1328 = vadd.f32 %v1264, 0.5
    %v1329 = vadd.f32 %v1265, 0.5
    %v1330 = vadd.f32 %v1266, 0.5
    %v1331 = vadd.f32 %v1267, 0.5
    %v1332 = vadd.f32 %v1268, 0.5
    %v1333 = vadd.f32 %v1269, 0.5
    %v1334 = vadd.f32 %v1270, 0.5
    %v1335 = vadd.f32 %v1271, 0.5
    %v1336 = vadd.f32 %v1272, 0.5
    %v1337 = vadd.f32 %v1273, 0.5
    %v1338 = vadd.f32 %v1274, 0.5
    %v1339 = vadd.f32 %v1275, 0.5
    %v1340 = vadd.f32 %v1276, 0.5
    %v1341 = vadd.f32 %v1277, 0.5
    %v1342 = vadd.f32 %v1278, 0.5
    %v1343 = vadd.f32 %v1279, 0.5
    %v1344 = vadd.f32 %v1280, 0.5
    %v1345 = vadd.f32 %v1281, 0.5
    %v1346 = vadd.f32 %v1282, 0.5
    %v1347 = vadd.f32 %v1283, 0.5
    %v1348 = vadd.f32 %v1284, 0.5
    %v1349 = vadd.f32 %v1285, 0.5
    %v1350 = vadd.f32 %v1286, 0.5
    %v1351 = vadd.f32 %v1287, 0.5
    %v1352 = vadd.f32 %v1288, 0.5
    %v1353 = vadd.f32 %v1289, 0.5
    %v1354 = vadd.f32 %v1290, 0.5
    %v1355 = vadd.f32 %v1291, 0.5
    %v1356 = vadd.f32 %v1292, 0.5
    %v1357 = vadd.f32 %v1293, 0.5
    %v1358 = vadd.f32 %v1294, 0.5
    %v1359 = vadd.f32 %v1295, 0.5
    %v1360 = vadd.f32 %v1296, 0.5
    %v1361 = vadd.f32 %v1297, 0.5
    %v1362 = vadd.f32 %v1298, 0.5
    %v1363 = vadd.f32 %v1299, 0.5
    %v1364 = vadd.f32 %v1300, 0.5
    %v1365 = vadd.f32 %v1301, 0.5
    %v1366 = vadd.f32 %v1302, 0.5
    %v1367 = vadd.f32 %v1303, 0.5
    %v1368 = vadd.f32 %v1304, 0.5
    %v1369 = vadd.f32 %v1305, 0.5
    %v1370 = vadd.f32 %v1306, 0.5
    %v1371 = vadd.f32 %v1307, 0.5
    %v1372 = vadd.f32 %v1308, 0.5
    %v1373 = vadd.f32 %v1309, 0.5
    %v1374 = vadd.f32 %v1310, 0.5
    %v1375 = vadd.f32 %v1311, 0.5
    %v1376 = vadd.f32 %v1312, 0.5
    %v1377 = vadd.f32 %v1313, 0.5
    %v1378 = vadd.f32 %v1314, 0.5
    %v1379 = vadd.f32 %v1315, 0.5
    %v1380 = vadd.f32 %v1316, 0.5
    %v1381 = vadd.f32 %v1317, 0.5
    %v1382 = vadd.f32 %v1318, 0.5
    %v1383 = vadd.f32 %v1319, 0.5
    %v1384 = vadd.f32 %v1320, 0.5
    %v1385 = vadd.f32 %v1321, 0.5
    %v1386 = vadd.f32 %v1322, 0.5
    %v1387 = vadd.f32 %v1323, 0.5
    %v1388 = vadd.f32 %v1324, 0.5
    %v1389 = vadd.f32 %v1325, 0.5
    %v1390 = vmul.f32 %v1070, %v1326
    %v1391 = vmul.f32 %v1071, %v1327
    %v1392 = vmul.f32 %v1072, %v1328
    %v1393 = vmul.f32 %v1073, %v1329
    %v1394 = vmul.f32 %v1074, %v1330
    %v1395 = vmul.f32 %v1075, %v1331
    %v1396 = vmul.f32 %v1076, %v1332
    %v1397 = vmul.f32 %v1077, %v1333
    %v1398 = vmul.f32 %v1078, %v1334
    %v1399 = vmul.f32 %v1079, %v1335
    %v1400 = vmul.f32 %v1080, %v1336
    %v1401 = vmul.f32 %v1081, %v1337
    %v1402 = vmul.f32 %v1082, %v1338
    %v1403 = vmul.f32 %v1083, %v1339
    %v1404 = vmul.f32 %v1084, %v1340
    %v1405 = vmul.f32 %v1085, %v1341
    %v1406 = vmul.f32 %v1086, %v1342
    %v1407 = vmul.f32 %v1087, %v1343
    %v1408 = vmul.f32 %v1088, %v1344
    %v1409 = vmul.f32 %v1089, %v1345
    %v1410 = vmul.f32 %v1090, %v1346
    %v1411 = vmul.f32 %v1091, %v1347
    %v1412 = vmul.f32 %v1092, %v1348
    %v1413 = vmul.f32 %v1093, %v1349
    %v1414 = vmul.f32 %v1094, %v1350
    %v1415 = vmul.f32 %v1095, %v1351
    %v1416 = vmul.f32 %v1096, %v1352
    %v1417 = vmul.f32 %v1097, %v1353
    %v1418 = vmul.f32 %v1098, %v1354
    %v1419 = vmul.f32 %v1099, %v1355
    %v1420 = vmul.f32 %v1100, %v1356
    %v1421 = vmul.f32 %v1101, %v1357
    %v1422 = vmul.f32 %v1102, %v1358
    %v1423 = vmul.f32 %v1103, %v1359
    %v1424 = vmul.f32 %v1104, %v1360
    %v1425 = vmul.f32 %v1105, %v1361
    %v1426 = vmul.f32 %v1106, %v1362
    %v1427 = vmul.f32 %v1107, %v1363
    %v1428 = vmul.f32 %v1108, %v1364
    %v1429 = vmul.f32 %v1109, %v1365
    %v1430 = vmul.f32 %v1110, %v1366
    %v1431 = vmul.f32 %v1111, %v1367
    %v1432 = vmul.f32 %v1112, %v1368
    %v1433 = vmul.f32 %v1113, %v1369
    %v1434 = vmul.f32 %v1114, %v1370
    %v1435 = vmul.f32 %v1115, %v1371
    %v1436 = vmul.f32 %v1116, %v1372
    %v1437 = vmul.f32 %v1117, %v1373
    %v1438 = vmul.f32 %v1118, %v1374
    %v1439 = vmul.f32 %v1119, %v1375
    %v1440 = vmul.f32 %v1120, %v1376
    %v1441 = vmul.f32 %v1121, %v1377
    %v1442 = vmul.f32 %v1122, %v1378
    %v1443 = vmul.f32 %v1123, %v1379
    %v1444 = vmul.f32 %v1124, %v1380
    %v1445 = vmul.f32 %v1125, %v1381
    %v1446 = vmul.f32 %v1126, %v1382
    %v1447 = vmul.f32 %v1127, %v1383
    %v1448 = vmul.f32 %v1128, %v1384
    %v1449 = vmul.f32 %v1129, %v1385
    %v1450 = vmul.f32 %v1130, %v1386
    %v1451 = vmul.f32 %v1131, %v1387
    %v1452 = vmul.f32 %v1132, %v1388
    %v1453 = vmul.f32 %v1133, %v1389
    %v1454 = vpack.c.bf16 %v1391, %v1390
    %v1455 = vpack.c.bf16 %v1393, %v1392
    %v1456 = vpack.c.bf16 %v1395, %v1394
    %v1457 = vpack.c.bf16 %v1397, %v1396
    %v1458 = vpack.c.bf16 %v1399, %v1398
    %v1459 = vpack.c.bf16 %v1401, %v1400
    %v1460 = vpack.c.bf16 %v1403, %v1402
    %v1461 = vpack.c.bf16 %v1405, %v1404
    %v1462 = vpack.c.bf16 %v1407, %v1406
    %v1463 = vpack.c.bf16 %v1409, %v1408
    %v1464 = vpack.c.bf16 %v1411, %v1410
    %v1465 = vpack.c.bf16 %v1413, %v1412
    %v1466 = vpack.c.bf16 %v1415, %v1414
    %v1467 = vpack.c.bf16 %v1417, %v1416
    %v1468 = vpack.c.bf16 %v1419, %v1418
    %v1469 = vpack.c.bf16 %v1421, %v1420
    %v1470 = vpack.c.bf16 %v1423, %v1422
    %v1471 = vpack.c.bf16 %v1425, %v1424
    %v1472 = vpack.c.bf16 %v1427, %v1426
    %v1473 = vpack.c.bf16 %v1429, %v1428
    %v1474 = vpack.c.bf16 %v1431, %v1430
    %v1475 = vpack.c.bf16 %v1433, %v1432
    %v1476 = vpack.c.bf16 %v1435, %v1434
    %v1477 = vpack.c.bf16 %v1437, %v1436
    %v1478 = vpack.c.bf16 %v1439, %v1438
    %v1479 = vpack.c.bf16 %v1441, %v1440
    %v1480 = vpack.c.bf16 %v1443, %v1442
    %v1481 = vpack.c.bf16 %v1445, %v1444
    %v1482 = vpack.c.bf16 %v1447, %v1446
    %v1483 = vpack.c.bf16 %v1449, %v1448
    %v1484 = vpack.c.bf16 %v1451, %v1450
    %v1485 = vpack.c.bf16 %v1453, %v1452
    %vm1486 = vcmask 130048
    %1487 = vst.msk [vmem:[#allocation2] sm:$0xff] %vm1486, 0
    %1488 = vst.msk [vmem:[#allocation2 + $0x108] sm:$0xff] %vm1486, 0
    %1489 = vst.msk [vmem:[#allocation2 + $0x8] sm:$0xff] %vm1486, %v1454
    %1490 = vst.msk [vmem:[#allocation2 + $0x10] sm:$0xff] %vm1486, %v1455
    %1491 = vst.msk [vmem:[#allocation2 + $0x18] sm:$0xff] %vm1486, %v1456
    %1492 = vst.msk [vmem:[#allocation2 + $0x20] sm:$0xff] %vm1486, %v1457
    %1493 = vst.msk [vmem:[#allocation2 + $0x28] sm:$0xff] %vm1486, %v1458
    %1494 = vst.msk [vmem:[#allocation2 + $0x30] sm:$0xff] %vm1486, %v1459
    %1495 = vst.msk [vmem:[#allocation2 + $0x38] sm:$0xff] %vm1486, %v1460
    %1496 = vst.msk [vmem:[#allocation2 + $0x40] sm:$0xff] %vm1486, %v1461
    %1497 = vst.msk [vmem:[#allocation2 + $0x48] sm:$0xff] %vm1486, %v1462
    %1498 = vst.msk [vmem:[#allocation2 + $0x50] sm:$0xff] %vm1486, %v1463
    %1499 = vst.msk [vmem:[#allocation2 + $0x58] sm:$0xff] %vm1486, %v1464
    %1500 = vst.msk [vmem:[#allocation2 + $0x60] sm:$0xff] %vm1486, %v1465
    %1501 = vst.msk [vmem:[#allocation2 + $0x68] sm:$0xff] %vm1486, %v1466
    %1502 = vst.msk [vmem:[#allocation2 + $0x70] sm:$0xff] %vm1486, %v1467
    %1503 = vst.msk [vmem:[#allocation2 + $0x78] sm:$0xff] %vm1486, %v1468
    %1504 = vst.msk [vmem:[#allocation2 + $0x80] sm:$0xff] %vm1486, %v1469
    %1505 = vst.msk [vmem:[#allocation2 + $0x88] sm:$0xff] %vm1486, %v1470
    %1506 = vst.msk [vmem:[#allocation2 + $0x90] sm:$0xff] %vm1486, %v1471
    %1507 = vst.msk [vmem:[#allocation2 + $0x98] sm:$0xff] %vm1486, %v1472
    %1508 = vst.msk [vmem:[#allocation2 + $0xa0] sm:$0xff] %vm1486, %v1473
    %1509 = vst.msk [vmem:[#allocation2 + $0xa8] sm:$0xff] %vm1486, %v1474
    %1510 = vst.msk [vmem:[#allocation2 + $0xb0] sm:$0xff] %vm1486, %v1475
    %1511 = vst.msk [vmem:[#allocation2 + $0xb8] sm:$0xff] %vm1486, %v1476
    %1512 = vst.msk [vmem:[#allocation2 + $0xc0] sm:$0xff] %vm1486, %v1477
    %1513 = vst.msk [vmem:[#allocation2 + $0xc8] sm:$0xff] %vm1486, %v1478
    %1514 = vst.msk [vmem:[#allocation2 + $0xd0] sm:$0xff] %vm1486, %v1479
    %1515 = vst.msk [vmem:[#allocation2 + $0xd8] sm:$0xff] %vm1486, %v1480
    %1516 = vst.msk [vmem:[#allocation2 + $0xe0] sm:$0xff] %vm1486, %v1481
    %1517 = vst.msk [vmem:[#allocation2 + $0xe8] sm:$0xff] %vm1486, %v1482
    %1518 = vst.msk [vmem:[#allocation2 + $0xf0] sm:$0xff] %vm1486, %v1483
    %1519 = vst.msk [vmem:[#allocation2 + $0xf8] sm:$0xff] %vm1486, %v1484
    %1520 = vst.msk [vmem:[#allocation2 + $0x100] sm:$0xff] %vm1486, %v1485
    %v1521 = vlaneseq
    %v1522 = vshrl.u32 %v1521, 7
    %v1523 = vadd.s32 %v1522, 8
    %v1524 = vadd.s32 %v1522, 16
    %v1525 = vadd.s32 %v1522, 24
    %v1526 = vadd.s32 %v1522, 32
    %v1527 = vadd.s32 %v1522, 40
    %v1528 = vadd.s32 %v1522, 48
    %v1529 = vadd.s32 %v1522, 56
    %v1530 = vadd.s32 %v1522, 64
    %v1531 = vadd.s32 %v1522, 72
    %v1532 = vadd.s32 %v1522, 80
    %v1533 = vadd.s32 %v1522, 88
    %v1534 = vadd.s32 %v1522, 96
    %v1535 = vadd.s32 %v1522, 104
    %v1536 = vadd.s32 %v1522, 112
    %v1537 = vadd.s32 %v1522, 120
    %v1538 = vadd.s32 %v1522, 128
    %v1539 = vadd.s32 %v1522, 136
    %v1540 = vadd.s32 %v1522, 144
    %v1541 = vadd.s32 %v1522, 152
    %v1542 = vadd.s32 %v1522, 160
    %v1543 = vadd.s32 %v1522, 168
    %v1544 = vadd.s32 %v1522, 176
    %v1545 = vadd.s32 %v1522, 184
    %v1546 = vadd.s32 %v1522, 192
    %v1547 = vadd.s32 %v1522, 200
    %v1548 = vadd.s32 %v1522, 208
    %v1549 = vadd.s32 %v1522, 216
    %v1550 = vadd.s32 %v1522, 224
    %v1551 = vadd.s32 %v1522, 232
    %v1552 = vadd.s32 %v1522, 240
    %v1553 = vadd.s32 %v1522, 248
    %v1554 = vadd.s32 %v1522, 256
    %v1555 = vadd.s32 %v1522, 264
    %v1556 = vadd.s32 %v1522, 272
    %v1557 = vadd.s32 %v1522, 280
    %v1558 = vadd.s32 %v1522, 288
    %v1559 = vadd.s32 %v1522, 296
    %v1560 = vadd.s32 %v1522, 304
    %v1561 = vadd.s32 %v1522, 312
    %v1562 = vadd.s32 %v1522, 320
    %v1563 = vadd.s32 %v1522, 328
    %v1564 = vadd.s32 %v1522, 336
    %v1565 = vadd.s32 %v1522, 344
    %v1566 = vadd.s32 %v1522, 352
    %v1567 = vadd.s32 %v1522, 360
    %v1568 = vadd.s32 %v1522, 368
    %v1569 = vadd.s32 %v1522, 376
    %v1570 = vadd.s32 %v1522, 384
    %v1571 = vadd.s32 %v1522, 392
    %v1572 = vadd.s32 %v1522, 400
    %v1573 = vadd.s32 %v1522, 408
    %v1574 = vadd.s32 %v1522, 416
    %v1575 = vadd.s32 %v1522, 424
    %v1576 = vadd.s32 %v1522, 432
    %v1577 = vadd.s32 %v1522, 440
    %v1578 = vadd.s32 %v1522, 448
    %v1579 = vadd.s32 %v1522, 456
    %v1580 = vadd.s32 %v1522, 464
    %v1581 = vadd.s32 %v1522, 472
    %v1582 = vadd.s32 %v1522, 480
    %v1583 = vadd.s32 %v1522, 488
    %v1584 = vadd.s32 %v1522, 496
    %v1585 = vadd.s32 %v1522, 504
    %vm1586 = vcmp.lt.s32.totalorder %v1522, 0
    %v1587 = vsub.s32 0, %v1522
    %v1588 = vsel %vm1586, %v1587, %v1522
    %v1589 = vshrl.u32 %v1588, 4
    %v1590 = vand.u32 %v1588, 15
    %v1591 = vsub.s32 0, %v1590
    %v1592 = vsel %vm1586, %v1591, %v1590
    %vm1593 = vcmp.lt.s32.totalorder %v1523, 0
    %v1594 = vsub.s32 0, %v1523
    %v1595 = vsel %vm1593, %v1594, %v1523
    %v1596 = vshrl.u32 %v1595, 4
    %v1597 = vand.u32 %v1595, 15
    %v1598 = vsub.s32 0, %v1597
    %v1599 = vsel %vm1593, %v1598, %v1597
    %vm1600 = vcmp.lt.s32.totalorder %v1524, 0
    %v1601 = vsub.s32 0, %v1524
    %v1602 = vsel %vm1600, %v1601, %v1524
    %v1603 = vshrl.u32 %v1602, 4
    %v1604 = vand.u32 %v1602, 15
    %v1605 = vsub.s32 0, %v1604
    %v1606 = vsel %vm1600, %v1605, %v1604
    %vm1607 = vcmp.lt.s32.totalorder %v1525, 0
    %v1608 = vsub.s32 0, %v1525
    %v1609 = vsel %vm1607, %v1608, %v1525
    %v1610 = vshrl.u32 %v1609, 4
    %v1611 = vand.u32 %v1609, 15
    %v1612 = vsub.s32 0, %v1611
    %v1613 = vsel %vm1607, %v1612, %v1611
    %vm1614 = vcmp.lt.s32.totalorder %v1526, 0
    %v1615 = vsub.s32 0, %v1526
    %v1616 = vsel %vm1614, %v1615, %v1526
    %v1617 = vshrl.u32 %v1616, 4
    %v1618 = vand.u32 %v1616, 15
    %v1619 = vsub.s32 0, %v1618
    %v1620 = vsel %vm1614, %v1619, %v1618
    %vm1621 = vcmp.lt.s32.totalorder %v1527, 0
    %v1622 = vsub.s32 0, %v1527
    %v1623 = vsel %vm1621, %v1622, %v1527
    %v1624 = vshrl.u32 %v1623, 4
    %v1625 = vand.u32 %v1623, 15
    %v1626 = vsub.s32 0, %v1625
    %v1627 = vsel %vm1621, %v1626, %v1625
    %vm1628 = vcmp.lt.s32.totalorder %v1528, 0
    %v1629 = vsub.s32 0, %v1528
    %v1630 = vsel %vm1628, %v1629, %v1528
    %v1631 = vshrl.u32 %v1630, 4
    %v1632 = vand.u32 %v1630, 15
    %v1633 = vsub.s32 0, %v1632
    %v1634 = vsel %vm1628, %v1633, %v1632
    %vm1635 = vcmp.lt.s32.totalorder %v1529, 0
    %v1636 = vsub.s32 0, %v1529
    %v1637 = vsel %vm1635, %v1636, %v1529
    %v1638 = vshrl.u32 %v1637, 4
    %v1639 = vand.u32 %v1637, 15
    %v1640 = vsub.s32 0, %v1639
    %v1641 = vsel %vm1635, %v1640, %v1639
    %vm1642 = vcmp.lt.s32.totalorder %v1530, 0
    %v1643 = vsub.s32 0, %v1530
    %v1644 = vsel %vm1642, %v1643, %v1530
    %v1645 = vshrl.u32 %v1644, 4
    %v1646 = vand.u32 %v1644, 15
    %v1647 = vsub.s32 0, %v1646
    %v1648 = vsel %vm1642, %v1647, %v1646
    %vm1649 = vcmp.lt.s32.totalorder %v1531, 0
    %v1650 = vsub.s32 0, %v1531
    %v1651 = vsel %vm1649, %v1650, %v1531
    %v1652 = vshrl.u32 %v1651, 4
    %v1653 = vand.u32 %v1651, 15
    %v1654 = vsub.s32 0, %v1653
    %v1655 = vsel %vm1649, %v1654, %v1653
    %vm1656 = vcmp.lt.s32.totalorder %v1532, 0
    %v1657 = vsub.s32 0, %v1532
    %v1658 = vsel %vm1656, %v1657, %v1532
    %v1659 = vshrl.u32 %v1658, 4
    %v1660 = vand.u32 %v1658, 15
    %v1661 = vsub.s32 0, %v1660
    %v1662 = vsel %vm1656, %v1661, %v1660
    %vm1663 = vcmp.lt.s32.totalorder %v1533, 0
    %v1664 = vsub.s32 0, %v1533
    %v1665 = vsel %vm1663, %v1664, %v1533
    %v1666 = vshrl.u32 %v1665, 4
    %v1667 = vand.u32 %v1665, 15
    %v1668 = vsub.s32 0, %v1667
    %v1669 = vsel %vm1663, %v1668, %v1667
    %vm1670 = vcmp.lt.s32.totalorder %v1534, 0
    %v1671 = vsub.s32 0, %v1534
    %v1672 = vsel %vm1670, %v1671, %v1534
    %v1673 = vshrl.u32 %v1672, 4
    %v1674 = vand.u32 %v1672, 15
    %v1675 = vsub.s32 0, %v1674
    %v1676 = vsel %vm1670, %v1675, %v1674
    %vm1677 = vcmp.lt.s32.totalorder %v1535, 0
    %v1678 = vsub.s32 0, %v1535
    %v1679 = vsel %vm1677, %v1678, %v1535
    %v1680 = vshrl.u32 %v1679, 4
    %v1681 = vand.u32 %v1679, 15
    %v1682 = vsub.s32 0, %v1681
    %v1683 = vsel %vm1677, %v1682, %v1681
    %vm1684 = vcmp.lt.s32.totalorder %v1536, 0
    %v1685 = vsub.s32 0, %v1536
    %v1686 = vsel %vm1684, %v1685, %v1536
    %v1687 = vshrl.u32 %v1686, 4
    %v1688 = vand.u32 %v1686, 15
    %v1689 = vsub.s32 0, %v1688
    %v1690 = vsel %vm1684, %v1689, %v1688
    %vm1691 = vcmp.lt.s32.totalorder %v1537, 0
    %v1692 = vsub.s32 0, %v1537
    %v1693 = vsel %vm1691, %v1692, %v1537
    %v1694 = vshrl.u32 %v1693, 4
    %v1695 = vand.u32 %v1693, 15
    %v1696 = vsub.s32 0, %v1695
    %v1697 = vsel %vm1691, %v1696, %v1695
    %vm1698 = vcmp.lt.s32.totalorder %v1538, 0
    %v1699 = vsub.s32 0, %v1538
    %v1700 = vsel %vm1698, %v1699, %v1538
    %v1701 = vshrl.u32 %v1700, 4
    %v1702 = vand.u32 %v1700, 15
    %v1703 = vsub.s32 0, %v1702
    %v1704 = vsel %vm1698, %v1703, %v1702
    %vm1705 = vcmp.lt.s32.totalorder %v1539, 0
    %v1706 = vsub.s32 0, %v1539
    %v1707 = vsel %vm1705, %v1706, %v1539
    %v1708 = vshrl.u32 %v1707, 4
    %v1709 = vand.u32 %v1707, 15
    %v1710 = vsub.s32 0, %v1709
    %v1711 = vsel %vm1705, %v1710, %v1709
    %vm1712 = vcmp.lt.s32.totalorder %v1540, 0
    %v1713 = vsub.s32 0, %v1540
    %v1714 = vsel %vm1712, %v1713, %v1540
    %v1715 = vshrl.u32 %v1714, 4
    %v1716 = vand.u32 %v1714, 15
    %v1717 = vsub.s32 0, %v1716
    %v1718 = vsel %vm1712, %v1717, %v1716
    %vm1719 = vcmp.lt.s32.totalorder %v1541, 0
    %v1720 = vsub.s32 0, %v1541
    %v1721 = vsel %vm1719, %v1720, %v1541
    %v1722 = vshrl.u32 %v1721, 4
    %v1723 = vand.u32 %v1721, 15
    %v1724 = vsub.s32 0, %v1723
    %v1725 = vsel %vm1719, %v1724, %v1723
    %vm1726 = vcmp.lt.s32.totalorder %v1542, 0
    %v1727 = vsub.s32 0, %v1542
    %v1728 = vsel %vm1726, %v1727, %v1542
    %v1729 = vshrl.u32 %v1728, 4
    %v1730 = vand.u32 %v1728, 15
    %v1731 = vsub.s32 0, %v1730
    %v1732 = vsel %vm1726, %v1731, %v1730
    %vm1733 = vcmp.lt.s32.totalorder %v1543, 0
    %v1734 = vsub.s32 0, %v1543
    %v1735 = vsel %vm1733, %v1734, %v1543
    %v1736 = vshrl.u32 %v1735, 4
    %v1737 = vand.u32 %v1735, 15
    %v1738 = vsub.s32 0, %v1737
    %v1739 = vsel %vm1733, %v1738, %v1737
    %vm1740 = vcmp.lt.s32.totalorder %v1544, 0
    %v1741 = vsub.s32 0, %v1544
    %v1742 = vsel %vm1740, %v1741, %v1544
    %v1743 = vshrl.u32 %v1742, 4
    %v1744 = vand.u32 %v1742, 15
    %v1745 = vsub.s32 0, %v1744
    %v1746 = vsel %vm1740, %v1745, %v1744
    %vm1747 = vcmp.lt.s32.totalorder %v1545, 0
    %v1748 = vsub.s32 0, %v1545
    %v1749 = vsel %vm1747, %v1748, %v1545
    %v1750 = vshrl.u32 %v1749, 4
    %v1751 = vand.u32 %v1749, 15
    %v1752 = vsub.s32 0, %v1751
    %v1753 = vsel %vm1747, %v1752, %v1751
    %vm1754 = vcmp.lt.s32.totalorder %v1546, 0
    %v1755 = vsub.s32 0, %v1546
    %v1756 = vsel %vm1754, %v1755, %v1546
    %v1757 = vshrl.u32 %v1756, 4
    %v1758 = vand.u32 %v1756, 15
    %v1759 = vsub.s32 0, %v1758
    %v1760 = vsel %vm1754, %v1759, %v1758
    %vm1761 = vcmp.lt.s32.totalorder %v1547, 0
    %v1762 = vsub.s32 0, %v1547
    %v1763 = vsel %vm1761, %v1762, %v1547
    %v1764 = vshrl.u32 %v1763, 4
    %v1765 = vand.u32 %v1763, 15
    %v1766 = vsub.s32 0, %v1765
    %v1767 = vsel %vm1761, %v1766, %v1765
    %vm1768 = vcmp.lt.s32.totalorder %v1548, 0
    %v1769 = vsub.s32 0, %v1548
    %v1770 = vsel %vm1768, %v1769, %v1548
    %v1771 = vshrl.u32 %v1770, 4
    %v1772 = vand.u32 %v1770, 15
    %v1773 = vsub.s32 0, %v1772
    %v1774 = vsel %vm1768, %v1773, %v1772
    %vm1775 = vcmp.lt.s32.totalorder %v1549, 0
    %v1776 = vsub.s32 0, %v1549
    %v1777 = vsel %vm1775, %v1776, %v1549
    %v1778 = vshrl.u32 %v1777, 4
    %v1779 = vand.u32 %v1777, 15
    %v1780 = vsub.s32 0, %v1779
    %v1781 = vsel %vm1775, %v1780, %v1779
    %vm1782 = vcmp.lt.s32.totalorder %v1550, 0
    %v1783 = vsub.s32 0, %v1550
    %v1784 = vsel %vm1782, %v1783, %v1550
    %v1785 = vshrl.u32 %v1784, 4
    %v1786 = vand.u32 %v1784, 15
    %v1787 = vsub.s32 0, %v1786
    %v1788 = vsel %vm1782, %v1787, %v1786
    %vm1789 = vcmp.lt.s32.totalorder %v1551, 0
    %v1790 = vsub.s32 0, %v1551
    %v1791 = vsel %vm1789, %v1790, %v1551
    %v1792 = vshrl.u32 %v1791, 4
    %v1793 = vand.u32 %v1791, 15
    %v1794 = vsub.s32 0, %v1793
    %v1795 = vsel %vm1789, %v1794, %v1793
    %vm1796 = vcmp.lt.s32.totalorder %v1552, 0
    %v1797 = vsub.s32 0, %v1552
    %v1798 = vsel %vm1796, %v1797, %v1552
    %v1799 = vshrl.u32 %v1798, 4
    %v1800 = vand.u32 %v1798, 15
    %v1801 = vsub.s32 0, %v1800
    %v1802 = vsel %vm1796, %v1801, %v1800
    %vm1803 = vcmp.lt.s32.totalorder %v1553, 0
    %v1804 = vsub.s32 0, %v1553
    %v1805 = vsel %vm1803, %v1804, %v1553
    %v1806 = vshrl.u32 %v1805, 4
    %v1807 = vand.u32 %v1805, 15
    %v1808 = vsub.s32 0, %v1807
    %v1809 = vsel %vm1803, %v1808, %v1807
    %vm1810 = vcmp.lt.s32.totalorder %v1554, 0
    %v1811 = vsub.s32 0, %v1554
    %v1812 = vsel %vm1810, %v1811, %v1554
    %v1813 = vshrl.u32 %v1812, 4
    %v1814 = vand.u32 %v1812, 15
    %v1815 = vsub.s32 0, %v1814
    %v1816 = vsel %vm1810, %v1815, %v1814
    %vm1817 = vcmp.lt.s32.totalorder %v1555, 0
    %v1818 = vsub.s32 0, %v1555
    %v1819 = vsel %vm1817, %v1818, %v1555
    %v1820 = vshrl.u32 %v1819, 4
    %v1821 = vand.u32 %v1819, 15
    %v1822 = vsub.s32 0, %v1821
    %v1823 = vsel %vm1817, %v1822, %v1821
    %vm1824 = vcmp.lt.s32.totalorder %v1556, 0
    %v1825 = vsub.s32 0, %v1556
    %v1826 = vsel %vm1824, %v1825, %v1556
    %v1827 = vshrl.u32 %v1826, 4
    %v1828 = vand.u32 %v1826, 15
    %v1829 = vsub.s32 0, %v1828
    %v1830 = vsel %vm1824, %v1829, %v1828
    %vm1831 = vcmp.lt.s32.totalorder %v1557, 0
    %v1832 = vsub.s32 0, %v1557
    %v1833 = vsel %vm1831, %v1832, %v1557
    %v1834 = vshrl.u32 %v1833, 4
    %v1835 = vand.u32 %v1833, 15
    %v1836 = vsub.s32 0, %v1835
    %v1837 = vsel %vm1831, %v1836, %v1835
    %vm1838 = vcmp.lt.s32.totalorder %v1558, 0
    %v1839 = vsub.s32 0, %v1558
    %v1840 = vsel %vm1838, %v1839, %v1558
    %v1841 = vshrl.u32 %v1840, 4
    %v1842 = vand.u32 %v1840, 15
    %v1843 = vsub.s32 0, %v1842
    %v1844 = vsel %vm1838, %v1843, %v1842
    %vm1845 = vcmp.lt.s32.totalorder %v1559, 0
    %v1846 = vsub.s32 0, %v1559
    %v1847 = vsel %vm1845, %v1846, %v1559
    %v1848 = vshrl.u32 %v1847, 4
    %v1849 = vand.u32 %v1847, 15
    %v1850 = vsub.s32 0, %v1849
    %v1851 = vsel %vm1845, %v1850, %v1849
    %vm1852 = vcmp.lt.s32.totalorder %v1560, 0
    %v1853 = vsub.s32 0, %v1560
    %v1854 = vsel %vm1852, %v1853, %v1560
    %v1855 = vshrl.u32 %v1854, 4
    %v1856 = vand.u32 %v1854, 15
    %v1857 = vsub.s32 0, %v1856
    %v1858 = vsel %vm1852, %v1857, %v1856
    %vm1859 = vcmp.lt.s32.totalorder %v1561, 0
    %v1860 = vsub.s32 0, %v1561
    %v1861 = vsel %vm1859, %v1860, %v1561
    %v1862 = vshrl.u32 %v1861, 4
    %v1863 = vand.u32 %v1861, 15
    %v1864 = vsub.s32 0, %v1863
    %v1865 = vsel %vm1859, %v1864, %v1863
    %vm1866 = vcmp.lt.s32.totalorder %v1562, 0
    %v1867 = vsub.s32 0, %v1562
    %v1868 = vsel %vm1866, %v1867, %v1562
    %v1869 = vshrl.u32 %v1868, 4
    %v1870 = vand.u32 %v1868, 15
    %v1871 = vsub.s32 0, %v1870
    %v1872 = vsel %vm1866, %v1871, %v1870
    %vm1873 = vcmp.lt.s32.totalorder %v1563, 0
    %v1874 = vsub.s32 0, %v1563
    %v1875 = vsel %vm1873, %v1874, %v1563
    %v1876 = vshrl.u32 %v1875, 4
    %v1877 = vand.u32 %v1875, 15
    %v1878 = vsub.s32 0, %v1877
    %v1879 = vsel %vm1873, %v1878, %v1877
    %vm1880 = vcmp.lt.s32.totalorder %v1564, 0
    %v1881 = vsub.s32 0, %v1564
    %v1882 = vsel %vm1880, %v1881, %v1564
    %v1883 = vshrl.u32 %v1882, 4
    %v1884 = vand.u32 %v1882, 15
    %v1885 = vsub.s32 0, %v1884
    %v1886 = vsel %vm1880, %v1885, %v1884
    %vm1887 = vcmp.lt.s32.totalorder %v1565, 0
    %v1888 = vsub.s32 0, %v1565
    %v1889 = vsel %vm1887, %v1888, %v1565
    %v1890 = vshrl.u32 %v1889, 4
    %v1891 = vand.u32 %v1889, 15
    %v1892 = vsub.s32 0, %v1891
    %v1893 = vsel %vm1887, %v1892, %v1891
    %vm1894 = vcmp.lt.s32.totalorder %v1566, 0
    %v1895 = vsub.s32 0, %v1566
    %v1896 = vsel %vm1894, %v1895, %v1566
    %v1897 = vshrl.u32 %v1896, 4
    %v1898 = vand.u32 %v1896, 15
    %v1899 = vsub.s32 0, %v1898
    %v1900 = vsel %vm1894, %v1899, %v1898
    %vm1901 = vcmp.lt.s32.totalorder %v1567, 0
    %v1902 = vsub.s32 0, %v1567
    %v1903 = vsel %vm1901, %v1902, %v1567
    %v1904 = vshrl.u32 %v1903, 4
    %v1905 = vand.u32 %v1903, 15
    %v1906 = vsub.s32 0, %v1905
    %v1907 = vsel %vm1901, %v1906, %v1905
    %vm1908 = vcmp.lt.s32.totalorder %v1568, 0
    %v1909 = vsub.s32 0, %v1568
    %v1910 = vsel %vm1908, %v1909, %v1568
    %v1911 = vshrl.u32 %v1910, 4
    %v1912 = vand.u32 %v1910, 15
    %v1913 = vsub.s32 0, %v1912
    %v1914 = vsel %vm1908, %v1913, %v1912
    %vm1915 = vcmp.lt.s32.totalorder %v1569, 0
    %v1916 = vsub.s32 0, %v1569
    %v1917 = vsel %vm1915, %v1916, %v1569
    %v1918 = vshrl.u32 %v1917, 4
    %v1919 = vand.u32 %v1917, 15
    %v1920 = vsub.s32 0, %v1919
    %v1921 = vsel %vm1915, %v1920, %v1919
    %vm1922 = vcmp.lt.s32.totalorder %v1570, 0
    %v1923 = vsub.s32 0, %v1570
    %v1924 = vsel %vm1922, %v1923, %v1570
    %v1925 = vshrl.u32 %v1924, 4
    %v1926 = vand.u32 %v1924, 15
    %v1927 = vsub.s32 0, %v1926
    %v1928 = vsel %vm1922, %v1927, %v1926
    %vm1929 = vcmp.lt.s32.totalorder %v1571, 0
    %v1930 = vsub.s32 0, %v1571
    %v1931 = vsel %vm1929, %v1930, %v1571
    %v1932 = vshrl.u32 %v1931, 4
    %v1933 = vand.u32 %v1931, 15
    %v1934 = vsub.s32 0, %v1933
    %v1935 = vsel %vm1929, %v1934, %v1933
    %vm1936 = vcmp.lt.s32.totalorder %v1572, 0
    %v1937 = vsub.s32 0, %v1572
    %v1938 = vsel %vm1936, %v1937, %v1572
    %v1939 = vshrl.u32 %v1938, 4
    %v1940 = vand.u32 %v1938, 15
    %v1941 = vsub.s32 0, %v1940
    %v1942 = vsel %vm1936, %v1941, %v1940
    %vm1943 = vcmp.lt.s32.totalorder %v1573, 0
    %v1944 = vsub.s32 0, %v1573
    %v1945 = vsel %vm1943, %v1944, %v1573
    %v1946 = vshrl.u32 %v1945, 4
    %v1947 = vand.u32 %v1945, 15
    %v1948 = vsub.s32 0, %v1947
    %v1949 = vsel %vm1943, %v1948, %v1947
    %vm1950 = vcmp.lt.s32.totalorder %v1574, 0
    %v1951 = vsub.s32 0, %v1574
    %v1952 = vsel %vm1950, %v1951, %v1574
    %v1953 = vshrl.u32 %v1952, 4
    %v1954 = vand.u32 %v1952, 15
    %v1955 = vsub.s32 0, %v1954
    %v1956 = vsel %vm1950, %v1955, %v1954
    %vm1957 = vcmp.lt.s32.totalorder %v1575, 0
    %v1958 = vsub.s32 0, %v1575
    %v1959 = vsel %vm1957, %v1958, %v1575
    %v1960 = vshrl.u32 %v1959, 4
    %v1961 = vand.u32 %v1959, 15
    %v1962 = vsub.s32 0, %v1961
    %v1963 = vsel %vm1957, %v1962, %v1961
    %vm1964 = vcmp.lt.s32.totalorder %v1576, 0
    %v1965 = vsub.s32 0, %v1576
    %v1966 = vsel %vm1964, %v1965, %v1576
    %v1967 = vshrl.u32 %v1966, 4
    %v1968 = vand.u32 %v1966, 15
    %v1969 = vsub.s32 0, %v1968
    %v1970 = vsel %vm1964, %v1969, %v1968
    %vm1971 = vcmp.lt.s32.totalorder %v1577, 0
    %v1972 = vsub.s32 0, %v1577
    %v1973 = vsel %vm1971, %v1972, %v1577
    %v1974 = vshrl.u32 %v1973, 4
    %v1975 = vand.u32 %v1973, 15
    %v1976 = vsub.s32 0, %v1975
    %v1977 = vsel %vm1971, %v1976, %v1975
    %vm1978 = vcmp.lt.s32.totalorder %v1578, 0
    %v1979 = vsub.s32 0, %v1578
    %v1980 = vsel %vm1978, %v1979, %v1578
    %v1981 = vshrl.u32 %v1980, 4
    %v1982 = vand.u32 %v1980, 15
    %v1983 = vsub.s32 0, %v1982
    %v1984 = vsel %vm1978, %v1983, %v1982
    %vm1985 = vcmp.lt.s32.totalorder %v1579, 0
    %v1986 = vsub.s32 0, %v1579
    %v1987 = vsel %vm1985, %v1986, %v1579
    %v1988 = vshrl.u32 %v1987, 4
    %v1989 = vand.u32 %v1987, 15
    %v1990 = vsub.s32 0, %v1989
    %v1991 = vsel %vm1985, %v1990, %v1989
    %vm1992 = vcmp.lt.s32.totalorder %v1580, 0
    %v1993 = vsub.s32 0, %v1580
    %v1994 = vsel %vm1992, %v1993, %v1580
    %v1995 = vshrl.u32 %v1994, 4
    %v1996 = vand.u32 %v1994, 15
    %v1997 = vsub.s32 0, %v1996
    %v1998 = vsel %vm1992, %v1997, %v1996
    %vm1999 = vcmp.lt.s32.totalorder %v1581, 0
    %v2000 = vsub.s32 0, %v1581
    %v2001 = vsel %vm1999, %v2000, %v1581
    %v2002 = vshrl.u32 %v2001, 4
    %v2003 = vand.u32 %v2001, 15
    %v2004 = vsub.s32 0, %v2003
    %v2005 = vsel %vm1999, %v2004, %v2003
    %vm2006 = vcmp.lt.s32.totalorder %v1582, 0
    %v2007 = vsub.s32 0, %v1582
    %v2008 = vsel %vm2006, %v2007, %v1582
    %v2009 = vshrl.u32 %v2008, 4
    %v2010 = vand.u32 %v2008, 15
    %v2011 = vsub.s32 0, %v2010
    %v2012 = vsel %vm2006, %v2011, %v2010
    %vm2013 = vcmp.lt.s32.totalorder %v1583, 0
    %v2014 = vsub.s32 0, %v1583
    %v2015 = vsel %vm2013, %v2014, %v1583
    %v2016 = vshrl.u32 %v2015, 4
    %v2017 = vand.u32 %v2015, 15
    %v2018 = vsub.s32 0, %v2017
    %v2019 = vsel %vm2013, %v2018, %v2017
    %vm2020 = vcmp.lt.s32.totalorder %v1584, 0
    %v2021 = vsub.s32 0, %v1584
    %v2022 = vsel %vm2020, %v2021, %v1584
    %v2023 = vshrl.u32 %v2022, 4
    %v2024 = vand.u32 %v2022, 15
    %v2025 = vsub.s32 0, %v2024
    %v2026 = vsel %vm2020, %v2025, %v2024
    %vm2027 = vcmp.lt.s32.totalorder %v1585, 0
    %v2028 = vsub.s32 0, %v1585
    %v2029 = vsel %vm2027, %v2028, %v1585
    %v2030 = vshrl.u32 %v2029, 4
    %v2031 = vand.u32 %v2029, 15
    %v2032 = vsub.s32 0, %v2031
    %v2033 = vsel %vm2027, %v2032, %v2031
    %vm2034 = vcmp.ne.s32.totalorder %v1592, 0
    %vm2035 = vcmp.ne.s32.totalorder %v1599, 0
    %vm2036 = vcmp.ne.s32.totalorder %v1606, 0
    %vm2037 = vcmp.ne.s32.totalorder %v1613, 0
    %vm2038 = vcmp.ne.s32.totalorder %v1620, 0
    %vm2039 = vcmp.ne.s32.totalorder %v1627, 0
    %vm2040 = vcmp.ne.s32.totalorder %v1634, 0
    %vm2041 = vcmp.ne.s32.totalorder %v1641, 0
    %vm2042 = vcmp.ne.s32.totalorder %v1648, 0
    %vm2043 = vcmp.ne.s32.totalorder %v1655, 0
    %vm2044 = vcmp.ne.s32.totalorder %v1662, 0
    %vm2045 = vcmp.ne.s32.totalorder %v1669, 0
    %vm2046 = vcmp.ne.s32.totalorder %v1676, 0
    %vm2047 = vcmp.ne.s32.totalorder %v1683, 0
    %vm2048 = vcmp.ne.s32.totalorder %v1690, 0
    %vm2049 = vcmp.ne.s32.totalorder %v1697, 0
    %vm2050 = vcmp.ne.s32.totalorder %v1704, 0
    %vm2051 = vcmp.ne.s32.totalorder %v1711, 0
    %vm2052 = vcmp.ne.s32.totalorder %v1718, 0
    %vm2053 = vcmp.ne.s32.totalorder %v1725, 0
    %vm2054 = vcmp.ne.s32.totalorder %v1732, 0
    %vm2055 = vcmp.ne.s32.totalorder %v1739, 0
    %vm2056 = vcmp.ne.s32.totalorder %v1746, 0
    %vm2057 = vcmp.ne.s32.totalorder %v1753, 0
    %vm2058 = vcmp.ne.s32.totalorder %v1760, 0
    %vm2059 = vcmp.ne.s32.totalorder %v1767, 0
    %vm2060 = vcmp.ne.s32.totalorder %v1774, 0
    %vm2061 = vcmp.ne.s32.totalorder %v1781, 0
    %vm2062 = vcmp.ne.s32.totalorder %v1788, 0
    %vm2063 = vcmp.ne.s32.totalorder %v1795, 0
    %vm2064 = vcmp.ne.s32.totalorder %v1802, 0
    %vm2065 = vcmp.ne.s32.totalorder %v1809, 0
    %vm2066 = vcmp.ne.s32.totalorder %v1816, 0
    %vm2067 = vcmp.ne.s32.totalorder %v1823, 0
    %vm2068 = vcmp.ne.s32.totalorder %v1830, 0
    %vm2069 = vcmp.ne.s32.totalorder %v1837, 0
    %vm2070 = vcmp.ne.s32.totalorder %v1844, 0
    %vm2071 = vcmp.ne.s32.totalorder %v1851, 0
    %vm2072 = vcmp.ne.s32.totalorder %v1858, 0
    %vm2073 = vcmp.ne.s32.totalorder %v1865, 0
    %vm2074 = vcmp.ne.s32.totalorder %v1872, 0
    %vm2075 = vcmp.ne.s32.totalorder %v1879, 0
    %vm2076 = vcmp.ne.s32.totalorder %v1886, 0
    %vm2077 = vcmp.ne.s32.totalorder %v1893, 0
    %vm2078 = vcmp.ne.s32.totalorder %v1900, 0
    %vm2079 = vcmp.ne.s32.totalorder %v1907, 0
    %vm2080 = vcmp.ne.s32.totalorder %v1914, 0
    %vm2081 = vcmp.ne.s32.totalorder %v1921, 0
    %vm2082 = vcmp.ne.s32.totalorder %v1928, 0
    %vm2083 = vcmp.ne.s32.totalorder %v1935, 0
    %vm2084 = vcmp.ne.s32.totalorder %v1942, 0
    %vm2085 = vcmp.ne.s32.totalorder %v1949, 0
    %vm2086 = vcmp.ne.s32.totalorder %v1956, 0
    %vm2087 = vcmp.ne.s32.totalorder %v1963, 0
    %vm2088 = vcmp.ne.s32.totalorder %v1970, 0
    %vm2089 = vcmp.ne.s32.totalorder %v1977, 0
    %vm2090 = vcmp.ne.s32.totalorder %v1984, 0
    %vm2091 = vcmp.ne.s32.totalorder %v1991, 0
    %vm2092 = vcmp.ne.s32.totalorder %v1998, 0
    %vm2093 = vcmp.ne.s32.totalorder %v2005, 0
    %vm2094 = vcmp.ne.s32.totalorder %v2012, 0
    %vm2095 = vcmp.ne.s32.totalorder %v2019, 0
    %vm2096 = vcmp.ne.s32.totalorder %v2026, 0
    %vm2097 = vcmp.ne.s32.totalorder %v2033, 0
    %vm2098 = vcmp.lt.s32.totalorder %v1592, 0
    %vm2099 = vcmp.lt.s32.totalorder %v1599, 0
    %vm2100 = vcmp.lt.s32.totalorder %v1606, 0
    %vm2101 = vcmp.lt.s32.totalorder %v1613, 0
    %vm2102 = vcmp.lt.s32.totalorder %v1620, 0
    %vm2103 = vcmp.lt.s32.totalorder %v1627, 0
    %vm2104 = vcmp.lt.s32.totalorder %v1634, 0
    %vm2105 = vcmp.lt.s32.totalorder %v1641, 0
    %vm2106 = vcmp.lt.s32.totalorder %v1648, 0
    %vm2107 = vcmp.lt.s32.totalorder %v1655, 0
    %vm2108 = vcmp.lt.s32.totalorder %v1662, 0
    %vm2109 = vcmp.lt.s32.totalorder %v1669, 0
    %vm2110 = vcmp.lt.s32.totalorder %v1676, 0
    %vm2111 = vcmp.lt.s32.totalorder %v1683, 0
    %vm2112 = vcmp.lt.s32.totalorder %v1690, 0
    %vm2113 = vcmp.lt.s32.totalorder %v1697, 0
    %vm2114 = vcmp.lt.s32.totalorder %v1704, 0
    %vm2115 = vcmp.lt.s32.totalorder %v1711, 0
    %vm2116 = vcmp.lt.s32.totalorder %v1718, 0
    %vm2117 = vcmp.lt.s32.totalorder %v1725, 0
    %vm2118 = vcmp.lt.s32.totalorder %v1732, 0
    %vm2119 = vcmp.lt.s32.totalorder %v1739, 0
    %vm2120 = vcmp.lt.s32.totalorder %v1746, 0
    %vm2121 = vcmp.lt.s32.totalorder %v1753, 0
    %vm2122 = vcmp.lt.s32.totalorder %v1760, 0
    %vm2123 = vcmp.lt.s32.totalorder %v1767, 0
    %vm2124 = vcmp.lt.s32.totalorder %v1774, 0
    %vm2125 = vcmp.lt.s32.totalorder %v1781, 0
    %vm2126 = vcmp.lt.s32.totalorder %v1788, 0
    %vm2127 = vcmp.lt.s32.totalorder %v1795, 0
    %vm2128 = vcmp.lt.s32.totalorder %v1802, 0
    %vm2129 = vcmp.lt.s32.totalorder %v1809, 0
    %vm2130 = vcmp.lt.s32.totalorder %v1816, 0
    %vm2131 = vcmp.lt.s32.totalorder %v1823, 0
    %vm2132 = vcmp.lt.s32.totalorder %v1830, 0
    %vm2133 = vcmp.lt.s32.totalorder %v1837, 0
    %vm2134 = vcmp.lt.s32.totalorder %v1844, 0
    %vm2135 = vcmp.lt.s32.totalorder %v1851, 0
    %vm2136 = vcmp.lt.s32.totalorder %v1858, 0
    %vm2137 = vcmp.lt.s32.totalorder %v1865, 0
    %vm2138 = vcmp.lt.s32.totalorder %v1872, 0
    %vm2139 = vcmp.lt.s32.totalorder %v1879, 0
    %vm2140 = vcmp.lt.s32.totalorder %v1886, 0
    %vm2141 = vcmp.lt.s32.totalorder %v1893, 0
    %vm2142 = vcmp.lt.s32.totalorder %v1900, 0
    %vm2143 = vcmp.lt.s32.totalorder %v1907, 0
    %vm2144 = vcmp.lt.s32.totalorder %v1914, 0
    %vm2145 = vcmp.lt.s32.totalorder %v1921, 0
    %vm2146 = vcmp.lt.s32.totalorder %v1928, 0
    %vm2147 = vcmp.lt.s32.totalorder %v1935, 0
    %vm2148 = vcmp.lt.s32.totalorder %v1942, 0
    %vm2149 = vcmp.lt.s32.totalorder %v1949, 0
    %vm2150 = vcmp.lt.s32.totalorder %v1956, 0
    %vm2151 = vcmp.lt.s32.totalorder %v1963, 0
    %vm2152 = vcmp.lt.s32.totalorder %v1970, 0
    %vm2153 = vcmp.lt.s32.totalorder %v1977, 0
    %vm2154 = vcmp.lt.s32.totalorder %v1984, 0
    %vm2155 = vcmp.lt.s32.totalorder %v1991, 0
    %vm2156 = vcmp.lt.s32.totalorder %v1998, 0
    %vm2157 = vcmp.lt.s32.totalorder %v2005, 0
    %vm2158 = vcmp.lt.s32.totalorder %v2012, 0
    %vm2159 = vcmp.lt.s32.totalorder %v2019, 0
    %vm2160 = vcmp.lt.s32.totalorder %v2026, 0
    %vm2161 = vcmp.lt.s32.totalorder %v2033, 0
    %vm2162 = vmand %vm2098, %vm2034
    %vm2163 = vmand %vm2099, %vm2035
    %vm2164 = vmand %vm2100, %vm2036
    %vm2165 = vmand %vm2101, %vm2037
    %vm2166 = vmand %vm2102, %vm2038
    %vm2167 = vmand %vm2103, %vm2039
    %vm2168 = vmand %vm2104, %vm2040
    %vm2169 = vmand %vm2105, %vm2041
    %vm2170 = vmand %vm2106, %vm2042
    %vm2171 = vmand %vm2107, %vm2043
    %vm2172 = vmand %vm2108, %vm2044
    %vm2173 = vmand %vm2109, %vm2045
    %vm2174 = vmand %vm2110, %vm2046
    %vm2175 = vmand %vm2111, %vm2047
    %vm2176 = vmand %vm2112, %vm2048
    %vm2177 = vmand %vm2113, %vm2049
    %vm2178 = vmand %vm2114, %vm2050
    %vm2179 = vmand %vm2115, %vm2051
    %vm2180 = vmand %vm2116, %vm2052
    %vm2181 = vmand %vm2117, %vm2053
    %vm2182 = vmand %vm2118, %vm2054
    %vm2183 = vmand %vm2119, %vm2055
    %vm2184 = vmand %vm2120, %vm2056
    %vm2185 = vmand %vm2121, %vm2057
    %vm2186 = vmand %vm2122, %vm2058
    %vm2187 = vmand %vm2123, %vm2059
    %vm2188 = vmand %vm2124, %vm2060
    %vm2189 = vmand %vm2125, %vm2061
    %vm2190 = vmand %vm2126, %vm2062
    %vm2191 = vmand %vm2127, %vm2063
    %vm2192 = vmand %vm2128, %vm2064
    %vm2193 = vmand %vm2129, %vm2065
    %vm2194 = vmand %vm2130, %vm2066
    %vm2195 = vmand %vm2131, %vm2067
    %vm2196 = vmand %vm2132, %vm2068
    %vm2197 = vmand %vm2133, %vm2069
    %vm2198 = vmand %vm2134, %vm2070
    %vm2199 = vmand %vm2135, %vm2071
    %vm2200 = vmand %vm2136, %vm2072
    %vm2201 = vmand %vm2137, %vm2073
    %vm2202 = vmand %vm2138, %vm2074
    %vm2203 = vmand %vm2139, %vm2075
    %vm2204 = vmand %vm2140, %vm2076
    %vm2205 = vmand %vm2141, %vm2077
    %vm2206 = vmand %vm2142, %vm2078
    %vm2207 = vmand %vm2143, %vm2079
    %vm2208 = vmand %vm2144, %vm2080
    %vm2209 = vmand %vm2145, %vm2081
    %vm2210 = vmand %vm2146, %vm2082
    %vm2211 = vmand %vm2147, %vm2083
    %vm2212 = vmand %vm2148, %vm2084
    %vm2213 = vmand %vm2149, %vm2085
    %vm2214 = vmand %vm2150, %vm2086
    %vm2215 = vmand %vm2151, %vm2087
    %vm2216 = vmand %vm2152, %vm2088
    %vm2217 = vmand %vm2153, %vm2089
    %vm2218 = vmand %vm2154, %vm2090
    %vm2219 = vmand %vm2155, %vm2091
    %vm2220 = vmand %vm2156, %vm2092
    %vm2221 = vmand %vm2157, %vm2093
    %vm2222 = vmand %vm2158, %vm2094
    %vm2223 = vmand %vm2159, %vm2095
    %vm2224 = vmand %vm2160, %vm2096
    %vm2225 = vmand %vm2161, %vm2097
    %v2226 = vadd.s32 %v1592, 16
    %v2227 = vadd.s32 %v1599, 16
    %v2228 = vadd.s32 %v1606, 16
    %v2229 = vadd.s32 %v1613, 16
    %v2230 = vadd.s32 %v1620, 16
    %v2231 = vadd.s32 %v1627, 16
    %v2232 = vadd.s32 %v1634, 16
    %v2233 = vadd.s32 %v1641, 16
    %v2234 = vadd.s32 %v1648, 16
    %v2235 = vadd.s32 %v1655, 16
    %v2236 = vadd.s32 %v1662, 16
    %v2237 = vadd.s32 %v1669, 16
    %v2238 = vadd.s32 %v1676, 16
    %v2239 = vadd.s32 %v1683, 16
    %v2240 = vadd.s32 %v1690, 16
    %v2241 = vadd.s32 %v1697, 16
    %v2242 = vadd.s32 %v1704, 16
    %v2243 = vadd.s32 %v1711, 16
    %v2244 = vadd.s32 %v1718, 16
    %v2245 = vadd.s32 %v1725, 16
    %v2246 = vadd.s32 %v1732, 16
    %v2247 = vadd.s32 %v1739, 16
    %v2248 = vadd.s32 %v1746, 16
    %v2249 = vadd.s32 %v1753, 16
    %v2250 = vadd.s32 %v1760, 16
    %v2251 = vadd.s32 %v1767, 16
    %v2252 = vadd.s32 %v1774, 16
    %v2253 = vadd.s32 %v1781, 16
    %v2254 = vadd.s32 %v1788, 16
    %v2255 = vadd.s32 %v1795, 16
    %v2256 = vadd.s32 %v1802, 16
    %v2257 = vadd.s32 %v1809, 16
    %v2258 = vadd.s32 %v1816, 16
    %v2259 = vadd.s32 %v1823, 16
    %v2260 = vadd.s32 %v1830, 16
    %v2261 = vadd.s32 %v1837, 16
    %v2262 = vadd.s32 %v1844, 16
    %v2263 = vadd.s32 %v1851, 16
    %v2264 = vadd.s32 %v1858, 16
    %v2265 = vadd.s32 %v1865, 16
    %v2266 = vadd.s32 %v1872, 16
    %v2267 = vadd.s32 %v1879, 16
    %v2268 = vadd.s32 %v1886, 16
    %v2269 = vadd.s32 %v1893, 16
    %v2270 = vadd.s32 %v1900, 16
    %v2271 = vadd.s32 %v1907, 16
    %v2272 = vadd.s32 %v1914, 16
    %v2273 = vadd.s32 %v1921, 16
    %v2274 = vadd.s32 %v1928, 16
    %v2275 = vadd.s32 %v1935, 16
    %v2276 = vadd.s32 %v1942, 16
    %v2277 = vadd.s32 %v1949, 16
    %v2278 = vadd.s32 %v1956, 16
    %v2279 = vadd.s32 %v1963, 16
    %v2280 = vadd.s32 %v1970, 16
    %v2281 = vadd.s32 %v1977, 16
    %v2282 = vadd.s32 %v1984, 16
    %v2283 = vadd.s32 %v1991, 16
    %v2284 = vadd.s32 %v1998, 16
    %v2285 = vadd.s32 %v2005, 16
    %v2286 = vadd.s32 %v2012, 16
    %v2287 = vadd.s32 %v2019, 16
    %v2288 = vadd.s32 %v2026, 16
    %v2289 = vadd.s32 %v2033, 16
    %v2290 = vsel %vm2162, %v2226, %v1592
    %v2291 = vsel %vm2163, %v2227, %v1599
    %v2292 = vsel %vm2164, %v2228, %v1606
    %v2293 = vsel %vm2165, %v2229, %v1613
    %v2294 = vsel %vm2166, %v2230, %v1620
    %v2295 = vsel %vm2167, %v2231, %v1627
    %v2296 = vsel %vm2168, %v2232, %v1634
    %v2297 = vsel %vm2169, %v2233, %v1641
    %v2298 = vsel %vm2170, %v2234, %v1648
    %v2299 = vsel %vm2171, %v2235, %v1655
    %v2300 = vsel %vm2172, %v2236, %v1662
    %v2301 = vsel %vm2173, %v2237, %v1669
    %v2302 = vsel %vm2174, %v2238, %v1676
    %v2303 = vsel %vm2175, %v2239, %v1683
    %v2304 = vsel %vm2176, %v2240, %v1690
    %v2305 = vsel %vm2177, %v2241, %v1697
    %v2306 = vsel %vm2178, %v2242, %v1704
    %v2307 = vsel %vm2179, %v2243, %v1711
    %v2308 = vsel %vm2180, %v2244, %v1718
    %v2309 = vsel %vm2181, %v2245, %v1725
    %v2310 = vsel %vm2182, %v2246, %v1732
    %v2311 = vsel %vm2183, %v2247, %v1739
    %v2312 = vsel %vm2184, %v2248, %v1746
    %v2313 = vsel %vm2185, %v2249, %v1753
    %v2314 = vsel %vm2186, %v2250, %v1760
    %v2315 = vsel %vm2187, %v2251, %v1767
    %v2316 = vsel %vm2188, %v2252, %v1774
    %v2317 = vsel %vm2189, %v2253, %v1781
    %v2318 = vsel %vm2190, %v2254, %v1788
    %v2319 = vsel %vm2191, %v2255, %v1795
    %v2320 = vsel %vm2192, %v2256, %v1802
    %v2321 = vsel %vm2193, %v2257, %v1809
    %v2322 = vsel %vm2194, %v2258, %v1816
    %v2323 = vsel %vm2195, %v2259, %v1823
    %v2324 = vsel %vm2196, %v2260, %v1830
    %v2325 = vsel %vm2197, %v2261, %v1837
    %v2326 = vsel %vm2198, %v2262, %v1844
    %v2327 = vsel %vm2199, %v2263, %v1851
    %v2328 = vsel %vm2200, %v2264, %v1858
    %v2329 = vsel %vm2201, %v2265, %v1865
    %v2330 = vsel %vm2202, %v2266, %v1872
    %v2331 = vsel %vm2203, %v2267, %v1879
    %v2332 = vsel %vm2204, %v2268, %v1886
    %v2333 = vsel %vm2205, %v2269, %v1893
    %v2334 = vsel %vm2206, %v2270, %v1900
    %v2335 = vsel %vm2207, %v2271, %v1907
    %v2336 = vsel %vm2208, %v2272, %v1914
    %v2337 = vsel %vm2209, %v2273, %v1921
    %v2338 = vsel %vm2210, %v2274, %v1928
    %v2339 = vsel %vm2211, %v2275, %v1935
    %v2340 = vsel %vm2212, %v2276, %v1942
    %v2341 = vsel %vm2213, %v2277, %v1949
    %v2342 = vsel %vm2214, %v2278, %v1956
    %v2343 = vsel %vm2215, %v2279, %v1963
    %v2344 = vsel %vm2216, %v2280, %v1970
    %v2345 = vsel %vm2217, %v2281, %v1977
    %v2346 = vsel %vm2218, %v2282, %v1984
    %v2347 = vsel %vm2219, %v2283, %v1991
    %v2348 = vsel %vm2220, %v2284, %v1998
    %v2349 = vsel %vm2221, %v2285, %v2005
    %v2350 = vsel %vm2222, %v2286, %v2012
    %v2351 = vsel %vm2223, %v2287, %v2019
    %v2352 = vsel %vm2224, %v2288, %v2026
    %v2353 = vsel %vm2225, %v2289, %v2033
    %v2354 = vld [vmem:[#allocation2] sm:$0x80]
    %v2355 = vld [vmem:[#allocation2 + $0x8] sm:$0xff]
    %v2356 = vld [vmem:[#allocation2 + $0x10] sm:$0xff]
    %v2357 = vld [vmem:[#allocation2 + $0x18] sm:$0xff]
    %v2358 = vld [vmem:[#allocation2 + $0x20] sm:$0xff]
    %v2359 = vld [vmem:[#allocation2 + $0x28] sm:$0xff]
    %v2360 = vld [vmem:[#allocation2 + $0x30] sm:$0xff]
    %v2361 = vld [vmem:[#allocation2 + $0x38] sm:$0xff]
    %v2362 = vld [vmem:[#allocation2 + $0x40] sm:$0xff]
    %v2363 = vld [vmem:[#allocation2 + $0x48] sm:$0xff]
    %v2364 = vld [vmem:[#allocation2 + $0x50] sm:$0xff]
    %v2365 = vld [vmem:[#allocation2 + $0x58] sm:$0xff]
    %v2366 = vld [vmem:[#allocation2 + $0x60] sm:$0xff]
    %v2367 = vld [vmem:[#allocation2 + $0x68] sm:$0xff]
    %v2368 = vld [vmem:[#allocation2 + $0x70] sm:$0xff]
    %v2369 = vld [vmem:[#allocation2 + $0x78] sm:$0xff]
    %v2370 = vld [vmem:[#allocation2 + $0x80] sm:$0xff]
    %v2371 = vld [vmem:[#allocation2 + $0x88] sm:$0xff]
    %v2372 = vld [vmem:[#allocation2 + $0x90] sm:$0xff]
    %v2373 = vld [vmem:[#allocation2 + $0x98] sm:$0xff]
    %v2374 = vld [vmem:[#allocation2 + $0xa0] sm:$0xff]
    %v2375 = vld [vmem:[#allocation2 + $0xa8] sm:$0xff]
    %v2376 = vld [vmem:[#allocation2 + $0xb0] sm:$0xff]
    %v2377 = vld [vmem:[#allocation2 + $0xb8] sm:$0xff]
    %v2378 = vld [vmem:[#allocation2 + $0xc0] sm:$0xff]
    %v2379 = vld [vmem:[#allocation2 + $0xc8] sm:$0xff]
    %v2380 = vld [vmem:[#allocation2 + $0xd0] sm:$0xff]
    %v2381 = vld [vmem:[#allocation2 + $0xd8] sm:$0xff]
    %v2382 = vld [vmem:[#allocation2 + $0xe0] sm:$0xff]
    %v2383 = vld [vmem:[#allocation2 + $0xe8] sm:$0xff]
    %v2384 = vld [vmem:[#allocation2 + $0xf0] sm:$0xff]
    %v2385 = vld [vmem:[#allocation2 + $0xf8] sm:$0xff]
    %v2386 = vld [vmem:[#allocation2 + $0x100] sm:$0xff]
    %v2387 = vld [vmem:[#allocation2 + $0x108] sm:$0x1]
    %vm2388 = vcmp.eq.s32.totalorder %v2290, 0
    %vm2389 = vcmp.eq.s32.totalorder %v2291, 0
    %vm2390 = vcmp.eq.s32.totalorder %v2292, 0
    %vm2391 = vcmp.eq.s32.totalorder %v2293, 0
    %vm2392 = vcmp.eq.s32.totalorder %v2294, 0
    %vm2393 = vcmp.eq.s32.totalorder %v2295, 0
    %vm2394 = vcmp.eq.s32.totalorder %v2296, 0
    %vm2395 = vcmp.eq.s32.totalorder %v2297, 0
    %vm2396 = vcmp.eq.s32.totalorder %v2298, 0
    %vm2397 = vcmp.eq.s32.totalorder %v2299, 0
    %vm2398 = vcmp.eq.s32.totalorder %v2300, 0
    %vm2399 = vcmp.eq.s32.totalorder %v2301, 0
    %vm2400 = vcmp.eq.s32.totalorder %v2302, 0
    %vm2401 = vcmp.eq.s32.totalorder %v2303, 0
    %vm2402 = vcmp.eq.s32.totalorder %v2304, 0
    %vm2403 = vcmp.eq.s32.totalorder %v2305, 0
    %vm2404 = vcmp.eq.s32.totalorder %v2306, 0
    %vm2405 = vcmp.eq.s32.totalorder %v2307, 0
    %vm2406 = vcmp.eq.s32.totalorder %v2308, 0
    %vm2407 = vcmp.eq.s32.totalorder %v2309, 0
    %vm2408 = vcmp.eq.s32.totalorder %v2310, 0
    %vm2409 = vcmp.eq.s32.totalorder %v2311, 0
    %vm2410 = vcmp.eq.s32.totalorder %v2312, 0
    %vm2411 = vcmp.eq.s32.totalorder %v2313, 0
    %vm2412 = vcmp.eq.s32.totalorder %v2314, 0
    %vm2413 = vcmp.eq.s32.totalorder %v2315, 0
    %vm2414 = vcmp.eq.s32.totalorder %v2316, 0
    %vm2415 = vcmp.eq.s32.totalorder %v2317, 0
    %vm2416 = vcmp.eq.s32.totalorder %v2318, 0
    %vm2417 = vcmp.eq.s32.totalorder %v2319, 0
    %vm2418 = vcmp.eq.s32.totalorder %v2320, 0
    %vm2419 = vcmp.eq.s32.totalorder %v2321, 0
    %vm2420 = vcmp.eq.s32.totalorder %v2322, 0
    %vm2421 = vcmp.eq.s32.totalorder %v2323, 0
    %vm2422 = vcmp.eq.s32.totalorder %v2324, 0
    %vm2423 = vcmp.eq.s32.totalorder %v2325, 0
    %vm2424 = vcmp.eq.s32.totalorder %v2326, 0
    %vm2425 = vcmp.eq.s32.totalorder %v2327, 0
    %vm2426 = vcmp.eq.s32.totalorder %v2328, 0
    %vm2427 = vcmp.eq.s32.totalorder %v2329, 0
    %vm2428 = vcmp.eq.s32.totalorder %v2330, 0
    %vm2429 = vcmp.eq.s32.totalorder %v2331, 0
    %vm2430 = vcmp.eq.s32.totalorder %v2332, 0
    %vm2431 = vcmp.eq.s32.totalorder %v2333, 0
    %vm2432 = vcmp.eq.s32.totalorder %v2334, 0
    %vm2433 = vcmp.eq.s32.totalorder %v2335, 0
    %vm2434 = vcmp.eq.s32.totalorder %v2336, 0
    %vm2435 = vcmp.eq.s32.totalorder %v2337, 0
    %vm2436 = vcmp.eq.s32.totalorder %v2338, 0
    %vm2437 = vcmp.eq.s32.totalorder %v2339, 0
    %vm2438 = vcmp.eq.s32.totalorder %v2340, 0
    %vm2439 = vcmp.eq.s32.totalorder %v2341, 0
    %vm2440 = vcmp.eq.s32.totalorder %v2342, 0
    %vm2441 = vcmp.eq.s32.totalorder %v2343, 0
    %vm2442 = vcmp.eq.s32.totalorder %v2344, 0
    %vm2443 = vcmp.eq.s32.totalorder %v2345, 0
    %vm2444 = vcmp.eq.s32.totalorder %v2346, 0
    %vm2445 = vcmp.eq.s32.totalorder %v2347, 0
    %vm2446 = vcmp.eq.s32.totalorder %v2348, 0
    %vm2447 = vcmp.eq.s32.totalorder %v2349, 0
    %vm2448 = vcmp.eq.s32.totalorder %v2350, 0
    %vm2449 = vcmp.eq.s32.totalorder %v2351, 0
    %vm2450 = vcmp.eq.s32.totalorder %v2352, 0
    %vm2451 = vcmp.eq.s32.totalorder %v2353, 0
    %v2452 = vsel %vm2388, 1, 0
    %v2453 = vsel %vm2389, 1, 0
    %v2454 = vsel %vm2390, 1, 0
    %v2455 = vsel %vm2391, 1, 0
    %v2456 = vsel %vm2392, 1, 0
    %v2457 = vsel %vm2393, 1, 0
    %v2458 = vsel %vm2394, 1, 0
    %v2459 = vsel %vm2395, 1, 0
    %v2460 = vsel %vm2396, 1, 0
    %v2461 = vsel %vm2397, 1, 0
    %v2462 = vsel %vm2398, 1, 0
    %v2463 = vsel %vm2399, 1, 0
    %v2464 = vsel %vm2400, 1, 0
    %v2465 = vsel %vm2401, 1, 0
    %v2466 = vsel %vm2402, 1, 0
    %v2467 = vsel %vm2403, 1, 0
    %v2468 = vsel %vm2404, 1, 0
    %v2469 = vsel %vm2405, 1, 0
    %v2470 = vsel %vm2406, 1, 0
    %v2471 = vsel %vm2407, 1, 0
    %v2472 = vsel %vm2408, 1, 0
    %v2473 = vsel %vm2409, 1, 0
    %v2474 = vsel %vm2410, 1, 0
    %v2475 = vsel %vm2411, 1, 0
    %v2476 = vsel %vm2412, 1, 0
    %v2477 = vsel %vm2413, 1, 0
    %v2478 = vsel %vm2414, 1, 0
    %v2479 = vsel %vm2415, 1, 0
    %v2480 = vsel %vm2416, 1, 0
    %v2481 = vsel %vm2417, 1, 0
    %v2482 = vsel %vm2418, 1, 0
    %v2483 = vsel %vm2419, 1, 0
    %v2484 = vsel %vm2420, 1, 0
    %v2485 = vsel %vm2421, 1, 0
    %v2486 = vsel %vm2422, 1, 0
    %v2487 = vsel %vm2423, 1, 0
    %v2488 = vsel %vm2424, 1, 0
    %v2489 = vsel %vm2425, 1, 0
    %v2490 = vsel %vm2426, 1, 0
    %v2491 = vsel %vm2427, 1, 0
    %v2492 = vsel %vm2428, 1, 0
    %v2493 = vsel %vm2429, 1, 0
    %v2494 = vsel %vm2430, 1, 0
    %v2495 = vsel %vm2431, 1, 0
    %v2496 = vsel %vm2432, 1, 0
    %v2497 = vsel %vm2433, 1, 0
    %v2498 = vsel %vm2434, 1, 0
    %v2499 = vsel %vm2435, 1, 0
    %v2500 = vsel %vm2436, 1, 0
    %v2501 = vsel %vm2437, 1, 0
    %v2502 = vsel %vm2438, 1, 0
    %v2503 = vsel %vm2439, 1, 0
    %v2504 = vsel %vm2440, 1, 0
    %v2505 = vsel %vm2441, 1, 0
    %v2506 = vsel %vm2442, 1, 0
    %v2507 = vsel %vm2443, 1, 0
    %v2508 = vsel %vm2444, 1, 0
    %v2509 = vsel %vm2445, 1, 0
    %v2510 = vsel %vm2446, 1, 0
    %v2511 = vsel %vm2447, 1, 0
    %v2512 = vsel %vm2448, 1, 0
    %v2513 = vsel %vm2449, 1, 0
    %v2514 = vsel %vm2450, 1, 0
    %v2515 = vsel %vm2451, 1, 0
    %vm2516 = vcmp.eq.s32.totalorder %v2452, 1
    %vm2517 = vcmp.eq.s32.totalorder %v2453, 1
    %vm2518 = vcmp.eq.s32.totalorder %v2454, 1
    %vm2519 = vcmp.eq.s32.totalorder %v2455, 1
    %vm2520 = vcmp.eq.s32.totalorder %v2456, 1
    %vm2521 = vcmp.eq.s32.totalorder %v2457, 1
    %vm2522 = vcmp.eq.s32.totalorder %v2458, 1
    %vm2523 = vcmp.eq.s32.totalorder %v2459, 1
    %vm2524 = vcmp.eq.s32.totalorder %v2460, 1
    %vm2525 = vcmp.eq.s32.totalorder %v2461, 1
    %vm2526 = vcmp.eq.s32.totalorder %v2462, 1
    %vm2527 = vcmp.eq.s32.totalorder %v2463, 1
    %vm2528 = vcmp.eq.s32.totalorder %v2464, 1
    %vm2529 = vcmp.eq.s32.totalorder %v2465, 1
    %vm2530 = vcmp.eq.s32.totalorder %v2466, 1
    %vm2531 = vcmp.eq.s32.totalorder %v2467, 1
    %vm2532 = vcmp.eq.s32.totalorder %v2468, 1
    %vm2533 = vcmp.eq.s32.totalorder %v2469, 1
    %vm2534 = vcmp.eq.s32.totalorder %v2470, 1
    %vm2535 = vcmp.eq.s32.totalorder %v2471, 1
    %vm2536 = vcmp.eq.s32.totalorder %v2472, 1
    %vm2537 = vcmp.eq.s32.totalorder %v2473, 1
    %vm2538 = vcmp.eq.s32.totalorder %v2474, 1
    %vm2539 = vcmp.eq.s32.totalorder %v2475, 1
    %vm2540 = vcmp.eq.s32.totalorder %v2476, 1
    %vm2541 = vcmp.eq.s32.totalorder %v2477, 1
    %vm2542 = vcmp.eq.s32.totalorder %v2478, 1
    %vm2543 = vcmp.eq.s32.totalorder %v2479, 1
    %vm2544 = vcmp.eq.s32.totalorder %v2480, 1
    %vm2545 = vcmp.eq.s32.totalorder %v2481, 1
    %vm2546 = vcmp.eq.s32.totalorder %v2482, 1
    %vm2547 = vcmp.eq.s32.totalorder %v2483, 1
    %vm2548 = vcmp.eq.s32.totalorder %v2484, 1
    %vm2549 = vcmp.eq.s32.totalorder %v2485, 1
    %vm2550 = vcmp.eq.s32.totalorder %v2486, 1
    %vm2551 = vcmp.eq.s32.totalorder %v2487, 1
    %vm2552 = vcmp.eq.s32.totalorder %v2488, 1
    %vm2553 = vcmp.eq.s32.totalorder %v2489, 1
    %vm2554 = vcmp.eq.s32.totalorder %v2490, 1
    %vm2555 = vcmp.eq.s32.totalorder %v2491, 1
    %vm2556 = vcmp.eq.s32.totalorder %v2492, 1
    %vm2557 = vcmp.eq.s32.totalorder %v2493, 1
    %vm2558 = vcmp.eq.s32.totalorder %v2494, 1
    %vm2559 = vcmp.eq.s32.totalorder %v2495, 1
    %vm2560 = vcmp.eq.s32.totalorder %v2496, 1
    %vm2561 = vcmp.eq.s32.totalorder %v2497, 1
    %vm2562 = vcmp.eq.s32.totalorder %v2498, 1
    %vm2563 = vcmp.eq.s32.totalorder %v2499, 1
    %vm2564 = vcmp.eq.s32.totalorder %v2500, 1
    %vm2565 = vcmp.eq.s32.totalorder %v2501, 1
    %vm2566 = vcmp.eq.s32.totalorder %v2502, 1
    %vm2567 = vcmp.eq.s32.totalorder %v2503, 1
    %vm2568 = vcmp.eq.s32.totalorder %v2504, 1
    %vm2569 = vcmp.eq.s32.totalorder %v2505, 1
    %vm2570 = vcmp.eq.s32.totalorder %v2506, 1
    %vm2571 = vcmp.eq.s32.totalorder %v2507, 1
    %vm2572 = vcmp.eq.s32.totalorder %v2508, 1
    %vm2573 = vcmp.eq.s32.totalorder %v2509, 1
    %vm2574 = vcmp.eq.s32.totalorder %v2510, 1
    %vm2575 = vcmp.eq.s32.totalorder %v2511, 1
    %vm2576 = vcmp.eq.s32.totalorder %v2512, 1
    %vm2577 = vcmp.eq.s32.totalorder %v2513, 1
    %vm2578 = vcmp.eq.s32.totalorder %v2514, 1
    %vm2579 = vcmp.eq.s32.totalorder %v2515, 1
    %vm2580 = vmpackc.low %vm2516, %vm2516
    %vm2581 = vmpackc.low %vm2517, %vm2517
    %vm2582 = vmpackc.low %vm2518, %vm2518
    %vm2583 = vmpackc.low %vm2519, %vm2519
    %vm2584 = vmpackc.low %vm2520, %vm2520
    %vm2585 = vmpackc.low %vm2521, %vm2521
    %vm2586 = vmpackc.low %vm2522, %vm2522
    %vm2587 = vmpackc.low %vm2523, %vm2523
    %vm2588 = vmpackc.low %vm2524, %vm2524
    %vm2589 = vmpackc.low %vm2525, %vm2525
    %vm2590 = vmpackc.low %vm2526, %vm2526
    %vm2591 = vmpackc.low %vm2527, %vm2527
    %vm2592 = vmpackc.low %vm2528, %vm2528
    %vm2593 = vmpackc.low %vm2529, %vm2529
    %vm2594 = vmpackc.low %vm2530, %vm2530
    %vm2595 = vmpackc.low %vm2531, %vm2531
    %vm2596 = vmpackc.low %vm2532, %vm2532
    %vm2597 = vmpackc.low %vm2533, %vm2533
    %vm2598 = vmpackc.low %vm2534, %vm2534
    %vm2599 = vmpackc.low %vm2535, %vm2535
    %vm2600 = vmpackc.low %vm2536, %vm2536
    %vm2601 = vmpackc.low %vm2537, %vm2537
    %vm2602 = vmpackc.low %vm2538, %vm2538
    %vm2603 = vmpackc.low %vm2539, %vm2539
    %vm2604 = vmpackc.low %vm2540, %vm2540
    %vm2605 = vmpackc.low %vm2541, %vm2541
    %vm2606 = vmpackc.low %vm2542, %vm2542
    %vm2607 = vmpackc.low %vm2543, %vm2543
    %vm2608 = vmpackc.low %vm2544, %vm2544
    %vm2609 = vmpackc.low %vm2545, %vm2545
    %vm2610 = vmpackc.low %vm2546, %vm2546
    %vm2611 = vmpackc.low %vm2547, %vm2547
    %vm2612 = vmpackc.low %vm2548, %vm2548
    %vm2613 = vmpackc.low %vm2549, %vm2549
    %vm2614 = vmpackc.low %vm2550, %vm2550
    %vm2615 = vmpackc.low %vm2551, %vm2551
    %vm2616 = vmpackc.low %vm2552, %vm2552
    %vm2617 = vmpackc.low %vm2553, %vm2553
    %vm2618 = vmpackc.low %vm2554, %vm2554
    %vm2619 = vmpackc.low %vm2555, %vm2555
    %vm2620 = vmpackc.low %vm2556, %vm2556
    %vm2621 = vmpackc.low %vm2557, %vm2557
    %vm2622 = vmpackc.low %vm2558, %vm2558
    %vm2623 = vmpackc.low %vm2559, %vm2559
    %vm2624 = vmpackc.low %vm2560, %vm2560
    %vm2625 = vmpackc.low %vm2561, %vm2561
    %vm2626 = vmpackc.low %vm2562, %vm2562
    %vm2627 = vmpackc.low %vm2563, %vm2563
    %vm2628 = vmpackc.low %vm2564, %vm2564
    %vm2629 = vmpackc.low %vm2565, %vm2565
    %vm2630 = vmpackc.low %vm2566, %vm2566
    %vm2631 = vmpackc.low %vm2567, %vm2567
    %vm2632 = vmpackc.low %vm2568, %vm2568
    %vm2633 = vmpackc.low %vm2569, %vm2569
    %vm2634 = vmpackc.low %vm2570, %vm2570
    %vm2635 = vmpackc.low %vm2571, %vm2571
    %vm2636 = vmpackc.low %vm2572, %vm2572
    %vm2637 = vmpackc.low %vm2573, %vm2573
    %vm2638 = vmpackc.low %vm2574, %vm2574
    %vm2639 = vmpackc.low %vm2575, %vm2575
    %vm2640 = vmpackc.low %vm2576, %vm2576
    %vm2641 = vmpackc.low %vm2577, %vm2577
    %vm2642 = vmpackc.low %vm2578, %vm2578
    %vm2643 = vmpackc.low %vm2579, %vm2579
    %v2644 = vsel %vm2580, 65537, 0
    %v2645 = vsel %vm2581, 65537, 0
    %v2646 = vsel %vm2582, 65537, 0
    %v2647 = vsel %vm2583, 65537, 0
    %v2648 = vsel %vm2584, 65537, 0
    %v2649 = vsel %vm2585, 65537, 0
    %v2650 = vsel %vm2586, 65537, 0
    %v2651 = vsel %vm2587, 65537, 0
    %v2652 = vsel %vm2588, 65537, 0
    %v2653 = vsel %vm2589, 65537, 0
    %v2654 = vsel %vm2590, 65537, 0
    %v2655 = vsel %vm2591, 65537, 0
    %v2656 = vsel %vm2592, 65537, 0
    %v2657 = vsel %vm2593, 65537, 0
    %v2658 = vsel %vm2594, 65537, 0
    %v2659 = vsel %vm2595, 65537, 0
    %v2660 = vsel %vm2596, 65537, 0
    %v2661 = vsel %vm2597, 65537, 0
    %v2662 = vsel %vm2598, 65537, 0
    %v2663 = vsel %vm2599, 65537, 0
    %v2664 = vsel %vm2600, 65537, 0
    %v2665 = vsel %vm2601, 65537, 0
    %v2666 = vsel %vm2602, 65537, 0
    %v2667 = vsel %vm2603, 65537, 0
    %v2668 = vsel %vm2604, 65537, 0
    %v2669 = vsel %vm2605, 65537, 0
    %v2670 = vsel %vm2606, 65537, 0
    %v2671 = vsel %vm2607, 65537, 0
    %v2672 = vsel %vm2608, 65537, 0
    %v2673 = vsel %vm2609, 65537, 0
    %v2674 = vsel %vm2610, 65537, 0
    %v2675 = vsel %vm2611, 65537, 0
    %v2676 = vsel %vm2612, 65537, 0
    %v2677 = vsel %vm2613, 65537, 0
    %v2678 = vsel %vm2614, 65537, 0
    %v2679 = vsel %vm2615, 65537, 0
    %v2680 = vsel %vm2616, 65537, 0
    %v2681 = vsel %vm2617, 65537, 0
    %v2682 = vsel %vm2618, 65537, 0
    %v2683 = vsel %vm2619, 65537, 0
    %v2684 = vsel %vm2620, 65537, 0
    %v2685 = vsel %vm2621, 65537, 0
    %v2686 = vsel %vm2622, 65537, 0
    %v2687 = vsel %vm2623, 65537, 0
    %v2688 = vsel %vm2624, 65537, 0
    %v2689 = vsel %vm2625, 65537, 0
    %v2690 = vsel %vm2626, 65537, 0
    %v2691 = vsel %vm2627, 65537, 0
    %v2692 = vsel %vm2628, 65537, 0
    %v2693 = vsel %vm2629, 65537, 0
    %v2694 = vsel %vm2630, 65537, 0
    %v2695 = vsel %vm2631, 65537, 0
    %v2696 = vsel %vm2632, 65537, 0
    %v2697 = vsel %vm2633, 65537, 0
    %v2698 = vsel %vm2634, 65537, 0
    %v2699 = vsel %vm2635, 65537, 0
    %v2700 = vsel %vm2636, 65537, 0
    %v2701 = vsel %vm2637, 65537, 0
    %v2702 = vsel %vm2638, 65537, 0
    %v2703 = vsel %vm2639, 65537, 0
    %v2704 = vsel %vm2640, 65537, 0
    %v2705 = vsel %vm2641, 65537, 0
    %v2706 = vsel %vm2642, 65537, 0
    %v2707 = vsel %vm2643, 65537, 0
    %v2708 = vunpack.c.l.b16 %v2644
    %v2709 = vunpack.c.l.b16 %v2645
    %v2710 = vunpack.c.l.b16 %v2646
    %v2711 = vunpack.c.l.b16 %v2647
    %v2712 = vunpack.c.l.b16 %v2648
    %v2713 = vunpack.c.l.b16 %v2649
    %v2714 = vunpack.c.l.b16 %v2650
    %v2715 = vunpack.c.l.b16 %v2651
    %v2716 = vunpack.c.l.b16 %v2652
    %v2717 = vunpack.c.l.b16 %v2653
    %v2718 = vunpack.c.l.b16 %v2654
    %v2719 = vunpack.c.l.b16 %v2655
    %v2720 = vunpack.c.l.b16 %v2656
    %v2721 = vunpack.c.l.b16 %v2657
    %v2722 = vunpack.c.l.b16 %v2658
    %v2723 = vunpack.c.l.b16 %v2659
    %v2724 = vunpack.c.l.b16 %v2660
    %v2725 = vunpack.c.l.b16 %v2661
    %v2726 = vunpack.c.l.b16 %v2662
    %v2727 = vunpack.c.l.b16 %v2663
    %v2728 = vunpack.c.l.b16 %v2664
    %v2729 = vunpack.c.l.b16 %v2665
    %v2730 = vunpack.c.l.b16 %v2666
    %v2731 = vunpack.c.l.b16 %v2667
    %v2732 = vunpack.c.l.b16 %v2668
    %v2733 = vunpack.c.l.b16 %v2669
    %v2734 = vunpack.c.l.b16 %v2670
    %v2735 = vunpack.c.l.b16 %v2671
    %v2736 = vunpack.c.l.b16 %v2672
    %v2737 = vunpack.c.l.b16 %v2673
    %v2738 = vunpack.c.l.b16 %v2674
    %v2739 = vunpack.c.l.b16 %v2675
    %v2740 = vunpack.c.l.b16 %v2676
    %v2741 = vunpack.c.l.b16 %v2677
    %v2742 = vunpack.c.l.b16 %v2678
    %v2743 = vunpack.c.l.b16 %v2679
    %v2744 = vunpack.c.l.b16 %v2680
    %v2745 = vunpack.c.l.b16 %v2681
    %v2746 = vunpack.c.l.b16 %v2682
    %v2747 = vunpack.c.l.b16 %v2683
    %v2748 = vunpack.c.l.b16 %v2684
    %v2749 = vunpack.c.l.b16 %v2685
    %v2750 = vunpack.c.l.b16 %v2686
    %v2751 = vunpack.c.l.b16 %v2687
    %v2752 = vunpack.c.l.b16 %v2688
    %v2753 = vunpack.c.l.b16 %v2689
    %v2754 = vunpack.c.l.b16 %v2690
    %v2755 = vunpack.c.l.b16 %v2691
    %v2756 = vunpack.c.l.b16 %v2692
    %v2757 = vunpack.c.l.b16 %v2693
    %v2758 = vunpack.c.l.b16 %v2694
    %v2759 = vunpack.c.l.b16 %v2695
    %v2760 = vunpack.c.l.b16 %v2696
    %v2761 = vunpack.c.l.b16 %v2697
    %v2762 = vunpack.c.l.b16 %v2698
    %v2763 = vunpack.c.l.b16 %v2699
    %v2764 = vunpack.c.l.b16 %v2700
    %v2765 = vunpack.c.l.b16 %v2701
    %v2766 = vunpack.c.l.b16 %v2702
    %v2767 = vunpack.c.l.b16 %v2703
    %v2768 = vunpack.c.l.b16 %v2704
    %v2769 = vunpack.c.l.b16 %v2705
    %v2770 = vunpack.c.l.b16 %v2706
    %v2771 = vunpack.c.l.b16 %v2707
    %v2772 = vpack.c.b16 %v2709, %v2708
    %v2773 = vpack.c.b16 %v2711, %v2710
    %v2774 = vpack.c.b16 %v2713, %v2712
    %v2775 = vpack.c.b16 %v2715, %v2714
    %v2776 = vpack.c.b16 %v2717, %v2716
    %v2777 = vpack.c.b16 %v2719, %v2718
    %v2778 = vpack.c.b16 %v2721, %v2720
    %v2779 = vpack.c.b16 %v2723, %v2722
    %v2780 = vpack.c.b16 %v2725, %v2724
    %v2781 = vpack.c.b16 %v2727, %v2726
    %v2782 = vpack.c.b16 %v2729, %v2728
    %v2783 = vpack.c.b16 %v2731, %v2730
    %v2784 = vpack.c.b16 %v2733, %v2732
    %v2785 = vpack.c.b16 %v2735, %v2734
    %v2786 = vpack.c.b16 %v2737, %v2736
    %v2787 = vpack.c.b16 %v2739, %v2738
    %v2788 = vpack.c.b16 %v2741, %v2740
    %v2789 = vpack.c.b16 %v2743, %v2742
    %v2790 = vpack.c.b16 %v2745, %v2744
    %v2791 = vpack.c.b16 %v2747, %v2746
    %v2792 = vpack.c.b16 %v2749, %v2748
    %v2793 = vpack.c.b16 %v2751, %v2750
    %v2794 = vpack.c.b16 %v2753, %v2752
    %v2795 = vpack.c.b16 %v2755, %v2754
    %v2796 = vpack.c.b16 %v2757, %v2756
    %v2797 = vpack.c.b16 %v2759, %v2758
    %v2798 = vpack.c.b16 %v2761, %v2760
    %v2799 = vpack.c.b16 %v2763, %v2762
    %v2800 = vpack.c.b16 %v2765, %v2764
    %v2801 = vpack.c.b16 %v2767, %v2766
    %v2802 = vpack.c.b16 %v2769, %v2768
    %v2803 = vpack.c.b16 %v2771, %v2770
    %vm2804 = vsmask.f32 7424
    %v2806 = vshll.u32 %v2772, 16
    %v2808 = vrot.slane %v2806, 1
    %v2809 = vshrl.u32 %v2772, 16
    %v2811 = vor.u32 %v2809, %v2808
    %v2813 = vshll.u32 %v2773, 16
    %v2815 = vrot.slane %v2813, 1
    %v2816 = vsel %vm2804, %v2811, %v2815
    %v2817 = vshrl.u32 %v2773, 16
    %v2819 = vor.u32 %v2817, %v2815
    %v2821 = vshll.u32 %v2774, 16
    %v2823 = vrot.slane %v2821, 1
    %v2824 = vsel %vm2804, %v2819, %v2823
    %v2825 = vshrl.u32 %v2774, 16
    %v2827 = vor.u32 %v2825, %v2823
    %v2829 = vshll.u32 %v2775, 16
    %v2831 = vrot.slane %v2829, 1
    %v2832 = vsel %vm2804, %v2827, %v2831
    %v2833 = vshrl.u32 %v2775, 16
    %v2835 = vor.u32 %v2833, %v2831
    %v2837 = vshll.u32 %v2776, 16
    %v2839 = vrot.slane %v2837, 1
    %v2840 = vsel %vm2804, %v2835, %v2839
    %v2841 = vshrl.u32 %v2776, 16
    %v2843 = vor.u32 %v2841, %v2839
    %v2845 = vshll.u32 %v2777, 16
    %v2847 = vrot.slane %v2845, 1
    %v2848 = vsel %vm2804, %v2843, %v2847
    %v2849 = vshrl.u32 %v2777, 16
    %v2851 = vor.u32 %v2849, %v2847
    %v2853 = vshll.u32 %v2778, 16
    %v2855 = vrot.slane %v2853, 1
    %v2856 = vsel %vm2804, %v2851, %v2855
    %v2857 = vshrl.u32 %v2778, 16
    %v2859 = vor.u32 %v2857, %v2855
    %v2861 = vshll.u32 %v2779, 16
    %v2863 = vrot.slane %v2861, 1
    %v2864 = vsel %vm2804, %v2859, %v2863
    %v2865 = vshrl.u32 %v2779, 16
    %v2867 = vor.u32 %v2865, %v2863
    %v2869 = vshll.u32 %v2780, 16
    %v2871 = vrot.slane %v2869, 1
    %v2872 = vsel %vm2804, %v2867, %v2871
    %v2873 = vshrl.u32 %v2780, 16
    %v2875 = vor.u32 %v2873, %v2871
    %v2877 = vshll.u32 %v2781, 16
    %v2879 = vrot.slane %v2877, 1
    %v2880 = vsel %vm2804, %v2875, %v2879
    %v2881 = vshrl.u32 %v2781, 16
    %v2883 = vor.u32 %v2881, %v2879
    %v2885 = vshll.u32 %v2782, 16
    %v2887 = vrot.slane %v2885, 1
    %v2888 = vsel %vm2804, %v2883, %v2887
    %v2889 = vshrl.u32 %v2782, 16
    %v2891 = vor.u32 %v2889, %v2887
    %v2893 = vshll.u32 %v2783, 16
    %v2895 = vrot.slane %v2893, 1
    %v2896 = vsel %vm2804, %v2891, %v2895
    %v2897 = vshrl.u32 %v2783, 16
    %v2899 = vor.u32 %v2897, %v2895
    %v2901 = vshll.u32 %v2784, 16
    %v2903 = vrot.slane %v2901, 1
    %v2904 = vsel %vm2804, %v2899, %v2903
    %v2905 = vshrl.u32 %v2784, 16
    %v2907 = vor.u32 %v2905, %v2903
    %v2909 = vshll.u32 %v2785, 16
    %v2911 = vrot.slane %v2909, 1
    %v2912 = vsel %vm2804, %v2907, %v2911
    %v2913 = vshrl.u32 %v2785, 16
    %v2915 = vor.u32 %v2913, %v2911
    %v2917 = vshll.u32 %v2786, 16
    %v2919 = vrot.slane %v2917, 1
    %v2920 = vsel %vm2804, %v2915, %v2919
    %v2921 = vshrl.u32 %v2786, 16
    %v2923 = vor.u32 %v2921, %v2919
    %v2925 = vshll.u32 %v2787, 16
    %v2927 = vrot.slane %v2925, 1
    %v2928 = vsel %vm2804, %v2923, %v2927
    %v2929 = vshrl.u32 %v2787, 16
    %v2931 = vor.u32 %v2929, %v2927
    %v2933 = vshll.u32 %v2788, 16
    %v2935 = vrot.slane %v2933, 1
    %v2936 = vsel %vm2804, %v2931, %v2935
    %v2937 = vshrl.u32 %v2788, 16
    %v2939 = vor.u32 %v2937, %v2935
    %v2941 = vshll.u32 %v2789, 16
    %v2943 = vrot.slane %v2941, 1
    %v2944 = vsel %vm2804, %v2939, %v2943
    %v2945 = vshrl.u32 %v2789, 16
    %v2947 = vor.u32 %v2945, %v2943
    %v2949 = vshll.u32 %v2790, 16
    %v2951 = vrot.slane %v2949, 1
    %v2952 = vsel %vm2804, %v2947, %v2951
    %v2953 = vshrl.u32 %v2790, 16
    %v2955 = vor.u32 %v2953, %v2951
    %v2957 = vshll.u32 %v2791, 16
    %v2959 = vrot.slane %v2957, 1
    %v2960 = vsel %vm2804, %v2955, %v2959
    %v2961 = vshrl.u32 %v2791, 16
    %v2963 = vor.u32 %v2961, %v2959
    %v2965 = vshll.u32 %v2792, 16
    %v2967 = vrot.slane %v2965, 1
    %v2968 = vsel %vm2804, %v2963, %v2967
    %v2969 = vshrl.u32 %v2792, 16
    %v2971 = vor.u32 %v2969, %v2967
    %v2973 = vshll.u32 %v2793, 16
    %v2975 = vrot.slane %v2973, 1
    %v2976 = vsel %vm2804, %v2971, %v2975
    %v2977 = vshrl.u32 %v2793, 16
    %v2979 = vor.u32 %v2977, %v2975
    %v2981 = vshll.u32 %v2794, 16
    %v2983 = vrot.slane %v2981, 1
    %v2984 = vsel %vm2804, %v2979, %v2983
    %v2985 = vshrl.u32 %v2794, 16
    %v2987 = vor.u32 %v2985, %v2983
    %v2989 = vshll.u32 %v2795, 16
    %v2991 = vrot.slane %v2989, 1
    %v2992 = vsel %vm2804, %v2987, %v2991
    %v2993 = vshrl.u32 %v2795, 16
    %v2995 = vor.u32 %v2993, %v2991
    %v2997 = vshll.u32 %v2796, 16
    %v2999 = vrot.slane %v2997, 1
    %v3000 = vsel %vm2804, %v2995, %v2999
    %v3001 = vshrl.u32 %v2796, 16
    %v3003 = vor.u32 %v3001, %v2999
    %v3005 = vshll.u32 %v2797, 16
    %v3007 = vrot.slane %v3005, 1
    %v3008 = vsel %vm2804, %v3003, %v3007
    %v3009 = vshrl.u32 %v2797, 16
    %v3011 = vor.u32 %v3009, %v3007
    %v3013 = vshll.u32 %v2798, 16
    %v3015 = vrot.slane %v3013, 1
    %v3016 = vsel %vm2804, %v3011, %v3015
    %v3017 = vshrl.u32 %v2798, 16
    %v3019 = vor.u32 %v3017, %v3015
    %v3021 = vshll.u32 %v2799, 16
    %v3023 = vrot.slane %v3021, 1
    %v3024 = vsel %vm2804, %v3019, %v3023
    %v3025 = vshrl.u32 %v2799, 16
    %v3027 = vor.u32 %v3025, %v3023
    %v3029 = vshll.u32 %v2800, 16
    %v3031 = vrot.slane %v3029, 1
    %v3032 = vsel %vm2804, %v3027, %v3031
    %v3033 = vshrl.u32 %v2800, 16
    %v3035 = vor.u32 %v3033, %v3031
    %v3037 = vshll.u32 %v2801, 16
    %v3039 = vrot.slane %v3037, 1
    %v3040 = vsel %vm2804, %v3035, %v3039
    %v3041 = vshrl.u32 %v2801, 16
    %v3043 = vor.u32 %v3041, %v3039
    %v3045 = vshll.u32 %v2802, 16
    %v3047 = vrot.slane %v3045, 1
    %v3048 = vsel %vm2804, %v3043, %v3047
    %v3049 = vshrl.u32 %v2802, 16
    %v3051 = vor.u32 %v3049, %v3047
    %v3053 = vshll.u32 %v2803, 16
    %v3055 = vrot.slane %v3053, 1
    %v3056 = vsel %vm2804, %v3051, %v3055
    %v3057 = vshrl.u32 %v2803, 16
    %v3059 = vor.u32 %v3057, %v3055
    %vm3060 = vcmp.ne.s16.totalorder %v2808, 0
    %vm3061 = vcmp.ne.s16.totalorder %v2816, 0
    %vm3062 = vcmp.ne.s16.totalorder %v2824, 0
    %vm3063 = vcmp.ne.s16.totalorder %v2832, 0
    %vm3064 = vcmp.ne.s16.totalorder %v2840, 0
    %vm3065 = vcmp.ne.s16.totalorder %v2848, 0
    %vm3066 = vcmp.ne.s16.totalorder %v2856, 0
    %vm3067 = vcmp.ne.s16.totalorder %v2864, 0
    %vm3068 = vcmp.ne.s16.totalorder %v2872, 0
    %vm3069 = vcmp.ne.s16.totalorder %v2880, 0
    %vm3070 = vcmp.ne.s16.totalorder %v2888, 0
    %vm3071 = vcmp.ne.s16.totalorder %v2896, 0
    %vm3072 = vcmp.ne.s16.totalorder %v2904, 0
    %vm3073 = vcmp.ne.s16.totalorder %v2912, 0
    %vm3074 = vcmp.ne.s16.totalorder %v2920, 0
    %vm3075 = vcmp.ne.s16.totalorder %v2928, 0
    %vm3076 = vcmp.ne.s16.totalorder %v2936, 0
    %vm3077 = vcmp.ne.s16.totalorder %v2944, 0
    %vm3078 = vcmp.ne.s16.totalorder %v2952, 0
    %vm3079 = vcmp.ne.s16.totalorder %v2960, 0
    %vm3080 = vcmp.ne.s16.totalorder %v2968, 0
    %vm3081 = vcmp.ne.s16.totalorder %v2976, 0
    %vm3082 = vcmp.ne.s16.totalorder %v2984, 0
    %vm3083 = vcmp.ne.s16.totalorder %v2992, 0
    %vm3084 = vcmp.ne.s16.totalorder %v3000, 0
    %vm3085 = vcmp.ne.s16.totalorder %v3008, 0
    %vm3086 = vcmp.ne.s16.totalorder %v3016, 0
    %vm3087 = vcmp.ne.s16.totalorder %v3024, 0
    %vm3088 = vcmp.ne.s16.totalorder %v3032, 0
    %vm3089 = vcmp.ne.s16.totalorder %v3040, 0
    %vm3090 = vcmp.ne.s16.totalorder %v3048, 0
    %vm3091 = vcmp.ne.s16.totalorder %v3056, 0
    %vm3092 = vcmp.ne.s16.totalorder %v3059, 0
    %v3093 = vsel %vm3060, 0, %v2354
    %v3094 = vsel %vm3061, 0, %v2355
    %v3095 = vsel %vm3062, 0, %v2356
    %v3096 = vsel %vm3063, 0, %v2357
    %v3097 = vsel %vm3064, 0, %v2358
    %v3098 = vsel %vm3065, 0, %v2359
    %v3099 = vsel %vm3066, 0, %v2360
    %v3100 = vsel %vm3067, 0, %v2361
    %v3101 = vsel %vm3068, 0, %v2362
    %v3102 = vsel %vm3069, 0, %v2363
    %v3103 = vsel %vm3070, 0, %v2364
    %v3104 = vsel %vm3071, 0, %v2365
    %v3105 = vsel %vm3072, 0, %v2366
    %v3106 = vsel %vm3073, 0, %v2367
    %v3107 = vsel %vm3074, 0, %v2368
    %v3108 = vsel %vm3075, 0, %v2369
    %v3109 = vsel %vm3076, 0, %v2370
    %v3110 = vsel %vm3077, 0, %v2371
    %v3111 = vsel %vm3078, 0, %v2372
    %v3112 = vsel %vm3079, 0, %v2373
    %v3113 = vsel %vm3080, 0, %v2374
    %v3114 = vsel %vm3081, 0, %v2375
    %v3115 = vsel %vm3082, 0, %v2376
    %v3116 = vsel %vm3083, 0, %v2377
    %v3117 = vsel %vm3084, 0, %v2378
    %v3118 = vsel %vm3085, 0, %v2379
    %v3119 = vsel %vm3086, 0, %v2380
    %v3120 = vsel %vm3087, 0, %v2381
    %v3121 = vsel %vm3088, 0, %v2382
    %v3122 = vsel %vm3089, 0, %v2383
    %v3123 = vsel %vm3090, 0, %v2384
    %v3124 = vsel %vm3091, 0, %v2385
    %v3125 = vsel %vm3092, 0, %v2386
    %vm3126 = vcmp.eq.s32.totalorder %v2290, 15
    %vm3127 = vcmp.eq.s32.totalorder %v2291, 15
    %vm3128 = vcmp.eq.s32.totalorder %v2292, 15
    %vm3129 = vcmp.eq.s32.totalorder %v2293, 15
    %vm3130 = vcmp.eq.s32.totalorder %v2294, 15
    %vm3131 = vcmp.eq.s32.totalorder %v2295, 15
    %vm3132 = vcmp.eq.s32.totalorder %v2296, 15
    %vm3133 = vcmp.eq.s32.totalorder %v2297, 15
    %vm3134 = vcmp.eq.s32.totalorder %v2298, 15
    %vm3135 = vcmp.eq.s32.totalorder %v2299, 15
    %vm3136 = vcmp.eq.s32.totalorder %v2300, 15
    %vm3137 = vcmp.eq.s32.totalorder %v2301, 15
    %vm3138 = vcmp.eq.s32.totalorder %v2302, 15
    %vm3139 = vcmp.eq.s32.totalorder %v2303, 15
    %vm3140 = vcmp.eq.s32.totalorder %v2304, 15
    %vm3141 = vcmp.eq.s32.totalorder %v2305, 15
    %vm3142 = vcmp.eq.s32.totalorder %v2306, 15
    %vm3143 = vcmp.eq.s32.totalorder %v2307, 15
    %vm3144 = vcmp.eq.s32.totalorder %v2308, 15
    %vm3145 = vcmp.eq.s32.totalorder %v2309, 15
    %vm3146 = vcmp.eq.s32.totalorder %v2310, 15
    %vm3147 = vcmp.eq.s32.totalorder %v2311, 15
    %vm3148 = vcmp.eq.s32.totalorder %v2312, 15
    %vm3149 = vcmp.eq.s32.totalorder %v2313, 15
    %vm3150 = vcmp.eq.s32.totalorder %v2314, 15
    %vm3151 = vcmp.eq.s32.totalorder %v2315, 15
    %vm3152 = vcmp.eq.s32.totalorder %v2316, 15
    %vm3153 = vcmp.eq.s32.totalorder %v2317, 15
    %vm3154 = vcmp.eq.s32.totalorder %v2318, 15
    %vm3155 = vcmp.eq.s32.totalorder %v2319, 15
    %vm3156 = vcmp.eq.s32.totalorder %v2320, 15
    %vm3157 = vcmp.eq.s32.totalorder %v2321, 15
    %vm3158 = vcmp.eq.s32.totalorder %v2322, 15
    %vm3159 = vcmp.eq.s32.totalorder %v2323, 15
    %vm3160 = vcmp.eq.s32.totalorder %v2324, 15
    %vm3161 = vcmp.eq.s32.totalorder %v2325, 15
    %vm3162 = vcmp.eq.s32.totalorder %v2326, 15
    %vm3163 = vcmp.eq.s32.totalorder %v2327, 15
    %vm3164 = vcmp.eq.s32.totalorder %v2328, 15
    %vm3165 = vcmp.eq.s32.totalorder %v2329, 15
    %vm3166 = vcmp.eq.s32.totalorder %v2330, 15
    %vm3167 = vcmp.eq.s32.totalorder %v2331, 15
    %vm3168 = vcmp.eq.s32.totalorder %v2332, 15
    %vm3169 = vcmp.eq.s32.totalorder %v2333, 15
    %vm3170 = vcmp.eq.s32.totalorder %v2334, 15
    %vm3171 = vcmp.eq.s32.totalorder %v2335, 15
    %vm3172 = vcmp.eq.s32.totalorder %v2336, 15
    %vm3173 = vcmp.eq.s32.totalorder %v2337, 15
    %vm3174 = vcmp.eq.s32.totalorder %v2338, 15
    %vm3175 = vcmp.eq.s32.totalorder %v2339, 15
    %vm3176 = vcmp.eq.s32.totalorder %v2340, 15
    %vm3177 = vcmp.eq.s32.totalorder %v2341, 15
    %vm3178 = vcmp.eq.s32.totalorder %v2342, 15
    %vm3179 = vcmp.eq.s32.totalorder %v2343, 15
    %vm3180 = vcmp.eq.s32.totalorder %v2344, 15
    %vm3181 = vcmp.eq.s32.totalorder %v2345, 15
    %vm3182 = vcmp.eq.s32.totalorder %v2346, 15
    %vm3183 = vcmp.eq.s32.totalorder %v2347, 15
    %vm3184 = vcmp.eq.s32.totalorder %v2348, 15
    %vm3185 = vcmp.eq.s32.totalorder %v2349, 15
    %vm3186 = vcmp.eq.s32.totalorder %v2350, 15
    %vm3187 = vcmp.eq.s32.totalorder %v2351, 15
    %vm3188 = vcmp.eq.s32.totalorder %v2352, 15
    %vm3189 = vcmp.eq.s32.totalorder %v2353, 15
    %v3190 = vsel %vm3126, 1, 0
    %v3191 = vsel %vm3127, 1, 0
    %v3192 = vsel %vm3128, 1, 0
    %v3193 = vsel %vm3129, 1, 0
    %v3194 = vsel %vm3130, 1, 0
    %v3195 = vsel %vm3131, 1, 0
    %v3196 = vsel %vm3132, 1, 0
    %v3197 = vsel %vm3133, 1, 0
    %v3198 = vsel %vm3134, 1, 0
    %v3199 = vsel %vm3135, 1, 0
    %v3200 = vsel %vm3136, 1, 0
    %v3201 = vsel %vm3137, 1, 0
    %v3202 = vsel %vm3138, 1, 0
    %v3203 = vsel %vm3139, 1, 0
    %v3204 = vsel %vm3140, 1, 0
    %v3205 = vsel %vm3141, 1, 0
    %v3206 = vsel %vm3142, 1, 0
    %v3207 = vsel %vm3143, 1, 0
    %v3208 = vsel %vm3144, 1, 0
    %v3209 = vsel %vm3145, 1, 0
    %v3210 = vsel %vm3146, 1, 0
    %v3211 = vsel %vm3147, 1, 0
    %v3212 = vsel %vm3148, 1, 0
    %v3213 = vsel %vm3149, 1, 0
    %v3214 = vsel %vm3150, 1, 0
    %v3215 = vsel %vm3151, 1, 0
    %v3216 = vsel %vm3152, 1, 0
    %v3217 = vsel %vm3153, 1, 0
    %v3218 = vsel %vm3154, 1, 0
    %v3219 = vsel %vm3155, 1, 0
    %v3220 = vsel %vm3156, 1, 0
    %v3221 = vsel %vm3157, 1, 0
    %v3222 = vsel %vm3158, 1, 0
    %v3223 = vsel %vm3159, 1, 0
    %v3224 = vsel %vm3160, 1, 0
    %v3225 = vsel %vm3161, 1, 0
    %v3226 = vsel %vm3162, 1, 0
    %v3227 = vsel %vm3163, 1, 0
    %v3228 = vsel %vm3164, 1, 0
    %v3229 = vsel %vm3165, 1, 0
    %v3230 = vsel %vm3166, 1, 0
    %v3231 = vsel %vm3167, 1, 0
    %v3232 = vsel %vm3168, 1, 0
    %v3233 = vsel %vm3169, 1, 0
    %v3234 = vsel %vm3170, 1, 0
    %v3235 = vsel %vm3171, 1, 0
    %v3236 = vsel %vm3172, 1, 0
    %v3237 = vsel %vm3173, 1, 0
    %v3238 = vsel %vm3174, 1, 0
    %v3239 = vsel %vm3175, 1, 0
    %v3240 = vsel %vm3176, 1, 0
    %v3241 = vsel %vm3177, 1, 0
    %v3242 = vsel %vm3178, 1, 0
    %v3243 = vsel %vm3179, 1, 0
    %v3244 = vsel %vm3180, 1, 0
    %v3245 = vsel %vm3181, 1, 0
    %v3246 = vsel %vm3182, 1, 0
    %v3247 = vsel %vm3183, 1, 0
    %v3248 = vsel %vm3184, 1, 0
    %v3249 = vsel %vm3185, 1, 0
    %v3250 = vsel %vm3186, 1, 0
    %v3251 = vsel %vm3187, 1, 0
    %v3252 = vsel %vm3188, 1, 0
    %v3253 = vsel %vm3189, 1, 0
    %vm3254 = vcmp.eq.s32.totalorder %v3190, 1
    %vm3255 = vcmp.eq.s32.totalorder %v3191, 1
    %vm3256 = vcmp.eq.s32.totalorder %v3192, 1
    %vm3257 = vcmp.eq.s32.totalorder %v3193, 1
    %vm3258 = vcmp.eq.s32.totalorder %v3194, 1
    %vm3259 = vcmp.eq.s32.totalorder %v3195, 1
    %vm3260 = vcmp.eq.s32.totalorder %v3196, 1
    %vm3261 = vcmp.eq.s32.totalorder %v3197, 1
    %vm3262 = vcmp.eq.s32.totalorder %v3198, 1
    %vm3263 = vcmp.eq.s32.totalorder %v3199, 1
    %vm3264 = vcmp.eq.s32.totalorder %v3200, 1
    %vm3265 = vcmp.eq.s32.totalorder %v3201, 1
    %vm3266 = vcmp.eq.s32.totalorder %v3202, 1
    %vm3267 = vcmp.eq.s32.totalorder %v3203, 1
    %vm3268 = vcmp.eq.s32.totalorder %v3204, 1
    %vm3269 = vcmp.eq.s32.totalorder %v3205, 1
    %vm3270 = vcmp.eq.s32.totalorder %v3206, 1
    %vm3271 = vcmp.eq.s32.totalorder %v3207, 1
    %vm3272 = vcmp.eq.s32.totalorder %v3208, 1
    %vm3273 = vcmp.eq.s32.totalorder %v3209, 1
    %vm3274 = vcmp.eq.s32.totalorder %v3210, 1
    %vm3275 = vcmp.eq.s32.totalorder %v3211, 1
    %vm3276 = vcmp.eq.s32.totalorder %v3212, 1
    %vm3277 = vcmp.eq.s32.totalorder %v3213, 1
    %vm3278 = vcmp.eq.s32.totalorder %v3214, 1
    %vm3279 = vcmp.eq.s32.totalorder %v3215, 1
    %vm3280 = vcmp.eq.s32.totalorder %v3216, 1
    %vm3281 = vcmp.eq.s32.totalorder %v3217, 1
    %vm3282 = vcmp.eq.s32.totalorder %v3218, 1
    %vm3283 = vcmp.eq.s32.totalorder %v3219, 1
    %vm3284 = vcmp.eq.s32.totalorder %v3220, 1
    %vm3285 = vcmp.eq.s32.totalorder %v3221, 1
    %vm3286 = vcmp.eq.s32.totalorder %v3222, 1
    %vm3287 = vcmp.eq.s32.totalorder %v3223, 1
    %vm3288 = vcmp.eq.s32.totalorder %v3224, 1
    %vm3289 = vcmp.eq.s32.totalorder %v3225, 1
    %vm3290 = vcmp.eq.s32.totalorder %v3226, 1
    %vm3291 = vcmp.eq.s32.totalorder %v3227, 1
    %vm3292 = vcmp.eq.s32.totalorder %v3228, 1
    %vm3293 = vcmp.eq.s32.totalorder %v3229, 1
    %vm3294 = vcmp.eq.s32.totalorder %v3230, 1
    %vm3295 = vcmp.eq.s32.totalorder %v3231, 1
    %vm3296 = vcmp.eq.s32.totalorder %v3232, 1
    %vm3297 = vcmp.eq.s32.totalorder %v3233, 1
    %vm3298 = vcmp.eq.s32.totalorder %v3234, 1
    %vm3299 = vcmp.eq.s32.totalorder %v3235, 1
    %vm3300 = vcmp.eq.s32.totalorder %v3236, 1
    %vm3301 = vcmp.eq.s32.totalorder %v3237, 1
    %vm3302 = vcmp.eq.s32.totalorder %v3238, 1
    %vm3303 = vcmp.eq.s32.totalorder %v3239, 1
    %vm3304 = vcmp.eq.s32.totalorder %v3240, 1
    %vm3305 = vcmp.eq.s32.totalorder %v3241, 1
    %vm3306 = vcmp.eq.s32.totalorder %v3242, 1
    %vm3307 = vcmp.eq.s32.totalorder %v3243, 1
    %vm3308 = vcmp.eq.s32.totalorder %v3244, 1
    %vm3309 = vcmp.eq.s32.totalorder %v3245, 1
    %vm3310 = vcmp.eq.s32.totalorder %v3246, 1
    %vm3311 = vcmp.eq.s32.totalorder %v3247, 1
    %vm3312 = vcmp.eq.s32.totalorder %v3248, 1
    %vm3313 = vcmp.eq.s32.totalorder %v3249, 1
    %vm3314 = vcmp.eq.s32.totalorder %v3250, 1
    %vm3315 = vcmp.eq.s32.totalorder %v3251, 1
    %vm3316 = vcmp.eq.s32.totalorder %v3252, 1
    %vm3317 = vcmp.eq.s32.totalorder %v3253, 1
    %vm3318 = vmpackc.low %vm3254, %vm3254
    %vm3319 = vmpackc.low %vm3255, %vm3255
    %vm3320 = vmpackc.low %vm3256, %vm3256
    %vm3321 = vmpackc.low %vm3257, %vm3257
    %vm3322 = vmpackc.low %vm3258, %vm3258
    %vm3323 = vmpackc.low %vm3259, %vm3259
    %vm3324 = vmpackc.low %vm3260, %vm3260
    %vm3325 = vmpackc.low %vm3261, %vm3261
    %vm3326 = vmpackc.low %vm3262, %vm3262
    %vm3327 = vmpackc.low %vm3263, %vm3263
    %vm3328 = vmpackc.low %vm3264, %vm3264
    %vm3329 = vmpackc.low %vm3265, %vm3265
    %vm3330 = vmpackc.low %vm3266, %vm3266
    %vm3331 = vmpackc.low %vm3267, %vm3267
    %vm3332 = vmpackc.low %vm3268, %vm3268
    %vm3333 = vmpackc.low %vm3269, %vm3269
    %vm3334 = vmpackc.low %vm3270, %vm3270
    %vm3335 = vmpackc.low %vm3271, %vm3271
    %vm3336 = vmpackc.low %vm3272, %vm3272
    %vm3337 = vmpackc.low %vm3273, %vm3273
    %vm3338 = vmpackc.low %vm3274, %vm3274
    %vm3339 = vmpackc.low %vm3275, %vm3275
    %vm3340 = vmpackc.low %vm3276, %vm3276
    %vm3341 = vmpackc.low %vm3277, %vm3277
    %vm3342 = vmpackc.low %vm3278, %vm3278
    %vm3343 = vmpackc.low %vm3279, %vm3279
    %vm3344 = vmpackc.low %vm3280, %vm3280
    %vm3345 = vmpackc.low %vm3281, %vm3281
    %vm3346 = vmpackc.low %vm3282, %vm3282
    %vm3347 = vmpackc.low %vm3283, %vm3283
    %vm3348 = vmpackc.low %vm3284, %vm3284
    %vm3349 = vmpackc.low %vm3285, %vm3285
    %vm3350 = vmpackc.low %vm3286, %vm3286
    %vm3351 = vmpackc.low %vm3287, %vm3287
    %vm3352 = vmpackc.low %vm3288, %vm3288
    %vm3353 = vmpackc.low %vm3289, %vm3289
    %vm3354 = vmpackc.low %vm3290, %vm3290
    %vm3355 = vmpackc.low %vm3291, %vm3291
    %vm3356 = vmpackc.low %vm3292, %vm3292
    %vm3357 = vmpackc.low %vm3293, %vm3293
    %vm3358 = vmpackc.low %vm3294, %vm3294
    %vm3359 = vmpackc.low %vm3295, %vm3295
    %vm3360 = vmpackc.low %vm3296, %vm3296
    %vm3361 = vmpackc.low %vm3297, %vm3297
    %vm3362 = vmpackc.low %vm3298, %vm3298
    %vm3363 = vmpackc.low %vm3299, %vm3299
    %vm3364 = vmpackc.low %vm3300, %vm3300
    %vm3365 = vmpackc.low %vm3301, %vm3301
    %vm3366 = vmpackc.low %vm3302, %vm3302
    %vm3367 = vmpackc.low %vm3303, %vm3303
    %vm3368 = vmpackc.low %vm3304, %vm3304
    %vm3369 = vmpackc.low %vm3305, %vm3305
    %vm3370 = vmpackc.low %vm3306, %vm3306
    %vm3371 = vmpackc.low %vm3307, %vm3307
    %vm3372 = vmpackc.low %vm3308, %vm3308
    %vm3373 = vmpackc.low %vm3309, %vm3309
    %vm3374 = vmpackc.low %vm3310, %vm3310
    %vm3375 = vmpackc.low %vm3311, %vm3311
    %vm3376 = vmpackc.low %vm3312, %vm3312
    %vm3377 = vmpackc.low %vm3313, %vm3313
    %vm3378 = vmpackc.low %vm3314, %vm3314
    %vm3379 = vmpackc.low %vm3315, %vm3315
    %vm3380 = vmpackc.low %vm3316, %vm3316
    %vm3381 = vmpackc.low %vm3317, %vm3317
    %v3382 = vsel %vm3318, 65537, 0
    %v3383 = vsel %vm3319, 65537, 0
    %v3384 = vsel %vm3320, 65537, 0
    %v3385 = vsel %vm3321, 65537, 0
    %v3386 = vsel %vm3322, 65537, 0
    %v3387 = vsel %vm3323, 65537, 0
    %v3388 = vsel %vm3324, 65537, 0
    %v3389 = vsel %vm3325, 65537, 0
    %v3390 = vsel %vm3326, 65537, 0
    %v3391 = vsel %vm3327, 65537, 0
    %v3392 = vsel %vm3328, 65537, 0
    %v3393 = vsel %vm3329, 65537, 0
    %v3394 = vsel %vm3330, 65537, 0
    %v3395 = vsel %vm3331, 65537, 0
    %v3396 = vsel %vm3332, 65537, 0
    %v3397 = vsel %vm3333, 65537, 0
    %v3398 = vsel %vm3334, 65537, 0
    %v3399 = vsel %vm3335, 65537, 0
    %v3400 = vsel %vm3336, 65537, 0
    %v3401 = vsel %vm3337, 65537, 0
    %v3402 = vsel %vm3338, 65537, 0
    %v3403 = vsel %vm3339, 65537, 0
    %v3404 = vsel %vm3340, 65537, 0
    %v3405 = vsel %vm3341, 65537, 0
    %v3406 = vsel %vm3342, 65537, 0
    %v3407 = vsel %vm3343, 65537, 0
    %v3408 = vsel %vm3344, 65537, 0
    %v3409 = vsel %vm3345, 65537, 0
    %v3410 = vsel %vm3346, 65537, 0
    %v3411 = vsel %vm3347, 65537, 0
    %v3412 = vsel %vm3348, 65537, 0
    %v3413 = vsel %vm3349, 65537, 0
    %v3414 = vsel %vm3350, 65537, 0
    %v3415 = vsel %vm3351, 65537, 0
    %v3416 = vsel %vm3352, 65537, 0
    %v3417 = vsel %vm3353, 65537, 0
    %v3418 = vsel %vm3354, 65537, 0
    %v3419 = vsel %vm3355, 65537, 0
    %v3420 = vsel %vm3356, 65537, 0
    %v3421 = vsel %vm3357, 65537, 0
    %v3422 = vsel %vm3358, 65537, 0
    %v3423 = vsel %vm3359, 65537, 0
    %v3424 = vsel %vm3360, 65537, 0
    %v3425 = vsel %vm3361, 65537, 0
    %v3426 = vsel %vm3362, 65537, 0
    %v3427 = vsel %vm3363, 65537, 0
    %v3428 = vsel %vm3364, 65537, 0
    %v3429 = vsel %vm3365, 65537, 0
    %v3430 = vsel %vm3366, 65537, 0
    %v3431 = vsel %vm3367, 65537, 0
    %v3432 = vsel %vm3368, 65537, 0
    %v3433 = vsel %vm3369, 65537, 0
    %v3434 = vsel %vm3370, 65537, 0
    %v3435 = vsel %vm3371, 65537, 0
    %v3436 = vsel %vm3372, 65537, 0
    %v3437 = vsel %vm3373, 65537, 0
    %v3438 = vsel %vm3374, 65537, 0
    %v3439 = vsel %vm3375, 65537, 0
    %v3440 = vsel %vm3376, 65537, 0
    %v3441 = vsel %vm3377, 65537, 0
    %v3442 = vsel %vm3378, 65537, 0
    %v3443 = vsel %vm3379, 65537, 0
    %v3444 = vsel %vm3380, 65537, 0
    %v3445 = vsel %vm3381, 65537, 0
    %v3446 = vunpack.c.l.b16 %v3382
    %v3447 = vunpack.c.l.b16 %v3383
    %v3448 = vunpack.c.l.b16 %v3384
    %v3449 = vunpack.c.l.b16 %v3385
    %v3450 = vunpack.c.l.b16 %v3386
    %v3451 = vunpack.c.l.b16 %v3387
    %v3452 = vunpack.c.l.b16 %v3388
    %v3453 = vunpack.c.l.b16 %v3389
    %v3454 = vunpack.c.l.b16 %v3390
    %v3455 = vunpack.c.l.b16 %v3391
    %v3456 = vunpack.c.l.b16 %v3392
    %v3457 = vunpack.c.l.b16 %v3393
    %v3458 = vunpack.c.l.b16 %v3394
    %v3459 = vunpack.c.l.b16 %v3395
    %v3460 = vunpack.c.l.b16 %v3396
    %v3461 = vunpack.c.l.b16 %v3397
    %v3462 = vunpack.c.l.b16 %v3398
    %v3463 = vunpack.c.l.b16 %v3399
    %v3464 = vunpack.c.l.b16 %v3400
    %v3465 = vunpack.c.l.b16 %v3401
    %v3466 = vunpack.c.l.b16 %v3402
    %v3467 = vunpack.c.l.b16 %v3403
    %v3468 = vunpack.c.l.b16 %v3404
    %v3469 = vunpack.c.l.b16 %v3405
    %v3470 = vunpack.c.l.b16 %v3406
    %v3471 = vunpack.c.l.b16 %v3407
    %v3472 = vunpack.c.l.b16 %v3408
    %v3473 = vunpack.c.l.b16 %v3409
    %v3474 = vunpack.c.l.b16 %v3410
    %v3475 = vunpack.c.l.b16 %v3411
    %v3476 = vunpack.c.l.b16 %v3412
    %v3477 = vunpack.c.l.b16 %v3413
    %v3478 = vunpack.c.l.b16 %v3414
    %v3479 = vunpack.c.l.b16 %v3415
    %v3480 = vunpack.c.l.b16 %v3416
    %v3481 = vunpack.c.l.b16 %v3417
    %v3482 = vunpack.c.l.b16 %v3418
    %v3483 = vunpack.c.l.b16 %v3419
    %v3484 = vunpack.c.l.b16 %v3420
    %v3485 = vunpack.c.l.b16 %v3421
    %v3486 = vunpack.c.l.b16 %v3422
    %v3487 = vunpack.c.l.b16 %v3423
    %v3488 = vunpack.c.l.b16 %v3424
    %v3489 = vunpack.c.l.b16 %v3425
    %v3490 = vunpack.c.l.b16 %v3426
    %v3491 = vunpack.c.l.b16 %v3427
    %v3492 = vunpack.c.l.b16 %v3428
    %v3493 = vunpack.c.l.b16 %v3429
    %v3494 = vunpack.c.l.b16 %v3430
    %v3495 = vunpack.c.l.b16 %v3431
    %v3496 = vunpack.c.l.b16 %v3432
    %v3497 = vunpack.c.l.b16 %v3433
    %v3498 = vunpack.c.l.b16 %v3434
    %v3499 = vunpack.c.l.b16 %v3435
    %v3500 = vunpack.c.l.b16 %v3436
    %v3501 = vunpack.c.l.b16 %v3437
    %v3502 = vunpack.c.l.b16 %v3438
    %v3503 = vunpack.c.l.b16 %v3439
    %v3504 = vunpack.c.l.b16 %v3440
    %v3505 = vunpack.c.l.b16 %v3441
    %v3506 = vunpack.c.l.b16 %v3442
    %v3507 = vunpack.c.l.b16 %v3443
    %v3508 = vunpack.c.l.b16 %v3444
    %v3509 = vunpack.c.l.b16 %v3445
    %v3510 = vpack.c.b16 %v3447, %v3446
    %v3511 = vpack.c.b16 %v3449, %v3448
    %v3512 = vpack.c.b16 %v3451, %v3450
    %v3513 = vpack.c.b16 %v3453, %v3452
    %v3514 = vpack.c.b16 %v3455, %v3454
    %v3515 = vpack.c.b16 %v3457, %v3456
    %v3516 = vpack.c.b16 %v3459, %v3458
    %v3517 = vpack.c.b16 %v3461, %v3460
    %v3518 = vpack.c.b16 %v3463, %v3462
    %v3519 = vpack.c.b16 %v3465, %v3464
    %v3520 = vpack.c.b16 %v3467, %v3466
    %v3521 = vpack.c.b16 %v3469, %v3468
    %v3522 = vpack.c.b16 %v3471, %v3470
    %v3523 = vpack.c.b16 %v3473, %v3472
    %v3524 = vpack.c.b16 %v3475, %v3474
    %v3525 = vpack.c.b16 %v3477, %v3476
    %v3526 = vpack.c.b16 %v3479, %v3478
    %v3527 = vpack.c.b16 %v3481, %v3480
    %v3528 = vpack.c.b16 %v3483, %v3482
    %v3529 = vpack.c.b16 %v3485, %v3484
    %v3530 = vpack.c.b16 %v3487, %v3486
    %v3531 = vpack.c.b16 %v3489, %v3488
    %v3532 = vpack.c.b16 %v3491, %v3490
    %v3533 = vpack.c.b16 %v3493, %v3492
    %v3534 = vpack.c.b16 %v3495, %v3494
    %v3535 = vpack.c.b16 %v3497, %v3496
    %v3536 = vpack.c.b16 %v3499, %v3498
    %v3537 = vpack.c.b16 %v3501, %v3500
    %v3538 = vpack.c.b16 %v3503, %v3502
    %v3539 = vpack.c.b16 %v3505, %v3504
    %v3540 = vpack.c.b16 %v3507, %v3506
    %v3541 = vpack.c.b16 %v3509, %v3508
    %vm3542 = vsmask.f32 256
    %v3544 = vshrl.u32 %v3510, 16
    %v3546 = vrot.slane %v3544, 7
    %v3547 = vshll.u32 %v3510, 16
    %v3549 = vor.u32 %v3546, %v3547
    %v3551 = vshrl.u32 %v3511, 16
    %v3553 = vrot.slane %v3551, 7
    %v3554 = vshll.u32 %v3511, 16
    %v3556 = vor.u32 %v3553, %v3554
    %v3557 = vsel %vm3542, %v3546, %v3556
    %v3559 = vshrl.u32 %v3512, 16
    %v3561 = vrot.slane %v3559, 7
    %v3562 = vshll.u32 %v3512, 16
    %v3564 = vor.u32 %v3561, %v3562
    %v3565 = vsel %vm3542, %v3553, %v3564
    %v3567 = vshrl.u32 %v3513, 16
    %v3569 = vrot.slane %v3567, 7
    %v3570 = vshll.u32 %v3513, 16
    %v3572 = vor.u32 %v3569, %v3570
    %v3573 = vsel %vm3542, %v3561, %v3572
    %v3575 = vshrl.u32 %v3514, 16
    %v3577 = vrot.slane %v3575, 7
    %v3578 = vshll.u32 %v3514, 16
    %v3580 = vor.u32 %v3577, %v3578
    %v3581 = vsel %vm3542, %v3569, %v3580
    %v3583 = vshrl.u32 %v3515, 16
    %v3585 = vrot.slane %v3583, 7
    %v3586 = vshll.u32 %v3515, 16
    %v3588 = vor.u32 %v3585, %v3586
    %v3589 = vsel %vm3542, %v3577, %v3588
    %v3591 = vshrl.u32 %v3516, 16
    %v3593 = vrot.slane %v3591, 7
    %v3594 = vshll.u32 %v3516, 16
    %v3596 = vor.u32 %v3593, %v3594
    %v3597 = vsel %vm3542, %v3585, %v3596
    %v3599 = vshrl.u32 %v3517, 16
    %v3601 = vrot.slane %v3599, 7
    %v3602 = vshll.u32 %v3517, 16
    %v3604 = vor.u32 %v3601, %v3602
    %v3605 = vsel %vm3542, %v3593, %v3604
    %v3607 = vshrl.u32 %v3518, 16
    %v3609 = vrot.slane %v3607, 7
    %v3610 = vshll.u32 %v3518, 16
    %v3612 = vor.u32 %v3609, %v3610
    %v3613 = vsel %vm3542, %v3601, %v3612
    %v3615 = vshrl.u32 %v3519, 16
    %v3617 = vrot.slane %v3615, 7
    %v3618 = vshll.u32 %v3519, 16
    %v3620 = vor.u32 %v3617, %v3618
    %v3621 = vsel %vm3542, %v3609, %v3620
    %v3623 = vshrl.u32 %v3520, 16
    %v3625 = vrot.slane %v3623, 7
    %v3626 = vshll.u32 %v3520, 16
    %v3628 = vor.u32 %v3625, %v3626
    %v3629 = vsel %vm3542, %v3617, %v3628
    %v3631 = vshrl.u32 %v3521, 16
    %v3633 = vrot.slane %v3631, 7
    %v3634 = vshll.u32 %v3521, 16
    %v3636 = vor.u32 %v3633, %v3634
    %v3637 = vsel %vm3542, %v3625, %v3636
    %v3639 = vshrl.u32 %v3522, 16
    %v3641 = vrot.slane %v3639, 7
    %v3642 = vshll.u32 %v3522, 16
    %v3644 = vor.u32 %v3641, %v3642
    %v3645 = vsel %vm3542, %v3633, %v3644
    %v3647 = vshrl.u32 %v3523, 16
    %v3649 = vrot.slane %v3647, 7
    %v3650 = vshll.u32 %v3523, 16
    %v3652 = vor.u32 %v3649, %v3650
    %v3653 = vsel %vm3542, %v3641, %v3652
    %v3655 = vshrl.u32 %v3524, 16
    %v3657 = vrot.slane %v3655, 7
    %v3658 = vshll.u32 %v3524, 16
    %v3660 = vor.u32 %v3657, %v3658
    %v3661 = vsel %vm3542, %v3649, %v3660
    %v3663 = vshrl.u32 %v3525, 16
    %v3665 = vrot.slane %v3663, 7
    %v3666 = vshll.u32 %v3525, 16
    %v3668 = vor.u32 %v3665, %v3666
    %v3669 = vsel %vm3542, %v3657, %v3668
    %v3671 = vshrl.u32 %v3526, 16
    %v3673 = vrot.slane %v3671, 7
    %v3674 = vshll.u32 %v3526, 16
    %v3676 = vor.u32 %v3673, %v3674
    %v3677 = vsel %vm3542, %v3665, %v3676
    %v3679 = vshrl.u32 %v3527, 16
    %v3681 = vrot.slane %v3679, 7
    %v3682 = vshll.u32 %v3527, 16
    %v3684 = vor.u32 %v3681, %v3682
    %v3685 = vsel %vm3542, %v3673, %v3684
    %v3687 = vshrl.u32 %v3528, 16
    %v3689 = vrot.slane %v3687, 7
    %v3690 = vshll.u32 %v3528, 16
    %v3692 = vor.u32 %v3689, %v3690
    %v3693 = vsel %vm3542, %v3681, %v3692
    %v3695 = vshrl.u32 %v3529, 16
    %v3697 = vrot.slane %v3695, 7
    %v3698 = vshll.u32 %v3529, 16
    %v3700 = vor.u32 %v3697, %v3698
    %v3701 = vsel %vm3542, %v3689, %v3700
    %v3703 = vshrl.u32 %v3530, 16
    %v3705 = vrot.slane %v3703, 7
    %v3706 = vshll.u32 %v3530, 16
    %v3708 = vor.u32 %v3705, %v3706
    %v3709 = vsel %vm3542, %v3697, %v3708
    %v3711 = vshrl.u32 %v3531, 16
    %v3713 = vrot.slane %v3711, 7
    %v3714 = vshll.u32 %v3531, 16
    %v3716 = vor.u32 %v3713, %v3714
    %v3717 = vsel %vm3542, %v3705, %v3716
    %v3719 = vshrl.u32 %v3532, 16
    %v3721 = vrot.slane %v3719, 7
    %v3722 = vshll.u32 %v3532, 16
    %v3724 = vor.u32 %v3721, %v3722
    %v3725 = vsel %vm3542, %v3713, %v3724
    %v3727 = vshrl.u32 %v3533, 16
    %v3729 = vrot.slane %v3727, 7
    %v3730 = vshll.u32 %v3533, 16
    %v3732 = vor.u32 %v3729, %v3730
    %v3733 = vsel %vm3542, %v3721, %v3732
    %v3735 = vshrl.u32 %v3534, 16
    %v3737 = vrot.slane %v3735, 7
    %v3738 = vshll.u32 %v3534, 16
    %v3740 = vor.u32 %v3737, %v3738
    %v3741 = vsel %vm3542, %v3729, %v3740
    %v3743 = vshrl.u32 %v3535, 16
    %v3745 = vrot.slane %v3743, 7
    %v3746 = vshll.u32 %v3535, 16
    %v3748 = vor.u32 %v3745, %v3746
    %v3749 = vsel %vm3542, %v3737, %v3748
    %v3751 = vshrl.u32 %v3536, 16
    %v3753 = vrot.slane %v3751, 7
    %v3754 = vshll.u32 %v3536, 16
    %v3756 = vor.u32 %v3753, %v3754
    %v3757 = vsel %vm3542, %v3745, %v3756
    %v3759 = vshrl.u32 %v3537, 16
    %v3761 = vrot.slane %v3759, 7
    %v3762 = vshll.u32 %v3537, 16
    %v3764 = vor.u32 %v3761, %v3762
    %v3765 = vsel %vm3542, %v3753, %v3764
    %v3767 = vshrl.u32 %v3538, 16
    %v3769 = vrot.slane %v3767, 7
    %v3770 = vshll.u32 %v3538, 16
    %v3772 = vor.u32 %v3769, %v3770
    %v3773 = vsel %vm3542, %v3761, %v3772
    %v3775 = vshrl.u32 %v3539, 16
    %v3777 = vrot.slane %v3775, 7
    %v3778 = vshll.u32 %v3539, 16
    %v3780 = vor.u32 %v3777, %v3778
    %v3781 = vsel %vm3542, %v3769, %v3780
    %v3783 = vshrl.u32 %v3540, 16
    %v3785 = vrot.slane %v3783, 7
    %v3786 = vshll.u32 %v3540, 16
    %v3788 = vor.u32 %v3785, %v3786
    %v3789 = vsel %vm3542, %v3777, %v3788
    %v3791 = vshrl.u32 %v3541, 16
    %v3793 = vrot.slane %v3791, 7
    %v3794 = vshll.u32 %v3541, 16
    %v3796 = vor.u32 %v3793, %v3794
    %v3797 = vsel %vm3542, %v3785, %v3796
    %vm3798 = vcmp.ne.s16.totalorder %v3549, 0
    %vm3799 = vcmp.ne.s16.totalorder %v3557, 0
    %vm3800 = vcmp.ne.s16.totalorder %v3565, 0
    %vm3801 = vcmp.ne.s16.totalorder %v3573, 0
    %vm3802 = vcmp.ne.s16.totalorder %v3581, 0
    %vm3803 = vcmp.ne.s16.totalorder %v3589, 0
    %vm3804 = vcmp.ne.s16.totalorder %v3597, 0
    %vm3805 = vcmp.ne.s16.totalorder %v3605, 0
    %vm3806 = vcmp.ne.s16.totalorder %v3613, 0
    %vm3807 = vcmp.ne.s16.totalorder %v3621, 0
    %vm3808 = vcmp.ne.s16.totalorder %v3629, 0
    %vm3809 = vcmp.ne.s16.totalorder %v3637, 0
    %vm3810 = vcmp.ne.s16.totalorder %v3645, 0
    %vm3811 = vcmp.ne.s16.totalorder %v3653, 0
    %vm3812 = vcmp.ne.s16.totalorder %v3661, 0
    %vm3813 = vcmp.ne.s16.totalorder %v3669, 0
    %vm3814 = vcmp.ne.s16.totalorder %v3677, 0
    %vm3815 = vcmp.ne.s16.totalorder %v3685, 0
    %vm3816 = vcmp.ne.s16.totalorder %v3693, 0
    %vm3817 = vcmp.ne.s16.totalorder %v3701, 0
    %vm3818 = vcmp.ne.s16.totalorder %v3709, 0
    %vm3819 = vcmp.ne.s16.totalorder %v3717, 0
    %vm3820 = vcmp.ne.s16.totalorder %v3725, 0
    %vm3821 = vcmp.ne.s16.totalorder %v3733, 0
    %vm3822 = vcmp.ne.s16.totalorder %v3741, 0
    %vm3823 = vcmp.ne.s16.totalorder %v3749, 0
    %vm3824 = vcmp.ne.s16.totalorder %v3757, 0
    %vm3825 = vcmp.ne.s16.totalorder %v3765, 0
    %vm3826 = vcmp.ne.s16.totalorder %v3773, 0
    %vm3827 = vcmp.ne.s16.totalorder %v3781, 0
    %vm3828 = vcmp.ne.s16.totalorder %v3789, 0
    %vm3829 = vcmp.ne.s16.totalorder %v3797, 0
    %vm3830 = vcmp.ne.s16.totalorder %v3793, 0
    %v3831 = vsel %vm3798, 0, %v2355
    %v3832 = vsel %vm3799, 0, %v2356
    %v3833 = vsel %vm3800, 0, %v2357
    %v3834 = vsel %vm3801, 0, %v2358
    %v3835 = vsel %vm3802, 0, %v2359
    %v3836 = vsel %vm3803, 0, %v2360
    %v3837 = vsel %vm3804, 0, %v2361
    %v3838 = vsel %vm3805, 0, %v2362
    %v3839 = vsel %vm3806, 0, %v2363
    %v3840 = vsel %vm3807, 0, %v2364
    %v3841 = vsel %vm3808, 0, %v2365
    %v3842 = vsel %vm3809, 0, %v2366
    %v3843 = vsel %vm3810, 0, %v2367
    %v3844 = vsel %vm3811, 0, %v2368
    %v3845 = vsel %vm3812, 0, %v2369
    %v3846 = vsel %vm3813, 0, %v2370
    %v3847 = vsel %vm3814, 0, %v2371
    %v3848 = vsel %vm3815, 0, %v2372
    %v3849 = vsel %vm3816, 0, %v2373
    %v3850 = vsel %vm3817, 0, %v2374
    %v3851 = vsel %vm3818, 0, %v2375
    %v3852 = vsel %vm3819, 0, %v2376
    %v3853 = vsel %vm3820, 0, %v2377
    %v3854 = vsel %vm3821, 0, %v2378
    %v3855 = vsel %vm3822, 0, %v2379
    %v3856 = vsel %vm3823, 0, %v2380
    %v3857 = vsel %vm3824, 0, %v2381
    %v3858 = vsel %vm3825, 0, %v2382
    %v3859 = vsel %vm3826, 0, %v2383
    %v3860 = vsel %vm3827, 0, %v2384
    %v3861 = vsel %vm3828, 0, %v2385
    %v3862 = vsel %vm3829, 0, %v2386
    %v3863 = vsel %vm3830, 0, %v2387
    %v3865 = vshll.u32 %v1454, 16
    %v3867 = vrot.slane %v3865, 1
    %v3868 = vshrl.u32 %v1454, 16
    %v3870 = vor.u32 %v3868, %v3867
    %v3872 = vshll.u32 %v1455, 16
    %v3874 = vrot.slane %v3872, 1
    %v3875 = vsel %vm2804, %v3870, %v3874
    %v3876 = vshrl.u32 %v1455, 16
    %v3878 = vor.u32 %v3876, %v3874
    %v3880 = vshll.u32 %v1456, 16
    %v3882 = vrot.slane %v3880, 1
    %v3883 = vsel %vm2804, %v3878, %v3882
    %v3884 = vshrl.u32 %v1456, 16
    %v3886 = vor.u32 %v3884, %v3882
    %v3888 = vshll.u32 %v1457, 16
    %v3890 = vrot.slane %v3888, 1
    %v3891 = vsel %vm2804, %v3886, %v3890
    %v3892 = vshrl.u32 %v1457, 16
    %v3894 = vor.u32 %v3892, %v3890
    %v3896 = vshll.u32 %v1458, 16
    %v3898 = vrot.slane %v3896, 1
    %v3899 = vsel %vm2804, %v3894, %v3898
    %v3900 = vshrl.u32 %v1458, 16
    %v3902 = vor.u32 %v3900, %v3898
    %v3904 = vshll.u32 %v1459, 16
    %v3906 = vrot.slane %v3904, 1
    %v3907 = vsel %vm2804, %v3902, %v3906
    %v3908 = vshrl.u32 %v1459, 16
    %v3910 = vor.u32 %v3908, %v3906
    %v3912 = vshll.u32 %v1460, 16
    %v3914 = vrot.slane %v3912, 1
    %v3915 = vsel %vm2804, %v3910, %v3914
    %v3916 = vshrl.u32 %v1460, 16
    %v3918 = vor.u32 %v3916, %v3914
    %v3920 = vshll.u32 %v1461, 16
    %v3922 = vrot.slane %v3920, 1
    %v3923 = vsel %vm2804, %v3918, %v3922
    %v3924 = vshrl.u32 %v1461, 16
    %v3926 = vor.u32 %v3924, %v3922
    %v3928 = vshll.u32 %v1462, 16
    %v3930 = vrot.slane %v3928, 1
    %v3931 = vsel %vm2804, %v3926, %v3930
    %v3932 = vshrl.u32 %v1462, 16
    %v3934 = vor.u32 %v3932, %v3930
    %v3936 = vshll.u32 %v1463, 16
    %v3938 = vrot.slane %v3936, 1
    %v3939 = vsel %vm2804, %v3934, %v3938
    %v3940 = vshrl.u32 %v1463, 16
    %v3942 = vor.u32 %v3940, %v3938
    %v3944 = vshll.u32 %v1464, 16
    %v3946 = vrot.slane %v3944, 1
    %v3947 = vsel %vm2804, %v3942, %v3946
    %v3948 = vshrl.u32 %v1464, 16
    %v3950 = vor.u32 %v3948, %v3946
    %v3952 = vshll.u32 %v1465, 16
    %v3954 = vrot.slane %v3952, 1
    %v3955 = vsel %vm2804, %v3950, %v3954
    %v3956 = vshrl.u32 %v1465, 16
    %v3958 = vor.u32 %v3956, %v3954
    %v3960 = vshll.u32 %v1466, 16
    %v3962 = vrot.slane %v3960, 1
    %v3963 = vsel %vm2804, %v3958, %v3962
    %v3964 = vshrl.u32 %v1466, 16
    %v3966 = vor.u32 %v3964, %v3962
    %v3968 = vshll.u32 %v1467, 16
    %v3970 = vrot.slane %v3968, 1
    %v3971 = vsel %vm2804, %v3966, %v3970
    %v3972 = vshrl.u32 %v1467, 16
    %v3974 = vor.u32 %v3972, %v3970
    %v3976 = vshll.u32 %v1468, 16
    %v3978 = vrot.slane %v3976, 1
    %v3979 = vsel %vm2804, %v3974, %v3978
    %v3980 = vshrl.u32 %v1468, 16
    %v3982 = vor.u32 %v3980, %v3978
    %v3984 = vshll.u32 %v1469, 16
    %v3986 = vrot.slane %v3984, 1
    %v3987 = vsel %vm2804, %v3982, %v3986
    %v3988 = vshrl.u32 %v1469, 16
    %v3990 = vor.u32 %v3988, %v3986
    %v3992 = vshll.u32 %v1470, 16
    %v3994 = vrot.slane %v3992, 1
    %v3995 = vsel %vm2804, %v3990, %v3994
    %v3996 = vshrl.u32 %v1470, 16
    %v3998 = vor.u32 %v3996, %v3994
    %v4000 = vshll.u32 %v1471, 16
    %v4002 = vrot.slane %v4000, 1
    %v4003 = vsel %vm2804, %v3998, %v4002
    %v4004 = vshrl.u32 %v1471, 16
    %v4006 = vor.u32 %v4004, %v4002
    %v4008 = vshll.u32 %v1472, 16
    %v4010 = vrot.slane %v4008, 1
    %v4011 = vsel %vm2804, %v4006, %v4010
    %v4012 = vshrl.u32 %v1472, 16
    %v4014 = vor.u32 %v4012, %v4010
    %v4016 = vshll.u32 %v1473, 16
    %v4018 = vrot.slane %v4016, 1
    %v4019 = vsel %vm2804, %v4014, %v4018
    %v4020 = vshrl.u32 %v1473, 16
    %v4022 = vor.u32 %v4020, %v4018
    %v4024 = vshll.u32 %v1474, 16
    %v4026 = vrot.slane %v4024, 1
    %v4027 = vsel %vm2804, %v4022, %v4026
    %v4028 = vshrl.u32 %v1474, 16
    %v4030 = vor.u32 %v4028, %v4026
    %v4032 = vshll.u32 %v1475, 16
    %v4034 = vrot.slane %v4032, 1
    %v4035 = vsel %vm2804, %v4030, %v4034
    %v4036 = vshrl.u32 %v1475, 16
    %v4038 = vor.u32 %v4036, %v4034
    %v4040 = vshll.u32 %v1476, 16
    %v4042 = vrot.slane %v4040, 1
    %v4043 = vsel %vm2804, %v4038, %v4042
    %v4044 = vshrl.u32 %v1476, 16
    %v4046 = vor.u32 %v4044, %v4042
    %v4048 = vshll.u32 %v1477, 16
    %v4050 = vrot.slane %v4048, 1
    %v4051 = vsel %vm2804, %v4046, %v4050
    %v4052 = vshrl.u32 %v1477, 16
    %v4054 = vor.u32 %v4052, %v4050
    %v4056 = vshll.u32 %v1478, 16
    %v4058 = vrot.slane %v4056, 1
    %v4059 = vsel %vm2804, %v4054, %v4058
    %v4060 = vshrl.u32 %v1478, 16
    %v4062 = vor.u32 %v4060, %v4058
    %v4064 = vshll.u32 %v1479, 16
    %v4066 = vrot.slane %v4064, 1
    %v4067 = vsel %vm2804, %v4062, %v4066
    %v4068 = vshrl.u32 %v1479, 16
    %v4070 = vor.u32 %v4068, %v4066
    %v4072 = vshll.u32 %v1480, 16
    %v4074 = vrot.slane %v4072, 1
    %v4075 = vsel %vm2804, %v4070, %v4074
    %v4076 = vshrl.u32 %v1480, 16
    %v4078 = vor.u32 %v4076, %v4074
    %v4080 = vshll.u32 %v1481, 16
    %v4082 = vrot.slane %v4080, 1
    %v4083 = vsel %vm2804, %v4078, %v4082
    %v4084 = vshrl.u32 %v1481, 16
    %v4086 = vor.u32 %v4084, %v4082
    %v4088 = vshll.u32 %v1482, 16
    %v4090 = vrot.slane %v4088, 1
    %v4091 = vsel %vm2804, %v4086, %v4090
    %v4092 = vshrl.u32 %v1482, 16
    %v4094 = vor.u32 %v4092, %v4090
    %v4096 = vshll.u32 %v1483, 16
    %v4098 = vrot.slane %v4096, 1
    %v4099 = vsel %vm2804, %v4094, %v4098
    %v4100 = vshrl.u32 %v1483, 16
    %v4102 = vor.u32 %v4100, %v4098
    %v4104 = vshll.u32 %v1484, 16
    %v4106 = vrot.slane %v4104, 1
    %v4107 = vsel %vm2804, %v4102, %v4106
    %v4108 = vshrl.u32 %v1484, 16
    %v4110 = vor.u32 %v4108, %v4106
    %v4112 = vshll.u32 %v1485, 16
    %v4114 = vrot.slane %v4112, 1
    %v4115 = vsel %vm2804, %v4110, %v4114
    %v4116 = vshrl.u32 %v1485, 16
    %v4118 = vor.u32 %v4116, %v4114
    %4119 = vrot.lane.b32.xlu0 %v3867, 16
    %v4120 = vpop.permute.xlu0 %4119
    %4121 = vrot.lane.b32.xlu0 %v3875, 16
    %v4122 = vpop.permute.xlu0 %4121
    %4123 = vrot.lane.b32.xlu0 %v3883, 16
    %v4124 = vpop.permute.xlu0 %4123
    %4125 = vrot.lane.b32.xlu0 %v3891, 16
    %v4126 = vpop.permute.xlu0 %4125
    %4127 = vrot.lane.b32.xlu0 %v3899, 16
    %v4128 = vpop.permute.xlu0 %4127
    %4129 = vrot.lane.b32.xlu0 %v3907, 16
    %v4130 = vpop.permute.xlu0 %4129
    %4131 = vrot.lane.b32.xlu0 %v3915, 16
    %v4132 = vpop.permute.xlu0 %4131
    %4133 = vrot.lane.b32.xlu0 %v3923, 16
    %v4134 = vpop.permute.xlu0 %4133
    %4135 = vrot.lane.b32.xlu0 %v3931, 16
    %v4136 = vpop.permute.xlu0 %4135
    %4137 = vrot.lane.b32.xlu0 %v3939, 16
    %v4138 = vpop.permute.xlu0 %4137
    %4139 = vrot.lane.b32.xlu0 %v3947, 16
    %v4140 = vpop.permute.xlu0 %4139
    %4141 = vrot.lane.b32.xlu0 %v3955, 16
    %v4142 = vpop.permute.xlu0 %4141
    %4143 = vrot.lane.b32.xlu0 %v3963, 16
    %v4144 = vpop.permute.xlu0 %4143
    %4145 = vrot.lane.b32.xlu0 %v3971, 16
    %v4146 = vpop.permute.xlu0 %4145
    %4147 = vrot.lane.b32.xlu0 %v3979, 16
    %v4148 = vpop.permute.xlu0 %4147
    %4149 = vrot.lane.b32.xlu0 %v3987, 16
    %v4150 = vpop.permute.xlu0 %4149
    %4151 = vrot.lane.b32.xlu0 %v3995, 16
    %v4152 = vpop.permute.xlu0 %4151
    %4153 = vrot.lane.b32.xlu0 %v4003, 16
    %v4154 = vpop.permute.xlu0 %4153
    %4155 = vrot.lane.b32.xlu0 %v4011, 16
    %v4156 = vpop.permute.xlu0 %4155
    %4157 = vrot.lane.b32.xlu0 %v4019, 16
    %v4158 = vpop.permute.xlu0 %4157
    %4159 = vrot.lane.b32.xlu0 %v4027, 16
    %v4160 = vpop.permute.xlu0 %4159
    %4161 = vrot.lane.b32.xlu0 %v4035, 16
    %v4162 = vpop.permute.xlu0 %4161
    %4163 = vrot.lane.b32.xlu0 %v4043, 16
    %v4164 = vpop.permute.xlu0 %4163
    %4165 = vrot.lane.b32.xlu0 %v4051, 16
    %v4166 = vpop.permute.xlu0 %4165
    %4167 = vrot.lane.b32.xlu0 %v4059, 16
    %v4168 = vpop.permute.xlu0 %4167
    %4169 = vrot.lane.b32.xlu0 %v4067, 16
    %v4170 = vpop.permute.xlu0 %4169
    %4171 = vrot.lane.b32.xlu0 %v4075, 16
    %v4172 = vpop.permute.xlu0 %4171
    %4173 = vrot.lane.b32.xlu0 %v4083, 16
    %v4174 = vpop.permute.xlu0 %4173
    %4175 = vrot.lane.b32.xlu0 %v4091, 16
    %v4176 = vpop.permute.xlu0 %4175
    %4177 = vrot.lane.b32.xlu0 %v4099, 16
    %v4178 = vpop.permute.xlu0 %4177
    %4179 = vrot.lane.b32.xlu0 %v4107, 16
    %v4180 = vpop.permute.xlu0 %4179
    %4181 = vrot.lane.b32.xlu0 %v4115, 16
    %v4182 = vpop.permute.xlu0 %4181
    %4183 = vrot.lane.b32.xlu0 %v4118, 16
    %v4184 = vpop.permute.xlu0 %4183
    %vm4218 = vcmask 1046528
    %v4219 = vrot.slane %v3831, 1
    %v4220 = vrot.slane %v3832, 1
    %v4221 = vsel %vm4218, %v4219, %v4220
    %v4222 = vrot.slane %v3833, 1
    %v4223 = vsel %vm4218, %v4220, %v4222
    %v4224 = vrot.slane %v3834, 1
    %v4225 = vsel %vm4218, %v4222, %v4224
    %v4226 = vrot.slane %v3835, 1
    %v4227 = vsel %vm4218, %v4224, %v4226
    %v4228 = vrot.slane %v3836, 1
    %v4229 = vsel %vm4218, %v4226, %v4228
    %v4230 = vrot.slane %v3837, 1
    %v4231 = vsel %vm4218, %v4228, %v4230
    %v4232 = vrot.slane %v3838, 1
    %v4233 = vsel %vm4218, %v4230, %v4232
    %v4234 = vrot.slane %v3839, 1
    %v4235 = vsel %vm4218, %v4232, %v4234
    %v4236 = vrot.slane %v3840, 1
    %v4237 = vsel %vm4218, %v4234, %v4236
    %v4238 = vrot.slane %v3841, 1
    %v4239 = vsel %vm4218, %v4236, %v4238
    %v4240 = vrot.slane %v3842, 1
    %v4241 = vsel %vm4218, %v4238, %v4240
    %v4242 = vrot.slane %v3843, 1
    %v4243 = vsel %vm4218, %v4240, %v4242
    %v4244 = vrot.slane %v3844, 1
    %v4245 = vsel %vm4218, %v4242, %v4244
    %v4246 = vrot.slane %v3845, 1
    %v4247 = vsel %vm4218, %v4244, %v4246
    %v4248 = vrot.slane %v3846, 1
    %v4249 = vsel %vm4218, %v4246, %v4248
    %v4250 = vrot.slane %v3847, 1
    %v4251 = vsel %vm4218, %v4248, %v4250
    %v4252 = vrot.slane %v3848, 1
    %v4253 = vsel %vm4218, %v4250, %v4252
    %v4254 = vrot.slane %v3849, 1
    %v4255 = vsel %vm4218, %v4252, %v4254
    %v4256 = vrot.slane %v3850, 1
    %v4257 = vsel %vm4218, %v4254, %v4256
    %v4258 = vrot.slane %v3851, 1
    %v4259 = vsel %vm4218, %v4256, %v4258
    %v4260 = vrot.slane %v3852, 1
    %v4261 = vsel %vm4218, %v4258, %v4260
    %v4262 = vrot.slane %v3853, 1
    %v4263 = vsel %vm4218, %v4260, %v4262
    %v4264 = vrot.slane %v3854, 1
    %v4265 = vsel %vm4218, %v4262, %v4264
    %v4266 = vrot.slane %v3855, 1
    %v4267 = vsel %vm4218, %v4264, %v4266
    %v4268 = vrot.slane %v3856, 1
    %v4269 = vsel %vm4218, %v4266, %v4268
    %v4270 = vrot.slane %v3857, 1
    %v4271 = vsel %vm4218, %v4268, %v4270
    %v4272 = vrot.slane %v3858, 1
    %v4273 = vsel %vm4218, %v4270, %v4272
    %v4274 = vrot.slane %v3859, 1
    %v4275 = vsel %vm4218, %v4272, %v4274
    %v4276 = vrot.slane %v3860, 1
    %v4277 = vsel %vm4218, %v4274, %v4276
    %v4278 = vrot.slane %v3861, 1
    %v4279 = vsel %vm4218, %v4276, %v4278
    %v4280 = vrot.slane %v3862, 1
    %v4281 = vsel %vm4218, %v4278, %v4280
    %v4282 = vrot.slane %v3863, 1
    %v4283 = vsel %vm4218, %v4280, %v4282
    %4284 = vrot.lane.b32.xlu0 %v4219, 32
    %v4285 = vpop.permute.xlu0 %4284
    %4286 = vrot.lane.b32.xlu0 %v4221, 32
    %v4287 = vpop.permute.xlu0 %4286
    %4288 = vrot.lane.b32.xlu0 %v4223, 32
    %v4289 = vpop.permute.xlu0 %4288
    %4290 = vrot.lane.b32.xlu0 %v4225, 32
    %v4291 = vpop.permute.xlu0 %4290
    %4292 = vrot.lane.b32.xlu0 %v4227, 32
    %v4293 = vpop.permute.xlu0 %4292
    %4294 = vrot.lane.b32.xlu0 %v4229, 32
    %v4295 = vpop.permute.xlu0 %4294
    %4296 = vrot.lane.b32.xlu0 %v4231, 32
    %v4297 = vpop.permute.xlu0 %4296
    %4298 = vrot.lane.b32.xlu0 %v4233, 32
    %v4299 = vpop.permute.xlu0 %4298
    %4300 = vrot.lane.b32.xlu0 %v4235, 32
    %v4301 = vpop.permute.xlu0 %4300
    %4302 = vrot.lane.b32.xlu0 %v4237, 32
    %v4303 = vpop.permute.xlu0 %4302
    %4304 = vrot.lane.b32.xlu0 %v4239, 32
    %v4305 = vpop.permute.xlu0 %4304
    %4306 = vrot.lane.b32.xlu0 %v4241, 32
    %v4307 = vpop.permute.xlu0 %4306
    %4308 = vrot.lane.b32.xlu0 %v4243, 32
    %v4309 = vpop.permute.xlu0 %4308
    %4310 = vrot.lane.b32.xlu0 %v4245, 32
    %v4311 = vpop.permute.xlu0 %4310
    %4312 = vrot.lane.b32.xlu0 %v4247, 32
    %v4313 = vpop.permute.xlu0 %4312
    %4314 = vrot.lane.b32.xlu0 %v4249, 32
    %v4315 = vpop.permute.xlu0 %4314
    %4316 = vrot.lane.b32.xlu0 %v4251, 32
    %v4317 = vpop.permute.xlu0 %4316
    %4318 = vrot.lane.b32.xlu0 %v4253, 32
    %v4319 = vpop.permute.xlu0 %4318
    %4320 = vrot.lane.b32.xlu0 %v4255, 32
    %v4321 = vpop.permute.xlu0 %4320
    %4322 = vrot.lane.b32.xlu0 %v4257, 32
    %v4323 = vpop.permute.xlu0 %4322
    %4324 = vrot.lane.b32.xlu0 %v4259, 32
    %v4325 = vpop.permute.xlu0 %4324
    %4326 = vrot.lane.b32.xlu0 %v4261, 32
    %v4327 = vpop.permute.xlu0 %4326
    %4328 = vrot.lane.b32.xlu0 %v4263, 32
    %v4329 = vpop.permute.xlu0 %4328
    %4330 = vrot.lane.b32.xlu0 %v4265, 32
    %v4331 = vpop.permute.xlu0 %4330
    %4332 = vrot.lane.b32.xlu0 %v4267, 32
    %v4333 = vpop.permute.xlu0 %4332
    %4334 = vrot.lane.b32.xlu0 %v4269, 32
    %v4335 = vpop.permute.xlu0 %4334
    %4336 = vrot.lane.b32.xlu0 %v4271, 32
    %v4337 = vpop.permute.xlu0 %4336
    %4338 = vrot.lane.b32.xlu0 %v4273, 32
    %v4339 = vpop.permute.xlu0 %4338
    %4340 = vrot.lane.b32.xlu0 %v4275, 32
    %v4341 = vpop.permute.xlu0 %4340
    %4342 = vrot.lane.b32.xlu0 %v4277, 32
    %v4343 = vpop.permute.xlu0 %4342
    %4344 = vrot.lane.b32.xlu0 %v4279, 32
    %v4345 = vpop.permute.xlu0 %4344
    %4346 = vrot.lane.b32.xlu0 %v4281, 32
    %v4347 = vpop.permute.xlu0 %4346
    %4348 = vrot.lane.b32.xlu0 %v4283, 32
    %v4349 = vpop.permute.xlu0 %4348
    %v4352 = vsel %vm1486, %v3093, %v4120
    %v4355 = vsel %vm1486, %v3094, %v4122
    %v4358 = vsel %vm1486, %v3095, %v4124
    %v4361 = vsel %vm1486, %v3096, %v4126
    %v4364 = vsel %vm1486, %v3097, %v4128
    %v4367 = vsel %vm1486, %v3098, %v4130
    %v4370 = vsel %vm1486, %v3099, %v4132
    %v4373 = vsel %vm1486, %v3100, %v4134
    %v4376 = vsel %vm1486, %v3101, %v4136
    %v4379 = vsel %vm1486, %v3102, %v4138
    %v4382 = vsel %vm1486, %v3103, %v4140
    %v4385 = vsel %vm1486, %v3104, %v4142
    %v4388 = vsel %vm1486, %v3105, %v4144
    %v4391 = vsel %vm1486, %v3106, %v4146
    %v4394 = vsel %vm1486, %v3107, %v4148
    %v4397 = vsel %vm1486, %v3108, %v4150
    %v4400 = vsel %vm1486, %v3109, %v4152
    %v4403 = vsel %vm1486, %v3110, %v4154
    %v4406 = vsel %vm1486, %v3111, %v4156
    %v4409 = vsel %vm1486, %v3112, %v4158
    %v4412 = vsel %vm1486, %v3113, %v4160
    %v4415 = vsel %vm1486, %v3114, %v4162
    %v4418 = vsel %vm1486, %v3115, %v4164
    %v4421 = vsel %vm1486, %v3116, %v4166
    %v4424 = vsel %vm1486, %v3117, %v4168
    %v4427 = vsel %vm1486, %v3118, %v4170
    %v4430 = vsel %vm1486, %v3119, %v4172
    %v4433 = vsel %vm1486, %v3120, %v4174
    %v4436 = vsel %vm1486, %v3121, %v4176
    %v4439 = vsel %vm1486, %v3122, %v4178
    %v4442 = vsel %vm1486, %v3123, %v4180
    %v4445 = vsel %vm1486, %v3124, %v4182
    %v4448 = vsel %vm1486, %v3125, %v4184
    %v4450 = vsel %vm270, %v4352, %v4285
    %v4452 = vsel %vm270, %v4355, %v4287
    %v4454 = vsel %vm270, %v4358, %v4289
    %v4456 = vsel %vm270, %v4361, %v4291
    %v4458 = vsel %vm270, %v4364, %v4293
    %v4460 = vsel %vm270, %v4367, %v4295
    %v4462 = vsel %vm270, %v4370, %v4297
    %v4464 = vsel %vm270, %v4373, %v4299
    %v4466 = vsel %vm270, %v4376, %v4301
    %v4468 = vsel %vm270, %v4379, %v4303
    %v4470 = vsel %vm270, %v4382, %v4305
    %v4472 = vsel %vm270, %v4385, %v4307
    %v4474 = vsel %vm270, %v4388, %v4309
    %v4476 = vsel %vm270, %v4391, %v4311
    %v4478 = vsel %vm270, %v4394, %v4313
    %v4480 = vsel %vm270, %v4397, %v4315
    %v4482 = vsel %vm270, %v4400, %v4317
    %v4484 = vsel %vm270, %v4403, %v4319
    %v4486 = vsel %vm270, %v4406, %v4321
    %v4488 = vsel %vm270, %v4409, %v4323
    %v4490 = vsel %vm270, %v4412, %v4325
    %v4492 = vsel %vm270, %v4415, %v4327
    %v4494 = vsel %vm270, %v4418, %v4329
    %v4496 = vsel %vm270, %v4421, %v4331
    %v4498 = vsel %vm270, %v4424, %v4333
    %v4500 = vsel %vm270, %v4427, %v4335
    %v4502 = vsel %vm270, %v4430, %v4337
    %v4504 = vsel %vm270, %v4433, %v4339
    %v4506 = vsel %vm270, %v4436, %v4341
    %v4508 = vsel %vm270, %v4439, %v4343
    %v4510 = vsel %vm270, %v4442, %v4345
    %v4512 = vsel %vm270, %v4445, %v4347
    %v4514 = vsel %vm270, %v4448, %v4349
    %vm4515 = vcmask 392192
    %4516 = vst.msk [vmem:[#allocation3] sm:$0xff] %vm4515, 0
    %4517 = vst.msk [vmem:[#allocation3 + $0x8] sm:$0xff] %vm4515, 0
    %4518 = vst.msk [vmem:[#allocation3 + $0x10] sm:$0xff] %vm4515, 0
    %4519 = vst.msk [vmem:[#allocation3 + $0x18] sm:$0xff] %vm4515, 0
    %4520 = vst.msk [vmem:[#allocation3 + $0x20] sm:$0xff] %vm4515, 0
    %4521 = vst.msk [vmem:[#allocation3 + $0x28] sm:$0xff] %vm4515, 0
    %4522 = vst.msk [vmem:[#allocation3 + $0x30] sm:$0xff] %vm4515, 0
    %4523 = vst.msk [vmem:[#allocation3 + $0x38] sm:$0xff] %vm4515, 0
    %4524 = vst.msk [vmem:[#allocation3 + $0x40] sm:$0xff] %vm4515, 0
    %4525 = vst.msk [vmem:[#allocation3 + $0x48] sm:$0xff] %vm4515, 0
    %4526 = vst.msk [vmem:[#allocation3 + $0x50] sm:$0xff] %vm4515, 0
    %4527 = vst.msk [vmem:[#allocation3 + $0x58] sm:$0xff] %vm4515, 0
    %4528 = vst.msk [vmem:[#allocation3 + $0x60] sm:$0xff] %vm4515, 0
    %4529 = vst.msk [vmem:[#allocation3 + $0x68] sm:$0xff] %vm4515, 0
    %4530 = vst.msk [vmem:[#allocation3 + $0x70] sm:$0xff] %vm4515, 0
    %4531 = vst.msk [vmem:[#allocation3 + $0x78] sm:$0xff] %vm4515, 0
    %4532 = vst.msk [vmem:[#allocation3 + $0x80] sm:$0xff] %vm4515, 0
    %4533 = vst.msk [vmem:[#allocation3 + $0x88] sm:$0xff] %vm4515, 0
    %4534 = vst.msk [vmem:[#allocation3 + $0x90] sm:$0xff] %vm4515, 0
    %4535 = vst.msk [vmem:[#allocation3 + $0x98] sm:$0xff] %vm4515, 0
    %4536 = vst.msk [vmem:[#allocation3 + $0xa0] sm:$0xff] %vm4515, 0
    %4537 = vst.msk [vmem:[#allocation3 + $0xa8] sm:$0xff] %vm4515, 0
    %4538 = vst.msk [vmem:[#allocation3 + $0xb0] sm:$0xff] %vm4515, 0
    %4539 = vst.msk [vmem:[#allocation3 + $0xb8] sm:$0xff] %vm4515, 0
    %4540 = vst.msk [vmem:[#allocation3 + $0xc0] sm:$0xff] %vm4515, 0
    %4541 = vst.msk [vmem:[#allocation3 + $0xc8] sm:$0xff] %vm4515, 0
    %4542 = vst.msk [vmem:[#allocation3 + $0xd0] sm:$0xff] %vm4515, 0
    %4543 = vst.msk [vmem:[#allocation3 + $0xd8] sm:$0xff] %vm4515, 0
    %4544 = vst.msk [vmem:[#allocation3 + $0xe0] sm:$0xff] %vm4515, 0
    %4545 = vst.msk [vmem:[#allocation3 + $0xe8] sm:$0xff] %vm4515, 0
    %4546 = vst.msk [vmem:[#allocation3 + $0xf0] sm:$0xff] %vm4515, 0
    %4547 = vst.msk [vmem:[#allocation3 + $0xf8] sm:$0xff] %vm4515, 0
    %4548 = vst.msk [vmem:[#allocation3 + $0x100] sm:$0xff] %vm4515, 0
    %4549 = vst.msk [vmem:[#allocation3 + $0x108] sm:$0xff] %vm4515, 0
    %4550 = vst.msk [vmem:[#allocation3 + $0x110] sm:$0xff] %vm4515, 0
    %v4551 = vshrl.u32 %v4450, 16
    %v4553 = vrot.slane %v4551, 7
    %v4554 = vshrl.u32 %v4452, 16
    %v4556 = vrot.slane %v4554, 7
    %v4557 = vshll.u32 %v4452, 16
    %v4559 = vor.u32 %v4556, %v4557
    %v4560 = vsel %vm3542, %v4553, %v4559
    %v4561 = vshrl.u32 %v4454, 16
    %v4563 = vrot.slane %v4561, 7
    %v4564 = vshll.u32 %v4454, 16
    %v4566 = vor.u32 %v4563, %v4564
    %v4567 = vsel %vm3542, %v4556, %v4566
    %v4568 = vshrl.u32 %v4456, 16
    %v4570 = vrot.slane %v4568, 7
    %v4571 = vshll.u32 %v4456, 16
    %v4573 = vor.u32 %v4570, %v4571
    %v4574 = vsel %vm3542, %v4563, %v4573
    %v4575 = vshrl.u32 %v4458, 16
    %v4577 = vrot.slane %v4575, 7
    %v4578 = vshll.u32 %v4458, 16
    %v4580 = vor.u32 %v4577, %v4578
    %v4581 = vsel %vm3542, %v4570, %v4580
    %v4582 = vshrl.u32 %v4460, 16
    %v4584 = vrot.slane %v4582, 7
    %v4585 = vshll.u32 %v4460, 16
    %v4587 = vor.u32 %v4584, %v4585
    %v4588 = vsel %vm3542, %v4577, %v4587
    %v4589 = vshrl.u32 %v4462, 16
    %v4591 = vrot.slane %v4589, 7
    %v4592 = vshll.u32 %v4462, 16
    %v4594 = vor.u32 %v4591, %v4592
    %v4595 = vsel %vm3542, %v4584, %v4594
    %v4596 = vshrl.u32 %v4464, 16
    %v4598 = vrot.slane %v4596, 7
    %v4599 = vshll.u32 %v4464, 16
    %v4601 = vor.u32 %v4598, %v4599
    %v4602 = vsel %vm3542, %v4591, %v4601
    %v4603 = vshrl.u32 %v4466, 16
    %v4605 = vrot.slane %v4603, 7
    %v4606 = vshll.u32 %v4466, 16
    %v4608 = vor.u32 %v4605, %v4606
    %v4609 = vsel %vm3542, %v4598, %v4608
    %v4610 = vshrl.u32 %v4468, 16
    %v4612 = vrot.slane %v4610, 7
    %v4613 = vshll.u32 %v4468, 16
    %v4615 = vor.u32 %v4612, %v4613
    %v4616 = vsel %vm3542, %v4605, %v4615
    %v4617 = vshrl.u32 %v4470, 16
    %v4619 = vrot.slane %v4617, 7
    %v4620 = vshll.u32 %v4470, 16
    %v4622 = vor.u32 %v4619, %v4620
    %v4623 = vsel %vm3542, %v4612, %v4622
    %v4624 = vshrl.u32 %v4472, 16
    %v4626 = vrot.slane %v4624, 7
    %v4627 = vshll.u32 %v4472, 16
    %v4629 = vor.u32 %v4626, %v4627
    %v4630 = vsel %vm3542, %v4619, %v4629
    %v4631 = vshrl.u32 %v4474, 16
    %v4633 = vrot.slane %v4631, 7
    %v4634 = vshll.u32 %v4474, 16
    %v4636 = vor.u32 %v4633, %v4634
    %v4637 = vsel %vm3542, %v4626, %v4636
    %v4638 = vshrl.u32 %v4476, 16
    %v4640 = vrot.slane %v4638, 7
    %v4641 = vshll.u32 %v4476, 16
    %v4643 = vor.u32 %v4640, %v4641
    %v4644 = vsel %vm3542, %v4633, %v4643
    %v4645 = vshrl.u32 %v4478, 16
    %v4647 = vrot.slane %v4645, 7
    %v4648 = vshll.u32 %v4478, 16
    %v4650 = vor.u32 %v4647, %v4648
    %v4651 = vsel %vm3542, %v4640, %v4650
    %v4652 = vshrl.u32 %v4480, 16
    %v4654 = vrot.slane %v4652, 7
    %v4655 = vshll.u32 %v4480, 16
    %v4657 = vor.u32 %v4654, %v4655
    %v4658 = vsel %vm3542, %v4647, %v4657
    %v4659 = vshrl.u32 %v4482, 16
    %v4661 = vrot.slane %v4659, 7
    %v4662 = vshll.u32 %v4482, 16
    %v4664 = vor.u32 %v4661, %v4662
    %v4665 = vsel %vm3542, %v4654, %v4664
    %4682 = vst.msk [vmem:[#allocation3 + $0x8] sm:$0xff] %vm4515, %v4560
    %4683 = vst.msk [vmem:[#allocation3 + $0x10] sm:$0xff] %vm4515, %v4567
    %4684 = vst.msk [vmem:[#allocation3 + $0x18] sm:$0xff] %vm4515, %v4574
    %4685 = vst.msk [vmem:[#allocation3 + $0x20] sm:$0xff] %vm4515, %v4581
    %4686 = vst.msk [vmem:[#allocation3 + $0x28] sm:$0xff] %vm4515, %v4588
    %4687 = vst.msk [vmem:[#allocation3 + $0x30] sm:$0xff] %vm4515, %v4595
    %4688 = vst.msk [vmem:[#allocation3 + $0x38] sm:$0xff] %vm4515, %v4602
    %4689 = vst.msk [vmem:[#allocation3 + $0x40] sm:$0xff] %vm4515, %v4609
    %4690 = vst.msk [vmem:[#allocation3 + $0x48] sm:$0xff] %vm4515, %v4616
    %4691 = vst.msk [vmem:[#allocation3 + $0x50] sm:$0xff] %vm4515, %v4623
    %4692 = vst.msk [vmem:[#allocation3 + $0x58] sm:$0xff] %vm4515, %v4630
    %4693 = vst.msk [vmem:[#allocation3 + $0x60] sm:$0xff] %vm4515, %v4637
    %4694 = vst.msk [vmem:[#allocation3 + $0x68] sm:$0xff] %vm4515, %v4644
    %4695 = vst.msk [vmem:[#allocation3 + $0x70] sm:$0xff] %vm4515, %v4651
    %4696 = vst.msk [vmem:[#allocation3 + $0x78] sm:$0xff] %vm4515, %v4658
    %4697 = vst.msk [vmem:[#allocation3 + $0x80] sm:$0xff] %vm4515, %v4665
    %v4698 = vshrl.u32 %v4484, 16
    %v4700 = vrot.slane %v4698, 7
    %v4701 = vshll.u32 %v4484, 16
    %v4703 = vor.u32 %v4700, %v4701
    %v4704 = vsel %vm3542, %v4661, %v4703
    %v4705 = vshrl.u32 %v4486, 16
    %v4707 = vrot.slane %v4705, 7
    %v4708 = vshll.u32 %v4486, 16
    %v4710 = vor.u32 %v4707, %v4708
    %v4711 = vsel %vm3542, %v4700, %v4710
    %v4712 = vshrl.u32 %v4488, 16
    %v4714 = vrot.slane %v4712, 7
    %v4715 = vshll.u32 %v4488, 16
    %v4717 = vor.u32 %v4714, %v4715
    %v4718 = vsel %vm3542, %v4707, %v4717
    %v4719 = vshrl.u32 %v4490, 16
    %v4721 = vrot.slane %v4719, 7
    %v4722 = vshll.u32 %v4490, 16
    %v4724 = vor.u32 %v4721, %v4722
    %v4725 = vsel %vm3542, %v4714, %v4724
    %v4726 = vshrl.u32 %v4492, 16
    %v4728 = vrot.slane %v4726, 7
    %v4729 = vshll.u32 %v4492, 16
    %v4731 = vor.u32 %v4728, %v4729
    %v4732 = vsel %vm3542, %v4721, %v4731
    %v4733 = vshrl.u32 %v4494, 16
    %v4735 = vrot.slane %v4733, 7
    %v4736 = vshll.u32 %v4494, 16
    %v4738 = vor.u32 %v4735, %v4736
    %v4739 = vsel %vm3542, %v4728, %v4738
    %v4740 = vshrl.u32 %v4496, 16
    %v4742 = vrot.slane %v4740, 7
    %v4743 = vshll.u32 %v4496, 16
    %v4745 = vor.u32 %v4742, %v4743
    %v4746 = vsel %vm3542, %v4735, %v4745
    %v4747 = vshrl.u32 %v4498, 16
    %v4749 = vrot.slane %v4747, 7
    %v4750 = vshll.u32 %v4498, 16
    %v4752 = vor.u32 %v4749, %v4750
    %v4753 = vsel %vm3542, %v4742, %v4752
    %v4754 = vshrl.u32 %v4500, 16
    %v4756 = vrot.slane %v4754, 7
    %v4757 = vshll.u32 %v4500, 16
    %v4759 = vor.u32 %v4756, %v4757
    %v4760 = vsel %vm3542, %v4749, %v4759
    %v4761 = vshrl.u32 %v4502, 16
    %v4763 = vrot.slane %v4761, 7
    %v4764 = vshll.u32 %v4502, 16
    %v4766 = vor.u32 %v4763, %v4764
    %v4767 = vsel %vm3542, %v4756, %v4766
    %v4768 = vshrl.u32 %v4504, 16
    %v4770 = vrot.slane %v4768, 7
    %v4771 = vshll.u32 %v4504, 16
    %v4773 = vor.u32 %v4770, %v4771
    %v4774 = vsel %vm3542, %v4763, %v4773
    %v4775 = vshrl.u32 %v4506, 16
    %v4777 = vrot.slane %v4775, 7
    %v4778 = vshll.u32 %v4506, 16
    %v4780 = vor.u32 %v4777, %v4778
    %v4781 = vsel %vm3542, %v4770, %v4780
    %v4782 = vshrl.u32 %v4508, 16
    %v4784 = vrot.slane %v4782, 7
    %v4785 = vshll.u32 %v4508, 16
    %v4787 = vor.u32 %v4784, %v4785
    %v4788 = vsel %vm3542, %v4777, %v4787
    %v4789 = vshrl.u32 %v4510, 16
    %v4791 = vrot.slane %v4789, 7
    %v4792 = vshll.u32 %v4510, 16
    %v4794 = vor.u32 %v4791, %v4792
    %v4795 = vsel %vm3542, %v4784, %v4794
    %v4796 = vshrl.u32 %v4512, 16
    %v4798 = vrot.slane %v4796, 7
    %v4799 = vshll.u32 %v4512, 16
    %v4801 = vor.u32 %v4798, %v4799
    %v4802 = vsel %vm3542, %v4791, %v4801
    %v4803 = vshrl.u32 %v4514, 16
    %v4805 = vrot.slane %v4803, 7
    %v4806 = vshll.u32 %v4514, 16
    %v4808 = vor.u32 %v4805, %v4806
    %v4809 = vsel %vm3542, %v4798, %v4808
    %4826 = vst.msk [vmem:[#allocation3 + $0x90] sm:$0xff] %vm4515, %v4704
    %4827 = vst.msk [vmem:[#allocation3 + $0x98] sm:$0xff] %vm4515, %v4711
    %4828 = vst.msk [vmem:[#allocation3 + $0xa0] sm:$0xff] %vm4515, %v4718
    %4829 = vst.msk [vmem:[#allocation3 + $0xa8] sm:$0xff] %vm4515, %v4725
    %4830 = vst.msk [vmem:[#allocation3 + $0xb0] sm:$0xff] %vm4515, %v4732
    %4831 = vst.msk [vmem:[#allocation3 + $0xb8] sm:$0xff] %vm4515, %v4739
    %4832 = vst.msk [vmem:[#allocation3 + $0xc0] sm:$0xff] %vm4515, %v4746
    %4833 = vst.msk [vmem:[#allocation3 + $0xc8] sm:$0xff] %vm4515, %v4753
    %4834 = vst.msk [vmem:[#allocation3 + $0xd0] sm:$0xff] %vm4515, %v4760
    %4835 = vst.msk [vmem:[#allocation3 + $0xd8] sm:$0xff] %vm4515, %v4767
    %4836 = vst.msk [vmem:[#allocation3 + $0xe0] sm:$0xff] %vm4515, %v4774
    %4837 = vst.msk [vmem:[#allocation3 + $0xe8] sm:$0xff] %vm4515, %v4781
    %4838 = vst.msk [vmem:[#allocation3 + $0xf0] sm:$0xff] %vm4515, %v4788
    %4839 = vst.msk [vmem:[#allocation3 + $0xf8] sm:$0xff] %vm4515, %v4795
    %4840 = vst.msk [vmem:[#allocation3 + $0x100] sm:$0xff] %vm4515, %v4802
    %4841 = vst.msk [vmem:[#allocation3 + $0x108] sm:$0xff] %vm4515, %v4809
    %v4842 = vld [vmem:[#allocation3] sm:$0xff]
    %v4843 = vld [vmem:[#allocation3 + $0x8] sm:$0xff]
    %v4844 = vld [vmem:[#allocation3 + $0x10] sm:$0xff]
    %v4845 = vld [vmem:[#allocation3 + $0x18] sm:$0xff]
    %v4846 = vld [vmem:[#allocation3 + $0x20] sm:$0xff]
    %v4847 = vld [vmem:[#allocation3 + $0x28] sm:$0xff]
    %v4848 = vld [vmem:[#allocation3 + $0x30] sm:$0xff]
    %v4849 = vld [vmem:[#allocation3 + $0x38] sm:$0xff]
    %v4850 = vld [vmem:[#allocation3 + $0x40] sm:$0xff]
    %v4851 = vld [vmem:[#allocation3 + $0x48] sm:$0xff]
    %v4852 = vld [vmem:[#allocation3 + $0x50] sm:$0xff]
    %v4853 = vld [vmem:[#allocation3 + $0x58] sm:$0xff]
    %v4854 = vld [vmem:[#allocation3 + $0x60] sm:$0xff]
    %v4855 = vld [vmem:[#allocation3 + $0x68] sm:$0xff]
    %v4856 = vld [vmem:[#allocation3 + $0x70] sm:$0xff]
    %v4857 = vld [vmem:[#allocation3 + $0x78] sm:$0xff]
    %v4858 = vld [vmem:[%s4] sm:$0xf]
    %v4859 = vld [vmem:[%s4 + $0x4] sm:$0xf]
    %v4860 = vld [vmem:[%s4 + $0x8] sm:$0xf]
    %v4861 = vld [vmem:[%s4 + $0xc] sm:$0xf]
    %v4862 = vld [vmem:[%s4 + $0x10] sm:$0xf]
    %v4863 = vld [vmem:[%s4 + $0x14] sm:$0xf]
    %v4864 = vld [vmem:[#allocation3 + $0x80] sm:$0xff]
    %v4865 = vld [vmem:[%s4 + $0x18] sm:$0xf]
    %v4866 = vld [vmem:[%s4 + $0x1c] sm:$0xf]
    %v4867 = vld [vmem:[%s4 + $0x20] sm:$0xf]
    %v4868 = vld [vmem:[%s4 + $0x24] sm:$0xf]
    %v4869 = vld [vmem:[%s4 + $0x28] sm:$0xf]
    %v4870 = vld [vmem:[%s4 + $0x2c] sm:$0xf]
    %v4877 = vunpack.c.l.b16 %v4865
    %v4878 = vunpack.c.l.b16 %v4866
    %v4879 = vunpack.c.l.b16 %v4867
    %v4880 = vunpack.c.l.b16 %v4868
    %v4881 = vunpack.c.l.b16 %v4869
    %v4882 = vunpack.c.l.b16 %v4870
    %v4883 = vpack.c.b16 %v4878, %v4877
    %v4884 = vpack.c.b16 %v4880, %v4879
    %v4885 = vpack.c.b16 %v4882, %v4881
    %v4890 = vsel %vm4515, %v4843, 0
    %v4893 = vsel %vm4515, %v4844, 0
    %v4896 = vsel %vm4515, %v4845, 0
    %v4899 = vsel %vm4515, %v4846, 0
    %v4902 = vsel %vm4515, %v4847, 0
    %v4905 = vsel %vm4515, %v4848, 0
    %v4908 = vsel %vm4515, %v4849, 0
    %v4911 = vsel %vm4515, %v4850, 0
    %v4914 = vsel %vm4515, %v4851, 0
    %v4917 = vsel %vm4515, %v4852, 0
    %v4920 = vsel %vm4515, %v4853, 0
    %v4923 = vsel %vm4515, %v4854, 0
    %v4926 = vsel %vm4515, %v4855, 0
    %v4929 = vsel %vm4515, %v4856, 0
    %v4932 = vsel %vm4515, %v4857, 0
    %v4935 = vsel %vm4515, %v4864, 0
    %4937 = vmatprep.subr.bf16.mxu0 0
    %4938 = vmatpush1.bf16.msra.mxu0 %v4883
    %4939 = vmatprep.subr.bf16.mxu0 0
    %4940 = vmatpush1.bf16.msra.mxu0 %v4884
    %4941 = vmatprep.subr.bf16.mxu0 0
    %4942 = vmatpush1.bf16.msra.mxu0 %v4885
    %4943 = vmatprep.subr.bf16.mxu0 0
    %4944 = vmatpush1.bf16.msra.mxu0 0
    %4945 = vmatprep.subr.bf16.mxu0 0
    %4946 = vmatpush1.bf16.msra.mxu0 0
    %4947 = vmatprep.subr.bf16.mxu0 0
    %4948 = vmatpush1.bf16.msra.mxu0 0
    %4949 = vmatprep.subr.bf16.mxu0 0
    %4950 = vmatpush1.bf16.msra.mxu0 0
    %4951 = vmatprep.subr.bf16.mxu0 0
    %4952 = vmatpush1.bf16.msra.mxu0 0
    %4953 = vmatprep.subr.bf16.mxu0 0
    %4954 = vmatpush1.bf16.msra.mxu0 0
    %4955 = vmatprep.subr.bf16.mxu0 0
    %4956 = vmatpush1.bf16.msra.mxu0 0
    %4957 = vmatprep.subr.bf16.mxu0 0
    %4958 = vmatpush1.bf16.msra.mxu0 0
    %4959 = vmatprep.subr.bf16.mxu0 0
    %4960 = vmatpush1.bf16.msra.mxu0 0
    %4961 = vmatprep.subr.bf16.mxu0 0
    %4962 = vmatpush1.bf16.msra.mxu0 0
    %4963 = vmatprep.subr.bf16.mxu0 0
    %4964 = vmatpush1.bf16.msra.mxu0 0
    %4965 = vmatprep.subr.bf16.mxu0 0
    %4966 = vmatpush1.bf16.msra.mxu0 0
    %4967 = vmatprep.subr.bf16.mxu0 0
    %4968 = vmatpush1.bf16.msra.mxu0 0
    %4969 = vmatprep.mubr.bf16.mxu0 0
    %4970 = vmatmul.mubr.bf16.gmra.mrb[0].mxu0 %v4890
    %v4971 = vpop.f32.mrb[0].mxu0
    %v4972 = vadd.f32 0.0, %v4971
    %v4973 = vpop.f32.mrb[0].mxu0
    %v4974 = vpop.f32.mrb[0].mxu0
    %v4975 = vadd.f32 0.0, %v4974
    %v4976 = vpop.f32.mrb[0].mxu0
    %4977 = vmatprep.mubr.bf16.mxu0 0
    %4978 = vmatmul.mubr.bf16.gmra.mrb[0].mxu0 %v4893
    %v4979 = vpop.f32.mrb[0].mxu0
    %v4980 = vadd.f32 0.0, %v4979
    %v4981 = vpop.f32.mrb[0].mxu0
    %v4982 = vpop.f32.mrb[0].mxu0
    %v4983 = vadd.f32 0.0, %v4982
    %v4984 = vpop.f32.mrb[0].mxu0
    %4985 = vmatprep.mubr.bf16.mxu0 0
    %4986 = vmatmul.mubr.bf16.gmra.mrb[0].mxu0 %v4896
    %v4987 = vpop.f32.mrb[0].mxu0
    %v4988 = vadd.f32 0.0, %v4987
    %v4989 = vpop.f32.mrb[0].mxu0
    %v4990 = vpop.f32.mrb[0].mxu0
    %v4991 = vadd.f32 0.0, %v4990
    %v4992 = vpop.f32.mrb[0].mxu0
    %4993 = vmatprep.mubr.bf16.mxu0 0
    %4994 = vmatmul.mubr.bf16.gmra.mrb[0].mxu0 %v4899
    %v4995 = vpop.f32.mrb[0].mxu0
    %v4996 = vadd.f32 0.0, %v4995
    %v4997 = vpop.f32.mrb[0].mxu0
    %v4998 = vpop.f32.mrb[0].mxu0
    %v4999 = vadd.f32 0.0, %v4998
    %v5000 = vpop.f32.mrb[0].mxu0
    %5001 = vmatprep.mubr.bf16.mxu0 0
    %5002 = vmatmul.mubr.bf16.gmra.mrb[0].mxu0 %v4902
    %v5003 = vpop.f32.mrb[0].mxu0
    %v5004 = vadd.f32 0.0, %v5003
    %v5005 = vpop.f32.mrb[0].mxu0
    %v5006 = vpop.f32.mrb[0].mxu0
    %v5007 = vadd.f32 0.0, %v5006
    %v5008 = vpop.f32.mrb[0].mxu0
    %5009 = vmatprep.mubr.bf16.mxu0 0
    %5010 = vmatmul.mubr.bf16.gmra.mrb[0].mxu0 %v4905
    %v5011 = vpop.f32.mrb[0].mxu0
    %v5012 = vadd.f32 0.0, %v5011
    %v5013 = vpop.f32.mrb[0].mxu0
    %v5014 = vpop.f32.mrb[0].mxu0
    %v5015 = vadd.f32 0.0, %v5014
    %v5016 = vpop.f32.mrb[0].mxu0
    %5017 = vmatprep.mubr.bf16.mxu0 0
    %5018 = vmatmul.mubr.bf16.gmra.mrb[0].mxu0 %v4908
    %v5019 = vpop.f32.mrb[0].mxu0
    %v5020 = vadd.f32 0.0, %v5019
    %v5021 = vpop.f32.mrb[0].mxu0
    %v5022 = vpop.f32.mrb[0].mxu0
    %v5023 = vadd.f32 0.0, %v5022
    %v5024 = vpop.f32.mrb[0].mxu0
    %5025 = vmatprep.mubr.bf16.mxu0 0
    %5026 = vmatmul.mubr.bf16.gmra.mrb[0].mxu0 %v4911
    %v5027 = vpop.f32.mrb[0].mxu0
    %v5028 = vadd.f32 0.0, %v5027
    %v5029 = vpop.f32.mrb[0].mxu0
    %v5030 = vpop.f32.mrb[0].mxu0
    %v5031 = vadd.f32 0.0, %v5030
    %v5032 = vpop.f32.mrb[0].mxu0
    %5033 = vmatprep.mubr.bf16.mxu0 0
    %5034 = vmatmul.mubr.bf16.gmra.mrb[0].mxu0 %v4914
    %v5035 = vpop.f32.mrb[0].mxu0
    %v5036 = vadd.f32 0.0, %v5035
    %v5037 = vpop.f32.mrb[0].mxu0
    %v5038 = vpop.f32.mrb[0].mxu0
    %v5039 = vadd.f32 0.0, %v5038
    %v5040 = vpop.f32.mrb[0].mxu0
    %5041 = vmatprep.mubr.bf16.mxu0 0
    %5042 = vmatmul.mubr.bf16.gmra.mrb[0].mxu0 %v4917
    %v5043 = vpop.f32.mrb[0].mxu0
    %v5044 = vadd.f32 0.0, %v5043
    %v5045 = vpop.f32.mrb[0].mxu0
    %v5046 = vpop.f32.mrb[0].mxu0
    %v5047 = vadd.f32 0.0, %v5046
    %v5048 = vpop.f32.mrb[0].mxu0
    %5049 = vmatprep.mubr.bf16.mxu0 0
    %5050 = vmatmul.mubr.bf16.gmra.mrb[0].mxu0 %v4920
    %v5051 = vpop.f32.mrb[0].mxu0
    %v5052 = vadd.f32 0.0, %v5051
    %v5053 = vpop.f32.mrb[0].mxu0
    %v5054 = vpop.f32.mrb[0].mxu0
    %v5055 = vadd.f32 0.0, %v5054
    %v5056 = vpop.f32.mrb[0].mxu0
    %5057 = vmatprep.mubr.bf16.mxu0 0
    %5058 = vmatmul.mubr.bf16.gmra.mrb[0].mxu0 %v4923
    %v5059 = vpop.f32.mrb[0].mxu0
    %v5060 = vadd.f32 0.0, %v5059
    %v5061 = vpop.f32.mrb[0].mxu0
    %v5062 = vpop.f32.mrb[0].mxu0
    %v5063 = vadd.f32 0.0, %v5062
    %v5064 = vpop.f32.mrb[0].mxu0
    %5065 = vmatprep.mubr.bf16.mxu0 0
    %5066 = vmatmul.mubr.bf16.gmra.mrb[0].mxu0 %v4926
    %v5067 = vpop.f32.mrb[0].mxu0
    %v5068 = vadd.f32 0.0, %v5067
    %v5069 = vpop.f32.mrb[0].mxu0
    %v5070 = vpop.f32.mrb[0].mxu0
    %v5071 = vadd.f32 0.0, %v5070
    %v5072 = vpop.f32.mrb[0].mxu0
    %5073 = vmatprep.mubr.bf16.mxu0 0
    %5074 = vmatmul.mubr.bf16.gmra.mrb[0].mxu0 %v4929
    %v5075 = vpop.f32.mrb[0].mxu0
    %v5076 = vadd.f32 0.0, %v5075
    %v5077 = vpop.f32.mrb[0].mxu0
    %v5078 = vpop.f32.mrb[0].mxu0
    %v5079 = vadd.f32 0.0, %v5078
    %v5080 = vpop.f32.mrb[0].mxu0
    %5081 = vmatprep.mubr.bf16.mxu0 0
    %5082 = vmatmul.mubr.bf16.gmra.mrb[0].mxu0 %v4932
    %v5083 = vpop.f32.mrb[0].mxu0
    %v5084 = vadd.f32 0.0, %v5083
    %v5085 = vpop.f32.mrb[0].mxu0
    %v5086 = vpop.f32.mrb[0].mxu0
    %v5087 = vadd.f32 0.0, %v5086
    %v5088 = vpop.f32.mrb[0].mxu0
    %5089 = vmatprep.mubr.bf16.mxu0 0
    %5090 = vmatmul.mubr.bf16.gmra.mrb[0].mxu0 %v4935
    %v5091 = vpop.f32.mrb[0].mxu0
    %v5092 = vadd.f32 0.0, %v5091
    %v5093 = vpop.f32.mrb[0].mxu0
    %v5094 = vpop.f32.mrb[0].mxu0
    %v5095 = vadd.f32 0.0, %v5094
    %v5096 = vpop.f32.mrb[0].mxu0
    %5097 = vdwg.mxu0
    %v5104 = vunpack.c.l.b16 %v4858
    %v5105 = vunpack.c.l.b16 %v4859
    %v5106 = vunpack.c.l.b16 %v4860
    %v5107 = vunpack.c.l.b16 %v4861
    %v5108 = vunpack.c.l.b16 %v4862
    %v5109 = vunpack.c.l.b16 %v4863
    %v5110 = vpack.c.b16 %v5105, %v5104
    %v5111 = vpack.c.b16 %v5107, %v5106
    %v5112 = vpack.c.b16 %v5109, %v5108
    %v5117 = vsel %vm4515, %v4842, 0
    %5119 = vmatprep.subr.bf16.mxu0 0
    %5120 = vmatpush1.bf16.msra.mxu0 %v5110
    %5121 = vmatprep.subr.bf16.mxu0 0
    %5122 = vmatpush1.bf16.msra.mxu0 %v5111
    %5123 = vmatprep.subr.bf16.mxu0 0
    %5124 = vmatpush1.bf16.msra.mxu0 %v5112
    %5125 = vmatprep.subr.bf16.mxu0 0
    %5126 = vmatpush1.bf16.msra.mxu0 0
    %5127 = vmatprep.subr.bf16.mxu0 0
    %5128 = vmatpush1.bf16.msra.mxu0 0
    %5129 = vmatprep.subr.bf16.mxu0 0
    %5130 = vmatpush1.bf16.msra.mxu0 0
    %5131 = vmatprep.subr.bf16.mxu0 0
    %5132 = vmatpush1.bf16.msra.mxu0 0
    %5133 = vmatprep.subr.bf16.mxu0 0
    %5134 = vmatpush1.bf16.msra.mxu0 0
    %5135 = vmatprep.subr.bf16.mxu0 0
    %5136 = vmatpush1.bf16.msra.mxu0 0
    %5137 = vmatprep.subr.bf16.mxu0 0
    %5138 = vmatpush1.bf16.msra.mxu0 0
    %5139 = vmatprep.subr.bf16.mxu0 0
    %5140 = vmatpush1.bf16.msra.mxu0 0
    %5141 = vmatprep.subr.bf16.mxu0 0
    %5142 = vmatpush1.bf16.msra.mxu0 0
    %5143 = vmatprep.subr.bf16.mxu0 0
    %5144 = vmatpush1.bf16.msra.mxu0 0
    %5145 = vmatprep.subr.bf16.mxu0 0
    %5146 = vmatpush1.bf16.msra.mxu0 0
    %5147 = vmatprep.subr.bf16.mxu0 0
    %5148 = vmatpush1.bf16.msra.mxu0 0
    %5149 = vmatprep.subr.bf16.mxu0 0
    %5150 = vmatpush1.bf16.msra.mxu0 0
    %5151 = vmatprep.mubr.bf16.mxu0 0
    %5152 = vmatmul.mubr.bf16.gmra.mrb[0].mxu0 %v5117
    %v5153 = vpop.f32.mrb[0].mxu0
    %v5154 = vadd.f32 %v4972, %v5153
    %v5155 = vpop.f32.mrb[0].mxu0
    %v5156 = vpop.f32.mrb[0].mxu0
    %v5157 = vadd.f32 %v4975, %v5156
    %v5158 = vpop.f32.mrb[0].mxu0
    %5159 = vmatprep.mubr.bf16.mxu0 0
    %5160 = vmatmul.mubr.bf16.gmra.mrb[0].mxu0 %v4890
    %v5161 = vpop.f32.mrb[0].mxu0
    %v5162 = vadd.f32 %v4980, %v5161
    %v5163 = vpop.f32.mrb[0].mxu0
    %v5164 = vpop.f32.mrb[0].mxu0
    %v5165 = vadd.f32 %v4983, %v5164
    %v5166 = vpop.f32.mrb[0].mxu0
    %5167 = vmatprep.mubr.bf16.mxu0 0
    %5168 = vmatmul.mubr.bf16.gmra.mrb[0].mxu0 %v4893
    %v5169 = vpop.f32.mrb[0].mxu0
    %v5170 = vadd.f32 %v4988, %v5169
    %v5171 = vpop.f32.mrb[0].mxu0
    %v5172 = vpop.f32.mrb[0].mxu0
    %v5173 = vadd.f32 %v4991, %v5172
    %v5174 = vpop.f32.mrb[0].mxu0
    %5175 = vmatprep.mubr.bf16.mxu0 0
    %5176 = vmatmul.mubr.bf16.gmra.mrb[0].mxu0 %v4896
    %v5177 = vpop.f32.mrb[0].mxu0
    %v5178 = vadd.f32 %v4996, %v5177
    %v5179 = vpop.f32.mrb[0].mxu0
    %v5180 = vpop.f32.mrb[0].mxu0
    %v5181 = vadd.f32 %v4999, %v5180
    %v5182 = vpop.f32.mrb[0].mxu0
    %5183 = vmatprep.mubr.bf16.mxu0 0
    %5184 = vmatmul.mubr.bf16.gmra.mrb[0].mxu0 %v4899
    %v5185 = vpop.f32.mrb[0].mxu0
    %v5186 = vadd.f32 %v5004, %v5185
    %v5187 = vpop.f32.mrb[0].mxu0
    %v5188 = vpop.f32.mrb[0].mxu0
    %v5189 = vadd.f32 %v5007, %v5188
    %v5190 = vpop.f32.mrb[0].mxu0
    %5191 = vmatprep.mubr.bf16.mxu0 0
    %5192 = vmatmul.mubr.bf16.gmra.mrb[0].mxu0 %v4902
    %v5193 = vpop.f32.mrb[0].mxu0
    %v5194 = vadd.f32 %v5012, %v5193
    %v5195 = vpop.f32.mrb[0].mxu0
    %v5196 = vpop.f32.mrb[0].mxu0
    %v5197 = vadd.f32 %v5015, %v5196
    %v5198 = vpop.f32.mrb[0].mxu0
    %5199 = vmatprep.mubr.bf16.mxu0 0
    %5200 = vmatmul.mubr.bf16.gmra.mrb[0].mxu0 %v4905
    %v5201 = vpop.f32.mrb[0].mxu0
    %v5202 = vadd.f32 %v5020, %v5201
    %v5203 = vpop.f32.mrb[0].mxu0
    %v5204 = vpop.f32.mrb[0].mxu0
    %v5205 = vadd.f32 %v5023, %v5204
    %v5206 = vpop.f32.mrb[0].mxu0
    %5207 = vmatprep.mubr.bf16.mxu0 0
    %5208 = vmatmul.mubr.bf16.gmra.mrb[0].mxu0 %v4908
    %v5209 = vpop.f32.mrb[0].mxu0
    %v5210 = vadd.f32 %v5028, %v5209
    %v5211 = vpop.f32.mrb[0].mxu0
    %v5212 = vpop.f32.mrb[0].mxu0
    %v5213 = vadd.f32 %v5031, %v5212
    %v5214 = vpop.f32.mrb[0].mxu0
    %5215 = vmatprep.mubr.bf16.mxu0 0
    %5216 = vmatmul.mubr.bf16.gmra.mrb[0].mxu0 %v4911
    %v5217 = vpop.f32.mrb[0].mxu0
    %v5218 = vadd.f32 %v5036, %v5217
    %v5219 = vpop.f32.mrb[0].mxu0
    %v5220 = vpop.f32.mrb[0].mxu0
    %v5221 = vadd.f32 %v5039, %v5220
    %v5222 = vpop.f32.mrb[0].mxu0
    %5223 = vmatprep.mubr.bf16.mxu0 0
    %5224 = vmatmul.mubr.bf16.gmra.mrb[0].mxu0 %v4914
    %v5225 = vpop.f32.mrb[0].mxu0
    %v5226 = vadd.f32 %v5044, %v5225
    %v5227 = vpop.f32.mrb[0].mxu0
    %v5228 = vpop.f32.mrb[0].mxu0
    %v5229 = vadd.f32 %v5047, %v5228
    %v5230 = vpop.f32.mrb[0].mxu0
    %5231 = vmatprep.mubr.bf16.mxu0 0
    %5232 = vmatmul.mubr.bf16.gmra.mrb[0].mxu0 %v4917
    %v5233 = vpop.f32.mrb[0].mxu0
    %v5234 = vadd.f32 %v5052, %v5233
    %v5235 = vpop.f32.mrb[0].mxu0
    %v5236 = vpop.f32.mrb[0].mxu0
    %v5237 = vadd.f32 %v5055, %v5236
    %v5238 = vpop.f32.mrb[0].mxu0
    %5239 = vmatprep.mubr.bf16.mxu0 0
    %5240 = vmatmul.mubr.bf16.gmra.mrb[0].mxu0 %v4920
    %v5241 = vpop.f32.mrb[0].mxu0
    %v5242 = vadd.f32 %v5060, %v5241
    %v5243 = vpop.f32.mrb[0].mxu0
    %v5244 = vpop.f32.mrb[0].mxu0
    %v5245 = vadd.f32 %v5063, %v5244
    %v5246 = vpop.f32.mrb[0].mxu0
    %5247 = vmatprep.mubr.bf16.mxu0 0
    %5248 = vmatmul.mubr.bf16.gmra.mrb[0].mxu0 %v4923
    %v5249 = vpop.f32.mrb[0].mxu0
    %v5250 = vadd.f32 %v5068, %v5249
    %v5251 = vpop.f32.mrb[0].mxu0
    %v5252 = vpop.f32.mrb[0].mxu0
    %v5253 = vadd.f32 %v5071, %v5252
    %v5254 = vpop.f32.mrb[0].mxu0
    %5255 = vmatprep.mubr.bf16.mxu0 0
    %5256 = vmatmul.mubr.bf16.gmra.mrb[0].mxu0 %v4926
    %v5257 = vpop.f32.mrb[0].mxu0
    %v5258 = vadd.f32 %v5076, %v5257
    %v5259 = vpop.f32.mrb[0].mxu0
    %v5260 = vpop.f32.mrb[0].mxu0
    %v5261 = vadd.f32 %v5079, %v5260
    %v5262 = vpop.f32.mrb[0].mxu0
    %5263 = vmatprep.mubr.bf16.mxu0 0
    %5264 = vmatmul.mubr.bf16.gmra.mrb[0].mxu0 %v4929
    %v5265 = vpop.f32.mrb[0].mxu0
    %v5266 = vadd.f32 %v5084, %v5265
    %v5267 = vpop.f32.mrb[0].mxu0
    %v5268 = vpop.f32.mrb[0].mxu0
    %v5269 = vadd.f32 %v5087, %v5268
    %v5270 = vpop.f32.mrb[0].mxu0
    %5271 = vmatprep.mubr.bf16.mxu0 0
    %5272 = vmatmul.mubr.bf16.gmra.mrb[0].mxu0 %v4932
    %v5273 = vpop.f32.mrb[0].mxu0
    %v5274 = vadd.f32 %v5092, %v5273
    %v5275 = vpop.f32.mrb[0].mxu0
    %v5276 = vpop.f32.mrb[0].mxu0
    %v5277 = vadd.f32 %v5095, %v5276
    %v5278 = vpop.f32.mrb[0].mxu0
    %5279 = vdwg.mxu0
    %v5280 = vld [vmem:[#allocation3 + $0x10] sm:$0xff]
    %v5281 = vld [vmem:[#allocation3 + $0x18] sm:$0xff]
    %v5282 = vld [vmem:[#allocation3 + $0x20] sm:$0xff]
    %v5283 = vld [vmem:[#allocation3 + $0x28] sm:$0xff]
    %v5284 = vld [vmem:[#allocation3 + $0x30] sm:$0xff]
    %v5285 = vld [vmem:[#allocation3 + $0x38] sm:$0xff]
    %v5286 = vld [vmem:[#allocation3 + $0x40] sm:$0xff]
    %v5287 = vld [vmem:[#allocation3 + $0x48] sm:$0xff]
    %v5288 = vld [vmem:[#allocation3 + $0x50] sm:$0xff]
    %v5289 = vld [vmem:[#allocation3 + $0x58] sm:$0xff]
    %v5290 = vld [vmem:[#allocation3 + $0x60] sm:$0xff]
    %v5291 = vld [vmem:[#allocation3 + $0x68] sm:$0xff]
    %v5292 = vld [vmem:[#allocation3 + $0x70] sm:$0xff]
    %v5293 = vld [vmem:[#allocation3 + $0x78] sm:$0xff]
    %v5294 = vld [vmem:[#allocation3 + $0x80] sm:$0xff]
    %v5295 = vld [vmem:[#allocation3 + $0x88] sm:$0xff]
    %v5296 = vld [vmem:[%s4 + $0x30] sm:$0xf]
    %v5297 = vld [vmem:[%s4 + $0x34] sm:$0xf]
    %v5298 = vld [vmem:[%s4 + $0x38] sm:$0xf]
    %v5299 = vld [vmem:[%s4 + $0x3c] sm:$0xf]
    %v5300 = vld [vmem:[%s4 + $0x40] sm:$0xf]
    %v5301 = vld [vmem:[%s4 + $0x44] sm:$0xf]
    %v5308 = vunpack.c.l.b16 %v5296
    %v5309 = vunpack.c.l.b16 %v5297
    %v5310 = vunpack.c.l.b16 %v5298
    %v5311 = vunpack.c.l.b16 %v5299
    %v5312 = vunpack.c.l.b16 %v5300
    %v5313 = vunpack.c.l.b16 %v5301
    %v5314 = vpack.c.b16 %v5309, %v5308
    %v5315 = vpack.c.b16 %v5311, %v5310
    %v5316 = vpack.c.b16 %v5313, %v5312
    %v5321 = vsel %vm4515, %v5280, 0
    %v5324 = vsel %vm4515, %v5281, 0
    %v5327 = vsel %vm4515, %v5282, 0
    %v5330 = vsel %vm4515, %v5283, 0
    %v5333 = vsel %vm4515, %v5284, 0
    %v5336 = vsel %vm4515, %v5285, 0
    %v5339 = vsel %vm4515, %v5286, 0
    %v5342 = vsel %vm4515, %v5287, 0
    %v5345 = vsel %vm4515, %v5288, 0
    %v5348 = vsel %vm4515, %v5289, 0
    %v5351 = vsel %vm4515, %v5290, 0
    %v5354 = vsel %vm4515, %v5291, 0
    %v5357 = vsel %vm4515, %v5292, 0
    %v5360 = vsel %vm4515, %v5293, 0
    %v5363 = vsel %vm4515, %v5294, 0
    %v5366 = vsel %vm4515, %v5295, 0
    %5368 = vmatprep.subr.bf16.mxu0 0
    %5369 = vmatpush1.bf16.msra.mxu0 %v5314
    %5370 = vmatprep.subr.bf16.mxu0 0
    %5371 = vmatpush1.bf16.msra.mxu0 %v5315
    %5372 = vmatprep.subr.bf16.mxu0 0
    %5373 = vmatpush1.bf16.msra.mxu0 %v5316
    %5374 = vmatprep.subr.bf16.mxu0 0
    %5375 = vmatpush1.bf16.msra.mxu0 0
    %5376 = vmatprep.subr.bf16.mxu0 0
    %5377 = vmatpush1.bf16.msra.mxu0 0
    %5378 = vmatprep.subr.bf16.mxu0 0
    %5379 = vmatpush1.bf16.msra.mxu0 0
    %5380 = vmatprep.subr.bf16.mxu0 0
    %5381 = vmatpush1.bf16.msra.mxu0 0
    %5382 = vmatprep.subr.bf16.mxu0 0
    %5383 = vmatpush1.bf16.msra.mxu0 0
    %5384 = vmatprep.subr.bf16.mxu0 0
    %5385 = vmatpush1.bf16.msra.mxu0 0
    %5386 = vmatprep.subr.bf16.mxu0 0
    %5387 = vmatpush1.bf16.msra.mxu0 0
    %5388 = vmatprep.subr.bf16.mxu0 0
    %5389 = vmatpush1.bf16.msra.mxu0 0
    %5390 = vmatprep.subr.bf16.mxu0 0
    %5391 = vmatpush1.bf16.msra.mxu0 0
    %5392 = vmatprep.subr.bf16.mxu0 0
    %5393 = vmatpush1.bf16.msra.mxu0 0
    %5394 = vmatprep.subr.bf16.mxu0 0
    %5395 = vmatpush1.bf16.msra.mxu0 0
    %5396 = vmatprep.subr.bf16.mxu0 0
    %5397 = vmatpush1.bf16.msra.mxu0 0
    %5398 = vmatprep.subr.bf16.mxu0 0
    %5399 = vmatpush1.bf16.msra.mxu0 0
    %5400 = vmatprep.mubr.bf16.mxu0 0
    %5401 = vmatmul.mubr.bf16.gmra.mrb[0].mxu0 %v5321
    %v5402 = vpop.f32.mrb[0].mxu0
    %v5403 = vadd.f32 0.0, %v5402
    %v5404 = vpop.f32.mrb[0].mxu0
    %v5405 = vpop.f32.mrb[0].mxu0
    %v5406 = vadd.f32 0.0, %v5405
    %v5407 = vpop.f32.mrb[0].mxu0
    %5408 = vmatprep.mubr.bf16.mxu0 0
    %5409 = vmatmul.mubr.bf16.gmra.mrb[0].mxu0 %v5324
    %v5410 = vpop.f32.mrb[0].mxu0
    %v5411 = vadd.f32 0.0, %v5410
    %v5412 = vpop.f32.mrb[0].mxu0
    %v5413 = vpop.f32.mrb[0].mxu0
    %v5414 = vadd.f32 0.0, %v5413
    %v5415 = vpop.f32.mrb[0].mxu0
    %5416 = vmatprep.mubr.bf16.mxu0 0
    %5417 = vmatmul.mubr.bf16.gmra.mrb[0].mxu0 %v5327
    %v5418 = vpop.f32.mrb[0].mxu0
    %v5419 = vadd.f32 0.0, %v5418
    %v5420 = vpop.f32.mrb[0].mxu0
    %v5421 = vpop.f32.mrb[0].mxu0
    %v5422 = vadd.f32 0.0, %v5421
    %v5423 = vpop.f32.mrb[0].mxu0
    %5424 = vmatprep.mubr.bf16.mxu0 0
    %5425 = vmatmul.mubr.bf16.gmra.mrb[0].mxu0 %v5330
    %v5426 = vpop.f32.mrb[0].mxu0
    %v5427 = vadd.f32 0.0, %v5426
    %v5428 = vpop.f32.mrb[0].mxu0
    %v5429 = vpop.f32.mrb[0].mxu0
    %v5430 = vadd.f32 0.0, %v5429
    %v5431 = vpop.f32.mrb[0].mxu0
    %5432 = vmatprep.mubr.bf16.mxu0 0
    %5433 = vmatmul.mubr.bf16.gmra.mrb[0].mxu0 %v5333
    %v5434 = vpop.f32.mrb[0].mxu0
    %v5435 = vadd.f32 0.0, %v5434
    %v5436 = vpop.f32.mrb[0].mxu0
    %v5437 = vpop.f32.mrb[0].mxu0
    %v5438 = vadd.f32 0.0, %v5437
    %v5439 = vpop.f32.mrb[0].mxu0
    %5440 = vmatprep.mubr.bf16.mxu0 0
    %5441 = vmatmul.mubr.bf16.gmra.mrb[0].mxu0 %v5336
    %v5442 = vpop.f32.mrb[0].mxu0
    %v5443 = vadd.f32 0.0, %v5442
    %v5444 = vpop.f32.mrb[0].mxu0
    %v5445 = vpop.f32.mrb[0].mxu0
    %v5446 = vadd.f32 0.0, %v5445
    %v5447 = vpop.f32.mrb[0].mxu0
    %5448 = vmatprep.mubr.bf16.mxu0 0
    %5449 = vmatmul.mubr.bf16.gmra.mrb[0].mxu0 %v5339
    %v5450 = vpop.f32.mrb[0].mxu0
    %v5451 = vadd.f32 0.0, %v5450
    %v5452 = vpop.f32.mrb[0].mxu0
    %v5453 = vpop.f32.mrb[0].mxu0
    %v5454 = vadd.f32 0.0, %v5453
    %v5455 = vpop.f32.mrb[0].mxu0
    %5456 = vmatprep.mubr.bf16.mxu0 0
    %5457 = vmatmul.mubr.bf16.gmra.mrb[0].mxu0 %v5342
    %v5458 = vpop.f32.mrb[0].mxu0
    %v5459 = vadd.f32 0.0, %v5458
    %v5460 = vpop.f32.mrb[0].mxu0
    %v5461 = vpop.f32.mrb[0].mxu0
    %v5462 = vadd.f32 0.0, %v5461
    %v5463 = vpop.f32.mrb[0].mxu0
    %5464 = vmatprep.mubr.bf16.mxu0 0
    %5465 = vmatmul.mubr.bf16.gmra.mrb[0].mxu0 %v5345
    %v5466 = vpop.f32.mrb[0].mxu0
    %v5467 = vadd.f32 0.0, %v5466
    %v5468 = vpop.f32.mrb[0].mxu0
    %v5469 = vpop.f32.mrb[0].mxu0
    %v5470 = vadd.f32 0.0, %v5469
    %v5471 = vpop.f32.mrb[0].mxu0
    %5472 = vmatprep.mubr.bf16.mxu0 0
    %5473 = vmatmul.mubr.bf16.gmra.mrb[0].mxu0 %v5348
    %v5474 = vpop.f32.mrb[0].mxu0
    %v5475 = vadd.f32 0.0, %v5474
    %v5476 = vpop.f32.mrb[0].mxu0
    %v5477 = vpop.f32.mrb[0].mxu0
    %v5478 = vadd.f32 0.0, %v5477
    %v5479 = vpop.f32.mrb[0].mxu0
    %5480 = vmatprep.mubr.bf16.mxu0 0
    %5481 = vmatmul.mubr.bf16.gmra.mrb[0].mxu0 %v5351
    %v5482 = vpop.f32.mrb[0].mxu0
    %v5483 = vadd.f32 0.0, %v5482
    %v5484 = vpop.f32.mrb[0].mxu0
    %v5485 = vpop.f32.mrb[0].mxu0
    %v5486 = vadd.f32 0.0, %v5485
    %v5487 = vpop.f32.mrb[0].mxu0
    %5488 = vmatprep.mubr.bf16.mxu0 0
    %5489 = vmatmul.mubr.bf16.gmra.mrb[0].mxu0 %v5354
    %v5490 = vpop.f32.mrb[0].mxu0
    %v5491 = vadd.f32 0.0, %v5490
    %v5492 = vpop.f32.mrb[0].mxu0
    %v5493 = vpop.f32.mrb[0].mxu0
    %v5494 = vadd.f32 0.0, %v5493
    %v5495 = vpop.f32.mrb[0].mxu0
    %5496 = vmatprep.mubr.bf16.mxu0 0
    %5497 = vmatmul.mubr.bf16.gmra.mrb[0].mxu0 %v5357
    %v5498 = vpop.f32.mrb[0].mxu0
    %v5499 = vadd.f32 0.0, %v5498
    %v5500 = vpop.f32.mrb[0].mxu0
    %v5501 = vpop.f32.mrb[0].mxu0
    %v5502 = vadd.f32 0.0, %v5501
    %v5503 = vpop.f32.mrb[0].mxu0
    %5504 = vmatprep.mubr.bf16.mxu0 0
    %5505 = vmatmul.mubr.bf16.gmra.mrb[0].mxu0 %v5360
    %v5506 = vpop.f32.mrb[0].mxu0
    %v5507 = vadd.f32 0.0, %v5506
    %v5508 = vpop.f32.mrb[0].mxu0
    %v5509 = vpop.f32.mrb[0].mxu0
    %v5510 = vadd.f32 0.0, %v5509
    %v5511 = vpop.f32.mrb[0].mxu0
    %5512 = vmatprep.mubr.bf16.mxu0 0
    %5513 = vmatmul.mubr.bf16.gmra.mrb[0].mxu0 %v5363
    %v5514 = vpop.f32.mrb[0].mxu0
    %v5515 = vadd.f32 0.0, %v5514
    %v5516 = vpop.f32.mrb[0].mxu0
    %v5517 = vpop.f32.mrb[0].mxu0
    %v5518 = vadd.f32 0.0, %v5517
    %v5519 = vpop.f32.mrb[0].mxu0
    %5520 = vmatprep.mubr.bf16.mxu0 0
    %5521 = vmatmul.mubr.bf16.gmra.mrb[0].mxu0 %v5366
    %v5522 = vpop.f32.mrb[0].mxu0
    %v5523 = vadd.f32 0.0, %v5522
    %v5524 = vpop.f32.mrb[0].mxu0
    %v5525 = vpop.f32.mrb[0].mxu0
    %v5526 = vadd.f32 0.0, %v5525
    %v5527 = vpop.f32.mrb[0].mxu0
    %5528 = vdwg.mxu0
    %v5529 = vadd.f32 %v5154, %v5403
    %v5530 = vadd.f32 %v5157, %v5406
    %v5531 = vadd.f32 %v5162, %v5411
    %v5532 = vadd.f32 %v5165, %v5414
    %v5533 = vadd.f32 %v5170, %v5419
    %v5534 = vadd.f32 %v5173, %v5422
    %v5535 = vadd.f32 %v5178, %v5427
    %v5536 = vadd.f32 %v5181, %v5430
    %v5537 = vadd.f32 %v5186, %v5435
    %v5538 = vadd.f32 %v5189, %v5438
    %v5539 = vadd.f32 %v5194, %v5443
    %v5540 = vadd.f32 %v5197, %v5446
    %v5541 = vadd.f32 %v5202, %v5451
    %v5542 = vadd.f32 %v5205, %v5454
    %v5543 = vadd.f32 %v5210, %v5459
    %v5544 = vadd.f32 %v5213, %v5462
    %v5545 = vadd.f32 %v5218, %v5467
    %v5546 = vadd.f32 %v5221, %v5470
    %v5547 = vadd.f32 %v5226, %v5475
    %v5548 = vadd.f32 %v5229, %v5478
    %v5549 = vadd.f32 %v5234, %v5483
    %v5550 = vadd.f32 %v5237, %v5486
    %v5551 = vadd.f32 %v5242, %v5491
    %v5552 = vadd.f32 %v5245, %v5494
    %v5553 = vadd.f32 %v5250, %v5499
    %v5554 = vadd.f32 %v5253, %v5502
    %v5555 = vadd.f32 %v5258, %v5507
    %v5556 = vadd.f32 %v5261, %v5510
    %v5557 = vadd.f32 %v5266, %v5515
    %v5558 = vadd.f32 %v5269, %v5518
    %v5559 = vadd.f32 %v5274, %v5523
    %v5560 = vadd.f32 %v5277, %v5526
    %v5561 = vld [vmem:[#allocation3 + $0x88] sm:$0xff]
    %v5562 = vld [vmem:[#allocation3 + $0x90] sm:$0xff]
    %v5563 = vld [vmem:[#allocation3 + $0x98] sm:$0xff]
    %v5564 = vld [vmem:[#allocation3 + $0xa0] sm:$0xff]
    %v5565 = vld [vmem:[#allocation3 + $0xa8] sm:$0xff]
    %v5566 = vld [vmem:[#allocation3 + $0xb0] sm:$0xff]
    %v5567 = vld [vmem:[#allocation3 + $0xb8] sm:$0xff]
    %v5568 = vld [vmem:[#allocation3 + $0xc0] sm:$0xff]
    %v5569 = vld [vmem:[#allocation3 + $0xc8] sm:$0xff]
    %v5570 = vld [vmem:[#allocation3 + $0xd0] sm:$0xff]
    %v5571 = vld [vmem:[#allocation3 + $0xd8] sm:$0xff]
    %v5572 = vld [vmem:[#allocation3 + $0xe0] sm:$0xff]
    %v5573 = vld [vmem:[#allocation3 + $0xe8] sm:$0xff]
    %v5574 = vld [vmem:[#allocation3 + $0xf0] sm:$0xff]
    %v5575 = vld [vmem:[#allocation3 + $0xf8] sm:$0xff]
    %v5576 = vld [vmem:[#allocation3 + $0x100] sm:$0xff]
    %v5577 = vld [vmem:[#allocation3 + $0x108] sm:$0xff]
    %v5579 = vsel %vm4515, %v5562, 0
    %v5582 = vsel %vm4515, %v5563, 0
    %v5585 = vsel %vm4515, %v5564, 0
    %v5588 = vsel %vm4515, %v5565, 0
    %v5591 = vsel %vm4515, %v5566, 0
    %v5594 = vsel %vm4515, %v5567, 0
    %v5597 = vsel %vm4515, %v5568, 0
    %v5600 = vsel %vm4515, %v5569, 0
    %v5603 = vsel %vm4515, %v5570, 0
    %v5606 = vsel %vm4515, %v5571, 0
    %v5609 = vsel %vm4515, %v5572, 0
    %v5612 = vsel %vm4515, %v5573, 0
    %v5615 = vsel %vm4515, %v5574, 0
    %v5618 = vsel %vm4515, %v5575, 0
    %v5621 = vsel %vm4515, %v5576, 0
    %v5624 = vsel %vm4515, %v5577, 0
    %5626 = vmatprep.subr.bf16.mxu0 0
    %5627 = vmatpush1.bf16.msra.mxu0 %v4883
    %5628 = vmatprep.subr.bf16.mxu0 0
    %5629 = vmatpush1.bf16.msra.mxu0 %v4884
    %5630 = vmatprep.subr.bf16.mxu0 0
    %5631 = vmatpush1.bf16.msra.mxu0 %v4885
    %5632 = vmatprep.subr.bf16.mxu0 0
    %5633 = vmatpush1.bf16.msra.mxu0 0
    %5634 = vmatprep.subr.bf16.mxu0 0
    %5635 = vmatpush1.bf16.msra.mxu0 0
    %5636 = vmatprep.subr.bf16.mxu0 0
    %5637 = vmatpush1.bf16.msra.mxu0 0
    %5638 = vmatprep.subr.bf16.mxu0 0
    %5639 = vmatpush1.bf16.msra.mxu0 0
    %5640 = vmatprep.subr.bf16.mxu0 0
    %5641 = vmatpush1.bf16.msra.mxu0 0
    %5642 = vmatprep.subr.bf16.mxu0 0
    %5643 = vmatpush1.bf16.msra.mxu0 0
    %5644 = vmatprep.subr.bf16.mxu0 0
    %5645 = vmatpush1.bf16.msra.mxu0 0
    %5646 = vmatprep.subr.bf16.mxu0 0
    %5647 = vmatpush1.bf16.msra.mxu0 0
    %5648 = vmatprep.subr.bf16.mxu0 0
    %5649 = vmatpush1.bf16.msra.mxu0 0
    %5650 = vmatprep.subr.bf16.mxu0 0
    %5651 = vmatpush1.bf16.msra.mxu0 0
    %5652 = vmatprep.subr.bf16.mxu0 0
    %5653 = vmatpush1.bf16.msra.mxu0 0
    %5654 = vmatprep.subr.bf16.mxu0 0
    %5655 = vmatpush1.bf16.msra.mxu0 0
    %5656 = vmatprep.subr.bf16.mxu0 0
    %5657 = vmatpush1.bf16.msra.mxu0 0
    %5658 = vmatprep.mubr.bf16.mxu0 0
    %5659 = vmatmul.mubr.bf16.gmra.mrb[0].mxu0 %v5579
    %v5660 = vpop.f32.mrb[0].mxu0
    %v5661 = vadd.f32 0.0, %v5660
    %v5662 = vpop.f32.mrb[0].mxu0
    %v5663 = vpop.f32.mrb[0].mxu0
    %v5664 = vadd.f32 0.0, %v5663
    %v5665 = vpop.f32.mrb[0].mxu0
    %5666 = vmatprep.mubr.bf16.mxu0 0
    %5667 = vmatmul.mubr.bf16.gmra.mrb[0].mxu0 %v5582
    %v5668 = vpop.f32.mrb[0].mxu0
    %v5669 = vadd.f32 0.0, %v5668
    %v5670 = vpop.f32.mrb[0].mxu0
    %v5671 = vpop.f32.mrb[0].mxu0
    %v5672 = vadd.f32 0.0, %v5671
    %v5673 = vpop.f32.mrb[0].mxu0
    %5674 = vmatprep.mubr.bf16.mxu0 0
    %5675 = vmatmul.mubr.bf16.gmra.mrb[0].mxu0 %v5585
    %v5676 = vpop.f32.mrb[0].mxu0
    %v5677 = vadd.f32 0.0, %v5676
    %v5678 = vpop.f32.mrb[0].mxu0
    %v5679 = vpop.f32.mrb[0].mxu0
    %v5680 = vadd.f32 0.0, %v5679
    %v5681 = vpop.f32.mrb[0].mxu0
    %5682 = vmatprep.mubr.bf16.mxu0 0
    %5683 = vmatmul.mubr.bf16.gmra.mrb[0].mxu0 %v5588
    %v5684 = vpop.f32.mrb[0].mxu0
    %v5685 = vadd.f32 0.0, %v5684
    %v5686 = vpop.f32.mrb[0].mxu0
    %v5687 = vpop.f32.mrb[0].mxu0
    %v5688 = vadd.f32 0.0, %v5687
    %v5689 = vpop.f32.mrb[0].mxu0
    %5690 = vmatprep.mubr.bf16.mxu0 0
    %5691 = vmatmul.mubr.bf16.gmra.mrb[0].mxu0 %v5591
    %v5692 = vpop.f32.mrb[0].mxu0
    %v5693 = vadd.f32 0.0, %v5692
    %v5694 = vpop.f32.mrb[0].mxu0
    %v5695 = vpop.f32.mrb[0].mxu0
    %v5696 = vadd.f32 0.0, %v5695
    %v5697 = vpop.f32.mrb[0].mxu0
    %5698 = vmatprep.mubr.bf16.mxu0 0
    %5699 = vmatmul.mubr.bf16.gmra.mrb[0].mxu0 %v5594
    %v5700 = vpop.f32.mrb[0].mxu0
    %v5701 = vadd.f32 0.0, %v5700
    %v5702 = vpop.f32.mrb[0].mxu0
    %v5703 = vpop.f32.mrb[0].mxu0
    %v5704 = vadd.f32 0.0, %v5703
    %v5705 = vpop.f32.mrb[0].mxu0
    %5706 = vmatprep.mubr.bf16.mxu0 0
    %5707 = vmatmul.mubr.bf16.gmra.mrb[0].mxu0 %v5597
    %v5708 = vpop.f32.mrb[0].mxu0
    %v5709 = vadd.f32 0.0, %v5708
    %v5710 = vpop.f32.mrb[0].mxu0
    %v5711 = vpop.f32.mrb[0].mxu0
    %v5712 = vadd.f32 0.0, %v5711
    %v5713 = vpop.f32.mrb[0].mxu0
    %5714 = vmatprep.mubr.bf16.mxu0 0
    %5715 = vmatmul.mubr.bf16.gmra.mrb[0].mxu0 %v5600
    %v5716 = vpop.f32.mrb[0].mxu0
    %v5717 = vadd.f32 0.0, %v5716
    %v5718 = vpop.f32.mrb[0].mxu0
    %v5719 = vpop.f32.mrb[0].mxu0
    %v5720 = vadd.f32 0.0, %v5719
    %v5721 = vpop.f32.mrb[0].mxu0
    %5722 = vmatprep.mubr.bf16.mxu0 0
    %5723 = vmatmul.mubr.bf16.gmra.mrb[0].mxu0 %v5603
    %v5724 = vpop.f32.mrb[0].mxu0
    %v5725 = vadd.f32 0.0, %v5724
    %v5726 = vpop.f32.mrb[0].mxu0
    %v5727 = vpop.f32.mrb[0].mxu0
    %v5728 = vadd.f32 0.0, %v5727
    %v5729 = vpop.f32.mrb[0].mxu0
    %5730 = vmatprep.mubr.bf16.mxu0 0
    %5731 = vmatmul.mubr.bf16.gmra.mrb[0].mxu0 %v5606
    %v5732 = vpop.f32.mrb[0].mxu0
    %v5733 = vadd.f32 0.0, %v5732
    %v5734 = vpop.f32.mrb[0].mxu0
    %v5735 = vpop.f32.mrb[0].mxu0
    %v5736 = vadd.f32 0.0, %v5735
    %v5737 = vpop.f32.mrb[0].mxu0
    %5738 = vmatprep.mubr.bf16.mxu0 0
    %5739 = vmatmul.mubr.bf16.gmra.mrb[0].mxu0 %v5609
    %v5740 = vpop.f32.mrb[0].mxu0
    %v5741 = vadd.f32 0.0, %v5740
    %v5742 = vpop.f32.mrb[0].mxu0
    %v5743 = vpop.f32.mrb[0].mxu0
    %v5744 = vadd.f32 0.0, %v5743
    %v5745 = vpop.f32.mrb[0].mxu0
    %5746 = vmatprep.mubr.bf16.mxu0 0
    %5747 = vmatmul.mubr.bf16.gmra.mrb[0].mxu0 %v5612
    %v5748 = vpop.f32.mrb[0].mxu0
    %v5749 = vadd.f32 0.0, %v5748
    %v5750 = vpop.f32.mrb[0].mxu0
    %v5751 = vpop.f32.mrb[0].mxu0
    %v5752 = vadd.f32 0.0, %v5751
    %v5753 = vpop.f32.mrb[0].mxu0
    %5754 = vmatprep.mubr.bf16.mxu0 0
    %5755 = vmatmul.mubr.bf16.gmra.mrb[0].mxu0 %v5615
    %v5756 = vpop.f32.mrb[0].mxu0
    %v5757 = vadd.f32 0.0, %v5756
    %v5758 = vpop.f32.mrb[0].mxu0
    %v5759 = vpop.f32.mrb[0].mxu0
    %v5760 = vadd.f32 0.0, %v5759
    %v5761 = vpop.f32.mrb[0].mxu0
    %5762 = vmatprep.mubr.bf16.mxu0 0
    %5763 = vmatmul.mubr.bf16.gmra.mrb[0].mxu0 %v5618
    %v5764 = vpop.f32.mrb[0].mxu0
    %v5765 = vadd.f32 0.0, %v5764
    %v5766 = vpop.f32.mrb[0].mxu0
    %v5767 = vpop.f32.mrb[0].mxu0
    %v5768 = vadd.f32 0.0, %v5767
    %v5769 = vpop.f32.mrb[0].mxu0
    %5770 = vmatprep.mubr.bf16.mxu0 0
    %5771 = vmatmul.mubr.bf16.gmra.mrb[0].mxu0 %v5621
    %v5772 = vpop.f32.mrb[0].mxu0
    %v5773 = vadd.f32 0.0, %v5772
    %v5774 = vpop.f32.mrb[0].mxu0
    %v5775 = vpop.f32.mrb[0].mxu0
    %v5776 = vadd.f32 0.0, %v5775
    %v5777 = vpop.f32.mrb[0].mxu0
    %5778 = vmatprep.mubr.bf16.mxu0 0
    %5779 = vmatmul.mubr.bf16.gmra.mrb[0].mxu0 %v5624
    %v5780 = vpop.f32.mrb[0].mxu0
    %v5781 = vadd.f32 0.0, %v5780
    %v5782 = vpop.f32.mrb[0].mxu0
    %v5783 = vpop.f32.mrb[0].mxu0
    %v5784 = vadd.f32 0.0, %v5783
    %v5785 = vpop.f32.mrb[0].mxu0
    %5786 = vdwg.mxu0
    %v5788 = vsel %vm4515, %v5561, 0
    %5790 = vmatprep.subr.bf16.mxu0 0
    %5791 = vmatpush1.bf16.msra.mxu0 %v5110
    %5792 = vmatprep.subr.bf16.mxu0 0
    %5793 = vmatpush1.bf16.msra.mxu0 %v5111
    %5794 = vmatprep.subr.bf16.mxu0 0
    %5795 = vmatpush1.bf16.msra.mxu0 %v5112
    %5796 = vmatprep.subr.bf16.mxu0 0
    %5797 = vmatpush1.bf16.msra.mxu0 0
    %5798 = vmatprep.subr.bf16.mxu0 0
    %5799 = vmatpush1.bf16.msra.mxu0 0
    %5800 = vmatprep.subr.bf16.mxu0 0
    %5801 = vmatpush1.bf16.msra.mxu0 0
    %5802 = vmatprep.subr.bf16.mxu0 0
    %5803 = vmatpush1.bf16.msra.mxu0 0
    %5804 = vmatprep.subr.bf16.mxu0 0
    %5805 = vmatpush1.bf16.msra.mxu0 0
    %5806 = vmatprep.subr.bf16.mxu0 0
    %5807 = vmatpush1.bf16.msra.mxu0 0
    %5808 = vmatprep.subr.bf16.mxu0 0
    %5809 = vmatpush1.bf16.msra.mxu0 0
    %5810 = vmatprep.subr.bf16.mxu0 0
    %5811 = vmatpush1.bf16.msra.mxu0 0
    %5812 = vmatprep.subr.bf16.mxu0 0
    %5813 = vmatpush1.bf16.msra.mxu0 0
    %5814 = vmatprep.subr.bf16.mxu0 0
    %5815 = vmatpush1.bf16.msra.mxu0 0
    %5816 = vmatprep.subr.bf16.mxu0 0
    %5817 = vmatpush1.bf16.msra.mxu0 0
    %5818 = vmatprep.subr.bf16.mxu0 0
    %5819 = vmatpush1.bf16.msra.mxu0 0
    %5820 = vmatprep.subr.bf16.mxu0 0
    %5821 = vmatpush1.bf16.msra.mxu0 0
    %5822 = vmatprep.mubr.bf16.mxu0 0
    %5823 = vmatmul.mubr.bf16.gmra.mrb[0].mxu0 %v5788
    %v5824 = vpop.f32.mrb[0].mxu0
    %v5825 = vadd.f32 %v5661, %v5824
    %v5826 = vpop.f32.mrb[0].mxu0
    %v5827 = vpop.f32.mrb[0].mxu0
    %v5828 = vadd.f32 %v5664, %v5827
    %v5829 = vpop.f32.mrb[0].mxu0
    %5830 = vmatprep.mubr.bf16.mxu0 0
    %5831 = vmatmul.mubr.bf16.gmra.mrb[0].mxu0 %v5579
    %v5832 = vpop.f32.mrb[0].mxu0
    %v5833 = vadd.f32 %v5669, %v5832
    %v5834 = vpop.f32.mrb[0].mxu0
    %v5835 = vpop.f32.mrb[0].mxu0
    %v5836 = vadd.f32 %v5672, %v5835
    %v5837 = vpop.f32.mrb[0].mxu0
    %5838 = vmatprep.mubr.bf16.mxu0 0
    %5839 = vmatmul.mubr.bf16.gmra.mrb[0].mxu0 %v5582
    %v5840 = vpop.f32.mrb[0].mxu0
    %v5841 = vadd.f32 %v5677, %v5840
    %v5842 = vpop.f32.mrb[0].mxu0
    %v5843 = vpop.f32.mrb[0].mxu0
    %v5844 = vadd.f32 %v5680, %v5843
    %v5845 = vpop.f32.mrb[0].mxu0
    %5846 = vmatprep.mubr.bf16.mxu0 0
    %5847 = vmatmul.mubr.bf16.gmra.mrb[0].mxu0 %v5585
    %v5848 = vpop.f32.mrb[0].mxu0
    %v5849 = vadd.f32 %v5685, %v5848
    %v5850 = vpop.f32.mrb[0].mxu0
    %v5851 = vpop.f32.mrb[0].mxu0
    %v5852 = vadd.f32 %v5688, %v5851
    %v5853 = vpop.f32.mrb[0].mxu0
    %5854 = vmatprep.mubr.bf16.mxu0 0
    %5855 = vmatmul.mubr.bf16.gmra.mrb[0].mxu0 %v5588
    %v5856 = vpop.f32.mrb[0].mxu0
    %v5857 = vadd.f32 %v5693, %v5856
    %v5858 = vpop.f32.mrb[0].mxu0
    %v5859 = vpop.f32.mrb[0].mxu0
    %v5860 = vadd.f32 %v5696, %v5859
    %v5861 = vpop.f32.mrb[0].mxu0
    %5862 = vmatprep.mubr.bf16.mxu0 0
    %5863 = vmatmul.mubr.bf16.gmra.mrb[0].mxu0 %v5591
    %v5864 = vpop.f32.mrb[0].mxu0
    %v5865 = vadd.f32 %v5701, %v5864
    %v5866 = vpop.f32.mrb[0].mxu0
    %v5867 = vpop.f32.mrb[0].mxu0
    %v5868 = vadd.f32 %v5704, %v5867
    %v5869 = vpop.f32.mrb[0].mxu0
    %5870 = vmatprep.mubr.bf16.mxu0 0
    %5871 = vmatmul.mubr.bf16.gmra.mrb[0].mxu0 %v5594
    %v5872 = vpop.f32.mrb[0].mxu0
    %v5873 = vadd.f32 %v5709, %v5872
    %v5874 = vpop.f32.mrb[0].mxu0
    %v5875 = vpop.f32.mrb[0].mxu0
    %v5876 = vadd.f32 %v5712, %v5875
    %v5877 = vpop.f32.mrb[0].mxu0
    %5878 = vmatprep.mubr.bf16.mxu0 0
    %5879 = vmatmul.mubr.bf16.gmra.mrb[0].mxu0 %v5597
    %v5880 = vpop.f32.mrb[0].mxu0
    %v5881 = vadd.f32 %v5717, %v5880
    %v5882 = vpop.f32.mrb[0].mxu0
    %v5883 = vpop.f32.mrb[0].mxu0
    %v5884 = vadd.f32 %v5720, %v5883
    %v5885 = vpop.f32.mrb[0].mxu0
    %5886 = vmatprep.mubr.bf16.mxu0 0
    %5887 = vmatmul.mubr.bf16.gmra.mrb[0].mxu0 %v5600
    %v5888 = vpop.f32.mrb[0].mxu0
    %v5889 = vadd.f32 %v5725, %v5888
    %v5890 = vpop.f32.mrb[0].mxu0
    %v5891 = vpop.f32.mrb[0].mxu0
    %v5892 = vadd.f32 %v5728, %v5891
    %v5893 = vpop.f32.mrb[0].mxu0
    %5894 = vmatprep.mubr.bf16.mxu0 0
    %5895 = vmatmul.mubr.bf16.gmra.mrb[0].mxu0 %v5603
    %v5896 = vpop.f32.mrb[0].mxu0
    %v5897 = vadd.f32 %v5733, %v5896
    %v5898 = vpop.f32.mrb[0].mxu0
    %v5899 = vpop.f32.mrb[0].mxu0
    %v5900 = vadd.f32 %v5736, %v5899
    %v5901 = vpop.f32.mrb[0].mxu0
    %5902 = vmatprep.mubr.bf16.mxu0 0
    %5903 = vmatmul.mubr.bf16.gmra.mrb[0].mxu0 %v5606
    %v5904 = vpop.f32.mrb[0].mxu0
    %v5905 = vadd.f32 %v5741, %v5904
    %v5906 = vpop.f32.mrb[0].mxu0
    %v5907 = vpop.f32.mrb[0].mxu0
    %v5908 = vadd.f32 %v5744, %v5907
    %v5909 = vpop.f32.mrb[0].mxu0
    %5910 = vmatprep.mubr.bf16.mxu0 0
    %5911 = vmatmul.mubr.bf16.gmra.mrb[0].mxu0 %v5609
    %v5912 = vpop.f32.mrb[0].mxu0
    %v5913 = vadd.f32 %v5749, %v5912
    %v5914 = vpop.f32.mrb[0].mxu0
    %v5915 = vpop.f32.mrb[0].mxu0
    %v5916 = vadd.f32 %v5752, %v5915
    %v5917 = vpop.f32.mrb[0].mxu0
    %5918 = vmatprep.mubr.bf16.mxu0 0
    %5919 = vmatmul.mubr.bf16.gmra.mrb[0].mxu0 %v5612
    %v5920 = vpop.f32.mrb[0].mxu0
    %v5921 = vadd.f32 %v5757, %v5920
    %v5922 = vpop.f32.mrb[0].mxu0
    %v5923 = vpop.f32.mrb[0].mxu0
    %v5924 = vadd.f32 %v5760, %v5923
    %v5925 = vpop.f32.mrb[0].mxu0
    %5926 = vmatprep.mubr.bf16.mxu0 0
    %5927 = vmatmul.mubr.bf16.gmra.mrb[0].mxu0 %v5615
    %v5928 = vpop.f32.mrb[0].mxu0
    %v5929 = vadd.f32 %v5765, %v5928
    %v5930 = vpop.f32.mrb[0].mxu0
    %v5931 = vpop.f32.mrb[0].mxu0
    %v5932 = vadd.f32 %v5768, %v5931
    %v5933 = vpop.f32.mrb[0].mxu0
    %5934 = vmatprep.mubr.bf16.mxu0 0
    %5935 = vmatmul.mubr.bf16.gmra.mrb[0].mxu0 %v5618
    %v5936 = vpop.f32.mrb[0].mxu0
    %v5937 = vadd.f32 %v5773, %v5936
    %v5938 = vpop.f32.mrb[0].mxu0
    %v5939 = vpop.f32.mrb[0].mxu0
    %v5940 = vadd.f32 %v5776, %v5939
    %v5941 = vpop.f32.mrb[0].mxu0
    %5942 = vmatprep.mubr.bf16.mxu0 0
    %5943 = vmatmul.mubr.bf16.gmra.mrb[0].mxu0 %v5621
    %v5944 = vpop.f32.mrb[0].mxu0
    %v5945 = vadd.f32 %v5781, %v5944
    %v5946 = vpop.f32.mrb[0].mxu0
    %v5947 = vpop.f32.mrb[0].mxu0
    %v5948 = vadd.f32 %v5784, %v5947
    %v5949 = vpop.f32.mrb[0].mxu0
    %5950 = vdwg.mxu0
    %v5951 = vld [vmem:[#allocation3 + $0x98] sm:$0xff]
    %v5952 = vld [vmem:[#allocation3 + $0xa0] sm:$0xff]
    %v5953 = vld [vmem:[#allocation3 + $0xa8] sm:$0xff]
    %v5954 = vld [vmem:[#allocation3 + $0xb0] sm:$0xff]
    %v5955 = vld [vmem:[#allocation3 + $0xb8] sm:$0xff]
    %v5956 = vld [vmem:[#allocation3 + $0xc0] sm:$0xff]
    %v5957 = vld [vmem:[#allocation3 + $0xc8] sm:$0xff]
    %v5958 = vld [vmem:[#allocation3 + $0xd0] sm:$0xff]
    %v5959 = vld [vmem:[#allocation3 + $0xd8] sm:$0xff]
    %v5960 = vld [vmem:[#allocation3 + $0xe0] sm:$0xff]
    %v5961 = vld [vmem:[#allocation3 + $0xe8] sm:$0xff]
    %v5962 = vld [vmem:[#allocation3 + $0xf0] sm:$0xff]
    %v5963 = vld [vmem:[#allocation3 + $0xf8] sm:$0xff]
    %v5964 = vld [vmem:[#allocation3 + $0x100] sm:$0xff]
    %v5965 = vld [vmem:[#allocation3 + $0x108] sm:$0xff]
    %v5966 = vld [vmem:[#allocation3 + $0x110] sm:$0xff]
    %v5968 = vsel %vm4515, %v5951, 0
    %v5971 = vsel %vm4515, %v5952, 0
    %v5974 = vsel %vm4515, %v5953, 0
    %v5977 = vsel %vm4515, %v5954, 0
    %v5980 = vsel %vm4515, %v5955, 0
    %v5983 = vsel %vm4515, %v5956, 0
    %v5986 = vsel %vm4515, %v5957, 0
    %v5989 = vsel %vm4515, %v5958, 0
    %v5992 = vsel %vm4515, %v5959, 0
    %v5995 = vsel %vm4515, %v5960, 0
    %v5998 = vsel %vm4515, %v5961, 0
    %v6001 = vsel %vm4515, %v5962, 0
    %v6004 = vsel %vm4515, %v5963, 0
    %v6007 = vsel %vm4515, %v5964, 0
    %v6010 = vsel %vm4515, %v5965, 0
    %v6013 = vsel %vm4515, %v5966, 0
    %6015 = vmatprep.subr.bf16.mxu0 0
    %6016 = vmatpush1.bf16.msra.mxu0 %v5314
    %6017 = vmatprep.subr.bf16.mxu0 0
    %6018 = vmatpush1.bf16.msra.mxu0 %v5315
    %6019 = vmatprep.subr.bf16.mxu0 0
    %6020 = vmatpush1.bf16.msra.mxu0 %v5316
    %6021 = vmatprep.subr.bf16.mxu0 0
    %6022 = vmatpush1.bf16.msra.mxu0 0
    %6023 = vmatprep.subr.bf16.mxu0 0
    %6024 = vmatpush1.bf16.msra.mxu0 0
    %6025 = vmatprep.subr.bf16.mxu0 0
    %6026 = vmatpush1.bf16.msra.mxu0 0
    %6027 = vmatprep.subr.bf16.mxu0 0
    %6028 = vmatpush1.bf16.msra.mxu0 0
    %6029 = vmatprep.subr.bf16.mxu0 0
    %6030 = vmatpush1.bf16.msra.mxu0 0
    %6031 = vmatprep.subr.bf16.mxu0 0
    %6032 = vmatpush1.bf16.msra.mxu0 0
    %6033 = vmatprep.subr.bf16.mxu0 0
    %6034 = vmatpush1.bf16.msra.mxu0 0
    %6035 = vmatprep.subr.bf16.mxu0 0
    %6036 = vmatpush1.bf16.msra.mxu0 0
    %6037 = vmatprep.subr.bf16.mxu0 0
    %6038 = vmatpush1.bf16.msra.mxu0 0
    %6039 = vmatprep.subr.bf16.mxu0 0
    %6040 = vmatpush1.bf16.msra.mxu0 0
    %6041 = vmatprep.subr.bf16.mxu0 0
    %6042 = vmatpush1.bf16.msra.mxu0 0
    %6043 = vmatprep.subr.bf16.mxu0 0
    %6044 = vmatpush1.bf16.msra.mxu0 0
    %6045 = vmatprep.subr.bf16.mxu0 0
    %6046 = vmatpush1.bf16.msra.mxu0 0
    %6047 = vmatprep.mubr.bf16.mxu0 0
    %6048 = vmatmul.mubr.bf16.gmra.mrb[0].mxu0 %v5968
    %v6049 = vpop.f32.mrb[0].mxu0
    %v6050 = vadd.f32 0.0, %v6049
    %v6051 = vpop.f32.mrb[0].mxu0
    %v6052 = vpop.f32.mrb[0].mxu0
    %v6053 = vadd.f32 0.0, %v6052
    %v6054 = vpop.f32.mrb[0].mxu0
    %6055 = vmatprep.mubr.bf16.mxu0 0
    %6056 = vmatmul.mubr.bf16.gmra.mrb[0].mxu0 %v5971
    %v6057 = vpop.f32.mrb[0].mxu0
    %v6058 = vadd.f32 0.0, %v6057
    %v6059 = vpop.f32.mrb[0].mxu0
    %v6060 = vpop.f32.mrb[0].mxu0
    %v6061 = vadd.f32 0.0, %v6060
    %v6062 = vpop.f32.mrb[0].mxu0
    %6063 = vmatprep.mubr.bf16.mxu0 0
    %6064 = vmatmul.mubr.bf16.gmra.mrb[0].mxu0 %v5974
    %v6065 = vpop.f32.mrb[0].mxu0
    %v6066 = vadd.f32 0.0, %v6065
    %v6067 = vpop.f32.mrb[0].mxu0
    %v6068 = vpop.f32.mrb[0].mxu0
    %v6069 = vadd.f32 0.0, %v6068
    %v6070 = vpop.f32.mrb[0].mxu0
    %6071 = vmatprep.mubr.bf16.mxu0 0
    %6072 = vmatmul.mubr.bf16.gmra.mrb[0].mxu0 %v5977
    %v6073 = vpop.f32.mrb[0].mxu0
    %v6074 = vadd.f32 0.0, %v6073
    %v6075 = vpop.f32.mrb[0].mxu0
    %v6076 = vpop.f32.mrb[0].mxu0
    %v6077 = vadd.f32 0.0, %v6076
    %v6078 = vpop.f32.mrb[0].mxu0
    %6079 = vmatprep.mubr.bf16.mxu0 0
    %6080 = vmatmul.mubr.bf16.gmra.mrb[0].mxu0 %v5980
    %v6081 = vpop.f32.mrb[0].mxu0
    %v6082 = vadd.f32 0.0, %v6081
    %v6083 = vpop.f32.mrb[0].mxu0
    %v6084 = vpop.f32.mrb[0].mxu0
    %v6085 = vadd.f32 0.0, %v6084
    %v6086 = vpop.f32.mrb[0].mxu0
    %6087 = vmatprep.mubr.bf16.mxu0 0
    %6088 = vmatmul.mubr.bf16.gmra.mrb[0].mxu0 %v5983
    %v6089 = vpop.f32.mrb[0].mxu0
    %v6090 = vadd.f32 0.0, %v6089
    %v6091 = vpop.f32.mrb[0].mxu0
    %v6092 = vpop.f32.mrb[0].mxu0
    %v6093 = vadd.f32 0.0, %v6092
    %v6094 = vpop.f32.mrb[0].mxu0
    %6095 = vmatprep.mubr.bf16.mxu0 0
    %6096 = vmatmul.mubr.bf16.gmra.mrb[0].mxu0 %v5986
    %v6097 = vpop.f32.mrb[0].mxu0
    %v6098 = vadd.f32 0.0, %v6097
    %v6099 = vpop.f32.mrb[0].mxu0
    %v6100 = vpop.f32.mrb[0].mxu0
    %v6101 = vadd.f32 0.0, %v6100
    %v6102 = vpop.f32.mrb[0].mxu0
    %6103 = vmatprep.mubr.bf16.mxu0 0
    %6104 = vmatmul.mubr.bf16.gmra.mrb[0].mxu0 %v5989
    %v6105 = vpop.f32.mrb[0].mxu0
    %v6106 = vadd.f32 0.0, %v6105
    %v6107 = vpop.f32.mrb[0].mxu0
    %v6108 = vpop.f32.mrb[0].mxu0
    %v6109 = vadd.f32 0.0, %v6108
    %v6110 = vpop.f32.mrb[0].mxu0
    %6111 = vmatprep.mubr.bf16.mxu0 0
    %6112 = vmatmul.mubr.bf16.gmra.mrb[0].mxu0 %v5992
    %v6113 = vpop.f32.mrb[0].mxu0
    %v6114 = vadd.f32 0.0, %v6113
    %v6115 = vpop.f32.mrb[0].mxu0
    %v6116 = vpop.f32.mrb[0].mxu0
    %v6117 = vadd.f32 0.0, %v6116
    %v6118 = vpop.f32.mrb[0].mxu0
    %6119 = vmatprep.mubr.bf16.mxu0 0
    %6120 = vmatmul.mubr.bf16.gmra.mrb[0].mxu0 %v5995
    %v6121 = vpop.f32.mrb[0].mxu0
    %v6122 = vadd.f32 0.0, %v6121
    %v6123 = vpop.f32.mrb[0].mxu0
    %v6124 = vpop.f32.mrb[0].mxu0
    %v6125 = vadd.f32 0.0, %v6124
    %v6126 = vpop.f32.mrb[0].mxu0
    %6127 = vmatprep.mubr.bf16.mxu0 0
    %6128 = vmatmul.mubr.bf16.gmra.mrb[0].mxu0 %v5998
    %v6129 = vpop.f32.mrb[0].mxu0
    %v6130 = vadd.f32 0.0, %v6129
    %v6131 = vpop.f32.mrb[0].mxu0
    %v6132 = vpop.f32.mrb[0].mxu0
    %v6133 = vadd.f32 0.0, %v6132
    %v6134 = vpop.f32.mrb[0].mxu0
    %6135 = vmatprep.mubr.bf16.mxu0 0
    %6136 = vmatmul.mubr.bf16.gmra.mrb[0].mxu0 %v6001
    %v6137 = vpop.f32.mrb[0].mxu0
    %v6138 = vadd.f32 0.0, %v6137
    %v6139 = vpop.f32.mrb[0].mxu0
    %v6140 = vpop.f32.mrb[0].mxu0
    %v6141 = vadd.f32 0.0, %v6140
    %v6142 = vpop.f32.mrb[0].mxu0
    %6143 = vmatprep.mubr.bf16.mxu0 0
    %6144 = vmatmul.mubr.bf16.gmra.mrb[0].mxu0 %v6004
    %v6145 = vpop.f32.mrb[0].mxu0
    %v6146 = vadd.f32 0.0, %v6145
    %v6147 = vpop.f32.mrb[0].mxu0
    %v6148 = vpop.f32.mrb[0].mxu0
    %v6149 = vadd.f32 0.0, %v6148
    %v6150 = vpop.f32.mrb[0].mxu0
    %6151 = vmatprep.mubr.bf16.mxu0 0
    %6152 = vmatmul.mubr.bf16.gmra.mrb[0].mxu0 %v6007
    %v6153 = vpop.f32.mrb[0].mxu0
    %v6154 = vadd.f32 0.0, %v6153
    %v6155 = vpop.f32.mrb[0].mxu0
    %v6156 = vpop.f32.mrb[0].mxu0
    %v6157 = vadd.f32 0.0, %v6156
    %v6158 = vpop.f32.mrb[0].mxu0
    %6159 = vmatprep.mubr.bf16.mxu0 0
    %6160 = vmatmul.mubr.bf16.gmra.mrb[0].mxu0 %v6010
    %v6161 = vpop.f32.mrb[0].mxu0
    %v6162 = vadd.f32 0.0, %v6161
    %v6163 = vpop.f32.mrb[0].mxu0
    %v6164 = vpop.f32.mrb[0].mxu0
    %v6165 = vadd.f32 0.0, %v6164
    %v6166 = vpop.f32.mrb[0].mxu0
    %6167 = vmatprep.mubr.bf16.mxu0 0
    %6168 = vmatmul.mubr.bf16.gmra.mrb[0].mxu0 %v6013
    %v6169 = vpop.f32.mrb[0].mxu0
    %v6170 = vadd.f32 0.0, %v6169
    %v6171 = vpop.f32.mrb[0].mxu0
    %v6172 = vpop.f32.mrb[0].mxu0
    %v6173 = vadd.f32 0.0, %v6172
    %v6174 = vpop.f32.mrb[0].mxu0
    %6175 = vdwg.mxu0
    %v6176 = vadd.f32 %v5825, %v6050
    %v6177 = vadd.f32 %v5828, %v6053
    %v6178 = vadd.f32 %v5833, %v6058
    %v6179 = vadd.f32 %v5836, %v6061
    %v6180 = vadd.f32 %v5841, %v6066
    %v6181 = vadd.f32 %v5844, %v6069
    %v6182 = vadd.f32 %v5849, %v6074
    %v6183 = vadd.f32 %v5852, %v6077
    %v6184 = vadd.f32 %v5857, %v6082
    %v6185 = vadd.f32 %v5860, %v6085
    %v6186 = vadd.f32 %v5865, %v6090
    %v6187 = vadd.f32 %v5868, %v6093
    %v6188 = vadd.f32 %v5873, %v6098
    %v6189 = vadd.f32 %v5876, %v6101
    %v6190 = vadd.f32 %v5881, %v6106
    %v6191 = vadd.f32 %v5884, %v6109
    %v6192 = vadd.f32 %v5889, %v6114
    %v6193 = vadd.f32 %v5892, %v6117
    %v6194 = vadd.f32 %v5897, %v6122
    %v6195 = vadd.f32 %v5900, %v6125
    %v6196 = vadd.f32 %v5905, %v6130
    %v6197 = vadd.f32 %v5908, %v6133
    %v6198 = vadd.f32 %v5913, %v6138
    %v6199 = vadd.f32 %v5916, %v6141
    %v6200 = vadd.f32 %v5921, %v6146
    %v6201 = vadd.f32 %v5924, %v6149
    %v6202 = vadd.f32 %v5929, %v6154
    %v6203 = vadd.f32 %v5932, %v6157
    %v6204 = vadd.f32 %v5937, %v6162
    %v6205 = vadd.f32 %v5940, %v6165
    %v6206 = vadd.f32 %v5945, %v6170
    %v6207 = vadd.f32 %v5948, %v6173
    %v6208 = vld [vmem:[%s5] sm:$0x1]
    %v6209 = vld [vmem:[%s6] sm:$0x1]
    %v6210 = vadd.f32 %v5529, %v5530
    %v6211 = vadd.f32 %v6210, %v5531
    %v6212 = vadd.f32 %v6211, %v5532
    %v6213 = vadd.f32 %v6212, %v5533
    %v6214 = vadd.f32 %v6213, %v5534
    %v6215 = vadd.f32 %v6214, %v5535
    %v6216 = vadd.f32 %v6215, %v5536
    %v6217 = vadd.f32 %v6216, %v5537
    %v6218 = vadd.f32 %v6217, %v5538
    %v6219 = vadd.f32 %v6218, %v5539
    %v6220 = vadd.f32 %v6219, %v5540
    %v6221 = vadd.f32 %v6220, %v5541
    %v6222 = vadd.f32 %v6221, %v5542
    %v6223 = vadd.f32 %v6222, %v5543
    %v6224 = vadd.f32 %v6223, %v5544
    %v6225 = vadd.f32 %v6224, %v5545
    %v6226 = vadd.f32 %v6225, %v5546
    %v6227 = vadd.f32 %v6226, %v5547
    %v6228 = vadd.f32 %v6227, %v5548
    %v6229 = vadd.f32 %v6228, %v5549
    %v6230 = vadd.f32 %v6229, %v5550
    %v6231 = vadd.f32 %v6230, %v5551
    %v6232 = vadd.f32 %v6231, %v5552
    %v6233 = vadd.f32 %v6232, %v5553
    %v6234 = vadd.f32 %v6233, %v5554
    %v6235 = vadd.f32 %v6234, %v5555
    %v6236 = vadd.f32 %v6235, %v5556
    %v6237 = vadd.f32 %v6236, %v5557
    %v6238 = vadd.f32 %v6237, %v5558
    %v6239 = vadd.f32 %v6238, %v5559
    %v6240 = vadd.f32 %v6239, %v5560
    %v6241 = vadd.f32 %v6240, %v6176
    %v6242 = vadd.f32 %v6241, %v6177
    %v6243 = vadd.f32 %v6242, %v6178
    %v6244 = vadd.f32 %v6243, %v6179
    %v6245 = vadd.f32 %v6244, %v6180
    %v6246 = vadd.f32 %v6245, %v6181
    %v6247 = vadd.f32 %v6246, %v6182
    %v6248 = vadd.f32 %v6247, %v6183
    %v6249 = vadd.f32 %v6248, %v6184
    %v6250 = vadd.f32 %v6249, %v6185
    %v6251 = vadd.f32 %v6250, %v6186
    %v6252 = vadd.f32 %v6251, %v6187
    %v6253 = vadd.f32 %v6252, %v6188
    %v6254 = vadd.f32 %v6253, %v6189
    %v6255 = vadd.f32 %v6254, %v6190
    %v6256 = vadd.f32 %v6255, %v6191
    %v6257 = vadd.f32 %v6256, %v6192
    %v6258 = vadd.f32 %v6257, %v6193
    %v6259 = vadd.f32 %v6258, %v6194
    %v6260 = vadd.f32 %v6259, %v6195
    %v6261 = vadd.f32 %v6260, %v6196
    %v6262 = vadd.f32 %v6261, %v6197
    %v6263 = vadd.f32 %v6262, %v6198
    %v6264 = vadd.f32 %v6263, %v6199
    %v6265 = vadd.f32 %v6264, %v6200
    %v6266 = vadd.f32 %v6265, %v6201
    %v6267 = vadd.f32 %v6266, %v6202
    %v6268 = vadd.f32 %v6267, %v6203
    %v6269 = vadd.f32 %v6268, %v6204
    %v6270 = vadd.f32 %v6269, %v6205
    %v6271 = vadd.f32 %v6270, %v6206
    %v6272 = vadd.f32 %v6271, %v6207
    %v6273 = vrot.slane %v6272, 4
    %v6274 = vadd.f32 %v6272, %v6273
    %v6275 = vrot.slane %v6274, 2
    %v6276 = vadd.f32 %v6274, %v6275
    %v6277 = vrot.slane %v6276, 1
    %v6278 = vadd.f32 %v6276, %v6277
    %v6279 = vmul.f32 %v6278, 0.001953125
    %v6280 = vmul.f32 %v5529, %v5529
    %v6281 = vmul.f32 %v5530, %v5530
    %v6282 = vmul.f32 %v5531, %v5531
    %v6283 = vmul.f32 %v5532, %v5532
    %v6284 = vmul.f32 %v5533, %v5533
    %v6285 = vmul.f32 %v5534, %v5534
    %v6286 = vmul.f32 %v5535, %v5535
    %v6287 = vmul.f32 %v5536, %v5536
    %v6288 = vmul.f32 %v5537, %v5537
    %v6289 = vmul.f32 %v5538, %v5538
    %v6290 = vmul.f32 %v5539, %v5539
    %v6291 = vmul.f32 %v5540, %v5540
    %v6292 = vmul.f32 %v5541, %v5541
    %v6293 = vmul.f32 %v5542, %v5542
    %v6294 = vmul.f32 %v5543, %v5543
    %v6295 = vmul.f32 %v5544, %v5544
    %v6296 = vmul.f32 %v5545, %v5545
    %v6297 = vmul.f32 %v5546, %v5546
    %v6298 = vmul.f32 %v5547, %v5547
    %v6299 = vmul.f32 %v5548, %v5548
    %v6300 = vmul.f32 %v5549, %v5549
    %v6301 = vmul.f32 %v5550, %v5550
    %v6302 = vmul.f32 %v5551, %v5551
    %v6303 = vmul.f32 %v5552, %v5552
    %v6304 = vmul.f32 %v5553, %v5553
    %v6305 = vmul.f32 %v5554, %v5554
    %v6306 = vmul.f32 %v5555, %v5555
    %v6307 = vmul.f32 %v5556, %v5556
    %v6308 = vmul.f32 %v5557, %v5557
    %v6309 = vmul.f32 %v5558, %v5558
    %v6310 = vmul.f32 %v5559, %v5559
    %v6311 = vmul.f32 %v5560, %v5560
    %v6312 = vmul.f32 %v6176, %v6176
    %v6313 = vmul.f32 %v6177, %v6177
    %v6314 = vmul.f32 %v6178, %v6178
    %v6315 = vmul.f32 %v6179, %v6179
    %v6316 = vmul.f32 %v6180, %v6180
    %v6317 = vmul.f32 %v6181, %v6181
    %v6318 = vmul.f32 %v6182, %v6182
    %v6319 = vmul.f32 %v6183, %v6183
    %v6320 = vmul.f32 %v6184, %v6184
    %v6321 = vmul.f32 %v6185, %v6185
    %v6322 = vmul.f32 %v6186, %v6186
    %v6323 = vmul.f32 %v6187, %v6187
    %v6324 = vmul.f32 %v6188, %v6188
    %v6325 = vmul.f32 %v6189, %v6189
    %v6326 = vmul.f32 %v6190, %v6190
    %v6327 = vmul.f32 %v6191, %v6191
    %v6328 = vmul.f32 %v6192, %v6192
    %v6329 = vmul.f32 %v6193, %v6193
    %v6330 = vmul.f32 %v6194, %v6194
    %v6331 = vmul.f32 %v6195, %v6195
    %v6332 = vmul.f32 %v6196, %v6196
    %v6333 = vmul.f32 %v6197, %v6197
    %v6334 = vmul.f32 %v6198, %v6198
    %v6335 = vmul.f32 %v6199, %v6199
    %v6336 = vmul.f32 %v6200, %v6200
    %v6337 = vmul.f32 %v6201, %v6201
    %v6338 = vmul.f32 %v6202, %v6202
    %v6339 = vmul.f32 %v6203, %v6203
    %v6340 = vmul.f32 %v6204, %v6204
    %v6341 = vmul.f32 %v6205, %v6205
    %v6342 = vmul.f32 %v6206, %v6206
    %v6343 = vmul.f32 %v6207, %v6207
    %v6344 = vadd.f32 %v6280, %v6281
    %v6345 = vadd.f32 %v6344, %v6282
    %v6346 = vadd.f32 %v6345, %v6283
    %v6347 = vadd.f32 %v6346, %v6284
    %v6348 = vadd.f32 %v6347, %v6285
    %v6349 = vadd.f32 %v6348, %v6286
    %v6350 = vadd.f32 %v6349, %v6287
    %v6351 = vadd.f32 %v6350, %v6288
    %v6352 = vadd.f32 %v6351, %v6289
    %v6353 = vadd.f32 %v6352, %v6290
    %v6354 = vadd.f32 %v6353, %v6291
    %v6355 = vadd.f32 %v6354, %v6292
    %v6356 = vadd.f32 %v6355, %v6293
    %v6357 = vadd.f32 %v6356, %v6294
    %v6358 = vadd.f32 %v6357, %v6295
    %v6359 = vadd.f32 %v6358, %v6296
    %v6360 = vadd.f32 %v6359, %v6297
    %v6361 = vadd.f32 %v6360, %v6298
    %v6362 = vadd.f32 %v6361, %v6299
    %v6363 = vadd.f32 %v6362, %v6300
    %v6364 = vadd.f32 %v6363, %v6301
    %v6365 = vadd.f32 %v6364, %v6302
    %v6366 = vadd.f32 %v6365, %v6303
    %v6367 = vadd.f32 %v6366, %v6304
    %v6368 = vadd.f32 %v6367, %v6305
    %v6369 = vadd.f32 %v6368, %v6306
    %v6370 = vadd.f32 %v6369, %v6307
    %v6371 = vadd.f32 %v6370, %v6308
    %v6372 = vadd.f32 %v6371, %v6309
    %v6373 = vadd.f32 %v6372, %v6310
    %v6374 = vadd.f32 %v6373, %v6311
    %v6375 = vadd.f32 %v6374, %v6312
    %v6376 = vadd.f32 %v6375, %v6313
    %v6377 = vadd.f32 %v6376, %v6314
    %v6378 = vadd.f32 %v6377, %v6315
    %v6379 = vadd.f32 %v6378, %v6316
    %v6380 = vadd.f32 %v6379, %v6317
    %v6381 = vadd.f32 %v6380, %v6318
    %v6382 = vadd.f32 %v6381, %v6319
    %v6383 = vadd.f32 %v6382, %v6320
    %v6384 = vadd.f32 %v6383, %v6321
    %v6385 = vadd.f32 %v6384, %v6322
    %v6386 = vadd.f32 %v6385, %v6323
    %v6387 = vadd.f32 %v6386, %v6324
    %v6388 = vadd.f32 %v6387, %v6325
    %v6389 = vadd.f32 %v6388, %v6326
    %v6390 = vadd.f32 %v6389, %v6327
    %v6391 = vadd.f32 %v6390, %v6328
    %v6392 = vadd.f32 %v6391, %v6329
    %v6393 = vadd.f32 %v6392, %v6330
    %v6394 = vadd.f32 %v6393, %v6331
    %v6395 = vadd.f32 %v6394, %v6332
    %v6396 = vadd.f32 %v6395, %v6333
    %v6397 = vadd.f32 %v6396, %v6334
    %v6398 = vadd.f32 %v6397, %v6335
    %v6399 = vadd.f32 %v6398, %v6336
    %v6400 = vadd.f32 %v6399, %v6337
    %v6401 = vadd.f32 %v6400, %v6338
    %v6402 = vadd.f32 %v6401, %v6339
    %v6403 = vadd.f32 %v6402, %v6340
    %v6404 = vadd.f32 %v6403, %v6341
    %v6405 = vadd.f32 %v6404, %v6342
    %v6406 = vadd.f32 %v6405, %v6343
    %v6407 = vrot.slane %v6406, 4
    %v6408 = vadd.f32 %v6406, %v6407
    %v6409 = vrot.slane %v6408, 2
    %v6410 = vadd.f32 %v6408, %v6409
    %v6411 = vrot.slane %v6410, 1
    %v6412 = vadd.f32 %v6410, %v6411
    %v6413 = vmul.f32 %v6412, 0.001953125
    %v6414 = vmul.f32 %v6279, %v6279
    %v6415 = vsub.f32 %v6413, %v6414
    %v6416 = vsub.f32 %v5529, %v6279
    %v6417 = vsub.f32 %v5530, %v6279
    %v6418 = vsub.f32 %v5531, %v6279
    %v6419 = vsub.f32 %v5532, %v6279
    %v6420 = vsub.f32 %v5533, %v6279
    %v6421 = vsub.f32 %v5534, %v6279
    %v6422 = vsub.f32 %v5535, %v6279
    %v6423 = vsub.f32 %v5536, %v6279
    %v6424 = vsub.f32 %v5537, %v6279
    %v6425 = vsub.f32 %v5538, %v6279
    %v6426 = vsub.f32 %v5539, %v6279
    %v6427 = vsub.f32 %v5540, %v6279
    %v6428 = vsub.f32 %v5541, %v6279
    %v6429 = vsub.f32 %v5542, %v6279
    %v6430 = vsub.f32 %v5543, %v6279
    %v6431 = vsub.f32 %v5544, %v6279
    %v6432 = vsub.f32 %v5545, %v6279
    %v6433 = vsub.f32 %v5546, %v6279
    %v6434 = vsub.f32 %v5547, %v6279
    %v6435 = vsub.f32 %v5548, %v6279
    %v6436 = vsub.f32 %v5549, %v6279
    %v6437 = vsub.f32 %v5550, %v6279
    %v6438 = vsub.f32 %v5551, %v6279
    %v6439 = vsub.f32 %v5552, %v6279
    %v6440 = vsub.f32 %v5553, %v6279
    %v6441 = vsub.f32 %v5554, %v6279
    %v6442 = vsub.f32 %v5555, %v6279
    %v6443 = vsub.f32 %v5556, %v6279
    %v6444 = vsub.f32 %v5557, %v6279
    %v6445 = vsub.f32 %v5558, %v6279
    %v6446 = vsub.f32 %v5559, %v6279
    %v6447 = vsub.f32 %v5560, %v6279
    %v6448 = vsub.f32 %v6176, %v6279
    %v6449 = vsub.f32 %v6177, %v6279
    %v6450 = vsub.f32 %v6178, %v6279
    %v6451 = vsub.f32 %v6179, %v6279
    %v6452 = vsub.f32 %v6180, %v6279
    %v6453 = vsub.f32 %v6181, %v6279
    %v6454 = vsub.f32 %v6182, %v6279
    %v6455 = vsub.f32 %v6183, %v6279
    %v6456 = vsub.f32 %v6184, %v6279
    %v6457 = vsub.f32 %v6185, %v6279
    %v6458 = vsub.f32 %v6186, %v6279
    %v6459 = vsub.f32 %v6187, %v6279
    %v6460 = vsub.f32 %v6188, %v6279
    %v6461 = vsub.f32 %v6189, %v6279
    %v6462 = vsub.f32 %v6190, %v6279
    %v6463 = vsub.f32 %v6191, %v6279
    %v6464 = vsub.f32 %v6192, %v6279
    %v6465 = vsub.f32 %v6193, %v6279
    %v6466 = vsub.f32 %v6194, %v6279
    %v6467 = vsub.f32 %v6195, %v6279
    %v6468 = vsub.f32 %v6196, %v6279
    %v6469 = vsub.f32 %v6197, %v6279
    %v6470 = vsub.f32 %v6198, %v6279
    %v6471 = vsub.f32 %v6199, %v6279
    %v6472 = vsub.f32 %v6200, %v6279
    %v6473 = vsub.f32 %v6201, %v6279
    %v6474 = vsub.f32 %v6202, %v6279
    %v6475 = vsub.f32 %v6203, %v6279
    %v6476 = vsub.f32 %v6204, %v6279
    %v6477 = vsub.f32 %v6205, %v6279
    %v6478 = vsub.f32 %v6206, %v6279
    %v6479 = vsub.f32 %v6207, %v6279
    %v6480 = vadd.f32 %v6415, 1e-05
    %v6481 = vrsqrt.pop %v6480
    %v6482 = vmul.f32 %v6416, %v6481
    %v6483 = vmul.f32 %v6417, %v6481
    %v6484 = vmul.f32 %v6418, %v6481
    %v6485 = vmul.f32 %v6419, %v6481
    %v6486 = vmul.f32 %v6420, %v6481
    %v6487 = vmul.f32 %v6421, %v6481
    %v6488 = vmul.f32 %v6422, %v6481
    %v6489 = vmul.f32 %v6423, %v6481
    %v6490 = vmul.f32 %v6424, %v6481
    %v6491 = vmul.f32 %v6425, %v6481
    %v6492 = vmul.f32 %v6426, %v6481
    %v6493 = vmul.f32 %v6427, %v6481
    %v6494 = vmul.f32 %v6428, %v6481
    %v6495 = vmul.f32 %v6429, %v6481
    %v6496 = vmul.f32 %v6430, %v6481
    %v6497 = vmul.f32 %v6431, %v6481
    %v6498 = vmul.f32 %v6432, %v6481
    %v6499 = vmul.f32 %v6433, %v6481
    %v6500 = vmul.f32 %v6434, %v6481
    %v6501 = vmul.f32 %v6435, %v6481
    %v6502 = vmul.f32 %v6436, %v6481
    %v6503 = vmul.f32 %v6437, %v6481
    %v6504 = vmul.f32 %v6438, %v6481
    %v6505 = vmul.f32 %v6439, %v6481
    %v6506 = vmul.f32 %v6440, %v6481
    %v6507 = vmul.f32 %v6441, %v6481
    %v6508 = vmul.f32 %v6442, %v6481
    %v6509 = vmul.f32 %v6443, %v6481
    %v6510 = vmul.f32 %v6444, %v6481
    %v6511 = vmul.f32 %v6445, %v6481
    %v6512 = vmul.f32 %v6446, %v6481
    %v6513 = vmul.f32 %v6447, %v6481
    %v6514 = vmul.f32 %v6448, %v6481
    %v6515 = vmul.f32 %v6449, %v6481
    %v6516 = vmul.f32 %v6450, %v6481
    %v6517 = vmul.f32 %v6451, %v6481
    %v6518 = vmul.f32 %v6452, %v6481
    %v6519 = vmul.f32 %v6453, %v6481
    %v6520 = vmul.f32 %v6454, %v6481
    %v6521 = vmul.f32 %v6455, %v6481
    %v6522 = vmul.f32 %v6456, %v6481
    %v6523 = vmul.f32 %v6457, %v6481
    %v6524 = vmul.f32 %v6458, %v6481
    %v6525 = vmul.f32 %v6459, %v6481
    %v6526 = vmul.f32 %v6460, %v6481
    %v6527 = vmul.f32 %v6461, %v6481
    %v6528 = vmul.f32 %v6462, %v6481
    %v6529 = vmul.f32 %v6463, %v6481
    %v6530 = vmul.f32 %v6464, %v6481
    %v6531 = vmul.f32 %v6465, %v6481
    %v6532 = vmul.f32 %v6466, %v6481
    %v6533 = vmul.f32 %v6467, %v6481
    %v6534 = vmul.f32 %v6468, %v6481
    %v6535 = vmul.f32 %v6469, %v6481
    %v6536 = vmul.f32 %v6470, %v6481
    %v6537 = vmul.f32 %v6471, %v6481
    %v6538 = vmul.f32 %v6472, %v6481
    %v6539 = vmul.f32 %v6473, %v6481
    %v6540 = vmul.f32 %v6474, %v6481
    %v6541 = vmul.f32 %v6475, %v6481
    %v6542 = vmul.f32 %v6476, %v6481
    %v6543 = vmul.f32 %v6477, %v6481
    %v6544 = vmul.f32 %v6478, %v6481
    %v6545 = vmul.f32 %v6479, %v6481
    %v6547 = vlaneseq
    %v6548 = vshrl.u32 %v6547, 7
    %v6549 = vsub.s32 0, %v6548
    %v6550 = vrot.slane %v6208, %v6549
    %v6552 = vmul.f32 %v6482, %v6550
    %v6553 = vmul.f32 %v6483, %v6550
    %v6554 = vmul.f32 %v6484, %v6550
    %v6555 = vmul.f32 %v6485, %v6550
    %v6556 = vmul.f32 %v6486, %v6550
    %v6557 = vmul.f32 %v6487, %v6550
    %v6558 = vmul.f32 %v6488, %v6550
    %v6559 = vmul.f32 %v6489, %v6550
    %v6560 = vmul.f32 %v6490, %v6550
    %v6561 = vmul.f32 %v6491, %v6550
    %v6562 = vmul.f32 %v6492, %v6550
    %v6563 = vmul.f32 %v6493, %v6550
    %v6564 = vmul.f32 %v6494, %v6550
    %v6565 = vmul.f32 %v6495, %v6550
    %v6566 = vmul.f32 %v6496, %v6550
    %v6567 = vmul.f32 %v6497, %v6550
    %v6568 = vmul.f32 %v6498, %v6550
    %v6569 = vmul.f32 %v6499, %v6550
    %v6570 = vmul.f32 %v6500, %v6550
    %v6571 = vmul.f32 %v6501, %v6550
    %v6572 = vmul.f32 %v6502, %v6550
    %v6573 = vmul.f32 %v6503, %v6550
    %v6574 = vmul.f32 %v6504, %v6550
    %v6575 = vmul.f32 %v6505, %v6550
    %v6576 = vmul.f32 %v6506, %v6550
    %v6577 = vmul.f32 %v6507, %v6550
    %v6578 = vmul.f32 %v6508, %v6550
    %v6579 = vmul.f32 %v6509, %v6550
    %v6580 = vmul.f32 %v6510, %v6550
    %v6581 = vmul.f32 %v6511, %v6550
    %v6582 = vmul.f32 %v6512, %v6550
    %v6583 = vmul.f32 %v6513, %v6550
    %v6584 = vmul.f32 %v6514, %v6550
    %v6585 = vmul.f32 %v6515, %v6550
    %v6586 = vmul.f32 %v6516, %v6550
    %v6587 = vmul.f32 %v6517, %v6550
    %v6588 = vmul.f32 %v6518, %v6550
    %v6589 = vmul.f32 %v6519, %v6550
    %v6590 = vmul.f32 %v6520, %v6550
    %v6591 = vmul.f32 %v6521, %v6550
    %v6592 = vmul.f32 %v6522, %v6550
    %v6593 = vmul.f32 %v6523, %v6550
    %v6594 = vmul.f32 %v6524, %v6550
    %v6595 = vmul.f32 %v6525, %v6550
    %v6596 = vmul.f32 %v6526, %v6550
    %v6597 = vmul.f32 %v6527, %v6550
    %v6598 = vmul.f32 %v6528, %v6550
    %v6599 = vmul.f32 %v6529, %v6550
    %v6600 = vmul.f32 %v6530, %v6550
    %v6601 = vmul.f32 %v6531, %v6550
    %v6602 = vmul.f32 %v6532, %v6550
    %v6603 = vmul.f32 %v6533, %v6550
    %v6604 = vmul.f32 %v6534, %v6550
    %v6605 = vmul.f32 %v6535, %v6550
    %v6606 = vmul.f32 %v6536, %v6550
    %v6607 = vmul.f32 %v6537, %v6550
    %v6608 = vmul.f32 %v6538, %v6550
    %v6609 = vmul.f32 %v6539, %v6550
    %v6610 = vmul.f32 %v6540, %v6550
    %v6611 = vmul.f32 %v6541, %v6550
    %v6612 = vmul.f32 %v6542, %v6550
    %v6613 = vmul.f32 %v6543, %v6550
    %v6614 = vmul.f32 %v6544, %v6550
    %v6615 = vmul.f32 %v6545, %v6550
    %v6617 = vlaneseq
    %v6618 = vshrl.u32 %v6617, 7
    %v6619 = vsub.s32 0, %v6618
    %v6620 = vrot.slane %v6209, %v6619
    %v6622 = vadd.f32 %v6552, %v6620
    %v6623 = vadd.f32 %v6553, %v6620
    %v6624 = vadd.f32 %v6554, %v6620
    %v6625 = vadd.f32 %v6555, %v6620
    %v6626 = vadd.f32 %v6556, %v6620
    %v6627 = vadd.f32 %v6557, %v6620
    %v6628 = vadd.f32 %v6558, %v6620
    %v6629 = vadd.f32 %v6559, %v6620
    %v6630 = vadd.f32 %v6560, %v6620
    %v6631 = vadd.f32 %v6561, %v6620
    %v6632 = vadd.f32 %v6562, %v6620
    %v6633 = vadd.f32 %v6563, %v6620
    %v6634 = vadd.f32 %v6564, %v6620
    %v6635 = vadd.f32 %v6565, %v6620
    %v6636 = vadd.f32 %v6566, %v6620
    %v6637 = vadd.f32 %v6567, %v6620
    %v6638 = vadd.f32 %v6568, %v6620
    %v6639 = vadd.f32 %v6569, %v6620
    %v6640 = vadd.f32 %v6570, %v6620
    %v6641 = vadd.f32 %v6571, %v6620
    %v6642 = vadd.f32 %v6572, %v6620
    %v6643 = vadd.f32 %v6573, %v6620
    %v6644 = vadd.f32 %v6574, %v6620
    %v6645 = vadd.f32 %v6575, %v6620
    %v6646 = vadd.f32 %v6576, %v6620
    %v6647 = vadd.f32 %v6577, %v6620
    %v6648 = vadd.f32 %v6578, %v6620
    %v6649 = vadd.f32 %v6579, %v6620
    %v6650 = vadd.f32 %v6580, %v6620
    %v6651 = vadd.f32 %v6581, %v6620
    %v6652 = vadd.f32 %v6582, %v6620
    %v6653 = vadd.f32 %v6583, %v6620
    %v6654 = vadd.f32 %v6584, %v6620
    %v6655 = vadd.f32 %v6585, %v6620
    %v6656 = vadd.f32 %v6586, %v6620
    %v6657 = vadd.f32 %v6587, %v6620
    %v6658 = vadd.f32 %v6588, %v6620
    %v6659 = vadd.f32 %v6589, %v6620
    %v6660 = vadd.f32 %v6590, %v6620
    %v6661 = vadd.f32 %v6591, %v6620
    %v6662 = vadd.f32 %v6592, %v6620
    %v6663 = vadd.f32 %v6593, %v6620
    %v6664 = vadd.f32 %v6594, %v6620
    %v6665 = vadd.f32 %v6595, %v6620
    %v6666 = vadd.f32 %v6596, %v6620
    %v6667 = vadd.f32 %v6597, %v6620
    %v6668 = vadd.f32 %v6598, %v6620
    %v6669 = vadd.f32 %v6599, %v6620
    %v6670 = vadd.f32 %v6600, %v6620
    %v6671 = vadd.f32 %v6601, %v6620
    %v6672 = vadd.f32 %v6602, %v6620
    %v6673 = vadd.f32 %v6603, %v6620
    %v6674 = vadd.f32 %v6604, %v6620
    %v6675 = vadd.f32 %v6605, %v6620
    %v6676 = vadd.f32 %v6606, %v6620
    %v6677 = vadd.f32 %v6607, %v6620
    %v6678 = vadd.f32 %v6608, %v6620
    %v6679 = vadd.f32 %v6609, %v6620
    %v6680 = vadd.f32 %v6610, %v6620
    %v6681 = vadd.f32 %v6611, %v6620
    %v6682 = vadd.f32 %v6612, %v6620
    %v6683 = vadd.f32 %v6613, %v6620
    %v6684 = vadd.f32 %v6614, %v6620
    %v6685 = vadd.f32 %v6615, %v6620
    %v6686 = vmul.f32 %v6622, 0.5
    %v6687 = vmul.f32 %v6623, 0.5
    %v6688 = vmul.f32 %v6624, 0.5
    %v6689 = vmul.f32 %v6625, 0.5
    %v6690 = vmul.f32 %v6626, 0.5
    %v6691 = vmul.f32 %v6627, 0.5
    %v6692 = vmul.f32 %v6628, 0.5
    %v6693 = vmul.f32 %v6629, 0.5
    %v6694 = vmul.f32 %v6630, 0.5
    %v6695 = vmul.f32 %v6631, 0.5
    %v6696 = vmul.f32 %v6632, 0.5
    %v6697 = vmul.f32 %v6633, 0.5
    %v6698 = vmul.f32 %v6634, 0.5
    %v6699 = vmul.f32 %v6635, 0.5
    %v6700 = vmul.f32 %v6636, 0.5
    %v6701 = vmul.f32 %v6637, 0.5
    %v6702 = vmul.f32 %v6638, 0.5
    %v6703 = vmul.f32 %v6639, 0.5
    %v6704 = vmul.f32 %v6640, 0.5
    %v6705 = vmul.f32 %v6641, 0.5
    %v6706 = vmul.f32 %v6642, 0.5
    %v6707 = vmul.f32 %v6643, 0.5
    %v6708 = vmul.f32 %v6644, 0.5
    %v6709 = vmul.f32 %v6645, 0.5
    %v6710 = vmul.f32 %v6646, 0.5
    %v6711 = vmul.f32 %v6647, 0.5
    %v6712 = vmul.f32 %v6648, 0.5
    %v6713 = vmul.f32 %v6649, 0.5
    %v6714 = vmul.f32 %v6650, 0.5
    %v6715 = vmul.f32 %v6651, 0.5
    %v6716 = vmul.f32 %v6652, 0.5
    %v6717 = vmul.f32 %v6653, 0.5
    %v6718 = vmul.f32 %v6654, 0.5
    %v6719 = vmul.f32 %v6655, 0.5
    %v6720 = vmul.f32 %v6656, 0.5
    %v6721 = vmul.f32 %v6657, 0.5
    %v6722 = vmul.f32 %v6658, 0.5
    %v6723 = vmul.f32 %v6659, 0.5
    %v6724 = vmul.f32 %v6660, 0.5
    %v6725 = vmul.f32 %v6661, 0.5
    %v6726 = vmul.f32 %v6662, 0.5
    %v6727 = vmul.f32 %v6663, 0.5
    %v6728 = vmul.f32 %v6664, 0.5
    %v6729 = vmul.f32 %v6665, 0.5
    %v6730 = vmul.f32 %v6666, 0.5
    %v6731 = vmul.f32 %v6667, 0.5
    %v6732 = vmul.f32 %v6668, 0.5
    %v6733 = vmul.f32 %v6669, 0.5
    %v6734 = vmul.f32 %v6670, 0.5
    %v6735 = vmul.f32 %v6671, 0.5
    %v6736 = vmul.f32 %v6672, 0.5
    %v6737 = vmul.f32 %v6673, 0.5
    %v6738 = vmul.f32 %v6674, 0.5
    %v6739 = vmul.f32 %v6675, 0.5
    %v6740 = vmul.f32 %v6676, 0.5
    %v6741 = vmul.f32 %v6677, 0.5
    %v6742 = vmul.f32 %v6678, 0.5
    %v6743 = vmul.f32 %v6679, 0.5
    %v6744 = vmul.f32 %v6680, 0.5
    %v6745 = vmul.f32 %v6681, 0.5
    %v6746 = vmul.f32 %v6682, 0.5
    %v6747 = vmul.f32 %v6683, 0.5
    %v6748 = vmul.f32 %v6684, 0.5
    %v6749 = vmul.f32 %v6685, 0.5
    %v6750 = vtanh.pop %v6686
    %v6751 = vtanh.pop %v6687
    %v6752 = vtanh.pop %v6688
    %v6753 = vtanh.pop %v6689
    %v6754 = vtanh.pop %v6690
    %v6755 = vtanh.pop %v6691
    %v6756 = vtanh.pop %v6692
    %v6757 = vtanh.pop %v6693
    %v6758 = vtanh.pop %v6694
    %v6759 = vtanh.pop %v6695
    %v6760 = vtanh.pop %v6696
    %v6761 = vtanh.pop %v6697
    %v6762 = vtanh.pop %v6698
    %v6763 = vtanh.pop %v6699
    %v6764 = vtanh.pop %v6700
    %v6765 = vtanh.pop %v6701
    %v6766 = vtanh.pop %v6702
    %v6767 = vtanh.pop %v6703
    %v6768 = vtanh.pop %v6704
    %v6769 = vtanh.pop %v6705
    %v6770 = vtanh.pop %v6706
    %v6771 = vtanh.pop %v6707
    %v6772 = vtanh.pop %v6708
    %v6773 = vtanh.pop %v6709
    %v6774 = vtanh.pop %v6710
    %v6775 = vtanh.pop %v6711
    %v6776 = vtanh.pop %v6712
    %v6777 = vtanh.pop %v6713
    %v6778 = vtanh.pop %v6714
    %v6779 = vtanh.pop %v6715
    %v6780 = vtanh.pop %v6716
    %v6781 = vtanh.pop %v6717
    %v6782 = vtanh.pop %v6718
    %v6783 = vtanh.pop %v6719
    %v6784 = vtanh.pop %v6720
    %v6785 = vtanh.pop %v6721
    %v6786 = vtanh.pop %v6722
    %v6787 = vtanh.pop %v6723
    %v6788 = vtanh.pop %v6724
    %v6789 = vtanh.pop %v6725
    %v6790 = vtanh.pop %v6726
    %v6791 = vtanh.pop %v6727
    %v6792 = vtanh.pop %v6728
    %v6793 = vtanh.pop %v6729
    %v6794 = vtanh.pop %v6730
    %v6795 = vtanh.pop %v6731
    %v6796 = vtanh.pop %v6732
    %v6797 = vtanh.pop %v6733
    %v6798 = vtanh.pop %v6734
    %v6799 = vtanh.pop %v6735
    %v6800 = vtanh.pop %v6736
    %v6801 = vtanh.pop %v6737
    %v6802 = vtanh.pop %v6738
    %v6803 = vtanh.pop %v6739
    %v6804 = vtanh.pop %v6740
    %v6805 = vtanh.pop %v6741
    %v6806 = vtanh.pop %v6742
    %v6807 = vtanh.pop %v6743
    %v6808 = vtanh.pop %v6744
    %v6809 = vtanh.pop %v6745
    %v6810 = vtanh.pop %v6746
    %v6811 = vtanh.pop %v6747
    %v6812 = vtanh.pop %v6748
    %v6813 = vtanh.pop %v6749
    %v6814 = vmul.f32 %v6750, 0.5
    %v6815 = vmul.f32 %v6751, 0.5
    %v6816 = vmul.f32 %v6752, 0.5
    %v6817 = vmul.f32 %v6753, 0.5
    %v6818 = vmul.f32 %v6754, 0.5
    %v6819 = vmul.f32 %v6755, 0.5
    %v6820 = vmul.f32 %v6756, 0.5
    %v6821 = vmul.f32 %v6757, 0.5
    %v6822 = vmul.f32 %v6758, 0.5
    %v6823 = vmul.f32 %v6759, 0.5
    %v6824 = vmul.f32 %v6760, 0.5
    %v6825 = vmul.f32 %v6761, 0.5
    %v6826 = vmul.f32 %v6762, 0.5
    %v6827 = vmul.f32 %v6763, 0.5
    %v6828 = vmul.f32 %v6764, 0.5
    %v6829 = vmul.f32 %v6765, 0.5
    %v6830 = vmul.f32 %v6766, 0.5
    %v6831 = vmul.f32 %v6767, 0.5
    %v6832 = vmul.f32 %v6768, 0.5
    %v6833 = vmul.f32 %v6769, 0.5
    %v6834 = vmul.f32 %v6770, 0.5
    %v6835 = vmul.f32 %v6771, 0.5
    %v6836 = vmul.f32 %v6772, 0.5
    %v6837 = vmul.f32 %v6773, 0.5
    %v6838 = vmul.f32 %v6774, 0.5
    %v6839 = vmul.f32 %v6775, 0.5
    %v6840 = vmul.f32 %v6776, 0.5
    %v6841 = vmul.f32 %v6777, 0.5
    %v6842 = vmul.f32 %v6778, 0.5
    %v6843 = vmul.f32 %v6779, 0.5
    %v6844 = vmul.f32 %v6780, 0.5
    %v6845 = vmul.f32 %v6781, 0.5
    %v6846 = vmul.f32 %v6782, 0.5
    %v6847 = vmul.f32 %v6783, 0.5
    %v6848 = vmul.f32 %v6784, 0.5
    %v6849 = vmul.f32 %v6785, 0.5
    %v6850 = vmul.f32 %v6786, 0.5
    %v6851 = vmul.f32 %v6787, 0.5
    %v6852 = vmul.f32 %v6788, 0.5
    %v6853 = vmul.f32 %v6789, 0.5
    %v6854 = vmul.f32 %v6790, 0.5
    %v6855 = vmul.f32 %v6791, 0.5
    %v6856 = vmul.f32 %v6792, 0.5
    %v6857 = vmul.f32 %v6793, 0.5
    %v6858 = vmul.f32 %v6794, 0.5
    %v6859 = vmul.f32 %v6795, 0.5
    %v6860 = vmul.f32 %v6796, 0.5
    %v6861 = vmul.f32 %v6797, 0.5
    %v6862 = vmul.f32 %v6798, 0.5
    %v6863 = vmul.f32 %v6799, 0.5
    %v6864 = vmul.f32 %v6800, 0.5
    %v6865 = vmul.f32 %v6801, 0.5
    %v6866 = vmul.f32 %v6802, 0.5
    %v6867 = vmul.f32 %v6803, 0.5
    %v6868 = vmul.f32 %v6804, 0.5
    %v6869 = vmul.f32 %v6805, 0.5
    %v6870 = vmul.f32 %v6806, 0.5
    %v6871 = vmul.f32 %v6807, 0.5
    %v6872 = vmul.f32 %v6808, 0.5
    %v6873 = vmul.f32 %v6809, 0.5
    %v6874 = vmul.f32 %v6810, 0.5
    %v6875 = vmul.f32 %v6811, 0.5
    %v6876 = vmul.f32 %v6812, 0.5
    %v6877 = vmul.f32 %v6813, 0.5
    %v6878 = vadd.f32 %v6814, 0.5
    %v6879 = vadd.f32 %v6815, 0.5
    %v6880 = vadd.f32 %v6816, 0.5
    %v6881 = vadd.f32 %v6817, 0.5
    %v6882 = vadd.f32 %v6818, 0.5
    %v6883 = vadd.f32 %v6819, 0.5
    %v6884 = vadd.f32 %v6820, 0.5
    %v6885 = vadd.f32 %v6821, 0.5
    %v6886 = vadd.f32 %v6822, 0.5
    %v6887 = vadd.f32 %v6823, 0.5
    %v6888 = vadd.f32 %v6824, 0.5
    %v6889 = vadd.f32 %v6825, 0.5
    %v6890 = vadd.f32 %v6826, 0.5
    %v6891 = vadd.f32 %v6827, 0.5
    %v6892 = vadd.f32 %v6828, 0.5
    %v6893 = vadd.f32 %v6829, 0.5
    %v6894 = vadd.f32 %v6830, 0.5
    %v6895 = vadd.f32 %v6831, 0.5
    %v6896 = vadd.f32 %v6832, 0.5
    %v6897 = vadd.f32 %v6833, 0.5
    %v6898 = vadd.f32 %v6834, 0.5
    %v6899 = vadd.f32 %v6835, 0.5
    %v6900 = vadd.f32 %v6836, 0.5
    %v6901 = vadd.f32 %v6837, 0.5
    %v6902 = vadd.f32 %v6838, 0.5
    %v6903 = vadd.f32 %v6839, 0.5
    %v6904 = vadd.f32 %v6840, 0.5
    %v6905 = vadd.f32 %v6841, 0.5
    %v6906 = vadd.f32 %v6842, 0.5
    %v6907 = vadd.f32 %v6843, 0.5
    %v6908 = vadd.f32 %v6844, 0.5
    %v6909 = vadd.f32 %v6845, 0.5
    %v6910 = vadd.f32 %v6846, 0.5
    %v6911 = vadd.f32 %v6847, 0.5
    %v6912 = vadd.f32 %v6848, 0.5
    %v6913 = vadd.f32 %v6849, 0.5
    %v6914 = vadd.f32 %v6850, 0.5
    %v6915 = vadd.f32 %v6851, 0.5
    %v6916 = vadd.f32 %v6852, 0.5
    %v6917 = vadd.f32 %v6853, 0.5
    %v6918 = vadd.f32 %v6854, 0.5
    %v6919 = vadd.f32 %v6855, 0.5
    %v6920 = vadd.f32 %v6856, 0.5
    %v6921 = vadd.f32 %v6857, 0.5
    %v6922 = vadd.f32 %v6858, 0.5
    %v6923 = vadd.f32 %v6859, 0.5
    %v6924 = vadd.f32 %v6860, 0.5
    %v6925 = vadd.f32 %v6861, 0.5
    %v6926 = vadd.f32 %v6862, 0.5
    %v6927 = vadd.f32 %v6863, 0.5
    %v6928 = vadd.f32 %v6864, 0.5
    %v6929 = vadd.f32 %v6865, 0.5
    %v6930 = vadd.f32 %v6866, 0.5
    %v6931 = vadd.f32 %v6867, 0.5
    %v6932 = vadd.f32 %v6868, 0.5
    %v6933 = vadd.f32 %v6869, 0.5
    %v6934 = vadd.f32 %v6870, 0.5
    %v6935 = vadd.f32 %v6871, 0.5
    %v6936 = vadd.f32 %v6872, 0.5
    %v6937 = vadd.f32 %v6873, 0.5
    %v6938 = vadd.f32 %v6874, 0.5
    %v6939 = vadd.f32 %v6875, 0.5
    %v6940 = vadd.f32 %v6876, 0.5
    %v6941 = vadd.f32 %v6877, 0.5
    %v6942 = vmul.f32 %v6622, %v6878
    %v6943 = vmul.f32 %v6623, %v6879
    %v6944 = vmul.f32 %v6624, %v6880
    %v6945 = vmul.f32 %v6625, %v6881
    %v6946 = vmul.f32 %v6626, %v6882
    %v6947 = vmul.f32 %v6627, %v6883
    %v6948 = vmul.f32 %v6628, %v6884
    %v6949 = vmul.f32 %v6629, %v6885
    %v6950 = vmul.f32 %v6630, %v6886
    %v6951 = vmul.f32 %v6631, %v6887
    %v6952 = vmul.f32 %v6632, %v6888
    %v6953 = vmul.f32 %v6633, %v6889
    %v6954 = vmul.f32 %v6634, %v6890
    %v6955 = vmul.f32 %v6635, %v6891
    %v6956 = vmul.f32 %v6636, %v6892
    %v6957 = vmul.f32 %v6637, %v6893
    %v6958 = vmul.f32 %v6638, %v6894
    %v6959 = vmul.f32 %v6639, %v6895
    %v6960 = vmul.f32 %v6640, %v6896
    %v6961 = vmul.f32 %v6641, %v6897
    %v6962 = vmul.f32 %v6642, %v6898
    %v6963 = vmul.f32 %v6643, %v6899
    %v6964 = vmul.f32 %v6644, %v6900
    %v6965 = vmul.f32 %v6645, %v6901
    %v6966 = vmul.f32 %v6646, %v6902
    %v6967 = vmul.f32 %v6647, %v6903
    %v6968 = vmul.f32 %v6648, %v6904
    %v6969 = vmul.f32 %v6649, %v6905
    %v6970 = vmul.f32 %v6650, %v6906
    %v6971 = vmul.f32 %v6651, %v6907
    %v6972 = vmul.f32 %v6652, %v6908
    %v6973 = vmul.f32 %v6653, %v6909
    %v6974 = vmul.f32 %v6654, %v6910
    %v6975 = vmul.f32 %v6655, %v6911
    %v6976 = vmul.f32 %v6656, %v6912
    %v6977 = vmul.f32 %v6657, %v6913
    %v6978 = vmul.f32 %v6658, %v6914
    %v6979 = vmul.f32 %v6659, %v6915
    %v6980 = vmul.f32 %v6660, %v6916
    %v6981 = vmul.f32 %v6661, %v6917
    %v6982 = vmul.f32 %v6662, %v6918
    %v6983 = vmul.f32 %v6663, %v6919
    %v6984 = vmul.f32 %v6664, %v6920
    %v6985 = vmul.f32 %v6665, %v6921
    %v6986 = vmul.f32 %v6666, %v6922
    %v6987 = vmul.f32 %v6667, %v6923
    %v6988 = vmul.f32 %v6668, %v6924
    %v6989 = vmul.f32 %v6669, %v6925
    %v6990 = vmul.f32 %v6670, %v6926
    %v6991 = vmul.f32 %v6671, %v6927
    %v6992 = vmul.f32 %v6672, %v6928
    %v6993 = vmul.f32 %v6673, %v6929
    %v6994 = vmul.f32 %v6674, %v6930
    %v6995 = vmul.f32 %v6675, %v6931
    %v6996 = vmul.f32 %v6676, %v6932
    %v6997 = vmul.f32 %v6677, %v6933
    %v6998 = vmul.f32 %v6678, %v6934
    %v6999 = vmul.f32 %v6679, %v6935
    %v7000 = vmul.f32 %v6680, %v6936
    %v7001 = vmul.f32 %v6681, %v6937
    %v7002 = vmul.f32 %v6682, %v6938
    %v7003 = vmul.f32 %v6683, %v6939
    %v7004 = vmul.f32 %v6684, %v6940
    %v7005 = vmul.f32 %v6685, %v6941
    %7006 = vst [vmem:[#allocation4] sm:$0xff] %v6942
    %7007 = vst [vmem:[#allocation4 + $0x8] sm:$0xff] %v6943
    %7008 = vst [vmem:[#allocation4 + $0x10] sm:$0xff] %v6944
    %7009 = vst [vmem:[#allocation4 + $0x18] sm:$0xff] %v6945
    %7010 = vst [vmem:[#allocation4 + $0x20] sm:$0xff] %v6946
    %7011 = vst [vmem:[#allocation4 + $0x28] sm:$0xff] %v6947
    %7012 = vst [vmem:[#allocation4 + $0x30] sm:$0xff] %v6948
    %7013 = vst [vmem:[#allocation4 + $0x38] sm:$0xff] %v6949
    %7014 = vst [vmem:[#allocation4 + $0x40] sm:$0xff] %v6950
    %7015 = vst [vmem:[#allocation4 + $0x48] sm:$0xff] %v6951
    %7016 = vst [vmem:[#allocation4 + $0x50] sm:$0xff] %v6952
    %7017 = vst [vmem:[#allocation4 + $0x58] sm:$0xff] %v6953
    %7018 = vst [vmem:[#allocation4 + $0x60] sm:$0xff] %v6954
    %7019 = vst [vmem:[#allocation4 + $0x68] sm:$0xff] %v6955
    %7020 = vst [vmem:[#allocation4 + $0x70] sm:$0xff] %v6956
    %7021 = vst [vmem:[#allocation4 + $0x78] sm:$0xff] %v6957
    %7022 = vst [vmem:[#allocation4 + $0x80] sm:$0xff] %v6958
    %7023 = vst [vmem:[#allocation4 + $0x88] sm:$0xff] %v6959
    %7024 = vst [vmem:[#allocation4 + $0x90] sm:$0xff] %v6960
    %7025 = vst [vmem:[#allocation4 + $0x98] sm:$0xff] %v6961
    %7026 = vst [vmem:[#allocation4 + $0xa0] sm:$0xff] %v6962
    %7027 = vst [vmem:[#allocation4 + $0xa8] sm:$0xff] %v6963
    %7028 = vst [vmem:[#allocation4 + $0xb0] sm:$0xff] %v6964
    %7029 = vst [vmem:[#allocation4 + $0xb8] sm:$0xff] %v6965
    %7030 = vst [vmem:[#allocation4 + $0xc0] sm:$0xff] %v6966
    %7031 = vst [vmem:[#allocation4 + $0xc8] sm:$0xff] %v6967
    %7032 = vst [vmem:[#allocation4 + $0xd0] sm:$0xff] %v6968
    %7033 = vst [vmem:[#allocation4 + $0xd8] sm:$0xff] %v6969
    %7034 = vst [vmem:[#allocation4 + $0xe0] sm:$0xff] %v6970
    %7035 = vst [vmem:[#allocation4 + $0xe8] sm:$0xff] %v6971
    %7036 = vst [vmem:[#allocation4 + $0xf0] sm:$0xff] %v6972
    %7037 = vst [vmem:[#allocation4 + $0xf8] sm:$0xff] %v6973
    %7038 = vst [vmem:[#allocation4 + $0x100] sm:$0xff] %v6974
    %7039 = vst [vmem:[#allocation4 + $0x108] sm:$0xff] %v6975
    %7040 = vst [vmem:[#allocation4 + $0x110] sm:$0xff] %v6976
    %7041 = vst [vmem:[#allocation4 + $0x118] sm:$0xff] %v6977
    %7042 = vst [vmem:[#allocation4 + $0x120] sm:$0xff] %v6978
    %7043 = vst [vmem:[#allocation4 + $0x128] sm:$0xff] %v6979
    %7044 = vst [vmem:[#allocation4 + $0x130] sm:$0xff] %v6980
    %7045 = vst [vmem:[#allocation4 + $0x138] sm:$0xff] %v6981
    %7046 = vst [vmem:[#allocation4 + $0x140] sm:$0xff] %v6982
    %7047 = vst [vmem:[#allocation4 + $0x148] sm:$0xff] %v6983
    %7048 = vst [vmem:[#allocation4 + $0x150] sm:$0xff] %v6984
    %7049 = vst [vmem:[#allocation4 + $0x158] sm:$0xff] %v6985
    %7050 = vst [vmem:[#allocation4 + $0x160] sm:$0xff] %v6986
    %7051 = vst [vmem:[#allocation4 + $0x168] sm:$0xff] %v6987
    %7052 = vst [vmem:[#allocation4 + $0x170] sm:$0xff] %v6988
    %7053 = vst [vmem:[#allocation4 + $0x178] sm:$0xff] %v6989
    %7054 = vst [vmem:[#allocation4 + $0x180] sm:$0xff] %v6990
    %7055 = vst [vmem:[#allocation4 + $0x188] sm:$0xff] %v6991
    %7056 = vst [vmem:[#allocation4 + $0x190] sm:$0xff] %v6992
    %7057 = vst [vmem:[#allocation4 + $0x198] sm:$0xff] %v6993
    %7058 = vst [vmem:[#allocation4 + $0x1a0] sm:$0xff] %v6994
    %7059 = vst [vmem:[#allocation4 + $0x1a8] sm:$0xff] %v6995
    %7060 = vst [vmem:[#allocation4 + $0x1b0] sm:$0xff] %v6996
    %7061 = vst [vmem:[#allocation4 + $0x1b8] sm:$0xff] %v6997
    %7062 = vst [vmem:[#allocation4 + $0x1c0] sm:$0xff] %v6998
    %7063 = vst [vmem:[#allocation4 + $0x1c8] sm:$0xff] %v6999
    %7064 = vst [vmem:[#allocation4 + $0x1d0] sm:$0xff] %v7000
    %7065 = vst [vmem:[#allocation4 + $0x1d8] sm:$0xff] %v7001
    %7066 = vst [vmem:[#allocation4 + $0x1e0] sm:$0xff] %v7002
    %7067 = vst [vmem:[#allocation4 + $0x1e8] sm:$0xff] %v7003
    %7068 = vst [vmem:[#allocation4 + $0x1f0] sm:$0xff] %v7004
    %7069 = vst [vmem:[#allocation4 + $0x1f8] sm:$0xff] %v7005
    // Predicated region
    $region30: #{bottleneck_down_forward.1} parent=1 // pred_check
      _
    $region31: #{bottleneck_down_forward.1} parent=1 // pred_check_branch
      %7071 = sbr.rel (0) target = $region33
    $region32: #{bottleneck_down_forward.1} parent=1 // pred_region
      %s7073 = ssub.s32 8192, 8192
      %7074 = vsyncadd [#allocation5], %s7073
      %s7075 = sshll.u32 [#allocation4], 4
      %s7076 = int_to_ptr.vmem [resolvable:$true] %s7075
      %7081 = dma.vmem_to_hbm [thread:$0]  %s7076, 8192, %s7, [#allocation5], 128, 128, 8
    $region33: #{bottleneck_down_forward.1} parent=1 // pred_fallthru
      _
    // Predicated region
    $region34: #{bottleneck_down_forward.1} parent=1 // pred_check
      _
    $region35: #{bottleneck_down_forward.1} parent=1 // pred_check_branch
      %7083 = sbr.rel (0) target = $region37
    $region36: #{bottleneck_down_forward.1} parent=1 // pred_region
      %7084 = dma.done [#allocation5], 8192
    $region37: #{bottleneck_down_forward.1} parent=1 // pred_fallthru
      _
    %7085 = vsyncpa [#allocation5], 1

</llo_original>
